<compile_context>
chip_gen: v7x
topology: tpu7x:2x2x1
jax: 0.10.0
libtpu: 0.0.40
codegen_flags: <defaults>
</compile_context>

<pallas_src>
import numpy as np
import jax
import jax.numpy as jnp
from jax.experimental import pallas as pl
from jax.experimental.pallas import tpu as pltpu

EPS_BN = 1e-5
NUM_HEADS = 8

_VMEM = pl.BlockSpec(memory_space=pltpu.MemorySpace.VMEM)

# act2 layout: row r of act2 holds p2pad[r - PAD_OFF] (p2pad = conv3-padded
# pooled2); payload starts at a sublane-aligned row.
_PAD_OFF = 6          # p2pad position 0 lives at act2 row 6
_ACT2_ROWS = 80       # rows 6..72 are read; 80 keeps the scratch 8-multiple


# --------------------------------------------------------------------------
# Single fused kernel
# --------------------------------------------------------------------------
def _fused_kernel(xs1_ref, x2_ref,
                  w1_ref, sc1_ref, sh1_ref,
                  w2_ref, sc2_ref, sh2_ref,
                  w3_ref, sc3_ref, sh3_ref,
                  wqkv_ref, wproj_ref, bproj_ref,
                  wl1_ref, bl1_ref, wl2_ref, bl2_ref,
                  mask_ref,
                  o_ref,
                  act1_ref, act2_ref, act3_ref):
    f32 = jnp.float32
    B = xs1_ref.shape[0]

    def mm(a, b):
        return jnp.dot(a, b, preferred_element_type=f32)

    # --- stage 1: Conv1d(2->32,k9,s2,p3) + BN + ReLU + MaxPool1d(2,2) -------
    # xs1 row g holds 32 consecutive padded-input positions (16g .. 16g+31,
    # 2 ch each).  One matmul produces 4 pooled output positions x 2 pooling
    # parities x 32 ch per row; the max-pool is a lane-half max and the result
    # lands directly in the "4 positions per 128-lane row" layout of act1.
    G1 = xs1_ref.shape[1]                                    # 64
    xs = xs1_ref[...].reshape(B * G1, xs1_ref.shape[2])      # (128, 64)
    a1 = mm(xs, w1_ref[...])                                 # (128, 256) = [even|odd]
    a1 = jnp.maximum(a1 * sc1_ref[...] + sh1_ref[...], 0.0)
    act1_ref[...] = jnp.maximum(a1[:, :128], a1[:, 128:]).reshape(B, G1, 128)

    # --- stage 2: Conv1d(32->64,k5,s2,p0) + BN + ReLU + AvgPool1d(2,2) ------
    # pooled2[p] needs pooled1[4p .. 4p+6] = act1 rows p and p+1 -> the matmul
    # operand is just the lane-concat of two full-width row windows (the last
    # 32 lanes of row p+1 hit structurally-zero weight rows).
    L2 = G1 - 1                                              # 63
    xs = jnp.concatenate([act1_ref[:, pl.ds(0, L2), :],
                          act1_ref[:, pl.ds(1, L2), :]], axis=-1)   # (B, 63, 256)
    a2 = mm(xs.reshape(B * L2, 256), w2_ref[...])            # (126, 128) = [even|odd]
    a2 = jnp.maximum(a2 * sc2_ref[...] + sh2_ref[...], 0.0)
    pooled2 = 0.5 * (a2[:, :64] + a2[:, 64:])                # (126, 64)
    # conv3-padded coords: act2 row r = p2pad[r - 6]; zero only the pad rows.
    act2_ref[:, pl.ds(_PAD_OFF, 2), :] = jnp.zeros((B, 2, 64), f32)       # p2pad[0:2]
    act2_ref[:, pl.ds(_PAD_OFF + 65, 2), :] = jnp.zeros((B, 2, 64), f32)  # p2pad[65:67]
    act2_ref[:, pl.ds(_PAD_OFF + 2, L2), :] = pooled2.reshape(B, L2, 64)  # p2pad[2:65]

    # --- stage 3: Conv1d(64->64,k5,s2,p2) + BN + ReLU + AvgPool1d(2,2) ------
    # pooled3[p] needs p2pad[4p .. 4p+6]; the 7 stride-4 taps are
    # lane-concatenated once into a single K=448 matmul operand.
    L3 = act3_ref.shape[1]                                   # 16
    xs = jnp.concatenate(
        [act2_ref[:, pl.ds(_PAD_OFF + c, L3, stride=4), :] for c in range(7)],
        axis=-1)                                             # (B, 16, 448)
    a3 = mm(xs.reshape(B * L3, 448), w3_ref[...])            # (32, 128) = [even|odd]
    a3 = jnp.maximum(a3 * sc3_ref[...] + sh3_ref[...], 0.0)
    act3_ref[...] = (0.5 * (a3[:, :64] + a3[:, 64:])).reshape(B, L3, 64)

    # --- tokens: (B,16,64) -> (B*4, 256)  (torch .transpose + reshape) ------
    N = L3 // 4                                              # 4 tokens per batch
    tokens = jnp.concatenate(
        [act3_ref[:, pl.ds(s, N, stride=4), :] for s in range(4)], axis=-1)
    C = wqkv_ref.shape[0]                                    # 256
    x2d = tokens.reshape(B * N, C)                           # row = b*N + n

    # --- multi-head self-attention ------------------------------------------
    # qkv in ONE lane-dense matmul; per-head split via static 32-lane slices.
    H = NUM_HEADS
    hd = C // H
    qkv = mm(x2d, wqkv_ref[...])                             # (B*N, 768)
    qh = jnp.stack([qkv[:, 0 * C + h * hd: 0 * C + (h + 1) * hd] for h in range(H)])
    kh = jnp.stack([qkv[:, 1 * C + h * hd: 1 * C + (h + 1) * hd] for h in range(H)])
    vh = jnp.stack([qkv[:, 2 * C + h * hd: 2 * C + (h + 1) * hd] for h in range(H)])
    s = jnp.einsum('hnd,hmd->hnm', qh, kh,
                   preferred_element_type=f32) * (float(hd) ** -0.5)
    s = s + mask_ref[...]                                    # block-diag over batches
    s = s - jnp.max(s, axis=-1, keepdims=True)
    p = jnp.exp(s)
    p = p * pl.reciprocal(jnp.sum(p, axis=-1, keepdims=True), approx=True)
    ctx = jnp.einsum('hnm,hmd->hnd', p, vh, preferred_element_type=f32)   # (H, BN, hd)
    ctx_cat = jnp.concatenate([ctx[h] for h in range(H)], axis=-1)        # (BN, 256)

    # proj(attn_out + x) in one matmul (matches reference residual placement)
    y = mm(x2d + ctx_cat, wproj_ref[...]) + bproj_ref[...]   # (BN, 256)

    pooled = jnp.mean(y.reshape(B, N, C), axis=1)            # (B, 256)
    out = mm(pooled, wl1_ref[...]) + bl1_ref[...]            # linear1

    # x2 branch: per-row standardization (torch .std(1): unbiased, eps on std)
    x2 = x2_ref[...]
    n2 = x2.shape[1]
    mu = jnp.mean(x2, axis=1, keepdims=True)
    var = jnp.sum((x2 - mu) ** 2, axis=1, keepdims=True) / (n2 - 1)
    x2n = (x2 - mu) / (jnp.sqrt(var) + 1e-5)
    out = out + mm(x2n, wl2_ref[...]) + bl2_ref[...]         # linear2
    o_ref[...] = out


# --------------------------------------------------------------------------
# One-time parameter preparation (BN folding, K-stacked conv tap matrices)
# --------------------------------------------------------------------------
def prepare_params(p):
    def bn_fold(bias, bn):
        s = bn['gamma'] / jnp.sqrt(bn['rvar'] + EPS_BN)
        return s, (bias - bn['rmean']) * s + bn['beta']

    def conv_block_w(w, in_pos, out_starts):
        """Build the K-stacked tap matrix.
        Operand row block bi holds the Cin channels of input position
        in_pos[bi] (relative to the window start); output column block ui
        holds the Cout channels of the conv output whose receptive field
        starts at out_starts[ui].  Taps outside the kernel are left zero."""
        w = np.asarray(w)                     # (Cout, Cin, K)
        cout, cin, kw = w.shape
        wk = np.transpose(w, (1, 2, 0))       # (Cin, K, Cout)
        W = np.zeros((len(in_pos) * cin, len(out_starts) * cout), np.float32)
        for bi, pos in enumerate(in_pos):
            for ui, s0 in enumerate(out_starts):
                k = pos - s0
                if 0 <= k < kw:
                    W[bi * cin:(bi + 1) * cin, ui * cout:(ui + 1) * cout] = wk[:, k, :]
        return jnp.asarray(W)

    prep = {}
    # bn1 (eval) applied in the wrapper before conv1 zero-padding
    s1 = p['bn1']['gamma'] / jnp.sqrt(p['bn1']['rvar'] + EPS_BN)
    prep['bn1_scale'] = s1
    prep['bn1_shift'] = p['bn1']['beta'] - p['bn1']['rmean'] * s1

    # stage 1: 32-position input window -> 4 pooled positions x 2 parities
    sc, sh = bn_fold(p['conv1_b'], p['bn_l1'])
    prep['w1'] = conv_block_w(p['conv1_w'], list(range(32)),
                              [4 * c + 2 * e for e in (0, 1) for c in range(4)])
    prep['sc1'] = jnp.tile(sc, 8).reshape(1, -1)
    prep['sh1'] = jnp.tile(sh, 8).reshape(1, -1)

    # stage 2: 8-pooled1-position window -> 1 pooled2 position x 2 parities
    sc, sh = bn_fold(p['conv2_b'], p['bn_l2'])
    prep['w2'] = conv_block_w(p['conv2_w'], list(range(8)), [0, 2])
    prep['sc2'] = jnp.tile(sc, 2).reshape(1, -1)
    prep['sh2'] = jnp.tile(sh, 2).reshape(1, -1)

    # stage 3: 7-p2pad-position window -> 1 pooled3 position x 2 parities
    sc, sh = bn_fold(p['conv3_b'], p['bn_l3'])
    prep['w3'] = conv_block_w(p['conv3_w'], list(range(7)), [0, 2])
    prep['sc3'] = jnp.tile(sc, 2).reshape(1, -1)
    prep['sh3'] = jnp.tile(sh, 2).reshape(1, -1)

    prep['wqkv'] = p['qkv_w'].T                  # (256, 768) = [q|k|v], head-major
    prep['wproj'] = p['proj_w'].T
    prep['bproj'] = p['proj_b'].reshape(1, -1)
    prep['wl1'] = p['lin1_w'].T
    prep['bl1'] = p['lin1_b'].reshape(1, -1)
    prep['wl2'] = p['lin2_w'].T
    prep['bl2'] = p['lin2_b'].reshape(1, -1)
    return prep


# --------------------------------------------------------------------------
# Forward (single pallas_call)
# --------------------------------------------------------------------------
def forward(prep, x1, x2):
    B, L, _ = x1.shape
    assert L == 1024, "prepared pipeline assumes seq length 1024"
    f32 = jnp.float32

    # bn1 (eval) on channels-last x1, conv1 zero-pad (3 left; extra right zeros
    # only feed outputs that are never read), then 32-position windows per row.
    x = x1.astype(f32) * prep['bn1_scale'] + prep['bn1_shift']
    xp = jnp.pad(x, ((0, 0), (3, 13), (0, 0)))               # (B, 1040, 2)
    xg = xp.reshape(B, 65, 32)                               # 16 positions / row
    xs1 = jnp.concatenate([xg[:, 0:64, :], xg[:, 1:65, :]], axis=-1)  # (B, 64, 64)

    ntok = B * 4
    blk = jnp.arange(ntok) // 4
    attn_mask = jnp.where(blk[:, None] == blk[None, :], 0.0, -1e30).astype(f32)

    args = (xs1, x2.astype(f32),
            prep['w1'], prep['sc1'], prep['sh1'],
            prep['w2'], prep['sc2'], prep['sh2'],
            prep['w3'], prep['sc3'], prep['sh3'],
            prep['wqkv'], prep['wproj'], prep['bproj'],
            prep['wl1'], prep['bl1'], prep['wl2'], prep['bl2'],
            attn_mask)

    # NOTE: no grid -- the whole workload is a few MFLOP and fits one
    # invocation.  On v7x, a grid=(B,) with dimension_semantics=("parallel",)
    # would engage the second TensorCore.
    return pl.pallas_call(
        _fused_kernel,
        out_shape=jax.ShapeDtypeStruct((B, 4), jnp.float32),
        in_specs=[_VMEM] * len(args),
        out_specs=_VMEM,
        scratch_shapes=[
            pltpu.VMEM((B, 64, 128), jnp.float32),          # pooled1, 4 pos / row
            pltpu.VMEM((B, _ACT2_ROWS, 64), jnp.float32),   # pooled2, conv3-padded
            pltpu.VMEM((B, 16, 64), jnp.float32),           # pooled3
        ],
    )(*args)


# --------------------------------------------------------------------------
# Deterministic parameter init (shapes from Conv_1D_2L_CA.__init__)
# --------------------------------------------------------------------------
def init_params(key):
    ks = jax.random.split(key, 20)

    def normal(k, shape, sc=0.1):
        return sc * jax.random.normal(k, shape, jnp.float32)

    def bn(k, c):
        k1, k2, k3, k4 = jax.random.split(k, 4)
        return dict(gamma=1.0 + 0.1 * jax.random.normal(k1, (c,), jnp.float32),
                    beta=0.1 * jax.random.normal(k2, (c,), jnp.float32),
                    rmean=0.1 * jax.random.normal(k3, (c,), jnp.float32),
                    rvar=jax.random.uniform(k4, (c,), jnp.float32, 0.5, 1.5))

    dim = 64 * 4
    return {
        'bn1': bn(ks[0], 2),
        'conv1_w': normal(ks[1], (32, 2, 9), (2 * 9) ** -0.5),
        'conv1_b': normal(ks[2], (32,)),
        'bn_l1': bn(ks[3], 32),
        'conv2_w': normal(ks[4], (64, 32, 5), (32 * 5) ** -0.5),
        'conv2_b': normal(ks[5], (64,)),
        'bn_l2': bn(ks[6], 64),
        'conv3_w': normal(ks[7], (64, 64, 5), (64 * 5) ** -0.5),
        'conv3_b': normal(ks[8], (64,)),
        'bn_l3': bn(ks[9], 64),
        'qkv_w': normal(ks[10], (3 * dim, dim), dim ** -0.5),   # PyTorch (out, in), bias=False
        'proj_w': normal(ks[11], (dim, dim), dim ** -0.5),
        'proj_b': normal(ks[12], (dim,)),
        'lin1_w': normal(ks[13], (4, dim), dim ** -0.5),
        'lin1_b': normal(ks[14], (4,)),
        'lin2_w': normal(ks[15], (4, 16), 16 ** -0.5),
        'lin2_b': normal(ks[16], (4,)),
    }


if __name__ == "__main__":
    key = jax.random.PRNGKey(0)
    k_param, k_x1, k_x2 = jax.random.split(key, 3)
    params = init_params(k_param)
    prep = prepare_params(params)            # one-time weight folding / layout prep

    B, L = 2, 1024
    x1 = jax.random.normal(k_x1, (B, L, 2), jnp.float32)   # (B, seq, 2) as in forward
    x2 = jax.random.normal(k_x2, (B, 16), jnp.float32)

    out = jax.jit(forward)(prep, x1, x2)
    out = jax.block_until_ready(out)
    assert out.shape == (B, 4) and out.dtype == jnp.float32
    print("KERNEL_OK")
</pallas_src>

<mosaic_0001>
module attributes {stable_mosaic.version = 11 : i64} {
  func.func @_fused_kernel(%arg0: memref<2x64x64xf32, #tpu.memory_space<vmem>>, %arg1: memref<2x16xf32, #tpu.memory_space<vmem>>, %arg2: memref<64x256xf32, #tpu.memory_space<vmem>>, %arg3: memref<1x256xf32, #tpu.memory_space<vmem>>, %arg4: memref<1x256xf32, #tpu.memory_space<vmem>>, %arg5: memref<256x128xf32, #tpu.memory_space<vmem>>, %arg6: memref<1x128xf32, #tpu.memory_space<vmem>>, %arg7: memref<1x128xf32, #tpu.memory_space<vmem>>, %arg8: memref<448x128xf32, #tpu.memory_space<vmem>>, %arg9: memref<1x128xf32, #tpu.memory_space<vmem>>, %arg10: memref<1x128xf32, #tpu.memory_space<vmem>>, %arg11: memref<256x768xf32, #tpu.memory_space<vmem>>, %arg12: memref<256x256xf32, #tpu.memory_space<vmem>>, %arg13: memref<1x256xf32, #tpu.memory_space<vmem>>, %arg14: memref<256x4xf32, #tpu.memory_space<vmem>>, %arg15: memref<1x4xf32, #tpu.memory_space<vmem>>, %arg16: memref<16x4xf32, #tpu.memory_space<vmem>>, %arg17: memref<1x4xf32, #tpu.memory_space<vmem>>, %arg18: memref<8x8xf32, #tpu.memory_space<vmem>>, %arg19: memref<2x4xf32, #tpu.memory_space<vmem>>, %arg20: memref<2x64x128xf32, #tpu.memory_space<vmem>>, %arg21: memref<2x80x64xf32, #tpu.memory_space<vmem>>, %arg22: memref<2x16x64xf32, #tpu.memory_space<vmem>>) attributes {dimension_semantics = [], scalar_prefetch = 0 : i64, scratch_operands = 3 : i64, tpu.core_type = #tpu.core_type<tc>} {
    %c0 = arith.constant 0 : index
    %c0_0 = arith.constant 0 : index
    %c0_1 = arith.constant 0 : index
    %0 = vector.load %arg0[%c0, %c0_0, %c0_1] : memref<2x64x64xf32, #tpu.memory_space<vmem>>, vector<2x64x64xf32>
    %1 = vector.shape_cast %0 : vector<2x64x64xf32> to vector<128x64xf32>
    %c0_2 = arith.constant 0 : index
    %c0_3 = arith.constant 0 : index
    %2 = vector.load %arg2[%c0_2, %c0_3] : memref<64x256xf32, #tpu.memory_space<vmem>>, vector<64x256xf32>
    %cst = arith.constant dense<0.000000e+00> : vector<128x256xf32>
    %3 = tpu.matmul %1, %2, %cst {dimension_numbers = #tpu.dot_dimension_numbers<[1], [0], [0], [1], [0, 0, 1, 1], [], []>} : vector<128x64xf32>, vector<64x256xf32>, vector<128x256xf32> -> vector<128x256xf32>
    %c0_4 = arith.constant 0 : index
    %c0_5 = arith.constant 0 : index
    %4 = vector.load %arg3[%c0_4, %c0_5] : memref<1x256xf32, #tpu.memory_space<vmem>>, vector<1x256xf32>
    %5 = vector.broadcast %4 : vector<1x256xf32> to vector<128x256xf32>
    %6 = arith.mulf %3, %5 : vector<128x256xf32>
    %c0_6 = arith.constant 0 : index
    %c0_7 = arith.constant 0 : index
    %7 = vector.load %arg4[%c0_6, %c0_7] : memref<1x256xf32, #tpu.memory_space<vmem>>, vector<1x256xf32>
    %8 = vector.broadcast %7 : vector<1x256xf32> to vector<128x256xf32>
    %9 = arith.addf %6, %8 : vector<128x256xf32>
    %cst_8 = arith.constant 0.000000e+00 : f32
    %10 = vector.broadcast %cst_8 : f32 to vector<128x256xf32>
    %11 = arith.maximumf %9, %10 : vector<128x256xf32>
    %12 = vector.extract_strided_slice %11 {offsets = [0, 0], sizes = [128, 128], strides = [1, 1]} : vector<128x256xf32> to vector<128x128xf32>
    %13 = vector.extract_strided_slice %11 {offsets = [0, 128], sizes = [128, 128], strides = [1, 1]} : vector<128x256xf32> to vector<128x128xf32>
    %14 = arith.maximumf %12, %13 : vector<128x128xf32>
    %15 = vector.shape_cast %14 : vector<128x128xf32> to vector<2x64x128xf32>
    %c0_9 = arith.constant 0 : index
    %c0_10 = arith.constant 0 : index
    %c0_11 = arith.constant 0 : index
    %16 = vector.load %arg20[%c0_9, %c0_10, %c0_11] : memref<2x64x128xf32, #tpu.memory_space<vmem>>, vector<2x64x128xf32>
    tpu.vector_store %arg20[%c0_9, %c0_10, %c0_11], %15 {strides = array<i32>} : memref<2x64x128xf32, #tpu.memory_space<vmem>>, vector<2x64x128xf32>,
    %c0_12 = arith.constant 0 : index
    %c0_13 = arith.constant 0 : index
    %c0_14 = arith.constant 0 : index
    %17 = vector.load %arg20[%c0_12, %c0_13, %c0_14] : memref<2x64x128xf32, #tpu.memory_space<vmem>>, vector<2x63x128xf32>
    %c0_15 = arith.constant 0 : index
    %c1 = arith.constant 1 : index
    %c0_16 = arith.constant 0 : index
    %18 = vector.load %arg20[%c0_15, %c1, %c0_16] : memref<2x64x128xf32, #tpu.memory_space<vmem>>, vector<2x63x128xf32>
    %19 = tpu.concatenate %17, %18 in 2 : vector<2x63x128xf32>, vector<2x63x128xf32> -> vector<2x63x256xf32>
    %20 = vector.shape_cast %19 : vector<2x63x256xf32> to vector<126x256xf32>
    %c0_17 = arith.constant 0 : index
    %c0_18 = arith.constant 0 : index
    %21 = vector.load %arg5[%c0_17, %c0_18] : memref<256x128xf32, #tpu.memory_space<vmem>>, vector<256x128xf32>
    %cst_19 = arith.constant dense<0.000000e+00> : vector<126x128xf32>
    %22 = tpu.matmul %20, %21, %cst_19 {dimension_numbers = #tpu.dot_dimension_numbers<[1], [0], [0], [1], [0, 0, 1, 1], [], []>} : vector<126x256xf32>, vector<256x128xf32>, vector<126x128xf32> -> vector<126x128xf32>
    %c0_20 = arith.constant 0 : index
    %c0_21 = arith.constant 0 : index
    %23 = vector.load %arg6[%c0_20, %c0_21] : memref<1x128xf32, #tpu.memory_space<vmem>>, vector<1x128xf32>
    %24 = vector.broadcast %23 : vector<1x128xf32> to vector<126x128xf32>
    %25 = arith.mulf %22, %24 : vector<126x128xf32>
    %c0_22 = arith.constant 0 : index
    %c0_23 = arith.constant 0 : index
    %26 = vector.load %arg7[%c0_22, %c0_23] : memref<1x128xf32, #tpu.memory_space<vmem>>, vector<1x128xf32>
    %27 = vector.broadcast %26 : vector<1x128xf32> to vector<126x128xf32>
    %28 = arith.addf %25, %27 : vector<126x128xf32>
    %cst_24 = arith.constant 0.000000e+00 : f32
    %29 = vector.broadcast %cst_24 : f32 to vector<126x128xf32>
    %30 = arith.maximumf %28, %29 : vector<126x128xf32>
    %31 = vector.extract_strided_slice %30 {offsets = [0, 0], sizes = [126, 64], strides = [1, 1]} : vector<126x128xf32> to vector<126x64xf32>
    %32 = vector.extract_strided_slice %30 {offsets = [0, 64], sizes = [126, 64], strides = [1, 1]} : vector<126x128xf32> to vector<126x64xf32>
    %33 = arith.addf %31, %32 : vector<126x64xf32>
    %cst_25 = arith.constant 5.000000e-01 : f32
    %34 = vector.broadcast %cst_25 : f32 to vector<126x64xf32>
    %35 = arith.mulf %34, %33 : vector<126x64xf32>
    %cst_26 = arith.constant 0.000000e+00 : f32
    %36 = vector.broadcast %cst_26 : f32 to vector<2x2x64xf32>
    %c0_27 = arith.constant 0 : index
    %c6 = arith.constant 6 : index
    %c0_28 = arith.constant 0 : index
    %37 = vector.load %arg21[%c0_27, %c6, %c0_28] : memref<2x80x64xf32, #tpu.memory_space<vmem>>, vector<2x2x64xf32>
    tpu.vector_store %arg21[%c0_27, %c6, %c0_28], %36 {strides = array<i32>} : memref<2x80x64xf32, #tpu.memory_space<vmem>>, vector<2x2x64xf32>,
    %cst_29 = arith.constant 0.000000e+00 : f32
    %38 = vector.broadcast %cst_29 : f32 to vector<2x2x64xf32>
    %c0_30 = arith.constant 0 : index
    %c71 = arith.constant 71 : index
    %c0_31 = arith.constant 0 : index
    %39 = vector.load %arg21[%c0_30, %c71, %c0_31] : memref<2x80x64xf32, #tpu.memory_space<vmem>>, vector<2x2x64xf32>
    tpu.vector_store %arg21[%c0_30, %c71, %c0_31], %38 {strides = array<i32>} : memref<2x80x64xf32, #tpu.memory_space<vmem>>, vector<2x2x64xf32>,
    %40 = vector.shape_cast %35 : vector<126x64xf32> to vector<2x63x64xf32>
    %c0_32 = arith.constant 0 : index
    %c8 = arith.constant 8 : index
    %c0_33 = arith.constant 0 : index
    %41 = vector.load %arg21[%c0_32, %c8, %c0_33] : memref<2x80x64xf32, #tpu.memory_space<vmem>>, vector<2x63x64xf32>
    tpu.vector_store %arg21[%c0_32, %c8, %c0_33], %40 {strides = array<i32>} : memref<2x80x64xf32, #tpu.memory_space<vmem>>, vector<2x63x64xf32>,
    %c0_34 = arith.constant 0 : index
    %c6_35 = arith.constant 6 : index
    %c0_36 = arith.constant 0 : index
    %42 = tpu.strided_load %arg21[%c0_34, %c6_35, %c0_36] {strides = array<i32: 1, 4, 1>} : memref<2x80x64xf32, #tpu.memory_space<vmem>>, vector<2x16x64xf32>
    %c0_37 = arith.constant 0 : index
    %c7 = arith.constant 7 : index
    %c0_38 = arith.constant 0 : index
    %43 = tpu.strided_load %arg21[%c0_37, %c7, %c0_38] {strides = array<i32: 1, 4, 1>} : memref<2x80x64xf32, #tpu.memory_space<vmem>>, vector<2x16x64xf32>
    %c0_39 = arith.constant 0 : index
    %c8_40 = arith.constant 8 : index
    %c0_41 = arith.constant 0 : index
    %44 = tpu.strided_load %arg21[%c0_39, %c8_40, %c0_41] {strides = array<i32: 1, 4, 1>} : memref<2x80x64xf32, #tpu.memory_space<vmem>>, vector<2x16x64xf32>
    %c0_42 = arith.constant 0 : index
    %c9 = arith.constant 9 : index
    %c0_43 = arith.constant 0 : index
    %45 = tpu.strided_load %arg21[%c0_42, %c9, %c0_43] {strides = array<i32: 1, 4, 1>} : memref<2x80x64xf32, #tpu.memory_space<vmem>>, vector<2x16x64xf32>
    %c0_44 = arith.constant 0 : index
    %c10 = arith.constant 10 : index
    %c0_45 = arith.constant 0 : index
    %46 = tpu.strided_load %arg21[%c0_44, %c10, %c0_45] {strides = array<i32: 1, 4, 1>} : memref<2x80x64xf32, #tpu.memory_space<vmem>>, vector<2x16x64xf32>
    %c0_46 = arith.constant 0 : index
    %c11 = arith.constant 11 : index
    %c0_47 = arith.constant 0 : index
    %47 = tpu.strided_load %arg21[%c0_46, %c11, %c0_47] {strides = array<i32: 1, 4, 1>} : memref<2x80x64xf32, #tpu.memory_space<vmem>>, vector<2x16x64xf32>
    %c0_48 = arith.constant 0 : index
    %c12 = arith.constant 12 : index
    %c0_49 = arith.constant 0 : index
    %48 = tpu.strided_load %arg21[%c0_48, %c12, %c0_49] {strides = array<i32: 1, 4, 1>} : memref<2x80x64xf32, #tpu.memory_space<vmem>>, vector<2x16x64xf32>
    %49 = tpu.concatenate %42, %43, %44, %45, %46, %47, %48 in 2 : vector<2x16x64xf32>, vector<2x16x64xf32>, vector<2x16x64xf32>, vector<2x16x64xf32>, vector<2x16x64xf32>, vector<2x16x64xf32>, vector<2x16x64xf32> -> vector<2x16x448xf32>
    %50 = vector.shape_cast %49 : vector<2x16x448xf32> to vector<32x448xf32>
    %c0_50 = arith.constant 0 : index
    %c0_51 = arith.constant 0 : index
    %51 = vector.load %arg8[%c0_50, %c0_51] : memref<448x128xf32, #tpu.memory_space<vmem>>, vector<448x128xf32>
    %cst_52 = arith.constant dense<0.000000e+00> : vector<32x128xf32>
    %52 = tpu.matmul %50, %51, %cst_52 {dimension_numbers = #tpu.dot_dimension_numbers<[1], [0], [0], [1], [0, 0, 1, 1], [], []>} : vector<32x448xf32>, vector<448x128xf32>, vector<32x128xf32> -> vector<32x128xf32>
    %c0_53 = arith.constant 0 : index
    %c0_54 = arith.constant 0 : index
    %53 = vector.load %arg9[%c0_53, %c0_54] : memref<1x128xf32, #tpu.memory_space<vmem>>, vector<1x128xf32>
    %54 = vector.broadcast %53 : vector<1x128xf32> to vector<32x128xf32>
    %55 = arith.mulf %52, %54 : vector<32x128xf32>
    %c0_55 = arith.constant 0 : index
    %c0_56 = arith.constant 0 : index
    %56 = vector.load %arg10[%c0_55, %c0_56] : memref<1x128xf32, #tpu.memory_space<vmem>>, vector<1x128xf32>
    %57 = vector.broadcast %56 : vector<1x128xf32> to vector<32x128xf32>
    %58 = arith.addf %55, %57 : vector<32x128xf32>
    %cst_57 = arith.constant 0.000000e+00 : f32
    %59 = vector.broadcast %cst_57 : f32 to vector<32x128xf32>
    %60 = arith.maximumf %58, %59 : vector<32x128xf32>
    %61 = vector.extract_strided_slice %60 {offsets = [0, 0], sizes = [32, 64], strides = [1, 1]} : vector<32x128xf32> to vector<32x64xf32>
    %62 = vector.extract_strided_slice %60 {offsets = [0, 64], sizes = [32, 64], strides = [1, 1]} : vector<32x128xf32> to vector<32x64xf32>
    %63 = arith.addf %61, %62 : vector<32x64xf32>
    %cst_58 = arith.constant 5.000000e-01 : f32
    %64 = vector.broadcast %cst_58 : f32 to vector<32x64xf32>
    %65 = arith.mulf %64, %63 : vector<32x64xf32>
    %66 = vector.shape_cast %65 : vector<32x64xf32> to vector<2x16x64xf32>
    %c0_59 = arith.constant 0 : index
    %c0_60 = arith.constant 0 : index
    %c0_61 = arith.constant 0 : index
    %67 = vector.load %arg22[%c0_59, %c0_60, %c0_61] : memref<2x16x64xf32, #tpu.memory_space<vmem>>, vector<2x16x64xf32>
    tpu.vector_store %arg22[%c0_59, %c0_60, %c0_61], %66 {strides = array<i32>} : memref<2x16x64xf32, #tpu.memory_space<vmem>>, vector<2x16x64xf32>,
    %c0_62 = arith.constant 0 : index
    %c0_63 = arith.constant 0 : index
    %c0_64 = arith.constant 0 : index
    %68 = tpu.strided_load %arg22[%c0_62, %c0_63, %c0_64] {strides = array<i32: 1, 4, 1>} : memref<2x16x64xf32, #tpu.memory_space<vmem>>, vector<2x4x64xf32>
    %c0_65 = arith.constant 0 : index
    %c1_66 = arith.constant 1 : index
    %c0_67 = arith.constant 0 : index
    %69 = tpu.strided_load %arg22[%c0_65, %c1_66, %c0_67] {strides = array<i32: 1, 4, 1>} : memref<2x16x64xf32, #tpu.memory_space<vmem>>, vector<2x4x64xf32>
    %c0_68 = arith.constant 0 : index
    %c2 = arith.constant 2 : index
    %c0_69 = arith.constant 0 : index
    %70 = tpu.strided_load %arg22[%c0_68, %c2, %c0_69] {strides = array<i32: 1, 4, 1>} : memref<2x16x64xf32, #tpu.memory_space<vmem>>, vector<2x4x64xf32>
    %c0_70 = arith.constant 0 : index
    %c3 = arith.constant 3 : index
    %c0_71 = arith.constant 0 : index
    %71 = tpu.strided_load %arg22[%c0_70, %c3, %c0_71] {strides = array<i32: 1, 4, 1>} : memref<2x16x64xf32, #tpu.memory_space<vmem>>, vector<2x4x64xf32>
    %72 = tpu.concatenate %68, %69, %70, %71 in 2 : vector<2x4x64xf32>, vector<2x4x64xf32>, vector<2x4x64xf32>, vector<2x4x64xf32> -> vector<2x4x256xf32>
    %73 = vector.shape_cast %72 : vector<2x4x256xf32> to vector<8x256xf32>
    %c0_72 = arith.constant 0 : index
    %c0_73 = arith.constant 0 : index
    %74 = vector.load %arg11[%c0_72, %c0_73] : memref<256x768xf32, #tpu.memory_space<vmem>>, vector<256x768xf32>
    %cst_74 = arith.constant dense<0.000000e+00> : vector<8x768xf32>
    %75 = tpu.matmul %73, %74, %cst_74 {dimension_numbers = #tpu.dot_dimension_numbers<[1], [0], [0], [1], [0, 0, 1, 1], [], []>} : vector<8x256xf32>, vector<256x768xf32>, vector<8x768xf32> -> vector<8x768xf32>
    %76 = vector.extract_strided_slice %75 {offsets = [0, 0], sizes = [8, 32], strides = [1, 1]} : vector<8x768xf32> to vector<8x32xf32>
    %77 = vector.extract_strided_slice %75 {offsets = [0, 32], sizes = [8, 32], strides = [1, 1]} : vector<8x768xf32> to vector<8x32xf32>
    %78 = vector.extract_strided_slice %75 {offsets = [0, 64], sizes = [8, 32], strides = [1, 1]} : vector<8x768xf32> to vector<8x32xf32>
    %79 = vector.extract_strided_slice %75 {offsets = [0, 96], sizes = [8, 32], strides = [1, 1]} : vector<8x768xf32> to vector<8x32xf32>
    %80 = vector.extract_strided_slice %75 {offsets = [0, 128], sizes = [8, 32], strides = [1, 1]} : vector<8x768xf32> to vector<8x32xf32>
    %81 = vector.extract_strided_slice %75 {offsets = [0, 160], sizes = [8, 32], strides = [1, 1]} : vector<8x768xf32> to vector<8x32xf32>
    %82 = vector.extract_strided_slice %75 {offsets = [0, 192], sizes = [8, 32], strides = [1, 1]} : vector<8x768xf32> to vector<8x32xf32>
    %83 = vector.extract_strided_slice %75 {offsets = [0, 224], sizes = [8, 32], strides = [1, 1]} : vector<8x768xf32> to vector<8x32xf32>
    %84 = vector.shape_cast %76 : vector<8x32xf32> to vector<1x8x32xf32>
    %85 = vector.shape_cast %77 : vector<8x32xf32> to vector<1x8x32xf32>
    %86 = vector.shape_cast %78 : vector<8x32xf32> to vector<1x8x32xf32>
    %87 = vector.shape_cast %79 : vector<8x32xf32> to vector<1x8x32xf32>
    %88 = vector.shape_cast %80 : vector<8x32xf32> to vector<1x8x32xf32>
    %89 = vector.shape_cast %81 : vector<8x32xf32> to vector<1x8x32xf32>
    %90 = vector.shape_cast %82 : vector<8x32xf32> to vector<1x8x32xf32>
    %91 = vector.shape_cast %83 : vector<8x32xf32> to vector<1x8x32xf32>
    %92 = tpu.concatenate %84, %85, %86, %87, %88, %89, %90, %91 in 0 : vector<1x8x32xf32>, vector<1x8x32xf32>, vector<1x8x32xf32>, vector<1x8x32xf32>, vector<1x8x32xf32>, vector<1x8x32xf32>, vector<1x8x32xf32>, vector<1x8x32xf32> -> vector<8x8x32xf32>
    %93 = vector.extract_strided_slice %75 {offsets = [0, 256], sizes = [8, 32], strides = [1, 1]} : vector<8x768xf32> to vector<8x32xf32>
    %94 = vector.extract_strided_slice %75 {offsets = [0, 288], sizes = [8, 32], strides = [1, 1]} : vector<8x768xf32> to vector<8x32xf32>
    %95 = vector.extract_strided_slice %75 {offsets = [0, 320], sizes = [8, 32], strides = [1, 1]} : vector<8x768xf32> to vector<8x32xf32>
    %96 = vector.extract_strided_slice %75 {offsets = [0, 352], sizes = [8, 32], strides = [1, 1]} : vector<8x768xf32> to vector<8x32xf32>
    %97 = vector.extract_strided_slice %75 {offsets = [0, 384], sizes = [8, 32], strides = [1, 1]} : vector<8x768xf32> to vector<8x32xf32>
    %98 = vector.extract_strided_slice %75 {offsets = [0, 416], sizes = [8, 32], strides = [1, 1]} : vector<8x768xf32> to vector<8x32xf32>
    %99 = vector.extract_strided_slice %75 {offsets = [0, 448], sizes = [8, 32], strides = [1, 1]} : vector<8x768xf32> to vector<8x32xf32>
    %100 = vector.extract_strided_slice %75 {offsets = [0, 480], sizes = [8, 32], strides = [1, 1]} : vector<8x768xf32> to vector<8x32xf32>
    %101 = vector.shape_cast %93 : vector<8x32xf32> to vector<1x8x32xf32>
    %102 = vector.shape_cast %94 : vector<8x32xf32> to vector<1x8x32xf32>
    %103 = vector.shape_cast %95 : vector<8x32xf32> to vector<1x8x32xf32>
    %104 = vector.shape_cast %96 : vector<8x32xf32> to vector<1x8x32xf32>
    %105 = vector.shape_cast %97 : vector<8x32xf32> to vector<1x8x32xf32>
    %106 = vector.shape_cast %98 : vector<8x32xf32> to vector<1x8x32xf32>
    %107 = vector.shape_cast %99 : vector<8x32xf32> to vector<1x8x32xf32>
    %108 = vector.shape_cast %100 : vector<8x32xf32> to vector<1x8x32xf32>
    %109 = tpu.concatenate %101, %102, %103, %104, %105, %106, %107, %108 in 0 : vector<1x8x32xf32>, vector<1x8x32xf32>, vector<1x8x32xf32>, vector<1x8x32xf32>, vector<1x8x32xf32>, vector<1x8x32xf32>, vector<1x8x32xf32>, vector<1x8x32xf32> -> vector<8x8x32xf32>
    %110 = vector.extract_strided_slice %75 {offsets = [0, 512], sizes = [8, 32], strides = [1, 1]} : vector<8x768xf32> to vector<8x32xf32>
    %111 = vector.extract_strided_slice %75 {offsets = [0, 544], sizes = [8, 32], strides = [1, 1]} : vector<8x768xf32> to vector<8x32xf32>
    %112 = vector.extract_strided_slice %75 {offsets = [0, 576], sizes = [8, 32], strides = [1, 1]} : vector<8x768xf32> to vector<8x32xf32>
    %113 = vector.extract_strided_slice %75 {offsets = [0, 608], sizes = [8, 32], strides = [1, 1]} : vector<8x768xf32> to vector<8x32xf32>
    %114 = vector.extract_strided_slice %75 {offsets = [0, 640], sizes = [8, 32], strides = [1, 1]} : vector<8x768xf32> to vector<8x32xf32>
    %115 = vector.extract_strided_slice %75 {offsets = [0, 672], sizes = [8, 32], strides = [1, 1]} : vector<8x768xf32> to vector<8x32xf32>
    %116 = vector.extract_strided_slice %75 {offsets = [0, 704], sizes = [8, 32], strides = [1, 1]} : vector<8x768xf32> to vector<8x32xf32>
    %117 = vector.extract_strided_slice %75 {offsets = [0, 736], sizes = [8, 32], strides = [1, 1]} : vector<8x768xf32> to vector<8x32xf32>
    %118 = vector.shape_cast %110 : vector<8x32xf32> to vector<1x8x32xf32>
    %119 = vector.shape_cast %111 : vector<8x32xf32> to vector<1x8x32xf32>
    %120 = vector.shape_cast %112 : vector<8x32xf32> to vector<1x8x32xf32>
    %121 = vector.shape_cast %113 : vector<8x32xf32> to vector<1x8x32xf32>
    %122 = vector.shape_cast %114 : vector<8x32xf32> to vector<1x8x32xf32>
    %123 = vector.shape_cast %115 : vector<8x32xf32> to vector<1x8x32xf32>
    %124 = vector.shape_cast %116 : vector<8x32xf32> to vector<1x8x32xf32>
    %125 = vector.shape_cast %117 : vector<8x32xf32> to vector<1x8x32xf32>
    %126 = tpu.concatenate %118, %119, %120, %121, %122, %123, %124, %125 in 0 : vector<1x8x32xf32>, vector<1x8x32xf32>, vector<1x8x32xf32>, vector<1x8x32xf32>, vector<1x8x32xf32>, vector<1x8x32xf32>, vector<1x8x32xf32>, vector<1x8x32xf32> -> vector<8x8x32xf32>
    "tpu.trace_start"() <{level = 10 : i32, message = "hnd,hmd->hnm"}> : () -> ()
    %cst_75 = arith.constant dense<0.000000e+00> : vector<8x8x8xf32>
    %127 = tpu.matmul %92, %109, %cst_75 {dimension_numbers = #tpu.dot_dimension_numbers<[2], [2], [1], [1], [0, 0, 0, 1, 1, 1], [0], [0]>} : vector<8x8x32xf32>, vector<8x8x32xf32>, vector<8x8x8xf32> -> vector<8x8x8xf32>
    "tpu.trace_stop"() : () -> ()
    %cst_76 = arith.constant 0.176776692 : f32
    %128 = vector.broadcast %cst_76 : f32 to vector<8x8x8xf32>
    %129 = arith.mulf %127, %128 : vector<8x8x8xf32>
    %c0_77 = arith.constant 0 : index
    %c0_78 = arith.constant 0 : index
    %130 = vector.load %arg18[%c0_77, %c0_78] : memref<8x8xf32, #tpu.memory_space<vmem>>, vector<8x8xf32>
    %131 = vector.shape_cast %130 : vector<8x8xf32> to vector<1x8x8xf32>
    %132 = vector.broadcast %131 : vector<1x8x8xf32> to vector<8x8x8xf32>
    %133 = arith.addf %129, %132 : vector<8x8x8xf32>
    %cst_79 = arith.constant dense<0xFF800000> : vector<8x8xf32>
    %134 = vector.multi_reduction <maximumf>, %133, %cst_79 [2] : vector<8x8x8xf32> to vector<8x8xf32>
    %135 = vector.shape_cast %134 : vector<8x8xf32> to vector<8x8x1xf32>
    %136 = vector.broadcast %135 : vector<8x8x1xf32> to vector<8x8x8xf32>
    %137 = arith.subf %133, %136 : vector<8x8x8xf32>
    %138 = math.exp %137 : vector<8x8x8xf32>
    %cst_80 = arith.constant dense<0.000000e+00> : vector<8x8xf32>
    %139 = vector.multi_reduction <add>, %138, %cst_80 [2] : vector<8x8x8xf32> to vector<8x8xf32>
    %140 = vector.shape_cast %139 : vector<8x8xf32> to vector<8x8x1xf32>
    %141 = tpu.reciprocal %140 {approx = true} : vector<8x8x1xf32> -> vector<8x8x1xf32>
    %142 = vector.broadcast %141 : vector<8x8x1xf32> to vector<8x8x8xf32>
    %143 = arith.mulf %138, %142 : vector<8x8x8xf32>
    "tpu.trace_start"() <{level = 10 : i32, message = "hnm,hmd->hnd"}> : () -> ()
    %cst_81 = arith.constant dense<0.000000e+00> : vector<8x8x32xf32>
    %144 = tpu.matmul %143, %126, %cst_81 {dimension_numbers = #tpu.dot_dimension_numbers<[2], [1], [1], [2], [0, 0, 0, 1, 1, 2], [0], [0]>} : vector<8x8x8xf32>, vector<8x8x32xf32>, vector<8x8x32xf32> -> vector<8x8x32xf32>
    "tpu.trace_stop"() : () -> ()
    %145 = vector.extract_strided_slice %144 {offsets = [0, 0, 0], sizes = [1, 8, 32], strides = [1, 1, 1]} : vector<8x8x32xf32> to vector<1x8x32xf32>
    %146 = vector.shape_cast %145 : vector<1x8x32xf32> to vector<8x32xf32>
    %147 = vector.extract_strided_slice %144 {offsets = [1, 0, 0], sizes = [1, 8, 32], strides = [1, 1, 1]} : vector<8x8x32xf32> to vector<1x8x32xf32>
    %148 = vector.shape_cast %147 : vector<1x8x32xf32> to vector<8x32xf32>
    %149 = vector.extract_strided_slice %144 {offsets = [2, 0, 0], sizes = [1, 8, 32], strides = [1, 1, 1]} : vector<8x8x32xf32> to vector<1x8x32xf32>
    %150 = vector.shape_cast %149 : vector<1x8x32xf32> to vector<8x32xf32>
    %151 = vector.extract_strided_slice %144 {offsets = [3, 0, 0], sizes = [1, 8, 32], strides = [1, 1, 1]} : vector<8x8x32xf32> to vector<1x8x32xf32>
    %152 = vector.shape_cast %151 : vector<1x8x32xf32> to vector<8x32xf32>
    %153 = vector.extract_strided_slice %144 {offsets = [4, 0, 0], sizes = [1, 8, 32], strides = [1, 1, 1]} : vector<8x8x32xf32> to vector<1x8x32xf32>
    %154 = vector.shape_cast %153 : vector<1x8x32xf32> to vector<8x32xf32>
    %155 = vector.extract_strided_slice %144 {offsets = [5, 0, 0], sizes = [1, 8, 32], strides = [1, 1, 1]} : vector<8x8x32xf32> to vector<1x8x32xf32>
    %156 = vector.shape_cast %155 : vector<1x8x32xf32> to vector<8x32xf32>
    %157 = vector.extract_strided_slice %144 {offsets = [6, 0, 0], sizes = [1, 8, 32], strides = [1, 1, 1]} : vector<8x8x32xf32> to vector<1x8x32xf32>
    %158 = vector.shape_cast %157 : vector<1x8x32xf32> to vector<8x32xf32>
    %159 = vector.extract_strided_slice %144 {offsets = [7, 0, 0], sizes = [1, 8, 32], strides = [1, 1, 1]} : vector<8x8x32xf32> to vector<1x8x32xf32>
    %160 = vector.shape_cast %159 : vector<1x8x32xf32> to vector<8x32xf32>
    %161 = tpu.concatenate %146, %148, %150, %152, %154, %156, %158, %160 in 1 : vector<8x32xf32>, vector<8x32xf32>, vector<8x32xf32>, vector<8x32xf32>, vector<8x32xf32>, vector<8x32xf32>, vector<8x32xf32>, vector<8x32xf32> -> vector<8x256xf32>
    %162 = arith.addf %73, %161 : vector<8x256xf32>
    %c0_82 = arith.constant 0 : index
    %c0_83 = arith.constant 0 : index
    %163 = vector.load %arg12[%c0_82, %c0_83] : memref<256x256xf32, #tpu.memory_space<vmem>>, vector<256x256xf32>
    %cst_84 = arith.constant dense<0.000000e+00> : vector<8x256xf32>
    %164 = tpu.matmul %162, %163, %cst_84 {dimension_numbers = #tpu.dot_dimension_numbers<[1], [0], [0], [1], [0, 0, 1, 1], [], []>} : vector<8x256xf32>, vector<256x256xf32>, vector<8x256xf32> -> vector<8x256xf32>
    %c0_85 = arith.constant 0 : index
    %c0_86 = arith.constant 0 : index
    %165 = vector.load %arg13[%c0_85, %c0_86] : memref<1x256xf32, #tpu.memory_space<vmem>>, vector<1x256xf32>
    %166 = vector.broadcast %165 : vector<1x256xf32> to vector<8x256xf32>
    %167 = arith.addf %164, %166 : vector<8x256xf32>
    %168 = vector.shape_cast %167 : vector<8x256xf32> to vector<2x4x256xf32>
    %cst_87 = arith.constant dense<0.000000e+00> : vector<2x256xf32>
    %169 = vector.multi_reduction <add>, %168, %cst_87 [1] : vector<2x4x256xf32> to vector<2x256xf32>
    %cst_88 = arith.constant 4.000000e+00 : f32
    %170 = vector.broadcast %cst_88 : f32 to vector<2x256xf32>
    %171 = arith.divf %169, %170 : vector<2x256xf32>
    %c0_89 = arith.constant 0 : index
    %c0_90 = arith.constant 0 : index
    %172 = vector.load %arg14[%c0_89, %c0_90] : memref<256x4xf32, #tpu.memory_space<vmem>>, vector<256x4xf32>
    %cst_91 = arith.constant dense<0.000000e+00> : vector<2x4xf32>
    %173 = tpu.matmul %171, %172, %cst_91 {dimension_numbers = #tpu.dot_dimension_numbers<[1], [0], [0], [1], [0, 0, 1, 1], [], []>} : vector<2x256xf32>, vector<256x4xf32>, vector<2x4xf32> -> vector<2x4xf32>
    %c0_92 = arith.constant 0 : index
    %c0_93 = arith.constant 0 : index
    %174 = vector.load %arg15[%c0_92, %c0_93] : memref<1x4xf32, #tpu.memory_space<vmem>>, vector<1x4xf32>
    %175 = vector.broadcast %174 : vector<1x4xf32> to vector<2x4xf32>
    %176 = arith.addf %173, %175 : vector<2x4xf32>
    %c0_94 = arith.constant 0 : index
    %c0_95 = arith.constant 0 : index
    %177 = vector.load %arg1[%c0_94, %c0_95] : memref<2x16xf32, #tpu.memory_space<vmem>>, vector<2x16xf32>
    %cst_96 = arith.constant dense<0.000000e+00> : vector<2xf32>
    %178 = vector.multi_reduction <add>, %177, %cst_96 [1] : vector<2x16xf32> to vector<2xf32>
    %179 = vector.shape_cast %178 : vector<2xf32> to vector<2x1xf32>
    %cst_97 = arith.constant 1.600000e+01 : f32
    %180 = vector.broadcast %cst_97 : f32 to vector<2x1xf32>
    %181 = arith.divf %179, %180 : vector<2x1xf32>
    %182 = vector.broadcast %181 : vector<2x1xf32> to vector<2x16xf32>
    %183 = arith.subf %177, %182 : vector<2x16xf32>
    %184 = arith.mulf %183, %183 : vector<2x16xf32>
    %cst_98 = arith.constant dense<0.000000e+00> : vector<2xf32>
    %185 = vector.multi_reduction <add>, %184, %cst_98 [1] : vector<2x16xf32> to vector<2xf32>
    %186 = vector.shape_cast %185 : vector<2xf32> to vector<2x1xf32>
    %cst_99 = arith.constant 1.500000e+01 : f32
    %187 = vector.broadcast %cst_99 : f32 to vector<2x1xf32>
    %188 = arith.divf %186, %187 : vector<2x1xf32>
    %189 = vector.broadcast %181 : vector<2x1xf32> to vector<2x16xf32>
    %190 = arith.subf %177, %189 : vector<2x16xf32>
    %191 = math.sqrt %188 : vector<2x1xf32>
    %cst_100 = arith.constant 9.99999974E-6 : f32
    %192 = vector.broadcast %cst_100 : f32 to vector<2x1xf32>
    %193 = arith.addf %191, %192 : vector<2x1xf32>
    %194 = vector.broadcast %193 : vector<2x1xf32> to vector<2x16xf32>
    %195 = arith.divf %190, %194 : vector<2x16xf32>
    %c0_101 = arith.constant 0 : index
    %c0_102 = arith.constant 0 : index
    %196 = vector.load %arg16[%c0_101, %c0_102] : memref<16x4xf32, #tpu.memory_space<vmem>>, vector<16x4xf32>
    %cst_103 = arith.constant dense<0.000000e+00> : vector<2x4xf32>
    %197 = tpu.matmul %195, %196, %cst_103 {dimension_numbers = #tpu.dot_dimension_numbers<[1], [0], [0], [1], [0, 0, 1, 1], [], []>} : vector<2x16xf32>, vector<16x4xf32>, vector<2x4xf32> -> vector<2x4xf32>
    %198 = arith.addf %176, %197 : vector<2x4xf32>
    %c0_104 = arith.constant 0 : index
    %c0_105 = arith.constant 0 : index
    %199 = vector.load %arg17[%c0_104, %c0_105] : memref<1x4xf32, #tpu.memory_space<vmem>>, vector<1x4xf32>
    %200 = vector.broadcast %199 : vector<1x4xf32> to vector<2x4xf32>
    %201 = arith.addf %198, %200 : vector<2x4xf32>
    %c0_106 = arith.constant 0 : index
    %c0_107 = arith.constant 0 : index
    %202 = vector.load %arg19[%c0_106, %c0_107] : memref<2x4xf32, #tpu.memory_space<vmem>>, vector<2x4xf32>
    tpu.vector_store %arg19[%c0_106, %c0_107], %201 {strides = array<i32>} : memref<2x4xf32, #tpu.memory_space<vmem>>, vector<2x4xf32>,
    return
  }
}

</mosaic_0001>

<llo_original>
// kernel: forward.1
$region0: #{forward.1}
  #allocation0 [shape = 'u32[]', space=smem, size = 0x4, offset = 0x4, fixed_abs, tag = 'smem constant byte address 0x4 - core index']
  #allocation1 [shape = 'u32[144,128]{1,0:T(1,128)}', space=vmem, size = 0x12000, scoped, tag = 'internal scratch']
  #allocation2 [shape = 'f32[2,64,128]{2,1,0:T(8,128)}', space=vmem, size = 0x10000, scoped, tag = 'scratch operand']
  #allocation3 [shape = 'f32[2,80,64]{2,1,0:T(8,128)}', space=vmem, size = 0x14000, scoped, tag = 'scratch operand']
  #allocation4 [shape = 'f32[2,16,64]{2,1,0:T(8,128)}', space=vmem, size = 0x4000, scoped, tag = 'scratch operand']
  %s0 = inlined_call_operand.vmem [shape: f32[2,64,64], index: 0, kind: input, shape index: {}]
  %s1 = inlined_call_operand.vmem [shape: f32[2,16], index: 1, kind: input, shape index: {}]
  %s2 = inlined_call_operand.vmem [shape: f32[64,256], index: 2, kind: input, shape index: {}]
  %s3 = inlined_call_operand.vmem [shape: f32[1,256], index: 3, kind: input, shape index: {}]
  %s4 = inlined_call_operand.vmem [shape: f32[1,256], index: 4, kind: input, shape index: {}]
  %s5 = inlined_call_operand.vmem [shape: f32[256,128], index: 5, kind: input, shape index: {}]
  %s6 = inlined_call_operand.vmem [shape: f32[1,128], index: 6, kind: input, shape index: {}]
  %s7 = inlined_call_operand.vmem [shape: f32[1,128], index: 7, kind: input, shape index: {}]
  %s8 = inlined_call_operand.vmem [shape: f32[448,128], index: 8, kind: input, shape index: {}]
  %s9 = inlined_call_operand.vmem [shape: f32[1,128], index: 9, kind: input, shape index: {}]
  %s10 = inlined_call_operand.vmem [shape: f32[1,128], index: 10, kind: input, shape index: {}]
  %s11 = inlined_call_operand.vmem [shape: f32[256,768], index: 11, kind: input, shape index: {}]
  %s12 = inlined_call_operand.vmem [shape: f32[256,256], index: 12, kind: input, shape index: {}]
  %s13 = inlined_call_operand.vmem [shape: f32[1,256], index: 13, kind: input, shape index: {}]
  %s14 = inlined_call_operand.vmem [shape: f32[256,4], index: 14, kind: input, shape index: {}]
  %s15 = inlined_call_operand.vmem [shape: f32[1,4], index: 15, kind: input, shape index: {}]
  %s16 = inlined_call_operand.vmem [shape: f32[16,4], index: 16, kind: input, shape index: {}]
  %s17 = inlined_call_operand.vmem [shape: f32[1,4], index: 17, kind: input, shape index: {}]
  %s18 = inlined_call_operand.vmem [shape: f32[8,8], index: 18, kind: input, shape index: {}]
  %s19 = inlined_call_operand.hbm [shape: f32[2,4], index: 19, kind: output, shape index: {}]
  %s20 = sld [smem:[#allocation0]]
  $region86: #{forward.1} parent=0
    _
  %s22 = ssub.s32 1, %s20
  %s23 = scalar_select 0, %s22, %s20
  $region1: #{forward.1} parent=0
    #allocation5 [shape = 'u8[1024]{0}', space=vmem, size = 0x400, scoped, tag = 'output window, operand 0, single buffered']
    #allocation6 [shape = 's32[1]{0}', space=sflag, size = 0x4, scoped, tag = 'scoped memory for forward.1']
    %24 = vsyncpa [#allocation6], 0
    // Predicated region
    $region2: #{forward.1} parent=1 // pred_check
      _
    $region3: #{forward.1} parent=1 // pred_check_branch
      %26 = sbr.rel (0) target = $region5
    $region4: #{forward.1} parent=1 // pred_region
      _
    $region5: #{forward.1} parent=1 // pred_fallthru
      _
    // Predicated region
    $region6: #{forward.1} parent=1 // pred_check
      _
    $region7: #{forward.1} parent=1 // pred_check_branch
      %28 = sbr.rel (0) target = $region9
    $region8: #{forward.1} parent=1 // pred_region
      _
    $region9: #{forward.1} parent=1 // pred_fallthru
      _
    // Predicated region
    $region10: #{forward.1} parent=1 // pred_check
      _
    $region11: #{forward.1} parent=1 // pred_check_branch
      %30 = sbr.rel (0) target = $region13
    $region12: #{forward.1} parent=1 // pred_region
      _
    $region13: #{forward.1} parent=1 // pred_fallthru
      _
    // Predicated region
    $region14: #{forward.1} parent=1 // pred_check
      _
    $region15: #{forward.1} parent=1 // pred_check_branch
      %32 = sbr.rel (0) target = $region17
    $region16: #{forward.1} parent=1 // pred_region
      _
    $region17: #{forward.1} parent=1 // pred_fallthru
      _
    // Predicated region
    $region18: #{forward.1} parent=1 // pred_check
      _
    $region19: #{forward.1} parent=1 // pred_check_branch
      %34 = sbr.rel (0) target = $region21
    $region20: #{forward.1} parent=1 // pred_region
      _
    $region21: #{forward.1} parent=1 // pred_fallthru
      _
    // Predicated region
    $region22: #{forward.1} parent=1 // pred_check
      _
    $region23: #{forward.1} parent=1 // pred_check_branch
      %36 = sbr.rel (0) target = $region25
    $region24: #{forward.1} parent=1 // pred_region
      _
    $region25: #{forward.1} parent=1 // pred_fallthru
      _
    // Predicated region
    $region26: #{forward.1} parent=1 // pred_check
      _
    $region27: #{forward.1} parent=1 // pred_check_branch
      %38 = sbr.rel (0) target = $region29
    $region28: #{forward.1} parent=1 // pred_region
      _
    $region29: #{forward.1} parent=1 // pred_fallthru
      _
    // Predicated region
    $region30: #{forward.1} parent=1 // pred_check
      _
    $region31: #{forward.1} parent=1 // pred_check_branch
      %40 = sbr.rel (0) target = $region33
    $region32: #{forward.1} parent=1 // pred_region
      _
    $region33: #{forward.1} parent=1 // pred_fallthru
      _
    // Predicated region
    $region34: #{forward.1} parent=1 // pred_check
      _
    $region35: #{forward.1} parent=1 // pred_check_branch
      %42 = sbr.rel (0) target = $region37
    $region36: #{forward.1} parent=1 // pred_region
      _
    $region37: #{forward.1} parent=1 // pred_fallthru
      _
    // Predicated region
    $region38: #{forward.1} parent=1 // pred_check
      _
    $region39: #{forward.1} parent=1 // pred_check_branch
      %44 = sbr.rel (0) target = $region41
    $region40: #{forward.1} parent=1 // pred_region
      _
    $region41: #{forward.1} parent=1 // pred_fallthru
      _
    // Predicated region
    $region42: #{forward.1} parent=1 // pred_check
      _
    $region43: #{forward.1} parent=1 // pred_check_branch
      %46 = sbr.rel (0) target = $region45
    $region44: #{forward.1} parent=1 // pred_region
      _
    $region45: #{forward.1} parent=1 // pred_fallthru
      _
    // Predicated region
    $region46: #{forward.1} parent=1 // pred_check
      _
    $region47: #{forward.1} parent=1 // pred_check_branch
      %48 = sbr.rel (0) target = $region49
    $region48: #{forward.1} parent=1 // pred_region
      _
    $region49: #{forward.1} parent=1 // pred_fallthru
      _
    // Predicated region
    $region50: #{forward.1} parent=1 // pred_check
      _
    $region51: #{forward.1} parent=1 // pred_check_branch
      %50 = sbr.rel (0) target = $region53
    $region52: #{forward.1} parent=1 // pred_region
      _
    $region53: #{forward.1} parent=1 // pred_fallthru
      _
    // Predicated region
    $region54: #{forward.1} parent=1 // pred_check
      _
    $region55: #{forward.1} parent=1 // pred_check_branch
      %52 = sbr.rel (0) target = $region57
    $region56: #{forward.1} parent=1 // pred_region
      _
    $region57: #{forward.1} parent=1 // pred_fallthru
      _
    // Predicated region
    $region58: #{forward.1} parent=1 // pred_check
      _
    $region59: #{forward.1} parent=1 // pred_check_branch
      %54 = sbr.rel (0) target = $region61
    $region60: #{forward.1} parent=1 // pred_region
      _
    $region61: #{forward.1} parent=1 // pred_fallthru
      _
    // Predicated region
    $region62: #{forward.1} parent=1 // pred_check
      _
    $region63: #{forward.1} parent=1 // pred_check_branch
      %56 = sbr.rel (0) target = $region65
    $region64: #{forward.1} parent=1 // pred_region
      _
    $region65: #{forward.1} parent=1 // pred_fallthru
      _
    // Predicated region
    $region66: #{forward.1} parent=1 // pred_check
      _
    $region67: #{forward.1} parent=1 // pred_check_branch
      %58 = sbr.rel (0) target = $region69
    $region68: #{forward.1} parent=1 // pred_region
      _
    $region69: #{forward.1} parent=1 // pred_fallthru
      _
    // Predicated region
    $region70: #{forward.1} parent=1 // pred_check
      _
    $region71: #{forward.1} parent=1 // pred_check_branch
      %60 = sbr.rel (0) target = $region73
    $region72: #{forward.1} parent=1 // pred_region
      _
    $region73: #{forward.1} parent=1 // pred_fallthru
      _
    // Predicated region
    $region74: #{forward.1} parent=1 // pred_check
      _
    $region75: #{forward.1} parent=1 // pred_check_branch
      %62 = sbr.rel (0) target = $region77
    $region76: #{forward.1} parent=1 // pred_region
      _
    $region77: #{forward.1} parent=1 // pred_fallthru
      _
    %v63 = vld [vmem:[%s0] sm:$0xff]
    %v64 = vld [vmem:[%s0 + $0x8] sm:$0xff]
    %v65 = vld [vmem:[%s0 + $0x10] sm:$0xff]
    %v66 = vld [vmem:[%s0 + $0x18] sm:$0xff]
    %v67 = vld [vmem:[%s0 + $0x20] sm:$0xff]
    %v68 = vld [vmem:[%s0 + $0x28] sm:$0xff]
    %v69 = vld [vmem:[%s0 + $0x30] sm:$0xff]
    %v70 = vld [vmem:[%s0 + $0x38] sm:$0xff]
    %v71 = vld [vmem:[%s0 + $0x40] sm:$0xff]
    %v72 = vld [vmem:[%s0 + $0x48] sm:$0xff]
    %v73 = vld [vmem:[%s0 + $0x50] sm:$0xff]
    %v74 = vld [vmem:[%s0 + $0x58] sm:$0xff]
    %v75 = vld [vmem:[%s0 + $0x60] sm:$0xff]
    %v76 = vld [vmem:[%s0 + $0x68] sm:$0xff]
    %v77 = vld [vmem:[%s0 + $0x70] sm:$0xff]
    %v78 = vld [vmem:[%s0 + $0x78] sm:$0xff]
    %v79 = vld [vmem:[%s2] sm:$0xff]
    %v80 = vld [vmem:[%s2 + $0x8] sm:$0xff]
    %v81 = vld [vmem:[%s2 + $0x10] sm:$0xff]
    %v82 = vld [vmem:[%s2 + $0x18] sm:$0xff]
    %v83 = vld [vmem:[%s2 + $0x20] sm:$0xff]
    %v84 = vld [vmem:[%s2 + $0x28] sm:$0xff]
    %v85 = vld [vmem:[%s2 + $0x30] sm:$0xff]
    %v86 = vld [vmem:[%s2 + $0x38] sm:$0xff]
    %v87 = vld [vmem:[%s2 + $0x40] sm:$0xff]
    %v88 = vld [vmem:[%s2 + $0x48] sm:$0xff]
    %v89 = vld [vmem:[%s2 + $0x50] sm:$0xff]
    %v90 = vld [vmem:[%s2 + $0x58] sm:$0xff]
    %v91 = vld [vmem:[%s2 + $0x60] sm:$0xff]
    %v92 = vld [vmem:[%s2 + $0x68] sm:$0xff]
    %v93 = vld [vmem:[%s2 + $0x70] sm:$0xff]
    %v94 = vld [vmem:[%s2 + $0x78] sm:$0xff]
    %vm95 = vcmask 523264
    %v97 = vsel %vm95, %v63, 0
    %v100 = vsel %vm95, %v64, 0
    %v103 = vsel %vm95, %v65, 0
    %v106 = vsel %vm95, %v66, 0
    %v109 = vsel %vm95, %v67, 0
    %v112 = vsel %vm95, %v68, 0
    %v115 = vsel %vm95, %v69, 0
    %v118 = vsel %vm95, %v70, 0
    %v121 = vsel %vm95, %v71, 0
    %v124 = vsel %vm95, %v72, 0
    %v127 = vsel %vm95, %v73, 0
    %v130 = vsel %vm95, %v74, 0
    %v133 = vsel %vm95, %v75, 0
    %v136 = vsel %vm95, %v76, 0
    %v139 = vsel %vm95, %v77, 0
    %v142 = vsel %vm95, %v78, 0
    %144 = vmatprep.subr.mxu0 %v80
    %145 = vmatpush1.msra.mxu0 %v79
    %146 = vmatprep.subr.mxu0 %v82
    %147 = vmatpush1.msra.mxu0 %v81
    %148 = vmatprep.subr.mxu0 %v84
    %149 = vmatpush1.msra.mxu0 %v83
    %150 = vmatprep.subr.mxu0 %v86
    %151 = vmatpush1.msra.mxu0 %v85
    %152 = vmatprep.subr.mxu0 %v88
    %153 = vmatpush1.msra.mxu0 %v87
    %154 = vmatprep.subr.mxu0 %v90
    %155 = vmatpush1.msra.mxu0 %v89
    %156 = vmatprep.subr.mxu0 %v92
    %157 = vmatpush1.msra.mxu0 %v91
    %158 = vmatprep.subr.mxu0 %v94
    %159 = vmatpush1.msra.mxu0 %v93
    %160 = vmatprep.subr.mxu0 0.0
    %161 = vmatpush1.msra.mxu0 0.0
    %162 = vmatprep.subr.mxu0 0.0
    %163 = vmatpush1.msra.mxu0 0.0
    %164 = vmatprep.subr.mxu0 0.0
    %165 = vmatpush1.msra.mxu0 0.0
    %166 = vmatprep.subr.mxu0 0.0
    %167 = vmatpush1.msra.mxu0 0.0
    %168 = vmatprep.subr.mxu0 0.0
    %169 = vmatpush1.msra.mxu0 0.0
    %170 = vmatprep.subr.mxu0 0.0
    %171 = vmatpush1.msra.mxu0 0.0
    %172 = vmatprep.subr.mxu0 0.0
    %173 = vmatpush1.msra.mxu0 0.0
    %174 = vmatprep.subr.mxu0 0.0
    %175 = vmatpush1.msra.mxu0 0.0
    %176 = vmatprep.subr.mxu0 0.0
    %177 = vmatpush1.msra.mxu0 0.0
    %178 = vmatprep.subr.mxu0 0.0
    %179 = vmatpush1.msra.mxu0 0.0
    %180 = vmatprep.subr.mxu0 0.0
    %181 = vmatpush1.msra.mxu0 0.0
    %182 = vmatprep.subr.mxu0 0.0
    %183 = vmatpush1.msra.mxu0 0.0
    %184 = vmatprep.subr.mxu0 0.0
    %185 = vmatpush1.msra.mxu0 0.0
    %186 = vmatprep.subr.mxu0 0.0
    %187 = vmatpush1.msra.mxu0 0.0
    %188 = vmatprep.subr.mxu0 0.0
    %189 = vmatpush1.msra.mxu0 0.0
    %190 = vmatprep.subr.mxu0 0.0
    %191 = vmatpush1.msra.mxu0 0.0
    %192 = vmatprep.subr.mxu0 0.0
    %193 = vmatpush1.msra.mxu0 0.0
    %194 = vmatprep.subr.mxu0 0.0
    %195 = vmatpush1.msra.mxu0 0.0
    %196 = vmatprep.subr.mxu0 0.0
    %197 = vmatpush1.msra.mxu0 0.0
    %198 = vmatprep.subr.mxu0 0.0
    %199 = vmatpush1.msra.mxu0 0.0
    %200 = vmatprep.subr.mxu0 0.0
    %201 = vmatpush1.msra.mxu0 0.0
    %202 = vmatprep.subr.mxu0 0.0
    %203 = vmatpush1.msra.mxu0 0.0
    %204 = vmatprep.subr.mxu0 0.0
    %205 = vmatpush1.msra.mxu0 0.0
    %206 = vmatprep.subr.mxu0 0.0
    %207 = vmatpush1.msra.mxu0 0.0
    %208 = vmatprep.mubr.f32.mxu0 0.0
    %209 = vmatmul.mubr.f32.gmra.mrb[0].mxu0 %v97
    %v210 = vpop.f32.mrb[0].mxu0
    %v211 = vadd.f32 0.0, %v210
    %v212 = vpop.f32.mrb[0].mxu0
    %v213 = vadd.f32 0.0, %v212
    %214 = vmatprep.mubr.f32.mxu0 0.0
    %215 = vmatmul.mubr.f32.gmra.mrb[0].mxu0 %v100
    %v216 = vpop.f32.mrb[0].mxu0
    %v217 = vadd.f32 0.0, %v216
    %v218 = vpop.f32.mrb[0].mxu0
    %v219 = vadd.f32 0.0, %v218
    %220 = vmatprep.mubr.f32.mxu0 0.0
    %221 = vmatmul.mubr.f32.gmra.mrb[0].mxu0 %v103
    %v222 = vpop.f32.mrb[0].mxu0
    %v223 = vadd.f32 0.0, %v222
    %v224 = vpop.f32.mrb[0].mxu0
    %v225 = vadd.f32 0.0, %v224
    %226 = vmatprep.mubr.f32.mxu0 0.0
    %227 = vmatmul.mubr.f32.gmra.mrb[0].mxu0 %v106
    %v228 = vpop.f32.mrb[0].mxu0
    %v229 = vadd.f32 0.0, %v228
    %v230 = vpop.f32.mrb[0].mxu0
    %v231 = vadd.f32 0.0, %v230
    %232 = vmatprep.mubr.f32.mxu0 0.0
    %233 = vmatmul.mubr.f32.gmra.mrb[0].mxu0 %v109
    %v234 = vpop.f32.mrb[0].mxu0
    %v235 = vadd.f32 0.0, %v234
    %v236 = vpop.f32.mrb[0].mxu0
    %v237 = vadd.f32 0.0, %v236
    %238 = vmatprep.mubr.f32.mxu0 0.0
    %239 = vmatmul.mubr.f32.gmra.mrb[0].mxu0 %v112
    %v240 = vpop.f32.mrb[0].mxu0
    %v241 = vadd.f32 0.0, %v240
    %v242 = vpop.f32.mrb[0].mxu0
    %v243 = vadd.f32 0.0, %v242
    %244 = vmatprep.mubr.f32.mxu0 0.0
    %245 = vmatmul.mubr.f32.gmra.mrb[0].mxu0 %v115
    %v246 = vpop.f32.mrb[0].mxu0
    %v247 = vadd.f32 0.0, %v246
    %v248 = vpop.f32.mrb[0].mxu0
    %v249 = vadd.f32 0.0, %v248
    %250 = vmatprep.mubr.f32.mxu0 0.0
    %251 = vmatmul.mubr.f32.gmra.mrb[0].mxu0 %v118
    %v252 = vpop.f32.mrb[0].mxu0
    %v253 = vadd.f32 0.0, %v252
    %v254 = vpop.f32.mrb[0].mxu0
    %v255 = vadd.f32 0.0, %v254
    %256 = vmatprep.mubr.f32.mxu0 0.0
    %257 = vmatmul.mubr.f32.gmra.mrb[0].mxu0 %v121
    %v258 = vpop.f32.mrb[0].mxu0
    %v259 = vadd.f32 0.0, %v258
    %v260 = vpop.f32.mrb[0].mxu0
    %v261 = vadd.f32 0.0, %v260
    %262 = vmatprep.mubr.f32.mxu0 0.0
    %263 = vmatmul.mubr.f32.gmra.mrb[0].mxu0 %v124
    %v264 = vpop.f32.mrb[0].mxu0
    %v265 = vadd.f32 0.0, %v264
    %v266 = vpop.f32.mrb[0].mxu0
    %v267 = vadd.f32 0.0, %v266
    %268 = vmatprep.mubr.f32.mxu0 0.0
    %269 = vmatmul.mubr.f32.gmra.mrb[0].mxu0 %v127
    %v270 = vpop.f32.mrb[0].mxu0
    %v271 = vadd.f32 0.0, %v270
    %v272 = vpop.f32.mrb[0].mxu0
    %v273 = vadd.f32 0.0, %v272
    %274 = vmatprep.mubr.f32.mxu0 0.0
    %275 = vmatmul.mubr.f32.gmra.mrb[0].mxu0 %v130
    %v276 = vpop.f32.mrb[0].mxu0
    %v277 = vadd.f32 0.0, %v276
    %v278 = vpop.f32.mrb[0].mxu0
    %v279 = vadd.f32 0.0, %v278
    %280 = vmatprep.mubr.f32.mxu0 0.0
    %281 = vmatmul.mubr.f32.gmra.mrb[0].mxu0 %v133
    %v282 = vpop.f32.mrb[0].mxu0
    %v283 = vadd.f32 0.0, %v282
    %v284 = vpop.f32.mrb[0].mxu0
    %v285 = vadd.f32 0.0, %v284
    %286 = vmatprep.mubr.f32.mxu0 0.0
    %287 = vmatmul.mubr.f32.gmra.mrb[0].mxu0 %v136
    %v288 = vpop.f32.mrb[0].mxu0
    %v289 = vadd.f32 0.0, %v288
    %v290 = vpop.f32.mrb[0].mxu0
    %v291 = vadd.f32 0.0, %v290
    %292 = vmatprep.mubr.f32.mxu0 0.0
    %293 = vmatmul.mubr.f32.gmra.mrb[0].mxu0 %v139
    %v294 = vpop.f32.mrb[0].mxu0
    %v295 = vadd.f32 0.0, %v294
    %v296 = vpop.f32.mrb[0].mxu0
    %v297 = vadd.f32 0.0, %v296
    %298 = vmatprep.mubr.f32.mxu0 0.0
    %299 = vmatmul.mubr.f32.gmra.mrb[0].mxu0 %v142
    %v300 = vpop.f32.mrb[0].mxu0
    %v301 = vadd.f32 0.0, %v300
    %v302 = vpop.f32.mrb[0].mxu0
    %v303 = vadd.f32 0.0, %v302
    %304 = vdwg.mxu0
    %v305 = vld [vmem:[%s3] sm:$0x3]
    %v307 = vlaneseq
    %v308 = vshrl.u32 %v307, 7
    %v309 = vsub.s32 0, %v308
    %v310 = vrot.slane %v305, %v309
    %v311 = vlaneseq
    %v312 = vshrl.u32 %v311, 7
    %v313 = vsub.s32 1, %v312
    %v314 = vrot.slane %v305, %v313
    %v317 = vmul.f32 %v211, %v310
    %v318 = vmul.f32 %v213, %v314
    %v319 = vmul.f32 %v217, %v310
    %v320 = vmul.f32 %v219, %v314
    %v321 = vmul.f32 %v223, %v310
    %v322 = vmul.f32 %v225, %v314
    %v323 = vmul.f32 %v229, %v310
    %v324 = vmul.f32 %v231, %v314
    %v325 = vmul.f32 %v235, %v310
    %v326 = vmul.f32 %v237, %v314
    %v327 = vmul.f32 %v241, %v310
    %v328 = vmul.f32 %v243, %v314
    %v329 = vmul.f32 %v247, %v310
    %v330 = vmul.f32 %v249, %v314
    %v331 = vmul.f32 %v253, %v310
    %v332 = vmul.f32 %v255, %v314
    %v333 = vmul.f32 %v259, %v310
    %v334 = vmul.f32 %v261, %v314
    %v335 = vmul.f32 %v265, %v310
    %v336 = vmul.f32 %v267, %v314
    %v337 = vmul.f32 %v271, %v310
    %v338 = vmul.f32 %v273, %v314
    %v339 = vmul.f32 %v277, %v310
    %v340 = vmul.f32 %v279, %v314
    %v341 = vmul.f32 %v283, %v310
    %v342 = vmul.f32 %v285, %v314
    %v343 = vmul.f32 %v289, %v310
    %v344 = vmul.f32 %v291, %v314
    %v345 = vmul.f32 %v295, %v310
    %v346 = vmul.f32 %v297, %v314
    %v347 = vmul.f32 %v301, %v310
    %v348 = vmul.f32 %v303, %v314
    %v349 = vld [vmem:[%s4] sm:$0x3]
    %v351 = vlaneseq
    %v352 = vshrl.u32 %v351, 7
    %v353 = vsub.s32 0, %v352
    %v354 = vrot.slane %v349, %v353
    %v355 = vlaneseq
    %v356 = vshrl.u32 %v355, 7
    %v357 = vsub.s32 1, %v356
    %v358 = vrot.slane %v349, %v357
    %v361 = vadd.f32 %v317, %v354
    %v362 = vadd.f32 %v318, %v358
    %v363 = vadd.f32 %v319, %v354
    %v364 = vadd.f32 %v320, %v358
    %v365 = vadd.f32 %v321, %v354
    %v366 = vadd.f32 %v322, %v358
    %v367 = vadd.f32 %v323, %v354
    %v368 = vadd.f32 %v324, %v358
    %v369 = vadd.f32 %v325, %v354
    %v370 = vadd.f32 %v326, %v358
    %v371 = vadd.f32 %v327, %v354
    %v372 = vadd.f32 %v328, %v358
    %v373 = vadd.f32 %v329, %v354
    %v374 = vadd.f32 %v330, %v358
    %v375 = vadd.f32 %v331, %v354
    %v376 = vadd.f32 %v332, %v358
    %v377 = vadd.f32 %v333, %v354
    %v378 = vadd.f32 %v334, %v358
    %v379 = vadd.f32 %v335, %v354
    %v380 = vadd.f32 %v336, %v358
    %v381 = vadd.f32 %v337, %v354
    %v382 = vadd.f32 %v338, %v358
    %v383 = vadd.f32 %v339, %v354
    %v384 = vadd.f32 %v340, %v358
    %v385 = vadd.f32 %v341, %v354
    %v386 = vadd.f32 %v342, %v358
    %v387 = vadd.f32 %v343, %v354
    %v388 = vadd.f32 %v344, %v358
    %v389 = vadd.f32 %v345, %v354
    %v390 = vadd.f32 %v346, %v358
    %v391 = vadd.f32 %v347, %v354
    %v392 = vadd.f32 %v348, %v358
    %v393 = vmax.f32 %v361, 0.0
    %v394 = vmax.f32 %v362, 0.0
    %v395 = vmax.f32 %v363, 0.0
    %v396 = vmax.f32 %v364, 0.0
    %v397 = vmax.f32 %v365, 0.0
    %v398 = vmax.f32 %v366, 0.0
    %v399 = vmax.f32 %v367, 0.0
    %v400 = vmax.f32 %v368, 0.0
    %v401 = vmax.f32 %v369, 0.0
    %v402 = vmax.f32 %v370, 0.0
    %v403 = vmax.f32 %v371, 0.0
    %v404 = vmax.f32 %v372, 0.0
    %v405 = vmax.f32 %v373, 0.0
    %v406 = vmax.f32 %v374, 0.0
    %v407 = vmax.f32 %v375, 0.0
    %v408 = vmax.f32 %v376, 0.0
    %v409 = vmax.f32 %v377, 0.0
    %v410 = vmax.f32 %v378, 0.0
    %v411 = vmax.f32 %v379, 0.0
    %v412 = vmax.f32 %v380, 0.0
    %v413 = vmax.f32 %v381, 0.0
    %v414 = vmax.f32 %v382, 0.0
    %v415 = vmax.f32 %v383, 0.0
    %v416 = vmax.f32 %v384, 0.0
    %v417 = vmax.f32 %v385, 0.0
    %v418 = vmax.f32 %v386, 0.0
    %v419 = vmax.f32 %v387, 0.0
    %v420 = vmax.f32 %v388, 0.0
    %v421 = vmax.f32 %v389, 0.0
    %v422 = vmax.f32 %v390, 0.0
    %v423 = vmax.f32 %v391, 0.0
    %v424 = vmax.f32 %v392, 0.0
    %v425 = vmax.f32 %v393, %v394
    %v426 = vmax.f32 %v395, %v396
    %v427 = vmax.f32 %v397, %v398
    %v428 = vmax.f32 %v399, %v400
    %v429 = vmax.f32 %v401, %v402
    %v430 = vmax.f32 %v403, %v404
    %v431 = vmax.f32 %v405, %v406
    %v432 = vmax.f32 %v407, %v408
    %v433 = vmax.f32 %v409, %v410
    %v434 = vmax.f32 %v411, %v412
    %v435 = vmax.f32 %v413, %v414
    %v436 = vmax.f32 %v415, %v416
    %v437 = vmax.f32 %v417, %v418
    %v438 = vmax.f32 %v419, %v420
    %v439 = vmax.f32 %v421, %v422
    %v440 = vmax.f32 %v423, %v424
    %441 = vst [vmem:[#allocation2] sm:$0xff] %v425
    %442 = vst [vmem:[#allocation2 + $0x8] sm:$0xff] %v426
    %443 = vst [vmem:[#allocation2 + $0x10] sm:$0xff] %v427
    %444 = vst [vmem:[#allocation2 + $0x18] sm:$0xff] %v428
    %445 = vst [vmem:[#allocation2 + $0x20] sm:$0xff] %v429
    %446 = vst [vmem:[#allocation2 + $0x28] sm:$0xff] %v430
    %447 = vst [vmem:[#allocation2 + $0x30] sm:$0xff] %v431
    %448 = vst [vmem:[#allocation2 + $0x38] sm:$0xff] %v432
    %449 = vst [vmem:[#allocation2 + $0x40] sm:$0xff] %v433
    %450 = vst [vmem:[#allocation2 + $0x48] sm:$0xff] %v434
    %451 = vst [vmem:[#allocation2 + $0x50] sm:$0xff] %v435
    %452 = vst [vmem:[#allocation2 + $0x58] sm:$0xff] %v436
    %453 = vst [vmem:[#allocation2 + $0x60] sm:$0xff] %v437
    %454 = vst [vmem:[#allocation2 + $0x68] sm:$0xff] %v438
    %455 = vst [vmem:[#allocation2 + $0x70] sm:$0xff] %v439
    %456 = vst [vmem:[#allocation2 + $0x78] sm:$0xff] %v440
    %v457 = vld [vmem:[#allocation2] sm:$0xff]
    %v458 = vld [vmem:[#allocation2 + $0x8] sm:$0xff]
    %v459 = vld [vmem:[#allocation2 + $0x10] sm:$0xff]
    %v460 = vld [vmem:[#allocation2 + $0x18] sm:$0xff]
    %v461 = vld [vmem:[#allocation2 + $0x20] sm:$0xff]
    %v462 = vld [vmem:[#allocation2 + $0x28] sm:$0xff]
    %v463 = vld [vmem:[#allocation2 + $0x30] sm:$0xff]
    %v464 = vld [vmem:[#allocation2 + $0x38] sm:$0x7f]
    %v465 = vld [vmem:[#allocation2 + $0x40] sm:$0xff]
    %v466 = vld [vmem:[#allocation2 + $0x48] sm:$0xff]
    %v467 = vld [vmem:[#allocation2 + $0x50] sm:$0xff]
    %v468 = vld [vmem:[#allocation2 + $0x58] sm:$0xff]
    %v469 = vld [vmem:[#allocation2 + $0x60] sm:$0xff]
    %v470 = vld [vmem:[#allocation2 + $0x68] sm:$0xff]
    %v471 = vld [vmem:[#allocation2 + $0x70] sm:$0xff]
    %v472 = vld [vmem:[#allocation2 + $0x78] sm:$0x7f]
    %v473 = vld [vmem:[#allocation2 + $0x1] sm:$0xff]
    %v474 = vld [vmem:[#allocation2 + $0x9] sm:$0xff]
    %v475 = vld [vmem:[#allocation2 + $0x11] sm:$0xff]
    %v476 = vld [vmem:[#allocation2 + $0x19] sm:$0xff]
    %v477 = vld [vmem:[#allocation2 + $0x21] sm:$0xff]
    %v478 = vld [vmem:[#allocation2 + $0x29] sm:$0xff]
    %v479 = vld [vmem:[#allocation2 + $0x31] sm:$0xff]
    %v480 = vld [vmem:[#allocation2 + $0x39] sm:$0x7f]
    %v481 = vld [vmem:[#allocation2 + $0x41] sm:$0xff]
    %v482 = vld [vmem:[#allocation2 + $0x49] sm:$0xff]
    %v483 = vld [vmem:[#allocation2 + $0x51] sm:$0xff]
    %v484 = vld [vmem:[#allocation2 + $0x59] sm:$0xff]
    %v485 = vld [vmem:[#allocation2 + $0x61] sm:$0xff]
    %v486 = vld [vmem:[#allocation2 + $0x69] sm:$0xff]
    %v487 = vld [vmem:[#allocation2 + $0x71] sm:$0xff]
    %v488 = vld [vmem:[#allocation2 + $0x79] sm:$0x7f]
    %v521 = vcombine.low %v457, %v473
    %v522 = vcombine.high %v457, %v473
    %v524 = vunpack.c.l.s4 1966171168
    %v525 = vunpack.c.0.s8 %v524
    %v526 = vlaneseq
    %v527 = vshrl.u32 %v526, 7
    %v528 = vsub.s32 %v525, %v527
    %v529 = vrot.slane %v521, %v528
    %v531 = vunpack.c.l.s4 1966171168
    %v532 = vunpack.c.0.s8 %v531
    %v533 = vlaneseq
    %v534 = vshrl.u32 %v533, 7
    %v535 = vsub.s32 %v532, %v534
    %v536 = vrot.slane %v522, %v535
    %v537 = vcombine.high %v529, %v529
    %v538 = vcombine.high %v536, %v536
    %v540 = vunpack.c.l.s4 1966171168
    %v541 = vunpack.c.0.s8 %v540
    %v542 = vlaneseq
    %v543 = vshrl.u32 %v542, 7
    %v544 = vsub.s32 %v541, %v543
    %v545 = vrot.slane %v529, %v544
    %v547 = vunpack.c.l.s4 1966171168
    %v548 = vunpack.c.0.s8 %v547
    %v549 = vlaneseq
    %v550 = vshrl.u32 %v549, 7
    %v551 = vsub.s32 %v548, %v550
    %v552 = vrot.slane %v536, %v551
    %v554 = vunpack.c.l.s4 1966171168
    %v555 = vunpack.c.0.s8 %v554
    %v556 = vlaneseq
    %v557 = vshrl.u32 %v556, 7
    %v558 = vsub.s32 %v555, %v557
    %v559 = vrot.slane %v537, %v558
    %v561 = vunpack.c.l.s4 1966171168
    %v562 = vunpack.c.0.s8 %v561
    %v563 = vlaneseq
    %v564 = vshrl.u32 %v563, 7
    %v565 = vsub.s32 %v562, %v564
    %v566 = vrot.slane %v538, %v565
    %v567 = vcombine.high %v545, %v545
    %v568 = vcombine.high %v552, %v552
    %v569 = vcombine.high %v559, %v559
    %v570 = vcombine.high %v566, %v566
    %v571 = vcombine.low %v458, %v474
    %v572 = vcombine.high %v458, %v474
    %v574 = vunpack.c.l.s4 1966171168
    %v575 = vunpack.c.0.s8 %v574
    %v576 = vlaneseq
    %v577 = vshrl.u32 %v576, 7
    %v578 = vsub.s32 %v575, %v577
    %v579 = vrot.slane %v571, %v578
    %v581 = vunpack.c.l.s4 1966171168
    %v582 = vunpack.c.0.s8 %v581
    %v583 = vlaneseq
    %v584 = vshrl.u32 %v583, 7
    %v585 = vsub.s32 %v582, %v584
    %v586 = vrot.slane %v572, %v585
    %v587 = vcombine.high %v579, %v579
    %v588 = vcombine.high %v586, %v586
    %v590 = vunpack.c.l.s4 1966171168
    %v591 = vunpack.c.0.s8 %v590
    %v592 = vlaneseq
    %v593 = vshrl.u32 %v592, 7
    %v594 = vsub.s32 %v591, %v593
    %v595 = vrot.slane %v579, %v594
    %v597 = vunpack.c.l.s4 1966171168
    %v598 = vunpack.c.0.s8 %v597
    %v599 = vlaneseq
    %v600 = vshrl.u32 %v599, 7
    %v601 = vsub.s32 %v598, %v600
    %v602 = vrot.slane %v586, %v601
    %v604 = vunpack.c.l.s4 1966171168
    %v605 = vunpack.c.0.s8 %v604
    %v606 = vlaneseq
    %v607 = vshrl.u32 %v606, 7
    %v608 = vsub.s32 %v605, %v607
    %v609 = vrot.slane %v587, %v608
    %v611 = vunpack.c.l.s4 1966171168
    %v612 = vunpack.c.0.s8 %v611
    %v613 = vlaneseq
    %v614 = vshrl.u32 %v613, 7
    %v615 = vsub.s32 %v612, %v614
    %v616 = vrot.slane %v588, %v615
    %v617 = vcombine.high %v595, %v595
    %v618 = vcombine.high %v602, %v602
    %v619 = vcombine.high %v609, %v609
    %v620 = vcombine.high %v616, %v616
    %v621 = vcombine.low %v459, %v475
    %v622 = vcombine.high %v459, %v475
    %v624 = vunpack.c.l.s4 1966171168
    %v625 = vunpack.c.0.s8 %v624
    %v626 = vlaneseq
    %v627 = vshrl.u32 %v626, 7
    %v628 = vsub.s32 %v625, %v627
    %v629 = vrot.slane %v621, %v628
    %v631 = vunpack.c.l.s4 1966171168
    %v632 = vunpack.c.0.s8 %v631
    %v633 = vlaneseq
    %v634 = vshrl.u32 %v633, 7
    %v635 = vsub.s32 %v632, %v634
    %v636 = vrot.slane %v622, %v635
    %v637 = vcombine.high %v629, %v629
    %v638 = vcombine.high %v636, %v636
    %v640 = vunpack.c.l.s4 1966171168
    %v641 = vunpack.c.0.s8 %v640
    %v642 = vlaneseq
    %v643 = vshrl.u32 %v642, 7
    %v644 = vsub.s32 %v641, %v643
    %v645 = vrot.slane %v629, %v644
    %v647 = vunpack.c.l.s4 1966171168
    %v648 = vunpack.c.0.s8 %v647
    %v649 = vlaneseq
    %v650 = vshrl.u32 %v649, 7
    %v651 = vsub.s32 %v648, %v650
    %v652 = vrot.slane %v636, %v651
    %v654 = vunpack.c.l.s4 1966171168
    %v655 = vunpack.c.0.s8 %v654
    %v656 = vlaneseq
    %v657 = vshrl.u32 %v656, 7
    %v658 = vsub.s32 %v655, %v657
    %v659 = vrot.slane %v637, %v658
    %v661 = vunpack.c.l.s4 1966171168
    %v662 = vunpack.c.0.s8 %v661
    %v663 = vlaneseq
    %v664 = vshrl.u32 %v663, 7
    %v665 = vsub.s32 %v662, %v664
    %v666 = vrot.slane %v638, %v665
    %v667 = vcombine.high %v645, %v645
    %v668 = vcombine.high %v652, %v652
    %v669 = vcombine.high %v659, %v659
    %v670 = vcombine.high %v666, %v666
    %v671 = vcombine.low %v460, %v476
    %v672 = vcombine.high %v460, %v476
    %v674 = vunpack.c.l.s4 1966171168
    %v675 = vunpack.c.0.s8 %v674
    %v676 = vlaneseq
    %v677 = vshrl.u32 %v676, 7
    %v678 = vsub.s32 %v675, %v677
    %v679 = vrot.slane %v671, %v678
    %v681 = vunpack.c.l.s4 1966171168
    %v682 = vunpack.c.0.s8 %v681
    %v683 = vlaneseq
    %v684 = vshrl.u32 %v683, 7
    %v685 = vsub.s32 %v682, %v684
    %v686 = vrot.slane %v672, %v685
    %v687 = vcombine.high %v679, %v679
    %v688 = vcombine.high %v686, %v686
    %v690 = vunpack.c.l.s4 1966171168
    %v691 = vunpack.c.0.s8 %v690
    %v692 = vlaneseq
    %v693 = vshrl.u32 %v692, 7
    %v694 = vsub.s32 %v691, %v693
    %v695 = vrot.slane %v679, %v694
    %v697 = vunpack.c.l.s4 1966171168
    %v698 = vunpack.c.0.s8 %v697
    %v699 = vlaneseq
    %v700 = vshrl.u32 %v699, 7
    %v701 = vsub.s32 %v698, %v700
    %v702 = vrot.slane %v686, %v701
    %v704 = vunpack.c.l.s4 1966171168
    %v705 = vunpack.c.0.s8 %v704
    %v706 = vlaneseq
    %v707 = vshrl.u32 %v706, 7
    %v708 = vsub.s32 %v705, %v707
    %v709 = vrot.slane %v687, %v708
    %v711 = vunpack.c.l.s4 1966171168
    %v712 = vunpack.c.0.s8 %v711
    %v713 = vlaneseq
    %v714 = vshrl.u32 %v713, 7
    %v715 = vsub.s32 %v712, %v714
    %v716 = vrot.slane %v688, %v715
    %v717 = vcombine.high %v695, %v695
    %v718 = vcombine.high %v702, %v702
    %v719 = vcombine.high %v709, %v709
    %v720 = vcombine.high %v716, %v716
    %v721 = vcombine.low %v461, %v477
    %v722 = vcombine.high %v461, %v477
    %v724 = vunpack.c.l.s4 1966171168
    %v725 = vunpack.c.0.s8 %v724
    %v726 = vlaneseq
    %v727 = vshrl.u32 %v726, 7
    %v728 = vsub.s32 %v725, %v727
    %v729 = vrot.slane %v721, %v728
    %v731 = vunpack.c.l.s4 1966171168
    %v732 = vunpack.c.0.s8 %v731
    %v733 = vlaneseq
    %v734 = vshrl.u32 %v733, 7
    %v735 = vsub.s32 %v732, %v734
    %v736 = vrot.slane %v722, %v735
    %v737 = vcombine.high %v729, %v729
    %v738 = vcombine.high %v736, %v736
    %v740 = vunpack.c.l.s4 1966171168
    %v741 = vunpack.c.0.s8 %v740
    %v742 = vlaneseq
    %v743 = vshrl.u32 %v742, 7
    %v744 = vsub.s32 %v741, %v743
    %v745 = vrot.slane %v729, %v744
    %v747 = vunpack.c.l.s4 1966171168
    %v748 = vunpack.c.0.s8 %v747
    %v749 = vlaneseq
    %v750 = vshrl.u32 %v749, 7
    %v751 = vsub.s32 %v748, %v750
    %v752 = vrot.slane %v736, %v751
    %v754 = vunpack.c.l.s4 1966171168
    %v755 = vunpack.c.0.s8 %v754
    %v756 = vlaneseq
    %v757 = vshrl.u32 %v756, 7
    %v758 = vsub.s32 %v755, %v757
    %v759 = vrot.slane %v737, %v758
    %v761 = vunpack.c.l.s4 1966171168
    %v762 = vunpack.c.0.s8 %v761
    %v763 = vlaneseq
    %v764 = vshrl.u32 %v763, 7
    %v765 = vsub.s32 %v762, %v764
    %v766 = vrot.slane %v738, %v765
    %v767 = vcombine.high %v745, %v745
    %v768 = vcombine.high %v752, %v752
    %v769 = vcombine.high %v759, %v759
    %v770 = vcombine.high %v766, %v766
    %v771 = vcombine.low %v462, %v478
    %v772 = vcombine.high %v462, %v478
    %v774 = vunpack.c.l.s4 1966171168
    %v775 = vunpack.c.0.s8 %v774
    %v776 = vlaneseq
    %v777 = vshrl.u32 %v776, 7
    %v778 = vsub.s32 %v775, %v777
    %v779 = vrot.slane %v771, %v778
    %v781 = vunpack.c.l.s4 1966171168
    %v782 = vunpack.c.0.s8 %v781
    %v783 = vlaneseq
    %v784 = vshrl.u32 %v783, 7
    %v785 = vsub.s32 %v782, %v784
    %v786 = vrot.slane %v772, %v785
    %v787 = vcombine.high %v779, %v779
    %v788 = vcombine.high %v786, %v786
    %v790 = vunpack.c.l.s4 1966171168
    %v791 = vunpack.c.0.s8 %v790
    %v792 = vlaneseq
    %v793 = vshrl.u32 %v792, 7
    %v794 = vsub.s32 %v791, %v793
    %v795 = vrot.slane %v779, %v794
    %v797 = vunpack.c.l.s4 1966171168
    %v798 = vunpack.c.0.s8 %v797
    %v799 = vlaneseq
    %v800 = vshrl.u32 %v799, 7
    %v801 = vsub.s32 %v798, %v800
    %v802 = vrot.slane %v786, %v801
    %v804 = vunpack.c.l.s4 1966171168
    %v805 = vunpack.c.0.s8 %v804
    %v806 = vlaneseq
    %v807 = vshrl.u32 %v806, 7
    %v808 = vsub.s32 %v805, %v807
    %v809 = vrot.slane %v787, %v808
    %v811 = vunpack.c.l.s4 1966171168
    %v812 = vunpack.c.0.s8 %v811
    %v813 = vlaneseq
    %v814 = vshrl.u32 %v813, 7
    %v815 = vsub.s32 %v812, %v814
    %v816 = vrot.slane %v788, %v815
    %v817 = vcombine.high %v795, %v795
    %v818 = vcombine.high %v802, %v802
    %v819 = vcombine.high %v809, %v809
    %v820 = vcombine.high %v816, %v816
    %v821 = vcombine.low %v463, %v479
    %v822 = vcombine.high %v463, %v479
    %v824 = vunpack.c.l.s4 1966171168
    %v825 = vunpack.c.0.s8 %v824
    %v826 = vlaneseq
    %v827 = vshrl.u32 %v826, 7
    %v828 = vsub.s32 %v825, %v827
    %v829 = vrot.slane %v821, %v828
    %v831 = vunpack.c.l.s4 1966171168
    %v832 = vunpack.c.0.s8 %v831
    %v833 = vlaneseq
    %v834 = vshrl.u32 %v833, 7
    %v835 = vsub.s32 %v832, %v834
    %v836 = vrot.slane %v822, %v835
    %v837 = vcombine.high %v829, %v829
    %v838 = vcombine.high %v836, %v836
    %v840 = vunpack.c.l.s4 1966171168
    %v841 = vunpack.c.0.s8 %v840
    %v842 = vlaneseq
    %v843 = vshrl.u32 %v842, 7
    %v844 = vsub.s32 %v841, %v843
    %v845 = vrot.slane %v829, %v844
    %v847 = vunpack.c.l.s4 1966171168
    %v848 = vunpack.c.0.s8 %v847
    %v849 = vlaneseq
    %v850 = vshrl.u32 %v849, 7
    %v851 = vsub.s32 %v848, %v850
    %v852 = vrot.slane %v836, %v851
    %v854 = vunpack.c.l.s4 1966171168
    %v855 = vunpack.c.0.s8 %v854
    %v856 = vlaneseq
    %v857 = vshrl.u32 %v856, 7
    %v858 = vsub.s32 %v855, %v857
    %v859 = vrot.slane %v837, %v858
    %v861 = vunpack.c.l.s4 1966171168
    %v862 = vunpack.c.0.s8 %v861
    %v863 = vlaneseq
    %v864 = vshrl.u32 %v863, 7
    %v865 = vsub.s32 %v862, %v864
    %v866 = vrot.slane %v838, %v865
    %v867 = vcombine.high %v845, %v845
    %v868 = vcombine.high %v852, %v852
    %v869 = vcombine.high %v859, %v859
    %v870 = vcombine.high %v866, %v866
    %v871 = vcombine.low %v464, %v480
    %v872 = vcombine.high %v464, %v480
    %v874 = vunpack.c.l.s4 1966171168
    %v875 = vunpack.c.0.s8 %v874
    %v876 = vlaneseq
    %v877 = vshrl.u32 %v876, 7
    %v878 = vsub.s32 %v875, %v877
    %v879 = vrot.slane %v871, %v878
    %v881 = vunpack.c.l.s4 1966171168
    %v882 = vunpack.c.0.s8 %v881
    %v883 = vlaneseq
    %v884 = vshrl.u32 %v883, 7
    %v885 = vsub.s32 %v882, %v884
    %v886 = vrot.slane %v872, %v885
    %v887 = vcombine.high %v879, %v879
    %v888 = vcombine.high %v886, %v886
    %v890 = vunpack.c.l.s4 1966171168
    %v891 = vunpack.c.0.s8 %v890
    %v892 = vlaneseq
    %v893 = vshrl.u32 %v892, 7
    %v894 = vsub.s32 %v891, %v893
    %v895 = vrot.slane %v879, %v894
    %v897 = vunpack.c.l.s4 1966171168
    %v898 = vunpack.c.0.s8 %v897
    %v899 = vlaneseq
    %v900 = vshrl.u32 %v899, 7
    %v901 = vsub.s32 %v898, %v900
    %v902 = vrot.slane %v886, %v901
    %v904 = vunpack.c.l.s4 1966171168
    %v905 = vunpack.c.0.s8 %v904
    %v906 = vlaneseq
    %v907 = vshrl.u32 %v906, 7
    %v908 = vsub.s32 %v905, %v907
    %v909 = vrot.slane %v887, %v908
    %v911 = vunpack.c.l.s4 1966171168
    %v912 = vunpack.c.0.s8 %v911
    %v913 = vlaneseq
    %v914 = vshrl.u32 %v913, 7
    %v915 = vsub.s32 %v912, %v914
    %v916 = vrot.slane %v888, %v915
    %v917 = vcombine.high %v895, %v895
    %v918 = vcombine.high %v902, %v902
    %v919 = vcombine.high %v909, %v909
    %v920 = vcombine.low %v465, %v481
    %v921 = vcombine.high %v465, %v481
    %v923 = vunpack.c.l.s4 1966171168
    %v924 = vunpack.c.0.s8 %v923
    %v925 = vlaneseq
    %v926 = vshrl.u32 %v925, 7
    %v927 = vsub.s32 %v924, %v926
    %v928 = vrot.slane %v920, %v927
    %v930 = vunpack.c.l.s4 1966171168
    %v931 = vunpack.c.0.s8 %v930
    %v932 = vlaneseq
    %v933 = vshrl.u32 %v932, 7
    %v934 = vsub.s32 %v931, %v933
    %v935 = vrot.slane %v921, %v934
    %v936 = vcombine.high %v928, %v928
    %v937 = vcombine.high %v935, %v935
    %v939 = vunpack.c.l.s4 1966171168
    %v940 = vunpack.c.0.s8 %v939
    %v941 = vlaneseq
    %v942 = vshrl.u32 %v941, 7
    %v943 = vsub.s32 %v940, %v942
    %v944 = vrot.slane %v928, %v943
    %v946 = vunpack.c.l.s4 1966171168
    %v947 = vunpack.c.0.s8 %v946
    %v948 = vlaneseq
    %v949 = vshrl.u32 %v948, 7
    %v950 = vsub.s32 %v947, %v949
    %v951 = vrot.slane %v935, %v950
    %v953 = vunpack.c.l.s4 1966171168
    %v954 = vunpack.c.0.s8 %v953
    %v955 = vlaneseq
    %v956 = vshrl.u32 %v955, 7
    %v957 = vsub.s32 %v954, %v956
    %v958 = vrot.slane %v936, %v957
    %v960 = vunpack.c.l.s4 1966171168
    %v961 = vunpack.c.0.s8 %v960
    %v962 = vlaneseq
    %v963 = vshrl.u32 %v962, 7
    %v964 = vsub.s32 %v961, %v963
    %v965 = vrot.slane %v937, %v964
    %v966 = vcombine.high %v944, %v944
    %v967 = vcombine.high %v951, %v951
    %v968 = vcombine.high %v958, %v958
    %v969 = vcombine.high %v965, %v965
    %v970 = vcombine.low %v466, %v482
    %v971 = vcombine.high %v466, %v482
    %v973 = vunpack.c.l.s4 1966171168
    %v974 = vunpack.c.0.s8 %v973
    %v975 = vlaneseq
    %v976 = vshrl.u32 %v975, 7
    %v977 = vsub.s32 %v974, %v976
    %v978 = vrot.slane %v970, %v977
    %v980 = vunpack.c.l.s4 1966171168
    %v981 = vunpack.c.0.s8 %v980
    %v982 = vlaneseq
    %v983 = vshrl.u32 %v982, 7
    %v984 = vsub.s32 %v981, %v983
    %v985 = vrot.slane %v971, %v984
    %v986 = vcombine.high %v978, %v978
    %v987 = vcombine.high %v985, %v985
    %v989 = vunpack.c.l.s4 1966171168
    %v990 = vunpack.c.0.s8 %v989
    %v991 = vlaneseq
    %v992 = vshrl.u32 %v991, 7
    %v993 = vsub.s32 %v990, %v992
    %v994 = vrot.slane %v978, %v993
    %v996 = vunpack.c.l.s4 1966171168
    %v997 = vunpack.c.0.s8 %v996
    %v998 = vlaneseq
    %v999 = vshrl.u32 %v998, 7
    %v1000 = vsub.s32 %v997, %v999
    %v1001 = vrot.slane %v985, %v1000
    %v1003 = vunpack.c.l.s4 1966171168
    %v1004 = vunpack.c.0.s8 %v1003
    %v1005 = vlaneseq
    %v1006 = vshrl.u32 %v1005, 7
    %v1007 = vsub.s32 %v1004, %v1006
    %v1008 = vrot.slane %v986, %v1007
    %v1010 = vunpack.c.l.s4 1966171168
    %v1011 = vunpack.c.0.s8 %v1010
    %v1012 = vlaneseq
    %v1013 = vshrl.u32 %v1012, 7
    %v1014 = vsub.s32 %v1011, %v1013
    %v1015 = vrot.slane %v987, %v1014
    %v1016 = vcombine.high %v994, %v994
    %v1017 = vcombine.high %v1001, %v1001
    %v1018 = vcombine.high %v1008, %v1008
    %v1019 = vcombine.high %v1015, %v1015
    %v1020 = vcombine.low %v467, %v483
    %v1021 = vcombine.high %v467, %v483
    %v1023 = vunpack.c.l.s4 1966171168
    %v1024 = vunpack.c.0.s8 %v1023
    %v1025 = vlaneseq
    %v1026 = vshrl.u32 %v1025, 7
    %v1027 = vsub.s32 %v1024, %v1026
    %v1028 = vrot.slane %v1020, %v1027
    %v1030 = vunpack.c.l.s4 1966171168
    %v1031 = vunpack.c.0.s8 %v1030
    %v1032 = vlaneseq
    %v1033 = vshrl.u32 %v1032, 7
    %v1034 = vsub.s32 %v1031, %v1033
    %v1035 = vrot.slane %v1021, %v1034
    %v1036 = vcombine.high %v1028, %v1028
    %v1037 = vcombine.high %v1035, %v1035
    %v1039 = vunpack.c.l.s4 1966171168
    %v1040 = vunpack.c.0.s8 %v1039
    %v1041 = vlaneseq
    %v1042 = vshrl.u32 %v1041, 7
    %v1043 = vsub.s32 %v1040, %v1042
    %v1044 = vrot.slane %v1028, %v1043
    %v1046 = vunpack.c.l.s4 1966171168
    %v1047 = vunpack.c.0.s8 %v1046
    %v1048 = vlaneseq
    %v1049 = vshrl.u32 %v1048, 7
    %v1050 = vsub.s32 %v1047, %v1049
    %v1051 = vrot.slane %v1035, %v1050
    %v1053 = vunpack.c.l.s4 1966171168
    %v1054 = vunpack.c.0.s8 %v1053
    %v1055 = vlaneseq
    %v1056 = vshrl.u32 %v1055, 7
    %v1057 = vsub.s32 %v1054, %v1056
    %v1058 = vrot.slane %v1036, %v1057
    %v1060 = vunpack.c.l.s4 1966171168
    %v1061 = vunpack.c.0.s8 %v1060
    %v1062 = vlaneseq
    %v1063 = vshrl.u32 %v1062, 7
    %v1064 = vsub.s32 %v1061, %v1063
    %v1065 = vrot.slane %v1037, %v1064
    %v1066 = vcombine.high %v1044, %v1044
    %v1067 = vcombine.high %v1051, %v1051
    %v1068 = vcombine.high %v1058, %v1058
    %v1069 = vcombine.high %v1065, %v1065
    %v1070 = vcombine.low %v468, %v484
    %v1071 = vcombine.high %v468, %v484
    %v1073 = vunpack.c.l.s4 1966171168
    %v1074 = vunpack.c.0.s8 %v1073
    %v1075 = vlaneseq
    %v1076 = vshrl.u32 %v1075, 7
    %v1077 = vsub.s32 %v1074, %v1076
    %v1078 = vrot.slane %v1070, %v1077
    %v1080 = vunpack.c.l.s4 1966171168
    %v1081 = vunpack.c.0.s8 %v1080
    %v1082 = vlaneseq
    %v1083 = vshrl.u32 %v1082, 7
    %v1084 = vsub.s32 %v1081, %v1083
    %v1085 = vrot.slane %v1071, %v1084
    %v1086 = vcombine.high %v1078, %v1078
    %v1087 = vcombine.high %v1085, %v1085
    %v1089 = vunpack.c.l.s4 1966171168
    %v1090 = vunpack.c.0.s8 %v1089
    %v1091 = vlaneseq
    %v1092 = vshrl.u32 %v1091, 7
    %v1093 = vsub.s32 %v1090, %v1092
    %v1094 = vrot.slane %v1078, %v1093
    %v1096 = vunpack.c.l.s4 1966171168
    %v1097 = vunpack.c.0.s8 %v1096
    %v1098 = vlaneseq
    %v1099 = vshrl.u32 %v1098, 7
    %v1100 = vsub.s32 %v1097, %v1099
    %v1101 = vrot.slane %v1085, %v1100
    %v1103 = vunpack.c.l.s4 1966171168
    %v1104 = vunpack.c.0.s8 %v1103
    %v1105 = vlaneseq
    %v1106 = vshrl.u32 %v1105, 7
    %v1107 = vsub.s32 %v1104, %v1106
    %v1108 = vrot.slane %v1086, %v1107
    %v1110 = vunpack.c.l.s4 1966171168
    %v1111 = vunpack.c.0.s8 %v1110
    %v1112 = vlaneseq
    %v1113 = vshrl.u32 %v1112, 7
    %v1114 = vsub.s32 %v1111, %v1113
    %v1115 = vrot.slane %v1087, %v1114
    %v1116 = vcombine.high %v1094, %v1094
    %v1117 = vcombine.high %v1101, %v1101
    %v1118 = vcombine.high %v1108, %v1108
    %v1119 = vcombine.high %v1115, %v1115
    %v1120 = vcombine.low %v469, %v485
    %v1121 = vcombine.high %v469, %v485
    %v1123 = vunpack.c.l.s4 1966171168
    %v1124 = vunpack.c.0.s8 %v1123
    %v1125 = vlaneseq
    %v1126 = vshrl.u32 %v1125, 7
    %v1127 = vsub.s32 %v1124, %v1126
    %v1128 = vrot.slane %v1120, %v1127
    %v1130 = vunpack.c.l.s4 1966171168
    %v1131 = vunpack.c.0.s8 %v1130
    %v1132 = vlaneseq
    %v1133 = vshrl.u32 %v1132, 7
    %v1134 = vsub.s32 %v1131, %v1133
    %v1135 = vrot.slane %v1121, %v1134
    %v1136 = vcombine.high %v1128, %v1128
    %v1137 = vcombine.high %v1135, %v1135
    %v1139 = vunpack.c.l.s4 1966171168
    %v1140 = vunpack.c.0.s8 %v1139
    %v1141 = vlaneseq
    %v1142 = vshrl.u32 %v1141, 7
    %v1143 = vsub.s32 %v1140, %v1142
    %v1144 = vrot.slane %v1128, %v1143
    %v1146 = vunpack.c.l.s4 1966171168
    %v1147 = vunpack.c.0.s8 %v1146
    %v1148 = vlaneseq
    %v1149 = vshrl.u32 %v1148, 7
    %v1150 = vsub.s32 %v1147, %v1149
    %v1151 = vrot.slane %v1135, %v1150
    %v1153 = vunpack.c.l.s4 1966171168
    %v1154 = vunpack.c.0.s8 %v1153
    %v1155 = vlaneseq
    %v1156 = vshrl.u32 %v1155, 7
    %v1157 = vsub.s32 %v1154, %v1156
    %v1158 = vrot.slane %v1136, %v1157
    %v1160 = vunpack.c.l.s4 1966171168
    %v1161 = vunpack.c.0.s8 %v1160
    %v1162 = vlaneseq
    %v1163 = vshrl.u32 %v1162, 7
    %v1164 = vsub.s32 %v1161, %v1163
    %v1165 = vrot.slane %v1137, %v1164
    %v1166 = vcombine.high %v1144, %v1144
    %v1167 = vcombine.high %v1151, %v1151
    %v1168 = vcombine.high %v1158, %v1158
    %v1169 = vcombine.high %v1165, %v1165
    %v1170 = vcombine.low %v470, %v486
    %v1171 = vcombine.high %v470, %v486
    %v1173 = vunpack.c.l.s4 1966171168
    %v1174 = vunpack.c.0.s8 %v1173
    %v1175 = vlaneseq
    %v1176 = vshrl.u32 %v1175, 7
    %v1177 = vsub.s32 %v1174, %v1176
    %v1178 = vrot.slane %v1170, %v1177
    %v1180 = vunpack.c.l.s4 1966171168
    %v1181 = vunpack.c.0.s8 %v1180
    %v1182 = vlaneseq
    %v1183 = vshrl.u32 %v1182, 7
    %v1184 = vsub.s32 %v1181, %v1183
    %v1185 = vrot.slane %v1171, %v1184
    %v1186 = vcombine.high %v1178, %v1178
    %v1187 = vcombine.high %v1185, %v1185
    %v1189 = vunpack.c.l.s4 1966171168
    %v1190 = vunpack.c.0.s8 %v1189
    %v1191 = vlaneseq
    %v1192 = vshrl.u32 %v1191, 7
    %v1193 = vsub.s32 %v1190, %v1192
    %v1194 = vrot.slane %v1178, %v1193
    %v1196 = vunpack.c.l.s4 1966171168
    %v1197 = vunpack.c.0.s8 %v1196
    %v1198 = vlaneseq
    %v1199 = vshrl.u32 %v1198, 7
    %v1200 = vsub.s32 %v1197, %v1199
    %v1201 = vrot.slane %v1185, %v1200
    %v1203 = vunpack.c.l.s4 1966171168
    %v1204 = vunpack.c.0.s8 %v1203
    %v1205 = vlaneseq
    %v1206 = vshrl.u32 %v1205, 7
    %v1207 = vsub.s32 %v1204, %v1206
    %v1208 = vrot.slane %v1186, %v1207
    %v1210 = vunpack.c.l.s4 1966171168
    %v1211 = vunpack.c.0.s8 %v1210
    %v1212 = vlaneseq
    %v1213 = vshrl.u32 %v1212, 7
    %v1214 = vsub.s32 %v1211, %v1213
    %v1215 = vrot.slane %v1187, %v1214
    %v1216 = vcombine.high %v1194, %v1194
    %v1217 = vcombine.high %v1201, %v1201
    %v1218 = vcombine.high %v1208, %v1208
    %v1219 = vcombine.high %v1215, %v1215
    %v1220 = vcombine.low %v471, %v487
    %v1221 = vcombine.high %v471, %v487
    %v1223 = vunpack.c.l.s4 1966171168
    %v1224 = vunpack.c.0.s8 %v1223
    %v1225 = vlaneseq
    %v1226 = vshrl.u32 %v1225, 7
    %v1227 = vsub.s32 %v1224, %v1226
    %v1228 = vrot.slane %v1220, %v1227
    %v1230 = vunpack.c.l.s4 1966171168
    %v1231 = vunpack.c.0.s8 %v1230
    %v1232 = vlaneseq
    %v1233 = vshrl.u32 %v1232, 7
    %v1234 = vsub.s32 %v1231, %v1233
    %v1235 = vrot.slane %v1221, %v1234
    %v1236 = vcombine.high %v1228, %v1228
    %v1237 = vcombine.high %v1235, %v1235
    %v1239 = vunpack.c.l.s4 1966171168
    %v1240 = vunpack.c.0.s8 %v1239
    %v1241 = vlaneseq
    %v1242 = vshrl.u32 %v1241, 7
    %v1243 = vsub.s32 %v1240, %v1242
    %v1244 = vrot.slane %v1228, %v1243
    %v1246 = vunpack.c.l.s4 1966171168
    %v1247 = vunpack.c.0.s8 %v1246
    %v1248 = vlaneseq
    %v1249 = vshrl.u32 %v1248, 7
    %v1250 = vsub.s32 %v1247, %v1249
    %v1251 = vrot.slane %v1235, %v1250
    %v1253 = vunpack.c.l.s4 1966171168
    %v1254 = vunpack.c.0.s8 %v1253
    %v1255 = vlaneseq
    %v1256 = vshrl.u32 %v1255, 7
    %v1257 = vsub.s32 %v1254, %v1256
    %v1258 = vrot.slane %v1236, %v1257
    %v1260 = vunpack.c.l.s4 1966171168
    %v1261 = vunpack.c.0.s8 %v1260
    %v1262 = vlaneseq
    %v1263 = vshrl.u32 %v1262, 7
    %v1264 = vsub.s32 %v1261, %v1263
    %v1265 = vrot.slane %v1237, %v1264
    %v1266 = vcombine.high %v1244, %v1244
    %v1267 = vcombine.high %v1251, %v1251
    %v1268 = vcombine.high %v1258, %v1258
    %v1269 = vcombine.high %v1265, %v1265
    %v1270 = vcombine.low %v472, %v488
    %v1271 = vcombine.high %v472, %v488
    %v1273 = vunpack.c.l.s4 1966171168
    %v1274 = vunpack.c.0.s8 %v1273
    %v1275 = vlaneseq
    %v1276 = vshrl.u32 %v1275, 7
    %v1277 = vsub.s32 %v1274, %v1276
    %v1278 = vrot.slane %v1270, %v1277
    %v1280 = vunpack.c.l.s4 1966171168
    %v1281 = vunpack.c.0.s8 %v1280
    %v1282 = vlaneseq
    %v1283 = vshrl.u32 %v1282, 7
    %v1284 = vsub.s32 %v1281, %v1283
    %v1285 = vrot.slane %v1271, %v1284
    %v1286 = vcombine.high %v1278, %v1278
    %v1287 = vcombine.high %v1285, %v1285
    %v1289 = vunpack.c.l.s4 1966171168
    %v1290 = vunpack.c.0.s8 %v1289
    %v1291 = vlaneseq
    %v1292 = vshrl.u32 %v1291, 7
    %v1293 = vsub.s32 %v1290, %v1292
    %v1294 = vrot.slane %v1278, %v1293
    %v1296 = vunpack.c.l.s4 1966171168
    %v1297 = vunpack.c.0.s8 %v1296
    %v1298 = vlaneseq
    %v1299 = vshrl.u32 %v1298, 7
    %v1300 = vsub.s32 %v1297, %v1299
    %v1301 = vrot.slane %v1285, %v1300
    %v1303 = vunpack.c.l.s4 1966171168
    %v1304 = vunpack.c.0.s8 %v1303
    %v1305 = vlaneseq
    %v1306 = vshrl.u32 %v1305, 7
    %v1307 = vsub.s32 %v1304, %v1306
    %v1308 = vrot.slane %v1286, %v1307
    %v1310 = vunpack.c.l.s4 1966171168
    %v1311 = vunpack.c.0.s8 %v1310
    %v1312 = vlaneseq
    %v1313 = vshrl.u32 %v1312, 7
    %v1314 = vsub.s32 %v1311, %v1313
    %v1315 = vrot.slane %v1287, %v1314
    %v1316 = vcombine.high %v1294, %v1294
    %v1317 = vcombine.high %v1301, %v1301
    %v1318 = vcombine.high %v1308, %v1308
    %v1319 = vld [vmem:[%s5] sm:$0xff]
    %v1320 = vld [vmem:[%s5 + $0x8] sm:$0xff]
    %v1321 = vld [vmem:[%s5 + $0x10] sm:$0xff]
    %v1322 = vld [vmem:[%s5 + $0x18] sm:$0xff]
    %v1323 = vld [vmem:[%s5 + $0x20] sm:$0xff]
    %v1324 = vld [vmem:[%s5 + $0x28] sm:$0xff]
    %v1325 = vld [vmem:[%s5 + $0x30] sm:$0xff]
    %v1326 = vld [vmem:[%s5 + $0x38] sm:$0xff]
    %v1327 = vld [vmem:[%s5 + $0x40] sm:$0xff]
    %v1328 = vld [vmem:[%s5 + $0x48] sm:$0xff]
    %v1329 = vld [vmem:[%s5 + $0x50] sm:$0xff]
    %v1330 = vld [vmem:[%s5 + $0x58] sm:$0xff]
    %v1331 = vld [vmem:[%s5 + $0x60] sm:$0xff]
    %v1332 = vld [vmem:[%s5 + $0x68] sm:$0xff]
    %v1333 = vld [vmem:[%s5 + $0x70] sm:$0xff]
    %v1334 = vld [vmem:[%s5 + $0x78] sm:$0xff]
    %v1335 = vld [vmem:[%s5 + $0x80] sm:$0xff]
    %v1336 = vld [vmem:[%s5 + $0x88] sm:$0xff]
    %v1337 = vld [vmem:[%s5 + $0x90] sm:$0xff]
    %v1338 = vld [vmem:[%s5 + $0x98] sm:$0xff]
    %v1339 = vld [vmem:[%s5 + $0xa0] sm:$0xff]
    %v1340 = vld [vmem:[%s5 + $0xa8] sm:$0xff]
    %v1341 = vld [vmem:[%s5 + $0xb0] sm:$0xff]
    %v1342 = vld [vmem:[%s5 + $0xb8] sm:$0xff]
    %v1343 = vld [vmem:[%s5 + $0xc0] sm:$0xff]
    %v1344 = vld [vmem:[%s5 + $0xc8] sm:$0xff]
    %v1345 = vld [vmem:[%s5 + $0xd0] sm:$0xff]
    %v1346 = vld [vmem:[%s5 + $0xd8] sm:$0xff]
    %v1347 = vld [vmem:[%s5 + $0xe0] sm:$0xff]
    %v1348 = vld [vmem:[%s5 + $0xe8] sm:$0xff]
    %v1349 = vld [vmem:[%s5 + $0xf0] sm:$0xff]
    %v1350 = vld [vmem:[%s5 + $0xf8] sm:$0xff]
    %v1351 = vcombine.low %v545, %v559
    %v1352 = vcombine.low %v567, %v569
    %v1353 = vcombine.low %v552, %v566
    %v1354 = vcombine.low %v568, %v570
    %v1356 = vunpack.c.l.s4 1966171168
    %v1357 = vunpack.c.0.s8 %v1356
    %v1358 = vlaneseq
    %v1359 = vshrl.u32 %v1358, 7
    %v1360 = vsub.s32 %v1357, %v1359
    %v1361 = vrot.slane %v1351, %v1360
    %v1363 = vunpack.c.l.s4 1966171168
    %v1364 = vunpack.c.0.s8 %v1363
    %v1365 = vlaneseq
    %v1366 = vshrl.u32 %v1365, 7
    %v1367 = vsub.s32 %v1364, %v1366
    %v1368 = vrot.slane %v1352, %v1367
    %v1370 = vunpack.c.l.s4 1966171168
    %v1371 = vunpack.c.0.s8 %v1370
    %v1372 = vlaneseq
    %v1373 = vshrl.u32 %v1372, 7
    %v1374 = vsub.s32 %v1371, %v1373
    %v1375 = vrot.slane %v1353, %v1374
    %v1377 = vunpack.c.l.s4 1966171168
    %v1378 = vunpack.c.0.s8 %v1377
    %v1379 = vlaneseq
    %v1380 = vshrl.u32 %v1379, 7
    %v1381 = vsub.s32 %v1378, %v1380
    %v1382 = vrot.slane %v1354, %v1381
    %v1383 = vcombine.low %v1361, %v1368
    %v1384 = vcombine.high %v1361, %v1368
    %v1385 = vcombine.low %v1375, %v1382
    %v1386 = vcombine.high %v1375, %v1382
    %v1388 = vunpack.c.l.s4 1966171168
    %v1389 = vunpack.c.0.s8 %v1388
    %v1390 = vlaneseq
    %v1391 = vshrl.u32 %v1390, 7
    %v1392 = vsub.s32 %v1389, %v1391
    %v1393 = vrot.slane %v1383, %v1392
    %v1395 = vunpack.c.l.s4 1966171168
    %v1396 = vunpack.c.0.s8 %v1395
    %v1397 = vlaneseq
    %v1398 = vshrl.u32 %v1397, 7
    %v1399 = vsub.s32 %v1396, %v1398
    %v1400 = vrot.slane %v1384, %v1399
    %v1402 = vunpack.c.l.s4 1966171168
    %v1403 = vunpack.c.0.s8 %v1402
    %v1404 = vlaneseq
    %v1405 = vshrl.u32 %v1404, 7
    %v1406 = vsub.s32 %v1403, %v1405
    %v1407 = vrot.slane %v1385, %v1406
    %v1409 = vunpack.c.l.s4 1966171168
    %v1410 = vunpack.c.0.s8 %v1409
    %v1411 = vlaneseq
    %v1412 = vshrl.u32 %v1411, 7
    %v1413 = vsub.s32 %v1410, %v1412
    %v1414 = vrot.slane %v1386, %v1413
    %v1415 = vcombine.low %v1393, %v1407
    %v1416 = vcombine.low %v1400, %v1414
    %v1417 = vcombine.low %v595, %v609
    %v1418 = vcombine.low %v617, %v619
    %v1419 = vcombine.low %v602, %v616
    %v1420 = vcombine.low %v618, %v620
    %v1422 = vunpack.c.l.s4 1966171168
    %v1423 = vunpack.c.0.s8 %v1422
    %v1424 = vlaneseq
    %v1425 = vshrl.u32 %v1424, 7
    %v1426 = vsub.s32 %v1423, %v1425
    %v1427 = vrot.slane %v1417, %v1426
    %v1429 = vunpack.c.l.s4 1966171168
    %v1430 = vunpack.c.0.s8 %v1429
    %v1431 = vlaneseq
    %v1432 = vshrl.u32 %v1431, 7
    %v1433 = vsub.s32 %v1430, %v1432
    %v1434 = vrot.slane %v1418, %v1433
    %v1436 = vunpack.c.l.s4 1966171168
    %v1437 = vunpack.c.0.s8 %v1436
    %v1438 = vlaneseq
    %v1439 = vshrl.u32 %v1438, 7
    %v1440 = vsub.s32 %v1437, %v1439
    %v1441 = vrot.slane %v1419, %v1440
    %v1443 = vunpack.c.l.s4 1966171168
    %v1444 = vunpack.c.0.s8 %v1443
    %v1445 = vlaneseq
    %v1446 = vshrl.u32 %v1445, 7
    %v1447 = vsub.s32 %v1444, %v1446
    %v1448 = vrot.slane %v1420, %v1447
    %v1449 = vcombine.low %v1427, %v1434
    %v1450 = vcombine.high %v1427, %v1434
    %v1451 = vcombine.low %v1441, %v1448
    %v1452 = vcombine.high %v1441, %v1448
    %v1454 = vunpack.c.l.s4 1966171168
    %v1455 = vunpack.c.0.s8 %v1454
    %v1456 = vlaneseq
    %v1457 = vshrl.u32 %v1456, 7
    %v1458 = vsub.s32 %v1455, %v1457
    %v1459 = vrot.slane %v1449, %v1458
    %v1461 = vunpack.c.l.s4 1966171168
    %v1462 = vunpack.c.0.s8 %v1461
    %v1463 = vlaneseq
    %v1464 = vshrl.u32 %v1463, 7
    %v1465 = vsub.s32 %v1462, %v1464
    %v1466 = vrot.slane %v1450, %v1465
    %v1468 = vunpack.c.l.s4 1966171168
    %v1469 = vunpack.c.0.s8 %v1468
    %v1470 = vlaneseq
    %v1471 = vshrl.u32 %v1470, 7
    %v1472 = vsub.s32 %v1469, %v1471
    %v1473 = vrot.slane %v1451, %v1472
    %v1475 = vunpack.c.l.s4 1966171168
    %v1476 = vunpack.c.0.s8 %v1475
    %v1477 = vlaneseq
    %v1478 = vshrl.u32 %v1477, 7
    %v1479 = vsub.s32 %v1476, %v1478
    %v1480 = vrot.slane %v1452, %v1479
    %v1481 = vcombine.low %v1459, %v1473
    %v1482 = vcombine.low %v1466, %v1480
    %v1483 = vcombine.low %v645, %v659
    %v1484 = vcombine.low %v667, %v669
    %v1485 = vcombine.low %v652, %v666
    %v1486 = vcombine.low %v668, %v670
    %v1488 = vunpack.c.l.s4 1966171168
    %v1489 = vunpack.c.0.s8 %v1488
    %v1490 = vlaneseq
    %v1491 = vshrl.u32 %v1490, 7
    %v1492 = vsub.s32 %v1489, %v1491
    %v1493 = vrot.slane %v1483, %v1492
    %v1495 = vunpack.c.l.s4 1966171168
    %v1496 = vunpack.c.0.s8 %v1495
    %v1497 = vlaneseq
    %v1498 = vshrl.u32 %v1497, 7
    %v1499 = vsub.s32 %v1496, %v1498
    %v1500 = vrot.slane %v1484, %v1499
    %v1502 = vunpack.c.l.s4 1966171168
    %v1503 = vunpack.c.0.s8 %v1502
    %v1504 = vlaneseq
    %v1505 = vshrl.u32 %v1504, 7
    %v1506 = vsub.s32 %v1503, %v1505
    %v1507 = vrot.slane %v1485, %v1506
    %v1509 = vunpack.c.l.s4 1966171168
    %v1510 = vunpack.c.0.s8 %v1509
    %v1511 = vlaneseq
    %v1512 = vshrl.u32 %v1511, 7
    %v1513 = vsub.s32 %v1510, %v1512
    %v1514 = vrot.slane %v1486, %v1513
    %v1515 = vcombine.low %v1493, %v1500
    %v1516 = vcombine.high %v1493, %v1500
    %v1517 = vcombine.low %v1507, %v1514
    %v1518 = vcombine.high %v1507, %v1514
    %v1520 = vunpack.c.l.s4 1966171168
    %v1521 = vunpack.c.0.s8 %v1520
    %v1522 = vlaneseq
    %v1523 = vshrl.u32 %v1522, 7
    %v1524 = vsub.s32 %v1521, %v1523
    %v1525 = vrot.slane %v1515, %v1524
    %v1527 = vunpack.c.l.s4 1966171168
    %v1528 = vunpack.c.0.s8 %v1527
    %v1529 = vlaneseq
    %v1530 = vshrl.u32 %v1529, 7
    %v1531 = vsub.s32 %v1528, %v1530
    %v1532 = vrot.slane %v1516, %v1531
    %v1534 = vunpack.c.l.s4 1966171168
    %v1535 = vunpack.c.0.s8 %v1534
    %v1536 = vlaneseq
    %v1537 = vshrl.u32 %v1536, 7
    %v1538 = vsub.s32 %v1535, %v1537
    %v1539 = vrot.slane %v1517, %v1538
    %v1541 = vunpack.c.l.s4 1966171168
    %v1542 = vunpack.c.0.s8 %v1541
    %v1543 = vlaneseq
    %v1544 = vshrl.u32 %v1543, 7
    %v1545 = vsub.s32 %v1542, %v1544
    %v1546 = vrot.slane %v1518, %v1545
    %v1547 = vcombine.low %v1525, %v1539
    %v1548 = vcombine.low %v1532, %v1546
    %v1549 = vcombine.low %v695, %v709
    %v1550 = vcombine.low %v717, %v719
    %v1551 = vcombine.low %v702, %v716
    %v1552 = vcombine.low %v718, %v720
    %v1554 = vunpack.c.l.s4 1966171168
    %v1555 = vunpack.c.0.s8 %v1554
    %v1556 = vlaneseq
    %v1557 = vshrl.u32 %v1556, 7
    %v1558 = vsub.s32 %v1555, %v1557
    %v1559 = vrot.slane %v1549, %v1558
    %v1561 = vunpack.c.l.s4 1966171168
    %v1562 = vunpack.c.0.s8 %v1561
    %v1563 = vlaneseq
    %v1564 = vshrl.u32 %v1563, 7
    %v1565 = vsub.s32 %v1562, %v1564
    %v1566 = vrot.slane %v1550, %v1565
    %v1568 = vunpack.c.l.s4 1966171168
    %v1569 = vunpack.c.0.s8 %v1568
    %v1570 = vlaneseq
    %v1571 = vshrl.u32 %v1570, 7
    %v1572 = vsub.s32 %v1569, %v1571
    %v1573 = vrot.slane %v1551, %v1572
    %v1575 = vunpack.c.l.s4 1966171168
    %v1576 = vunpack.c.0.s8 %v1575
    %v1577 = vlaneseq
    %v1578 = vshrl.u32 %v1577, 7
    %v1579 = vsub.s32 %v1576, %v1578
    %v1580 = vrot.slane %v1552, %v1579
    %v1581 = vcombine.low %v1559, %v1566
    %v1582 = vcombine.high %v1559, %v1566
    %v1583 = vcombine.low %v1573, %v1580
    %v1584 = vcombine.high %v1573, %v1580
    %v1586 = vunpack.c.l.s4 1966171168
    %v1587 = vunpack.c.0.s8 %v1586
    %v1588 = vlaneseq
    %v1589 = vshrl.u32 %v1588, 7
    %v1590 = vsub.s32 %v1587, %v1589
    %v1591 = vrot.slane %v1581, %v1590
    %v1593 = vunpack.c.l.s4 1966171168
    %v1594 = vunpack.c.0.s8 %v1593
    %v1595 = vlaneseq
    %v1596 = vshrl.u32 %v1595, 7
    %v1597 = vsub.s32 %v1594, %v1596
    %v1598 = vrot.slane %v1582, %v1597
    %v1600 = vunpack.c.l.s4 1966171168
    %v1601 = vunpack.c.0.s8 %v1600
    %v1602 = vlaneseq
    %v1603 = vshrl.u32 %v1602, 7
    %v1604 = vsub.s32 %v1601, %v1603
    %v1605 = vrot.slane %v1583, %v1604
    %v1607 = vunpack.c.l.s4 1966171168
    %v1608 = vunpack.c.0.s8 %v1607
    %v1609 = vlaneseq
    %v1610 = vshrl.u32 %v1609, 7
    %v1611 = vsub.s32 %v1608, %v1610
    %v1612 = vrot.slane %v1584, %v1611
    %v1613 = vcombine.low %v1591, %v1605
    %v1614 = vcombine.low %v1598, %v1612
    %v1615 = vcombine.low %v745, %v759
    %v1616 = vcombine.low %v767, %v769
    %v1617 = vcombine.low %v752, %v766
    %v1618 = vcombine.low %v768, %v770
    %v1620 = vunpack.c.l.s4 1966171168
    %v1621 = vunpack.c.0.s8 %v1620
    %v1622 = vlaneseq
    %v1623 = vshrl.u32 %v1622, 7
    %v1624 = vsub.s32 %v1621, %v1623
    %v1625 = vrot.slane %v1615, %v1624
    %v1627 = vunpack.c.l.s4 1966171168
    %v1628 = vunpack.c.0.s8 %v1627
    %v1629 = vlaneseq
    %v1630 = vshrl.u32 %v1629, 7
    %v1631 = vsub.s32 %v1628, %v1630
    %v1632 = vrot.slane %v1616, %v1631
    %v1634 = vunpack.c.l.s4 1966171168
    %v1635 = vunpack.c.0.s8 %v1634
    %v1636 = vlaneseq
    %v1637 = vshrl.u32 %v1636, 7
    %v1638 = vsub.s32 %v1635, %v1637
    %v1639 = vrot.slane %v1617, %v1638
    %v1641 = vunpack.c.l.s4 1966171168
    %v1642 = vunpack.c.0.s8 %v1641
    %v1643 = vlaneseq
    %v1644 = vshrl.u32 %v1643, 7
    %v1645 = vsub.s32 %v1642, %v1644
    %v1646 = vrot.slane %v1618, %v1645
    %v1647 = vcombine.low %v1625, %v1632
    %v1648 = vcombine.high %v1625, %v1632
    %v1649 = vcombine.low %v1639, %v1646
    %v1650 = vcombine.high %v1639, %v1646
    %v1652 = vunpack.c.l.s4 1966171168
    %v1653 = vunpack.c.0.s8 %v1652
    %v1654 = vlaneseq
    %v1655 = vshrl.u32 %v1654, 7
    %v1656 = vsub.s32 %v1653, %v1655
    %v1657 = vrot.slane %v1647, %v1656
    %v1659 = vunpack.c.l.s4 1966171168
    %v1660 = vunpack.c.0.s8 %v1659
    %v1661 = vlaneseq
    %v1662 = vshrl.u32 %v1661, 7
    %v1663 = vsub.s32 %v1660, %v1662
    %v1664 = vrot.slane %v1648, %v1663
    %v1666 = vunpack.c.l.s4 1966171168
    %v1667 = vunpack.c.0.s8 %v1666
    %v1668 = vlaneseq
    %v1669 = vshrl.u32 %v1668, 7
    %v1670 = vsub.s32 %v1667, %v1669
    %v1671 = vrot.slane %v1649, %v1670
    %v1673 = vunpack.c.l.s4 1966171168
    %v1674 = vunpack.c.0.s8 %v1673
    %v1675 = vlaneseq
    %v1676 = vshrl.u32 %v1675, 7
    %v1677 = vsub.s32 %v1674, %v1676
    %v1678 = vrot.slane %v1650, %v1677
    %v1679 = vcombine.low %v1657, %v1671
    %v1680 = vcombine.low %v1664, %v1678
    %v1681 = vcombine.low %v795, %v809
    %v1682 = vcombine.low %v817, %v819
    %v1683 = vcombine.low %v802, %v816
    %v1684 = vcombine.low %v818, %v820
    %v1686 = vunpack.c.l.s4 1966171168
    %v1687 = vunpack.c.0.s8 %v1686
    %v1688 = vlaneseq
    %v1689 = vshrl.u32 %v1688, 7
    %v1690 = vsub.s32 %v1687, %v1689
    %v1691 = vrot.slane %v1681, %v1690
    %v1693 = vunpack.c.l.s4 1966171168
    %v1694 = vunpack.c.0.s8 %v1693
    %v1695 = vlaneseq
    %v1696 = vshrl.u32 %v1695, 7
    %v1697 = vsub.s32 %v1694, %v1696
    %v1698 = vrot.slane %v1682, %v1697
    %v1700 = vunpack.c.l.s4 1966171168
    %v1701 = vunpack.c.0.s8 %v1700
    %v1702 = vlaneseq
    %v1703 = vshrl.u32 %v1702, 7
    %v1704 = vsub.s32 %v1701, %v1703
    %v1705 = vrot.slane %v1683, %v1704
    %v1707 = vunpack.c.l.s4 1966171168
    %v1708 = vunpack.c.0.s8 %v1707
    %v1709 = vlaneseq
    %v1710 = vshrl.u32 %v1709, 7
    %v1711 = vsub.s32 %v1708, %v1710
    %v1712 = vrot.slane %v1684, %v1711
    %v1713 = vcombine.low %v1691, %v1698
    %v1714 = vcombine.high %v1691, %v1698
    %v1715 = vcombine.low %v1705, %v1712
    %v1716 = vcombine.high %v1705, %v1712
    %v1718 = vunpack.c.l.s4 1966171168
    %v1719 = vunpack.c.0.s8 %v1718
    %v1720 = vlaneseq
    %v1721 = vshrl.u32 %v1720, 7
    %v1722 = vsub.s32 %v1719, %v1721
    %v1723 = vrot.slane %v1713, %v1722
    %v1725 = vunpack.c.l.s4 1966171168
    %v1726 = vunpack.c.0.s8 %v1725
    %v1727 = vlaneseq
    %v1728 = vshrl.u32 %v1727, 7
    %v1729 = vsub.s32 %v1726, %v1728
    %v1730 = vrot.slane %v1714, %v1729
    %v1732 = vunpack.c.l.s4 1966171168
    %v1733 = vunpack.c.0.s8 %v1732
    %v1734 = vlaneseq
    %v1735 = vshrl.u32 %v1734, 7
    %v1736 = vsub.s32 %v1733, %v1735
    %v1737 = vrot.slane %v1715, %v1736
    %v1739 = vunpack.c.l.s4 1966171168
    %v1740 = vunpack.c.0.s8 %v1739
    %v1741 = vlaneseq
    %v1742 = vshrl.u32 %v1741, 7
    %v1743 = vsub.s32 %v1740, %v1742
    %v1744 = vrot.slane %v1716, %v1743
    %v1745 = vcombine.low %v1723, %v1737
    %v1746 = vcombine.low %v1730, %v1744
    %v1747 = vcombine.low %v845, %v859
    %v1748 = vcombine.low %v867, %v869
    %v1749 = vcombine.low %v852, %v866
    %v1750 = vcombine.low %v868, %v870
    %v1752 = vunpack.c.l.s4 1966171168
    %v1753 = vunpack.c.0.s8 %v1752
    %v1754 = vlaneseq
    %v1755 = vshrl.u32 %v1754, 7
    %v1756 = vsub.s32 %v1753, %v1755
    %v1757 = vrot.slane %v1747, %v1756
    %v1759 = vunpack.c.l.s4 1966171168
    %v1760 = vunpack.c.0.s8 %v1759
    %v1761 = vlaneseq
    %v1762 = vshrl.u32 %v1761, 7
    %v1763 = vsub.s32 %v1760, %v1762
    %v1764 = vrot.slane %v1748, %v1763
    %v1766 = vunpack.c.l.s4 1966171168
    %v1767 = vunpack.c.0.s8 %v1766
    %v1768 = vlaneseq
    %v1769 = vshrl.u32 %v1768, 7
    %v1770 = vsub.s32 %v1767, %v1769
    %v1771 = vrot.slane %v1749, %v1770
    %v1773 = vunpack.c.l.s4 1966171168
    %v1774 = vunpack.c.0.s8 %v1773
    %v1775 = vlaneseq
    %v1776 = vshrl.u32 %v1775, 7
    %v1777 = vsub.s32 %v1774, %v1776
    %v1778 = vrot.slane %v1750, %v1777
    %v1779 = vcombine.low %v1757, %v1764
    %v1780 = vcombine.high %v1757, %v1764
    %v1781 = vcombine.low %v1771, %v1778
    %v1782 = vcombine.high %v1771, %v1778
    %v1784 = vunpack.c.l.s4 1966171168
    %v1785 = vunpack.c.0.s8 %v1784
    %v1786 = vlaneseq
    %v1787 = vshrl.u32 %v1786, 7
    %v1788 = vsub.s32 %v1785, %v1787
    %v1789 = vrot.slane %v1779, %v1788
    %v1791 = vunpack.c.l.s4 1966171168
    %v1792 = vunpack.c.0.s8 %v1791
    %v1793 = vlaneseq
    %v1794 = vshrl.u32 %v1793, 7
    %v1795 = vsub.s32 %v1792, %v1794
    %v1796 = vrot.slane %v1780, %v1795
    %v1798 = vunpack.c.l.s4 1966171168
    %v1799 = vunpack.c.0.s8 %v1798
    %v1800 = vlaneseq
    %v1801 = vshrl.u32 %v1800, 7
    %v1802 = vsub.s32 %v1799, %v1801
    %v1803 = vrot.slane %v1781, %v1802
    %v1805 = vunpack.c.l.s4 1966171168
    %v1806 = vunpack.c.0.s8 %v1805
    %v1807 = vlaneseq
    %v1808 = vshrl.u32 %v1807, 7
    %v1809 = vsub.s32 %v1806, %v1808
    %v1810 = vrot.slane %v1782, %v1809
    %v1811 = vcombine.low %v1789, %v1803
    %v1812 = vcombine.low %v1796, %v1810
    %v1813 = vcombine.low %v895, %v909
    %v1814 = vcombine.low %v917, %v919
    %v1815 = vcombine.low %v902, %v916
    %v1816 = vcombine.low %v918, %v944
    %v1818 = vunpack.c.l.s4 1966171168
    %v1819 = vunpack.c.0.s8 %v1818
    %v1820 = vlaneseq
    %v1821 = vshrl.u32 %v1820, 7
    %v1822 = vsub.s32 %v1819, %v1821
    %v1823 = vrot.slane %v1813, %v1822
    %v1825 = vunpack.c.l.s4 1966171168
    %v1826 = vunpack.c.0.s8 %v1825
    %v1827 = vlaneseq
    %v1828 = vshrl.u32 %v1827, 7
    %v1829 = vsub.s32 %v1826, %v1828
    %v1830 = vrot.slane %v1814, %v1829
    %v1832 = vunpack.c.l.s4 1966171168
    %v1833 = vunpack.c.0.s8 %v1832
    %v1834 = vlaneseq
    %v1835 = vshrl.u32 %v1834, 7
    %v1836 = vsub.s32 %v1833, %v1835
    %v1837 = vrot.slane %v1815, %v1836
    %v1839 = vunpack.c.l.s4 1966171168
    %v1840 = vunpack.c.0.s8 %v1839
    %v1841 = vlaneseq
    %v1842 = vshrl.u32 %v1841, 7
    %v1843 = vsub.s32 %v1840, %v1842
    %v1844 = vrot.slane %v1816, %v1843
    %v1845 = vcombine.low %v1823, %v1830
    %v1846 = vcombine.high %v1823, %v1830
    %v1847 = vcombine.low %v1837, %v1844
    %v1848 = vcombine.high %v1837, %v1844
    %v1850 = vunpack.c.l.s4 1966171168
    %v1851 = vunpack.c.0.s8 %v1850
    %v1852 = vlaneseq
    %v1853 = vshrl.u32 %v1852, 7
    %v1854 = vsub.s32 %v1851, %v1853
    %v1855 = vrot.slane %v1845, %v1854
    %v1857 = vunpack.c.l.s4 1966171168
    %v1858 = vunpack.c.0.s8 %v1857
    %v1859 = vlaneseq
    %v1860 = vshrl.u32 %v1859, 7
    %v1861 = vsub.s32 %v1858, %v1860
    %v1862 = vrot.slane %v1846, %v1861
    %v1864 = vunpack.c.l.s4 1966171168
    %v1865 = vunpack.c.0.s8 %v1864
    %v1866 = vlaneseq
    %v1867 = vshrl.u32 %v1866, 7
    %v1868 = vsub.s32 %v1865, %v1867
    %v1869 = vrot.slane %v1847, %v1868
    %v1871 = vunpack.c.l.s4 1966171168
    %v1872 = vunpack.c.0.s8 %v1871
    %v1873 = vlaneseq
    %v1874 = vshrl.u32 %v1873, 7
    %v1875 = vsub.s32 %v1872, %v1874
    %v1876 = vrot.slane %v1848, %v1875
    %v1877 = vcombine.low %v1855, %v1869
    %v1878 = vcombine.low %v1862, %v1876
    %v1879 = vcombine.low %v958, %v966
    %v1880 = vcombine.low %v968, %v951
    %v1881 = vcombine.low %v965, %v967
    %v1882 = vcombine.low %v969, %v994
    %v1884 = vunpack.c.l.s4 1966171168
    %v1885 = vunpack.c.0.s8 %v1884
    %v1886 = vlaneseq
    %v1887 = vshrl.u32 %v1886, 7
    %v1888 = vsub.s32 %v1885, %v1887
    %v1889 = vrot.slane %v1879, %v1888
    %v1891 = vunpack.c.l.s4 1966171168
    %v1892 = vunpack.c.0.s8 %v1891
    %v1893 = vlaneseq
    %v1894 = vshrl.u32 %v1893, 7
    %v1895 = vsub.s32 %v1892, %v1894
    %v1896 = vrot.slane %v1880, %v1895
    %v1898 = vunpack.c.l.s4 1966171168
    %v1899 = vunpack.c.0.s8 %v1898
    %v1900 = vlaneseq
    %v1901 = vshrl.u32 %v1900, 7
    %v1902 = vsub.s32 %v1899, %v1901
    %v1903 = vrot.slane %v1881, %v1902
    %v1905 = vunpack.c.l.s4 1966171168
    %v1906 = vunpack.c.0.s8 %v1905
    %v1907 = vlaneseq
    %v1908 = vshrl.u32 %v1907, 7
    %v1909 = vsub.s32 %v1906, %v1908
    %v1910 = vrot.slane %v1882, %v1909
    %v1911 = vcombine.low %v1889, %v1896
    %v1912 = vcombine.high %v1889, %v1896
    %v1913 = vcombine.low %v1903, %v1910
    %v1914 = vcombine.high %v1903, %v1910
    %v1916 = vunpack.c.l.s4 1966171168
    %v1917 = vunpack.c.0.s8 %v1916
    %v1918 = vlaneseq
    %v1919 = vshrl.u32 %v1918, 7
    %v1920 = vsub.s32 %v1917, %v1919
    %v1921 = vrot.slane %v1911, %v1920
    %v1923 = vunpack.c.l.s4 1966171168
    %v1924 = vunpack.c.0.s8 %v1923
    %v1925 = vlaneseq
    %v1926 = vshrl.u32 %v1925, 7
    %v1927 = vsub.s32 %v1924, %v1926
    %v1928 = vrot.slane %v1912, %v1927
    %v1930 = vunpack.c.l.s4 1966171168
    %v1931 = vunpack.c.0.s8 %v1930
    %v1932 = vlaneseq
    %v1933 = vshrl.u32 %v1932, 7
    %v1934 = vsub.s32 %v1931, %v1933
    %v1935 = vrot.slane %v1913, %v1934
    %v1937 = vunpack.c.l.s4 1966171168
    %v1938 = vunpack.c.0.s8 %v1937
    %v1939 = vlaneseq
    %v1940 = vshrl.u32 %v1939, 7
    %v1941 = vsub.s32 %v1938, %v1940
    %v1942 = vrot.slane %v1914, %v1941
    %v1943 = vcombine.low %v1921, %v1935
    %v1944 = vcombine.low %v1928, %v1942
    %v1945 = vcombine.low %v1008, %v1016
    %v1946 = vcombine.low %v1018, %v1001
    %v1947 = vcombine.low %v1015, %v1017
    %v1948 = vcombine.low %v1019, %v1044
    %v1950 = vunpack.c.l.s4 1966171168
    %v1951 = vunpack.c.0.s8 %v1950
    %v1952 = vlaneseq
    %v1953 = vshrl.u32 %v1952, 7
    %v1954 = vsub.s32 %v1951, %v1953
    %v1955 = vrot.slane %v1945, %v1954
    %v1957 = vunpack.c.l.s4 1966171168
    %v1958 = vunpack.c.0.s8 %v1957
    %v1959 = vlaneseq
    %v1960 = vshrl.u32 %v1959, 7
    %v1961 = vsub.s32 %v1958, %v1960
    %v1962 = vrot.slane %v1946, %v1961
    %v1964 = vunpack.c.l.s4 1966171168
    %v1965 = vunpack.c.0.s8 %v1964
    %v1966 = vlaneseq
    %v1967 = vshrl.u32 %v1966, 7
    %v1968 = vsub.s32 %v1965, %v1967
    %v1969 = vrot.slane %v1947, %v1968
    %v1971 = vunpack.c.l.s4 1966171168
    %v1972 = vunpack.c.0.s8 %v1971
    %v1973 = vlaneseq
    %v1974 = vshrl.u32 %v1973, 7
    %v1975 = vsub.s32 %v1972, %v1974
    %v1976 = vrot.slane %v1948, %v1975
    %v1977 = vcombine.low %v1955, %v1962
    %v1978 = vcombine.high %v1955, %v1962
    %v1979 = vcombine.low %v1969, %v1976
    %v1980 = vcombine.high %v1969, %v1976
    %v1982 = vunpack.c.l.s4 1966171168
    %v1983 = vunpack.c.0.s8 %v1982
    %v1984 = vlaneseq
    %v1985 = vshrl.u32 %v1984, 7
    %v1986 = vsub.s32 %v1983, %v1985
    %v1987 = vrot.slane %v1977, %v1986
    %v1989 = vunpack.c.l.s4 1966171168
    %v1990 = vunpack.c.0.s8 %v1989
    %v1991 = vlaneseq
    %v1992 = vshrl.u32 %v1991, 7
    %v1993 = vsub.s32 %v1990, %v1992
    %v1994 = vrot.slane %v1978, %v1993
    %v1996 = vunpack.c.l.s4 1966171168
    %v1997 = vunpack.c.0.s8 %v1996
    %v1998 = vlaneseq
    %v1999 = vshrl.u32 %v1998, 7
    %v2000 = vsub.s32 %v1997, %v1999
    %v2001 = vrot.slane %v1979, %v2000
    %v2003 = vunpack.c.l.s4 1966171168
    %v2004 = vunpack.c.0.s8 %v2003
    %v2005 = vlaneseq
    %v2006 = vshrl.u32 %v2005, 7
    %v2007 = vsub.s32 %v2004, %v2006
    %v2008 = vrot.slane %v1980, %v2007
    %v2009 = vcombine.low %v1987, %v2001
    %v2010 = vcombine.low %v1994, %v2008
    %v2011 = vcombine.low %v1058, %v1066
    %v2012 = vcombine.low %v1068, %v1051
    %v2013 = vcombine.low %v1065, %v1067
    %v2014 = vcombine.low %v1069, %v1094
    %v2016 = vunpack.c.l.s4 1966171168
    %v2017 = vunpack.c.0.s8 %v2016
    %v2018 = vlaneseq
    %v2019 = vshrl.u32 %v2018, 7
    %v2020 = vsub.s32 %v2017, %v2019
    %v2021 = vrot.slane %v2011, %v2020
    %v2023 = vunpack.c.l.s4 1966171168
    %v2024 = vunpack.c.0.s8 %v2023
    %v2025 = vlaneseq
    %v2026 = vshrl.u32 %v2025, 7
    %v2027 = vsub.s32 %v2024, %v2026
    %v2028 = vrot.slane %v2012, %v2027
    %v2030 = vunpack.c.l.s4 1966171168
    %v2031 = vunpack.c.0.s8 %v2030
    %v2032 = vlaneseq
    %v2033 = vshrl.u32 %v2032, 7
    %v2034 = vsub.s32 %v2031, %v2033
    %v2035 = vrot.slane %v2013, %v2034
    %v2037 = vunpack.c.l.s4 1966171168
    %v2038 = vunpack.c.0.s8 %v2037
    %v2039 = vlaneseq
    %v2040 = vshrl.u32 %v2039, 7
    %v2041 = vsub.s32 %v2038, %v2040
    %v2042 = vrot.slane %v2014, %v2041
    %v2043 = vcombine.low %v2021, %v2028
    %v2044 = vcombine.high %v2021, %v2028
    %v2045 = vcombine.low %v2035, %v2042
    %v2046 = vcombine.high %v2035, %v2042
    %v2048 = vunpack.c.l.s4 1966171168
    %v2049 = vunpack.c.0.s8 %v2048
    %v2050 = vlaneseq
    %v2051 = vshrl.u32 %v2050, 7
    %v2052 = vsub.s32 %v2049, %v2051
    %v2053 = vrot.slane %v2043, %v2052
    %v2055 = vunpack.c.l.s4 1966171168
    %v2056 = vunpack.c.0.s8 %v2055
    %v2057 = vlaneseq
    %v2058 = vshrl.u32 %v2057, 7
    %v2059 = vsub.s32 %v2056, %v2058
    %v2060 = vrot.slane %v2044, %v2059
    %v2062 = vunpack.c.l.s4 1966171168
    %v2063 = vunpack.c.0.s8 %v2062
    %v2064 = vlaneseq
    %v2065 = vshrl.u32 %v2064, 7
    %v2066 = vsub.s32 %v2063, %v2065
    %v2067 = vrot.slane %v2045, %v2066
    %v2069 = vunpack.c.l.s4 1966171168
    %v2070 = vunpack.c.0.s8 %v2069
    %v2071 = vlaneseq
    %v2072 = vshrl.u32 %v2071, 7
    %v2073 = vsub.s32 %v2070, %v2072
    %v2074 = vrot.slane %v2046, %v2073
    %v2075 = vcombine.low %v2053, %v2067
    %v2076 = vcombine.low %v2060, %v2074
    %v2077 = vcombine.low %v1108, %v1116
    %v2078 = vcombine.low %v1118, %v1101
    %v2079 = vcombine.low %v1115, %v1117
    %v2080 = vcombine.low %v1119, %v1144
    %v2082 = vunpack.c.l.s4 1966171168
    %v2083 = vunpack.c.0.s8 %v2082
    %v2084 = vlaneseq
    %v2085 = vshrl.u32 %v2084, 7
    %v2086 = vsub.s32 %v2083, %v2085
    %v2087 = vrot.slane %v2077, %v2086
    %v2089 = vunpack.c.l.s4 1966171168
    %v2090 = vunpack.c.0.s8 %v2089
    %v2091 = vlaneseq
    %v2092 = vshrl.u32 %v2091, 7
    %v2093 = vsub.s32 %v2090, %v2092
    %v2094 = vrot.slane %v2078, %v2093
    %v2096 = vunpack.c.l.s4 1966171168
    %v2097 = vunpack.c.0.s8 %v2096
    %v2098 = vlaneseq
    %v2099 = vshrl.u32 %v2098, 7
    %v2100 = vsub.s32 %v2097, %v2099
    %v2101 = vrot.slane %v2079, %v2100
    %v2103 = vunpack.c.l.s4 1966171168
    %v2104 = vunpack.c.0.s8 %v2103
    %v2105 = vlaneseq
    %v2106 = vshrl.u32 %v2105, 7
    %v2107 = vsub.s32 %v2104, %v2106
    %v2108 = vrot.slane %v2080, %v2107
    %v2109 = vcombine.low %v2087, %v2094
    %v2110 = vcombine.high %v2087, %v2094
    %v2111 = vcombine.low %v2101, %v2108
    %v2112 = vcombine.high %v2101, %v2108
    %v2114 = vunpack.c.l.s4 1966171168
    %v2115 = vunpack.c.0.s8 %v2114
    %v2116 = vlaneseq
    %v2117 = vshrl.u32 %v2116, 7
    %v2118 = vsub.s32 %v2115, %v2117
    %v2119 = vrot.slane %v2109, %v2118
    %v2121 = vunpack.c.l.s4 1966171168
    %v2122 = vunpack.c.0.s8 %v2121
    %v2123 = vlaneseq
    %v2124 = vshrl.u32 %v2123, 7
    %v2125 = vsub.s32 %v2122, %v2124
    %v2126 = vrot.slane %v2110, %v2125
    %v2128 = vunpack.c.l.s4 1966171168
    %v2129 = vunpack.c.0.s8 %v2128
    %v2130 = vlaneseq
    %v2131 = vshrl.u32 %v2130, 7
    %v2132 = vsub.s32 %v2129, %v2131
    %v2133 = vrot.slane %v2111, %v2132
    %v2135 = vunpack.c.l.s4 1966171168
    %v2136 = vunpack.c.0.s8 %v2135
    %v2137 = vlaneseq
    %v2138 = vshrl.u32 %v2137, 7
    %v2139 = vsub.s32 %v2136, %v2138
    %v2140 = vrot.slane %v2112, %v2139
    %v2141 = vcombine.low %v2119, %v2133
    %v2142 = vcombine.low %v2126, %v2140
    %v2143 = vcombine.low %v1158, %v1166
    %v2144 = vcombine.low %v1168, %v1151
    %v2145 = vcombine.low %v1165, %v1167
    %v2146 = vcombine.low %v1169, %v1194
    %v2148 = vunpack.c.l.s4 1966171168
    %v2149 = vunpack.c.0.s8 %v2148
    %v2150 = vlaneseq
    %v2151 = vshrl.u32 %v2150, 7
    %v2152 = vsub.s32 %v2149, %v2151
    %v2153 = vrot.slane %v2143, %v2152
    %v2155 = vunpack.c.l.s4 1966171168
    %v2156 = vunpack.c.0.s8 %v2155
    %v2157 = vlaneseq
    %v2158 = vshrl.u32 %v2157, 7
    %v2159 = vsub.s32 %v2156, %v2158
    %v2160 = vrot.slane %v2144, %v2159
    %v2162 = vunpack.c.l.s4 1966171168
    %v2163 = vunpack.c.0.s8 %v2162
    %v2164 = vlaneseq
    %v2165 = vshrl.u32 %v2164, 7
    %v2166 = vsub.s32 %v2163, %v2165
    %v2167 = vrot.slane %v2145, %v2166
    %v2169 = vunpack.c.l.s4 1966171168
    %v2170 = vunpack.c.0.s8 %v2169
    %v2171 = vlaneseq
    %v2172 = vshrl.u32 %v2171, 7
    %v2173 = vsub.s32 %v2170, %v2172
    %v2174 = vrot.slane %v2146, %v2173
    %v2175 = vcombine.low %v2153, %v2160
    %v2176 = vcombine.high %v2153, %v2160
    %v2177 = vcombine.low %v2167, %v2174
    %v2178 = vcombine.high %v2167, %v2174
    %v2180 = vunpack.c.l.s4 1966171168
    %v2181 = vunpack.c.0.s8 %v2180
    %v2182 = vlaneseq
    %v2183 = vshrl.u32 %v2182, 7
    %v2184 = vsub.s32 %v2181, %v2183
    %v2185 = vrot.slane %v2175, %v2184
    %v2187 = vunpack.c.l.s4 1966171168
    %v2188 = vunpack.c.0.s8 %v2187
    %v2189 = vlaneseq
    %v2190 = vshrl.u32 %v2189, 7
    %v2191 = vsub.s32 %v2188, %v2190
    %v2192 = vrot.slane %v2176, %v2191
    %v2194 = vunpack.c.l.s4 1966171168
    %v2195 = vunpack.c.0.s8 %v2194
    %v2196 = vlaneseq
    %v2197 = vshrl.u32 %v2196, 7
    %v2198 = vsub.s32 %v2195, %v2197
    %v2199 = vrot.slane %v2177, %v2198
    %v2201 = vunpack.c.l.s4 1966171168
    %v2202 = vunpack.c.0.s8 %v2201
    %v2203 = vlaneseq
    %v2204 = vshrl.u32 %v2203, 7
    %v2205 = vsub.s32 %v2202, %v2204
    %v2206 = vrot.slane %v2178, %v2205
    %v2207 = vcombine.low %v2185, %v2199
    %v2208 = vcombine.low %v2192, %v2206
    %v2209 = vcombine.low %v1208, %v1216
    %v2210 = vcombine.low %v1218, %v1201
    %v2211 = vcombine.low %v1215, %v1217
    %v2212 = vcombine.low %v1219, %v1244
    %v2214 = vunpack.c.l.s4 1966171168
    %v2215 = vunpack.c.0.s8 %v2214
    %v2216 = vlaneseq
    %v2217 = vshrl.u32 %v2216, 7
    %v2218 = vsub.s32 %v2215, %v2217
    %v2219 = vrot.slane %v2209, %v2218
    %v2221 = vunpack.c.l.s4 1966171168
    %v2222 = vunpack.c.0.s8 %v2221
    %v2223 = vlaneseq
    %v2224 = vshrl.u32 %v2223, 7
    %v2225 = vsub.s32 %v2222, %v2224
    %v2226 = vrot.slane %v2210, %v2225
    %v2228 = vunpack.c.l.s4 1966171168
    %v2229 = vunpack.c.0.s8 %v2228
    %v2230 = vlaneseq
    %v2231 = vshrl.u32 %v2230, 7
    %v2232 = vsub.s32 %v2229, %v2231
    %v2233 = vrot.slane %v2211, %v2232
    %v2235 = vunpack.c.l.s4 1966171168
    %v2236 = vunpack.c.0.s8 %v2235
    %v2237 = vlaneseq
    %v2238 = vshrl.u32 %v2237, 7
    %v2239 = vsub.s32 %v2236, %v2238
    %v2240 = vrot.slane %v2212, %v2239
    %v2241 = vcombine.low %v2219, %v2226
    %v2242 = vcombine.high %v2219, %v2226
    %v2243 = vcombine.low %v2233, %v2240
    %v2244 = vcombine.high %v2233, %v2240
    %v2246 = vunpack.c.l.s4 1966171168
    %v2247 = vunpack.c.0.s8 %v2246
    %v2248 = vlaneseq
    %v2249 = vshrl.u32 %v2248, 7
    %v2250 = vsub.s32 %v2247, %v2249
    %v2251 = vrot.slane %v2241, %v2250
    %v2253 = vunpack.c.l.s4 1966171168
    %v2254 = vunpack.c.0.s8 %v2253
    %v2255 = vlaneseq
    %v2256 = vshrl.u32 %v2255, 7
    %v2257 = vsub.s32 %v2254, %v2256
    %v2258 = vrot.slane %v2242, %v2257
    %v2260 = vunpack.c.l.s4 1966171168
    %v2261 = vunpack.c.0.s8 %v2260
    %v2262 = vlaneseq
    %v2263 = vshrl.u32 %v2262, 7
    %v2264 = vsub.s32 %v2261, %v2263
    %v2265 = vrot.slane %v2243, %v2264
    %v2267 = vunpack.c.l.s4 1966171168
    %v2268 = vunpack.c.0.s8 %v2267
    %v2269 = vlaneseq
    %v2270 = vshrl.u32 %v2269, 7
    %v2271 = vsub.s32 %v2268, %v2270
    %v2272 = vrot.slane %v2244, %v2271
    %v2273 = vcombine.low %v2251, %v2265
    %v2274 = vcombine.low %v2258, %v2272
    %v2275 = vcombine.low %v1258, %v1266
    %v2276 = vcombine.low %v1268, %v1251
    %v2277 = vcombine.low %v1265, %v1267
    %v2278 = vcombine.low %v1269, %v1294
    %v2280 = vunpack.c.l.s4 1966171168
    %v2281 = vunpack.c.0.s8 %v2280
    %v2282 = vlaneseq
    %v2283 = vshrl.u32 %v2282, 7
    %v2284 = vsub.s32 %v2281, %v2283
    %v2285 = vrot.slane %v2275, %v2284
    %v2287 = vunpack.c.l.s4 1966171168
    %v2288 = vunpack.c.0.s8 %v2287
    %v2289 = vlaneseq
    %v2290 = vshrl.u32 %v2289, 7
    %v2291 = vsub.s32 %v2288, %v2290
    %v2292 = vrot.slane %v2276, %v2291
    %v2294 = vunpack.c.l.s4 1966171168
    %v2295 = vunpack.c.0.s8 %v2294
    %v2296 = vlaneseq
    %v2297 = vshrl.u32 %v2296, 7
    %v2298 = vsub.s32 %v2295, %v2297
    %v2299 = vrot.slane %v2277, %v2298
    %v2301 = vunpack.c.l.s4 1966171168
    %v2302 = vunpack.c.0.s8 %v2301
    %v2303 = vlaneseq
    %v2304 = vshrl.u32 %v2303, 7
    %v2305 = vsub.s32 %v2302, %v2304
    %v2306 = vrot.slane %v2278, %v2305
    %v2307 = vcombine.low %v2285, %v2292
    %v2308 = vcombine.high %v2285, %v2292
    %v2309 = vcombine.low %v2299, %v2306
    %v2310 = vcombine.high %v2299, %v2306
    %v2312 = vunpack.c.l.s4 1966171168
    %v2313 = vunpack.c.0.s8 %v2312
    %v2314 = vlaneseq
    %v2315 = vshrl.u32 %v2314, 7
    %v2316 = vsub.s32 %v2313, %v2315
    %v2317 = vrot.slane %v2307, %v2316
    %v2319 = vunpack.c.l.s4 1966171168
    %v2320 = vunpack.c.0.s8 %v2319
    %v2321 = vlaneseq
    %v2322 = vshrl.u32 %v2321, 7
    %v2323 = vsub.s32 %v2320, %v2322
    %v2324 = vrot.slane %v2308, %v2323
    %v2326 = vunpack.c.l.s4 1966171168
    %v2327 = vunpack.c.0.s8 %v2326
    %v2328 = vlaneseq
    %v2329 = vshrl.u32 %v2328, 7
    %v2330 = vsub.s32 %v2327, %v2329
    %v2331 = vrot.slane %v2309, %v2330
    %v2333 = vunpack.c.l.s4 1966171168
    %v2334 = vunpack.c.0.s8 %v2333
    %v2335 = vlaneseq
    %v2336 = vshrl.u32 %v2335, 7
    %v2337 = vsub.s32 %v2334, %v2336
    %v2338 = vrot.slane %v2310, %v2337
    %v2339 = vcombine.low %v2317, %v2331
    %v2340 = vcombine.low %v2324, %v2338
    %v2341 = vcombine.low %v1308, %v1316
    %v2342 = vcombine.low %v1318, %v1301
    %v2343 = vcombine.low %v1315, %v1317
    %v2345 = vunpack.c.l.s4 1966171168
    %v2346 = vunpack.c.0.s8 %v2345
    %v2347 = vlaneseq
    %v2348 = vshrl.u32 %v2347, 7
    %v2349 = vsub.s32 %v2346, %v2348
    %v2350 = vrot.slane %v2341, %v2349
    %v2352 = vunpack.c.l.s4 1966171168
    %v2353 = vunpack.c.0.s8 %v2352
    %v2354 = vlaneseq
    %v2355 = vshrl.u32 %v2354, 7
    %v2356 = vsub.s32 %v2353, %v2355
    %v2357 = vrot.slane %v2342, %v2356
    %v2359 = vunpack.c.l.s4 1966171168
    %v2360 = vunpack.c.0.s8 %v2359
    %v2361 = vlaneseq
    %v2362 = vshrl.u32 %v2361, 7
    %v2363 = vsub.s32 %v2360, %v2362
    %v2364 = vrot.slane %v2343, %v2363
    %v2365 = vcombine.low %v2350, %v2357
    %v2366 = vcombine.high %v2350, %v2357
    %v2367 = vcombine.high %v2364, %v2364
    %v2369 = vunpack.c.l.s4 1966171168
    %v2370 = vunpack.c.0.s8 %v2369
    %v2371 = vlaneseq
    %v2372 = vshrl.u32 %v2371, 7
    %v2373 = vsub.s32 %v2370, %v2372
    %v2374 = vrot.slane %v2365, %v2373
    %v2376 = vunpack.c.l.s4 1966171168
    %v2377 = vunpack.c.0.s8 %v2376
    %v2378 = vlaneseq
    %v2379 = vshrl.u32 %v2378, 7
    %v2380 = vsub.s32 %v2377, %v2379
    %v2381 = vrot.slane %v2366, %v2380
    %v2383 = vunpack.c.l.s4 1966171168
    %v2384 = vunpack.c.0.s8 %v2383
    %v2385 = vlaneseq
    %v2386 = vshrl.u32 %v2385, 7
    %v2387 = vsub.s32 %v2384, %v2386
    %v2388 = vrot.slane %v2364, %v2387
    %v2390 = vunpack.c.l.s4 1966171168
    %v2391 = vunpack.c.0.s8 %v2390
    %v2392 = vlaneseq
    %v2393 = vshrl.u32 %v2392, 7
    %v2394 = vsub.s32 %v2391, %v2393
    %v2395 = vrot.slane %v2367, %v2394
    %v2396 = vcombine.low %v2374, %v2388
    %v2397 = vcombine.low %v2381, %v2395
    %2430 = vmatprep.subr.mxu0 0.0
    %2431 = vmatpush1.msra.mxu0 %v1319
    %2432 = vmatprep.subr.mxu0 0.0
    %2433 = vmatpush1.msra.mxu0 %v1320
    %2434 = vmatprep.subr.mxu0 0.0
    %2435 = vmatpush1.msra.mxu0 %v1321
    %2436 = vmatprep.subr.mxu0 0.0
    %2437 = vmatpush1.msra.mxu0 %v1322
    %2438 = vmatprep.subr.mxu0 0.0
    %2439 = vmatpush1.msra.mxu0 %v1323
    %2440 = vmatprep.subr.mxu0 0.0
    %2441 = vmatpush1.msra.mxu0 %v1324
    %2442 = vmatprep.subr.mxu0 0.0
    %2443 = vmatpush1.msra.mxu0 %v1325
    %2444 = vmatprep.subr.mxu0 0.0
    %2445 = vmatpush1.msra.mxu0 %v1326
    %2446 = vmatprep.subr.mxu0 0.0
    %2447 = vmatpush1.msra.mxu0 %v1327
    %2448 = vmatprep.subr.mxu0 0.0
    %2449 = vmatpush1.msra.mxu0 %v1328
    %2450 = vmatprep.subr.mxu0 0.0
    %2451 = vmatpush1.msra.mxu0 %v1329
    %2452 = vmatprep.subr.mxu0 0.0
    %2453 = vmatpush1.msra.mxu0 %v1330
    %2454 = vmatprep.subr.mxu0 0.0
    %2455 = vmatpush1.msra.mxu0 %v1331
    %2456 = vmatprep.subr.mxu0 0.0
    %2457 = vmatpush1.msra.mxu0 %v1332
    %2458 = vmatprep.subr.mxu0 0.0
    %2459 = vmatpush1.msra.mxu0 %v1333
    %2460 = vmatprep.subr.mxu0 0.0
    %2461 = vmatpush1.msra.mxu0 %v1334
    %2462 = vmatprep.subr.mxu0 0.0
    %2463 = vmatpush1.msra.mxu0 %v1335
    %2464 = vmatprep.subr.mxu0 0.0
    %2465 = vmatpush1.msra.mxu0 %v1336
    %2466 = vmatprep.subr.mxu0 0.0
    %2467 = vmatpush1.msra.mxu0 %v1337
    %2468 = vmatprep.subr.mxu0 0.0
    %2469 = vmatpush1.msra.mxu0 %v1338
    %2470 = vmatprep.subr.mxu0 0.0
    %2471 = vmatpush1.msra.mxu0 %v1339
    %2472 = vmatprep.subr.mxu0 0.0
    %2473 = vmatpush1.msra.mxu0 %v1340
    %2474 = vmatprep.subr.mxu0 0.0
    %2475 = vmatpush1.msra.mxu0 %v1341
    %2476 = vmatprep.subr.mxu0 0.0
    %2477 = vmatpush1.msra.mxu0 %v1342
    %2478 = vmatprep.subr.mxu0 0.0
    %2479 = vmatpush1.msra.mxu0 %v1343
    %2480 = vmatprep.subr.mxu0 0.0
    %2481 = vmatpush1.msra.mxu0 %v1344
    %2482 = vmatprep.subr.mxu0 0.0
    %2483 = vmatpush1.msra.mxu0 %v1345
    %2484 = vmatprep.subr.mxu0 0.0
    %2485 = vmatpush1.msra.mxu0 %v1346
    %2486 = vmatprep.subr.mxu0 0.0
    %2487 = vmatpush1.msra.mxu0 %v1347
    %2488 = vmatprep.subr.mxu0 0.0
    %2489 = vmatpush1.msra.mxu0 %v1348
    %2490 = vmatprep.subr.mxu0 0.0
    %2491 = vmatpush1.msra.mxu0 %v1349
    %2492 = vmatprep.subr.mxu0 0.0
    %2493 = vmatpush1.msra.mxu0 %v1350
    %2494 = vmatprep.mubr.f32.mxu0 %v1416
    %2495 = vmatmul.mubr.f32.gmra.mrb[0].mxu0 %v1415
    %v2496 = vpop.f32.mrb[0].mxu0
    %v2497 = vadd.f32 0.0, %v2496
    %v2498 = vpop.f32.mrb[0].mxu0
    %2499 = vmatprep.mubr.f32.mxu0 %v1482
    %2500 = vmatmul.mubr.f32.gmra.mrb[0].mxu0 %v1481
    %v2501 = vpop.f32.mrb[0].mxu0
    %v2502 = vadd.f32 0.0, %v2501
    %v2503 = vpop.f32.mrb[0].mxu0
    %2504 = vmatprep.mubr.f32.mxu0 %v1548
    %2505 = vmatmul.mubr.f32.gmra.mrb[0].mxu0 %v1547
    %v2506 = vpop.f32.mrb[0].mxu0
    %v2507 = vadd.f32 0.0, %v2506
    %v2508 = vpop.f32.mrb[0].mxu0
    %2509 = vmatprep.mubr.f32.mxu0 %v1614
    %2510 = vmatmul.mubr.f32.gmra.mrb[0].mxu0 %v1613
    %v2511 = vpop.f32.mrb[0].mxu0
    %v2512 = vadd.f32 0.0, %v2511
    %v2513 = vpop.f32.mrb[0].mxu0
    %2514 = vmatprep.mubr.f32.mxu0 %v1680
    %2515 = vmatmul.mubr.f32.gmra.mrb[0].mxu0 %v1679
    %v2516 = vpop.f32.mrb[0].mxu0
    %v2517 = vadd.f32 0.0, %v2516
    %v2518 = vpop.f32.mrb[0].mxu0
    %2519 = vmatprep.mubr.f32.mxu0 %v1746
    %2520 = vmatmul.mubr.f32.gmra.mrb[0].mxu0 %v1745
    %v2521 = vpop.f32.mrb[0].mxu0
    %v2522 = vadd.f32 0.0, %v2521
    %v2523 = vpop.f32.mrb[0].mxu0
    %2524 = vmatprep.mubr.f32.mxu0 %v1812
    %2525 = vmatmul.mubr.f32.gmra.mrb[0].mxu0 %v1811
    %v2526 = vpop.f32.mrb[0].mxu0
    %v2527 = vadd.f32 0.0, %v2526
    %v2528 = vpop.f32.mrb[0].mxu0
    %2529 = vmatprep.mubr.f32.mxu0 %v1878
    %2530 = vmatmul.mubr.f32.gmra.mrb[0].mxu0 %v1877
    %v2531 = vpop.f32.mrb[0].mxu0
    %v2532 = vadd.f32 0.0, %v2531
    %v2533 = vpop.f32.mrb[0].mxu0
    %2534 = vmatprep.mubr.f32.mxu0 %v1944
    %2535 = vmatmul.mubr.f32.gmra.mrb[0].mxu0 %v1943
    %v2536 = vpop.f32.mrb[0].mxu0
    %v2537 = vadd.f32 0.0, %v2536
    %v2538 = vpop.f32.mrb[0].mxu0
    %2539 = vmatprep.mubr.f32.mxu0 %v2010
    %2540 = vmatmul.mubr.f32.gmra.mrb[0].mxu0 %v2009
    %v2541 = vpop.f32.mrb[0].mxu0
    %v2542 = vadd.f32 0.0, %v2541
    %v2543 = vpop.f32.mrb[0].mxu0
    %2544 = vmatprep.mubr.f32.mxu0 %v2076
    %2545 = vmatmul.mubr.f32.gmra.mrb[0].mxu0 %v2075
    %v2546 = vpop.f32.mrb[0].mxu0
    %v2547 = vadd.f32 0.0, %v2546
    %v2548 = vpop.f32.mrb[0].mxu0
    %2549 = vmatprep.mubr.f32.mxu0 %v2142
    %2550 = vmatmul.mubr.f32.gmra.mrb[0].mxu0 %v2141
    %v2551 = vpop.f32.mrb[0].mxu0
    %v2552 = vadd.f32 0.0, %v2551
    %v2553 = vpop.f32.mrb[0].mxu0
    %2554 = vmatprep.mubr.f32.mxu0 %v2208
    %2555 = vmatmul.mubr.f32.gmra.mrb[0].mxu0 %v2207
    %v2556 = vpop.f32.mrb[0].mxu0
    %v2557 = vadd.f32 0.0, %v2556
    %v2558 = vpop.f32.mrb[0].mxu0
    %2559 = vmatprep.mubr.f32.mxu0 %v2274
    %2560 = vmatmul.mubr.f32.gmra.mrb[0].mxu0 %v2273
    %v2561 = vpop.f32.mrb[0].mxu0
    %v2562 = vadd.f32 0.0, %v2561
    %v2563 = vpop.f32.mrb[0].mxu0
    %2564 = vmatprep.mubr.f32.mxu0 %v2340
    %2565 = vmatmul.mubr.f32.gmra.mrb[0].mxu0 %v2339
    %v2566 = vpop.f32.mrb[0].mxu0
    %v2567 = vadd.f32 0.0, %v2566
    %v2568 = vpop.f32.mrb[0].mxu0
    %2569 = vmatprep.mubr.f32.mxu0 %v2397
    %2570 = vmatmul.mubr.f32.gmra.mrb[0].mxu0 %v2396
    %v2571 = vpop.f32.mrb[0].mxu0
    %v2572 = vadd.f32 0.0, %v2571
    %v2573 = vpop.f32.mrb[0].mxu0
    %2574 = vdwg.mxu0
    %v2575 = vld [vmem:[%s6] sm:$0x1]
    %v2577 = vlaneseq
    %v2578 = vshrl.u32 %v2577, 7
    %v2579 = vsub.s32 0, %v2578
    %v2580 = vrot.slane %v2575, %v2579
    %v2582 = vmul.f32 %v2497, %v2580
    %v2583 = vmul.f32 %v2502, %v2580
    %v2584 = vmul.f32 %v2507, %v2580
    %v2585 = vmul.f32 %v2512, %v2580
    %v2586 = vmul.f32 %v2517, %v2580
    %v2587 = vmul.f32 %v2522, %v2580
    %v2588 = vmul.f32 %v2527, %v2580
    %v2589 = vmul.f32 %v2532, %v2580
    %v2590 = vmul.f32 %v2537, %v2580
    %v2591 = vmul.f32 %v2542, %v2580
    %v2592 = vmul.f32 %v2547, %v2580
    %v2593 = vmul.f32 %v2552, %v2580
    %v2594 = vmul.f32 %v2557, %v2580
    %v2595 = vmul.f32 %v2562, %v2580
    %v2596 = vmul.f32 %v2567, %v2580
    %v2597 = vmul.f32 %v2572, %v2580
    %v2598 = vld [vmem:[%s7] sm:$0x1]
    %v2600 = vlaneseq
    %v2601 = vshrl.u32 %v2600, 7
    %v2602 = vsub.s32 0, %v2601
    %v2603 = vrot.slane %v2598, %v2602
    %v2605 = vadd.f32 %v2582, %v2603
    %v2606 = vadd.f32 %v2583, %v2603
    %v2607 = vadd.f32 %v2584, %v2603
    %v2608 = vadd.f32 %v2585, %v2603
    %v2609 = vadd.f32 %v2586, %v2603
    %v2610 = vadd.f32 %v2587, %v2603
    %v2611 = vadd.f32 %v2588, %v2603
    %v2612 = vadd.f32 %v2589, %v2603
    %v2613 = vadd.f32 %v2590, %v2603
    %v2614 = vadd.f32 %v2591, %v2603
    %v2615 = vadd.f32 %v2592, %v2603
    %v2616 = vadd.f32 %v2593, %v2603
    %v2617 = vadd.f32 %v2594, %v2603
    %v2618 = vadd.f32 %v2595, %v2603
    %v2619 = vadd.f32 %v2596, %v2603
    %v2620 = vadd.f32 %v2597, %v2603
    %v2621 = vmax.f32 %v2605, 0.0
    %v2622 = vmax.f32 %v2606, 0.0
    %v2623 = vmax.f32 %v2607, 0.0
    %v2624 = vmax.f32 %v2608, 0.0
    %v2625 = vmax.f32 %v2609, 0.0
    %v2626 = vmax.f32 %v2610, 0.0
    %v2627 = vmax.f32 %v2611, 0.0
    %v2628 = vmax.f32 %v2612, 0.0
    %v2629 = vmax.f32 %v2613, 0.0
    %v2630 = vmax.f32 %v2614, 0.0
    %v2631 = vmax.f32 %v2615, 0.0
    %v2632 = vmax.f32 %v2616, 0.0
    %v2633 = vmax.f32 %v2617, 0.0
    %v2634 = vmax.f32 %v2618, 0.0
    %v2635 = vmax.f32 %v2619, 0.0
    %v2636 = vmax.f32 %v2620, 0.0
    %2653 = vrot.lane.b32.xlu0 %v2621, 64
    %v2654 = vpop.permute.xlu0 %2653
    %2655 = vrot.lane.b32.xlu0 %v2622, 64
    %v2656 = vpop.permute.xlu0 %2655
    %2657 = vrot.lane.b32.xlu0 %v2623, 64
    %v2658 = vpop.permute.xlu0 %2657
    %2659 = vrot.lane.b32.xlu0 %v2624, 64
    %v2660 = vpop.permute.xlu0 %2659
    %2661 = vrot.lane.b32.xlu0 %v2625, 64
    %v2662 = vpop.permute.xlu0 %2661
    %2663 = vrot.lane.b32.xlu0 %v2626, 64
    %v2664 = vpop.permute.xlu0 %2663
    %2665 = vrot.lane.b32.xlu0 %v2627, 64
    %v2666 = vpop.permute.xlu0 %2665
    %2667 = vrot.lane.b32.xlu0 %v2628, 64
    %v2668 = vpop.permute.xlu0 %2667
    %2669 = vrot.lane.b32.xlu0 %v2629, 64
    %v2670 = vpop.permute.xlu0 %2669
    %2671 = vrot.lane.b32.xlu0 %v2630, 64
    %v2672 = vpop.permute.xlu0 %2671
    %2673 = vrot.lane.b32.xlu0 %v2631, 64
    %v2674 = vpop.permute.xlu0 %2673
    %2675 = vrot.lane.b32.xlu0 %v2632, 64
    %v2676 = vpop.permute.xlu0 %2675
    %2677 = vrot.lane.b32.xlu0 %v2633, 64
    %v2678 = vpop.permute.xlu0 %2677
    %2679 = vrot.lane.b32.xlu0 %v2634, 64
    %v2680 = vpop.permute.xlu0 %2679
    %2681 = vrot.lane.b32.xlu0 %v2635, 64
    %v2682 = vpop.permute.xlu0 %2681
    %2683 = vrot.lane.b32.xlu0 %v2636, 64
    %v2684 = vpop.permute.xlu0 %2683
    %v2701 = vadd.f32 %v2621, %v2654
    %v2702 = vadd.f32 %v2622, %v2656
    %v2703 = vadd.f32 %v2623, %v2658
    %v2704 = vadd.f32 %v2624, %v2660
    %v2705 = vadd.f32 %v2625, %v2662
    %v2706 = vadd.f32 %v2626, %v2664
    %v2707 = vadd.f32 %v2627, %v2666
    %v2708 = vadd.f32 %v2628, %v2668
    %v2709 = vadd.f32 %v2629, %v2670
    %v2710 = vadd.f32 %v2630, %v2672
    %v2711 = vadd.f32 %v2631, %v2674
    %v2712 = vadd.f32 %v2632, %v2676
    %v2713 = vadd.f32 %v2633, %v2678
    %v2714 = vadd.f32 %v2634, %v2680
    %v2715 = vadd.f32 %v2635, %v2682
    %v2716 = vadd.f32 %v2636, %v2684
    %v2717 = vmul.f32 %v2701, 0.5
    %v2718 = vmul.f32 %v2702, 0.5
    %v2719 = vmul.f32 %v2703, 0.5
    %v2720 = vmul.f32 %v2704, 0.5
    %v2721 = vmul.f32 %v2705, 0.5
    %v2722 = vmul.f32 %v2706, 0.5
    %v2723 = vmul.f32 %v2707, 0.5
    %v2724 = vmul.f32 %v2708, 0.5
    %v2725 = vmul.f32 %v2709, 0.5
    %v2726 = vmul.f32 %v2710, 0.5
    %v2727 = vmul.f32 %v2711, 0.5
    %v2728 = vmul.f32 %v2712, 0.5
    %v2729 = vmul.f32 %v2713, 0.5
    %v2730 = vmul.f32 %v2714, 0.5
    %v2731 = vmul.f32 %v2715, 0.5
    %v2732 = vmul.f32 %v2716, 0.5
    %vm2733 = vcmask 517120
    %2734 = vst.msk [vmem:[#allocation3 + $0x6] sm:$0x3] %vm2733, 0.0
    %2735 = vst.msk [vmem:[#allocation3 + $0x56] sm:$0x3] %vm2733, 0.0
    %2736 = vst.msk [vmem:[#allocation3 + $0x47] sm:$0x3] %vm2733, 0.0
    %2737 = vst.msk [vmem:[#allocation3 + $0x97] sm:$0x3] %vm2733, 0.0
    %v2754 = vcombine.high %v2717, %v2717
    %v2756 = vunpack.c.l.s4 1966171168
    %v2757 = vunpack.c.0.s8 %v2756
    %v2758 = vlaneseq
    %v2759 = vshrl.u32 %v2758, 7
    %v2760 = vsub.s32 %v2757, %v2759
    %v2761 = vrot.slane %v2717, %v2760
    %v2763 = vunpack.c.l.s4 1966171168
    %v2764 = vunpack.c.0.s8 %v2763
    %v2765 = vlaneseq
    %v2766 = vshrl.u32 %v2765, 7
    %v2767 = vsub.s32 %v2764, %v2766
    %v2768 = vrot.slane %v2754, %v2767
    %v2769 = vcombine.high %v2761, %v2761
    %v2770 = vcombine.high %v2768, %v2768
    %v2772 = vunpack.c.l.s4 1966171168
    %v2773 = vunpack.c.0.s8 %v2772
    %v2774 = vlaneseq
    %v2775 = vshrl.u32 %v2774, 7
    %v2776 = vsub.s32 %v2773, %v2775
    %v2777 = vrot.slane %v2761, %v2776
    %v2779 = vunpack.c.l.s4 1966171168
    %v2780 = vunpack.c.0.s8 %v2779
    %v2781 = vlaneseq
    %v2782 = vshrl.u32 %v2781, 7
    %v2783 = vsub.s32 %v2780, %v2782
    %v2784 = vrot.slane %v2768, %v2783
    %v2786 = vunpack.c.l.s4 1966171168
    %v2787 = vunpack.c.0.s8 %v2786
    %v2788 = vlaneseq
    %v2789 = vshrl.u32 %v2788, 7
    %v2790 = vsub.s32 %v2787, %v2789
    %v2791 = vrot.slane %v2769, %v2790
    %v2793 = vunpack.c.l.s4 1966171168
    %v2794 = vunpack.c.0.s8 %v2793
    %v2795 = vlaneseq
    %v2796 = vshrl.u32 %v2795, 7
    %v2797 = vsub.s32 %v2794, %v2796
    %v2798 = vrot.slane %v2770, %v2797
    %v2799 = vcombine.high %v2777, %v2777
    %v2800 = vcombine.high %v2784, %v2784
    %v2801 = vcombine.high %v2791, %v2791
    %v2802 = vcombine.high %v2798, %v2798
    %v2803 = vcombine.high %v2718, %v2718
    %v2805 = vunpack.c.l.s4 1966171168
    %v2806 = vunpack.c.0.s8 %v2805
    %v2807 = vlaneseq
    %v2808 = vshrl.u32 %v2807, 7
    %v2809 = vsub.s32 %v2806, %v2808
    %v2810 = vrot.slane %v2718, %v2809
    %v2812 = vunpack.c.l.s4 1966171168
    %v2813 = vunpack.c.0.s8 %v2812
    %v2814 = vlaneseq
    %v2815 = vshrl.u32 %v2814, 7
    %v2816 = vsub.s32 %v2813, %v2815
    %v2817 = vrot.slane %v2803, %v2816
    %v2818 = vcombine.high %v2810, %v2810
    %v2819 = vcombine.high %v2817, %v2817
    %v2821 = vunpack.c.l.s4 1966171168
    %v2822 = vunpack.c.0.s8 %v2821
    %v2823 = vlaneseq
    %v2824 = vshrl.u32 %v2823, 7
    %v2825 = vsub.s32 %v2822, %v2824
    %v2826 = vrot.slane %v2810, %v2825
    %v2828 = vunpack.c.l.s4 1966171168
    %v2829 = vunpack.c.0.s8 %v2828
    %v2830 = vlaneseq
    %v2831 = vshrl.u32 %v2830, 7
    %v2832 = vsub.s32 %v2829, %v2831
    %v2833 = vrot.slane %v2817, %v2832
    %v2835 = vunpack.c.l.s4 1966171168
    %v2836 = vunpack.c.0.s8 %v2835
    %v2837 = vlaneseq
    %v2838 = vshrl.u32 %v2837, 7
    %v2839 = vsub.s32 %v2836, %v2838
    %v2840 = vrot.slane %v2818, %v2839
    %v2842 = vunpack.c.l.s4 1966171168
    %v2843 = vunpack.c.0.s8 %v2842
    %v2844 = vlaneseq
    %v2845 = vshrl.u32 %v2844, 7
    %v2846 = vsub.s32 %v2843, %v2845
    %v2847 = vrot.slane %v2819, %v2846
    %v2848 = vcombine.high %v2826, %v2826
    %v2849 = vcombine.high %v2833, %v2833
    %v2850 = vcombine.high %v2840, %v2840
    %v2851 = vcombine.high %v2847, %v2847
    %v2852 = vcombine.high %v2719, %v2719
    %v2854 = vunpack.c.l.s4 1966171168
    %v2855 = vunpack.c.0.s8 %v2854
    %v2856 = vlaneseq
    %v2857 = vshrl.u32 %v2856, 7
    %v2858 = vsub.s32 %v2855, %v2857
    %v2859 = vrot.slane %v2719, %v2858
    %v2861 = vunpack.c.l.s4 1966171168
    %v2862 = vunpack.c.0.s8 %v2861
    %v2863 = vlaneseq
    %v2864 = vshrl.u32 %v2863, 7
    %v2865 = vsub.s32 %v2862, %v2864
    %v2866 = vrot.slane %v2852, %v2865
    %v2867 = vcombine.high %v2859, %v2859
    %v2868 = vcombine.high %v2866, %v2866
    %v2870 = vunpack.c.l.s4 1966171168
    %v2871 = vunpack.c.0.s8 %v2870
    %v2872 = vlaneseq
    %v2873 = vshrl.u32 %v2872, 7
    %v2874 = vsub.s32 %v2871, %v2873
    %v2875 = vrot.slane %v2859, %v2874
    %v2877 = vunpack.c.l.s4 1966171168
    %v2878 = vunpack.c.0.s8 %v2877
    %v2879 = vlaneseq
    %v2880 = vshrl.u32 %v2879, 7
    %v2881 = vsub.s32 %v2878, %v2880
    %v2882 = vrot.slane %v2866, %v2881
    %v2884 = vunpack.c.l.s4 1966171168
    %v2885 = vunpack.c.0.s8 %v2884
    %v2886 = vlaneseq
    %v2887 = vshrl.u32 %v2886, 7
    %v2888 = vsub.s32 %v2885, %v2887
    %v2889 = vrot.slane %v2867, %v2888
    %v2891 = vunpack.c.l.s4 1966171168
    %v2892 = vunpack.c.0.s8 %v2891
    %v2893 = vlaneseq
    %v2894 = vshrl.u32 %v2893, 7
    %v2895 = vsub.s32 %v2892, %v2894
    %v2896 = vrot.slane %v2868, %v2895
    %v2897 = vcombine.high %v2875, %v2875
    %v2898 = vcombine.high %v2882, %v2882
    %v2899 = vcombine.high %v2889, %v2889
    %v2900 = vcombine.high %v2896, %v2896
    %v2901 = vcombine.high %v2720, %v2720
    %v2903 = vunpack.c.l.s4 1966171168
    %v2904 = vunpack.c.0.s8 %v2903
    %v2905 = vlaneseq
    %v2906 = vshrl.u32 %v2905, 7
    %v2907 = vsub.s32 %v2904, %v2906
    %v2908 = vrot.slane %v2720, %v2907
    %v2910 = vunpack.c.l.s4 1966171168
    %v2911 = vunpack.c.0.s8 %v2910
    %v2912 = vlaneseq
    %v2913 = vshrl.u32 %v2912, 7
    %v2914 = vsub.s32 %v2911, %v2913
    %v2915 = vrot.slane %v2901, %v2914
    %v2916 = vcombine.high %v2908, %v2908
    %v2917 = vcombine.high %v2915, %v2915
    %v2919 = vunpack.c.l.s4 1966171168
    %v2920 = vunpack.c.0.s8 %v2919
    %v2921 = vlaneseq
    %v2922 = vshrl.u32 %v2921, 7
    %v2923 = vsub.s32 %v2920, %v2922
    %v2924 = vrot.slane %v2908, %v2923
    %v2926 = vunpack.c.l.s4 1966171168
    %v2927 = vunpack.c.0.s8 %v2926
    %v2928 = vlaneseq
    %v2929 = vshrl.u32 %v2928, 7
    %v2930 = vsub.s32 %v2927, %v2929
    %v2931 = vrot.slane %v2915, %v2930
    %v2933 = vunpack.c.l.s4 1966171168
    %v2934 = vunpack.c.0.s8 %v2933
    %v2935 = vlaneseq
    %v2936 = vshrl.u32 %v2935, 7
    %v2937 = vsub.s32 %v2934, %v2936
    %v2938 = vrot.slane %v2916, %v2937
    %v2940 = vunpack.c.l.s4 1966171168
    %v2941 = vunpack.c.0.s8 %v2940
    %v2942 = vlaneseq
    %v2943 = vshrl.u32 %v2942, 7
    %v2944 = vsub.s32 %v2941, %v2943
    %v2945 = vrot.slane %v2917, %v2944
    %v2946 = vcombine.high %v2924, %v2924
    %v2947 = vcombine.high %v2931, %v2931
    %v2948 = vcombine.high %v2938, %v2938
    %v2949 = vcombine.high %v2945, %v2945
    %v2950 = vcombine.high %v2721, %v2721
    %v2952 = vunpack.c.l.s4 1966171168
    %v2953 = vunpack.c.0.s8 %v2952
    %v2954 = vlaneseq
    %v2955 = vshrl.u32 %v2954, 7
    %v2956 = vsub.s32 %v2953, %v2955
    %v2957 = vrot.slane %v2721, %v2956
    %v2959 = vunpack.c.l.s4 1966171168
    %v2960 = vunpack.c.0.s8 %v2959
    %v2961 = vlaneseq
    %v2962 = vshrl.u32 %v2961, 7
    %v2963 = vsub.s32 %v2960, %v2962
    %v2964 = vrot.slane %v2950, %v2963
    %v2965 = vcombine.high %v2957, %v2957
    %v2966 = vcombine.high %v2964, %v2964
    %v2968 = vunpack.c.l.s4 1966171168
    %v2969 = vunpack.c.0.s8 %v2968
    %v2970 = vlaneseq
    %v2971 = vshrl.u32 %v2970, 7
    %v2972 = vsub.s32 %v2969, %v2971
    %v2973 = vrot.slane %v2957, %v2972
    %v2975 = vunpack.c.l.s4 1966171168
    %v2976 = vunpack.c.0.s8 %v2975
    %v2977 = vlaneseq
    %v2978 = vshrl.u32 %v2977, 7
    %v2979 = vsub.s32 %v2976, %v2978
    %v2980 = vrot.slane %v2964, %v2979
    %v2982 = vunpack.c.l.s4 1966171168
    %v2983 = vunpack.c.0.s8 %v2982
    %v2984 = vlaneseq
    %v2985 = vshrl.u32 %v2984, 7
    %v2986 = vsub.s32 %v2983, %v2985
    %v2987 = vrot.slane %v2965, %v2986
    %v2989 = vunpack.c.l.s4 1966171168
    %v2990 = vunpack.c.0.s8 %v2989
    %v2991 = vlaneseq
    %v2992 = vshrl.u32 %v2991, 7
    %v2993 = vsub.s32 %v2990, %v2992
    %v2994 = vrot.slane %v2966, %v2993
    %v2995 = vcombine.high %v2973, %v2973
    %v2996 = vcombine.high %v2980, %v2980
    %v2997 = vcombine.high %v2987, %v2987
    %v2998 = vcombine.high %v2994, %v2994
    %v2999 = vcombine.high %v2722, %v2722
    %v3001 = vunpack.c.l.s4 1966171168
    %v3002 = vunpack.c.0.s8 %v3001
    %v3003 = vlaneseq
    %v3004 = vshrl.u32 %v3003, 7
    %v3005 = vsub.s32 %v3002, %v3004
    %v3006 = vrot.slane %v2722, %v3005
    %v3008 = vunpack.c.l.s4 1966171168
    %v3009 = vunpack.c.0.s8 %v3008
    %v3010 = vlaneseq
    %v3011 = vshrl.u32 %v3010, 7
    %v3012 = vsub.s32 %v3009, %v3011
    %v3013 = vrot.slane %v2999, %v3012
    %v3014 = vcombine.high %v3006, %v3006
    %v3015 = vcombine.high %v3013, %v3013
    %v3017 = vunpack.c.l.s4 1966171168
    %v3018 = vunpack.c.0.s8 %v3017
    %v3019 = vlaneseq
    %v3020 = vshrl.u32 %v3019, 7
    %v3021 = vsub.s32 %v3018, %v3020
    %v3022 = vrot.slane %v3006, %v3021
    %v3024 = vunpack.c.l.s4 1966171168
    %v3025 = vunpack.c.0.s8 %v3024
    %v3026 = vlaneseq
    %v3027 = vshrl.u32 %v3026, 7
    %v3028 = vsub.s32 %v3025, %v3027
    %v3029 = vrot.slane %v3013, %v3028
    %v3031 = vunpack.c.l.s4 1966171168
    %v3032 = vunpack.c.0.s8 %v3031
    %v3033 = vlaneseq
    %v3034 = vshrl.u32 %v3033, 7
    %v3035 = vsub.s32 %v3032, %v3034
    %v3036 = vrot.slane %v3014, %v3035
    %v3038 = vunpack.c.l.s4 1966171168
    %v3039 = vunpack.c.0.s8 %v3038
    %v3040 = vlaneseq
    %v3041 = vshrl.u32 %v3040, 7
    %v3042 = vsub.s32 %v3039, %v3041
    %v3043 = vrot.slane %v3015, %v3042
    %v3044 = vcombine.high %v3022, %v3022
    %v3045 = vcombine.high %v3029, %v3029
    %v3046 = vcombine.high %v3036, %v3036
    %v3047 = vcombine.high %v3043, %v3043
    %v3048 = vcombine.high %v2723, %v2723
    %v3050 = vunpack.c.l.s4 1966171168
    %v3051 = vunpack.c.0.s8 %v3050
    %v3052 = vlaneseq
    %v3053 = vshrl.u32 %v3052, 7
    %v3054 = vsub.s32 %v3051, %v3053
    %v3055 = vrot.slane %v2723, %v3054
    %v3057 = vunpack.c.l.s4 1966171168
    %v3058 = vunpack.c.0.s8 %v3057
    %v3059 = vlaneseq
    %v3060 = vshrl.u32 %v3059, 7
    %v3061 = vsub.s32 %v3058, %v3060
    %v3062 = vrot.slane %v3048, %v3061
    %v3063 = vcombine.high %v3055, %v3055
    %v3064 = vcombine.high %v3062, %v3062
    %v3066 = vunpack.c.l.s4 1966171168
    %v3067 = vunpack.c.0.s8 %v3066
    %v3068 = vlaneseq
    %v3069 = vshrl.u32 %v3068, 7
    %v3070 = vsub.s32 %v3067, %v3069
    %v3071 = vrot.slane %v3055, %v3070
    %v3073 = vunpack.c.l.s4 1966171168
    %v3074 = vunpack.c.0.s8 %v3073
    %v3075 = vlaneseq
    %v3076 = vshrl.u32 %v3075, 7
    %v3077 = vsub.s32 %v3074, %v3076
    %v3078 = vrot.slane %v3062, %v3077
    %v3080 = vunpack.c.l.s4 1966171168
    %v3081 = vunpack.c.0.s8 %v3080
    %v3082 = vlaneseq
    %v3083 = vshrl.u32 %v3082, 7
    %v3084 = vsub.s32 %v3081, %v3083
    %v3085 = vrot.slane %v3063, %v3084
    %v3087 = vunpack.c.l.s4 1966171168
    %v3088 = vunpack.c.0.s8 %v3087
    %v3089 = vlaneseq
    %v3090 = vshrl.u32 %v3089, 7
    %v3091 = vsub.s32 %v3088, %v3090
    %v3092 = vrot.slane %v3064, %v3091
    %v3093 = vcombine.high %v3071, %v3071
    %v3094 = vcombine.high %v3078, %v3078
    %v3095 = vcombine.high %v3085, %v3085
    %v3096 = vcombine.high %v3092, %v3092
    %v3097 = vcombine.high %v2724, %v2724
    %v3099 = vunpack.c.l.s4 1966171168
    %v3100 = vunpack.c.0.s8 %v3099
    %v3101 = vlaneseq
    %v3102 = vshrl.u32 %v3101, 7
    %v3103 = vsub.s32 %v3100, %v3102
    %v3104 = vrot.slane %v2724, %v3103
    %v3106 = vunpack.c.l.s4 1966171168
    %v3107 = vunpack.c.0.s8 %v3106
    %v3108 = vlaneseq
    %v3109 = vshrl.u32 %v3108, 7
    %v3110 = vsub.s32 %v3107, %v3109
    %v3111 = vrot.slane %v3097, %v3110
    %v3112 = vcombine.high %v3104, %v3104
    %v3113 = vcombine.high %v3111, %v3111
    %v3115 = vunpack.c.l.s4 1966171168
    %v3116 = vunpack.c.0.s8 %v3115
    %v3117 = vlaneseq
    %v3118 = vshrl.u32 %v3117, 7
    %v3119 = vsub.s32 %v3116, %v3118
    %v3120 = vrot.slane %v3104, %v3119
    %v3122 = vunpack.c.l.s4 1966171168
    %v3123 = vunpack.c.0.s8 %v3122
    %v3124 = vlaneseq
    %v3125 = vshrl.u32 %v3124, 7
    %v3126 = vsub.s32 %v3123, %v3125
    %v3127 = vrot.slane %v3111, %v3126
    %v3129 = vunpack.c.l.s4 1966171168
    %v3130 = vunpack.c.0.s8 %v3129
    %v3131 = vlaneseq
    %v3132 = vshrl.u32 %v3131, 7
    %v3133 = vsub.s32 %v3130, %v3132
    %v3134 = vrot.slane %v3112, %v3133
    %v3136 = vunpack.c.l.s4 1966171168
    %v3137 = vunpack.c.0.s8 %v3136
    %v3138 = vlaneseq
    %v3139 = vshrl.u32 %v3138, 7
    %v3140 = vsub.s32 %v3137, %v3139
    %v3141 = vrot.slane %v3113, %v3140
    %v3142 = vcombine.high %v3120, %v3120
    %v3143 = vcombine.high %v3127, %v3127
    %v3144 = vcombine.high %v3134, %v3134
    %v3145 = vcombine.high %v3141, %v3141
    %v3146 = vcombine.high %v2725, %v2725
    %v3148 = vunpack.c.l.s4 1966171168
    %v3149 = vunpack.c.0.s8 %v3148
    %v3150 = vlaneseq
    %v3151 = vshrl.u32 %v3150, 7
    %v3152 = vsub.s32 %v3149, %v3151
    %v3153 = vrot.slane %v2725, %v3152
    %v3155 = vunpack.c.l.s4 1966171168
    %v3156 = vunpack.c.0.s8 %v3155
    %v3157 = vlaneseq
    %v3158 = vshrl.u32 %v3157, 7
    %v3159 = vsub.s32 %v3156, %v3158
    %v3160 = vrot.slane %v3146, %v3159
    %v3161 = vcombine.high %v3153, %v3153
    %v3162 = vcombine.high %v3160, %v3160
    %v3164 = vunpack.c.l.s4 1966171168
    %v3165 = vunpack.c.0.s8 %v3164
    %v3166 = vlaneseq
    %v3167 = vshrl.u32 %v3166, 7
    %v3168 = vsub.s32 %v3165, %v3167
    %v3169 = vrot.slane %v3153, %v3168
    %v3171 = vunpack.c.l.s4 1966171168
    %v3172 = vunpack.c.0.s8 %v3171
    %v3173 = vlaneseq
    %v3174 = vshrl.u32 %v3173, 7
    %v3175 = vsub.s32 %v3172, %v3174
    %v3176 = vrot.slane %v3160, %v3175
    %v3178 = vunpack.c.l.s4 1966171168
    %v3179 = vunpack.c.0.s8 %v3178
    %v3180 = vlaneseq
    %v3181 = vshrl.u32 %v3180, 7
    %v3182 = vsub.s32 %v3179, %v3181
    %v3183 = vrot.slane %v3161, %v3182
    %v3185 = vunpack.c.l.s4 1966171168
    %v3186 = vunpack.c.0.s8 %v3185
    %v3187 = vlaneseq
    %v3188 = vshrl.u32 %v3187, 7
    %v3189 = vsub.s32 %v3186, %v3188
    %v3190 = vrot.slane %v3162, %v3189
    %v3191 = vcombine.high %v3169, %v3169
    %v3192 = vcombine.high %v3176, %v3176
    %v3193 = vcombine.high %v3183, %v3183
    %v3194 = vcombine.high %v3190, %v3190
    %v3195 = vcombine.high %v2726, %v2726
    %v3197 = vunpack.c.l.s4 1966171168
    %v3198 = vunpack.c.0.s8 %v3197
    %v3199 = vlaneseq
    %v3200 = vshrl.u32 %v3199, 7
    %v3201 = vsub.s32 %v3198, %v3200
    %v3202 = vrot.slane %v2726, %v3201
    %v3204 = vunpack.c.l.s4 1966171168
    %v3205 = vunpack.c.0.s8 %v3204
    %v3206 = vlaneseq
    %v3207 = vshrl.u32 %v3206, 7
    %v3208 = vsub.s32 %v3205, %v3207
    %v3209 = vrot.slane %v3195, %v3208
    %v3210 = vcombine.high %v3202, %v3202
    %v3211 = vcombine.high %v3209, %v3209
    %v3213 = vunpack.c.l.s4 1966171168
    %v3214 = vunpack.c.0.s8 %v3213
    %v3215 = vlaneseq
    %v3216 = vshrl.u32 %v3215, 7
    %v3217 = vsub.s32 %v3214, %v3216
    %v3218 = vrot.slane %v3202, %v3217
    %v3220 = vunpack.c.l.s4 1966171168
    %v3221 = vunpack.c.0.s8 %v3220
    %v3222 = vlaneseq
    %v3223 = vshrl.u32 %v3222, 7
    %v3224 = vsub.s32 %v3221, %v3223
    %v3225 = vrot.slane %v3209, %v3224
    %v3227 = vunpack.c.l.s4 1966171168
    %v3228 = vunpack.c.0.s8 %v3227
    %v3229 = vlaneseq
    %v3230 = vshrl.u32 %v3229, 7
    %v3231 = vsub.s32 %v3228, %v3230
    %v3232 = vrot.slane %v3210, %v3231
    %v3234 = vunpack.c.l.s4 1966171168
    %v3235 = vunpack.c.0.s8 %v3234
    %v3236 = vlaneseq
    %v3237 = vshrl.u32 %v3236, 7
    %v3238 = vsub.s32 %v3235, %v3237
    %v3239 = vrot.slane %v3211, %v3238
    %v3240 = vcombine.high %v3218, %v3218
    %v3241 = vcombine.high %v3225, %v3225
    %v3242 = vcombine.high %v3232, %v3232
    %v3243 = vcombine.high %v3239, %v3239
    %v3244 = vcombine.high %v2727, %v2727
    %v3246 = vunpack.c.l.s4 1966171168
    %v3247 = vunpack.c.0.s8 %v3246
    %v3248 = vlaneseq
    %v3249 = vshrl.u32 %v3248, 7
    %v3250 = vsub.s32 %v3247, %v3249
    %v3251 = vrot.slane %v2727, %v3250
    %v3253 = vunpack.c.l.s4 1966171168
    %v3254 = vunpack.c.0.s8 %v3253
    %v3255 = vlaneseq
    %v3256 = vshrl.u32 %v3255, 7
    %v3257 = vsub.s32 %v3254, %v3256
    %v3258 = vrot.slane %v3244, %v3257
    %v3259 = vcombine.high %v3251, %v3251
    %v3260 = vcombine.high %v3258, %v3258
    %v3262 = vunpack.c.l.s4 1966171168
    %v3263 = vunpack.c.0.s8 %v3262
    %v3264 = vlaneseq
    %v3265 = vshrl.u32 %v3264, 7
    %v3266 = vsub.s32 %v3263, %v3265
    %v3267 = vrot.slane %v3251, %v3266
    %v3269 = vunpack.c.l.s4 1966171168
    %v3270 = vunpack.c.0.s8 %v3269
    %v3271 = vlaneseq
    %v3272 = vshrl.u32 %v3271, 7
    %v3273 = vsub.s32 %v3270, %v3272
    %v3274 = vrot.slane %v3258, %v3273
    %v3276 = vunpack.c.l.s4 1966171168
    %v3277 = vunpack.c.0.s8 %v3276
    %v3278 = vlaneseq
    %v3279 = vshrl.u32 %v3278, 7
    %v3280 = vsub.s32 %v3277, %v3279
    %v3281 = vrot.slane %v3259, %v3280
    %v3283 = vunpack.c.l.s4 1966171168
    %v3284 = vunpack.c.0.s8 %v3283
    %v3285 = vlaneseq
    %v3286 = vshrl.u32 %v3285, 7
    %v3287 = vsub.s32 %v3284, %v3286
    %v3288 = vrot.slane %v3260, %v3287
    %v3289 = vcombine.high %v3267, %v3267
    %v3290 = vcombine.high %v3274, %v3274
    %v3291 = vcombine.high %v3281, %v3281
    %v3292 = vcombine.high %v3288, %v3288
    %v3293 = vcombine.high %v2728, %v2728
    %v3295 = vunpack.c.l.s4 1966171168
    %v3296 = vunpack.c.0.s8 %v3295
    %v3297 = vlaneseq
    %v3298 = vshrl.u32 %v3297, 7
    %v3299 = vsub.s32 %v3296, %v3298
    %v3300 = vrot.slane %v2728, %v3299
    %v3302 = vunpack.c.l.s4 1966171168
    %v3303 = vunpack.c.0.s8 %v3302
    %v3304 = vlaneseq
    %v3305 = vshrl.u32 %v3304, 7
    %v3306 = vsub.s32 %v3303, %v3305
    %v3307 = vrot.slane %v3293, %v3306
    %v3308 = vcombine.high %v3300, %v3300
    %v3309 = vcombine.high %v3307, %v3307
    %v3311 = vunpack.c.l.s4 1966171168
    %v3312 = vunpack.c.0.s8 %v3311
    %v3313 = vlaneseq
    %v3314 = vshrl.u32 %v3313, 7
    %v3315 = vsub.s32 %v3312, %v3314
    %v3316 = vrot.slane %v3300, %v3315
    %v3318 = vunpack.c.l.s4 1966171168
    %v3319 = vunpack.c.0.s8 %v3318
    %v3320 = vlaneseq
    %v3321 = vshrl.u32 %v3320, 7
    %v3322 = vsub.s32 %v3319, %v3321
    %v3323 = vrot.slane %v3307, %v3322
    %v3325 = vunpack.c.l.s4 1966171168
    %v3326 = vunpack.c.0.s8 %v3325
    %v3327 = vlaneseq
    %v3328 = vshrl.u32 %v3327, 7
    %v3329 = vsub.s32 %v3326, %v3328
    %v3330 = vrot.slane %v3308, %v3329
    %v3332 = vunpack.c.l.s4 1966171168
    %v3333 = vunpack.c.0.s8 %v3332
    %v3334 = vlaneseq
    %v3335 = vshrl.u32 %v3334, 7
    %v3336 = vsub.s32 %v3333, %v3335
    %v3337 = vrot.slane %v3309, %v3336
    %v3338 = vcombine.high %v3316, %v3316
    %v3339 = vcombine.high %v3323, %v3323
    %v3340 = vcombine.high %v3330, %v3330
    %v3341 = vcombine.high %v3337, %v3337
    %v3342 = vcombine.high %v2729, %v2729
    %v3344 = vunpack.c.l.s4 1966171168
    %v3345 = vunpack.c.0.s8 %v3344
    %v3346 = vlaneseq
    %v3347 = vshrl.u32 %v3346, 7
    %v3348 = vsub.s32 %v3345, %v3347
    %v3349 = vrot.slane %v2729, %v3348
    %v3351 = vunpack.c.l.s4 1966171168
    %v3352 = vunpack.c.0.s8 %v3351
    %v3353 = vlaneseq
    %v3354 = vshrl.u32 %v3353, 7
    %v3355 = vsub.s32 %v3352, %v3354
    %v3356 = vrot.slane %v3342, %v3355
    %v3357 = vcombine.high %v3349, %v3349
    %v3358 = vcombine.high %v3356, %v3356
    %v3360 = vunpack.c.l.s4 1966171168
    %v3361 = vunpack.c.0.s8 %v3360
    %v3362 = vlaneseq
    %v3363 = vshrl.u32 %v3362, 7
    %v3364 = vsub.s32 %v3361, %v3363
    %v3365 = vrot.slane %v3349, %v3364
    %v3367 = vunpack.c.l.s4 1966171168
    %v3368 = vunpack.c.0.s8 %v3367
    %v3369 = vlaneseq
    %v3370 = vshrl.u32 %v3369, 7
    %v3371 = vsub.s32 %v3368, %v3370
    %v3372 = vrot.slane %v3356, %v3371
    %v3374 = vunpack.c.l.s4 1966171168
    %v3375 = vunpack.c.0.s8 %v3374
    %v3376 = vlaneseq
    %v3377 = vshrl.u32 %v3376, 7
    %v3378 = vsub.s32 %v3375, %v3377
    %v3379 = vrot.slane %v3357, %v3378
    %v3381 = vunpack.c.l.s4 1966171168
    %v3382 = vunpack.c.0.s8 %v3381
    %v3383 = vlaneseq
    %v3384 = vshrl.u32 %v3383, 7
    %v3385 = vsub.s32 %v3382, %v3384
    %v3386 = vrot.slane %v3358, %v3385
    %v3387 = vcombine.high %v3365, %v3365
    %v3388 = vcombine.high %v3372, %v3372
    %v3389 = vcombine.high %v3379, %v3379
    %v3390 = vcombine.high %v3386, %v3386
    %v3391 = vcombine.high %v2730, %v2730
    %v3393 = vunpack.c.l.s4 1966171168
    %v3394 = vunpack.c.0.s8 %v3393
    %v3395 = vlaneseq
    %v3396 = vshrl.u32 %v3395, 7
    %v3397 = vsub.s32 %v3394, %v3396
    %v3398 = vrot.slane %v2730, %v3397
    %v3400 = vunpack.c.l.s4 1966171168
    %v3401 = vunpack.c.0.s8 %v3400
    %v3402 = vlaneseq
    %v3403 = vshrl.u32 %v3402, 7
    %v3404 = vsub.s32 %v3401, %v3403
    %v3405 = vrot.slane %v3391, %v3404
    %v3406 = vcombine.high %v3398, %v3398
    %v3407 = vcombine.high %v3405, %v3405
    %v3409 = vunpack.c.l.s4 1966171168
    %v3410 = vunpack.c.0.s8 %v3409
    %v3411 = vlaneseq
    %v3412 = vshrl.u32 %v3411, 7
    %v3413 = vsub.s32 %v3410, %v3412
    %v3414 = vrot.slane %v3398, %v3413
    %v3416 = vunpack.c.l.s4 1966171168
    %v3417 = vunpack.c.0.s8 %v3416
    %v3418 = vlaneseq
    %v3419 = vshrl.u32 %v3418, 7
    %v3420 = vsub.s32 %v3417, %v3419
    %v3421 = vrot.slane %v3405, %v3420
    %v3423 = vunpack.c.l.s4 1966171168
    %v3424 = vunpack.c.0.s8 %v3423
    %v3425 = vlaneseq
    %v3426 = vshrl.u32 %v3425, 7
    %v3427 = vsub.s32 %v3424, %v3426
    %v3428 = vrot.slane %v3406, %v3427
    %v3430 = vunpack.c.l.s4 1966171168
    %v3431 = vunpack.c.0.s8 %v3430
    %v3432 = vlaneseq
    %v3433 = vshrl.u32 %v3432, 7
    %v3434 = vsub.s32 %v3431, %v3433
    %v3435 = vrot.slane %v3407, %v3434
    %v3436 = vcombine.high %v3414, %v3414
    %v3437 = vcombine.high %v3421, %v3421
    %v3438 = vcombine.high %v3428, %v3428
    %v3439 = vcombine.high %v3435, %v3435
    %v3440 = vcombine.high %v2731, %v2731
    %v3442 = vunpack.c.l.s4 1966171168
    %v3443 = vunpack.c.0.s8 %v3442
    %v3444 = vlaneseq
    %v3445 = vshrl.u32 %v3444, 7
    %v3446 = vsub.s32 %v3443, %v3445
    %v3447 = vrot.slane %v2731, %v3446
    %v3449 = vunpack.c.l.s4 1966171168
    %v3450 = vunpack.c.0.s8 %v3449
    %v3451 = vlaneseq
    %v3452 = vshrl.u32 %v3451, 7
    %v3453 = vsub.s32 %v3450, %v3452
    %v3454 = vrot.slane %v3440, %v3453
    %v3455 = vcombine.high %v3447, %v3447
    %v3456 = vcombine.high %v3454, %v3454
    %v3458 = vunpack.c.l.s4 1966171168
    %v3459 = vunpack.c.0.s8 %v3458
    %v3460 = vlaneseq
    %v3461 = vshrl.u32 %v3460, 7
    %v3462 = vsub.s32 %v3459, %v3461
    %v3463 = vrot.slane %v3447, %v3462
    %v3465 = vunpack.c.l.s4 1966171168
    %v3466 = vunpack.c.0.s8 %v3465
    %v3467 = vlaneseq
    %v3468 = vshrl.u32 %v3467, 7
    %v3469 = vsub.s32 %v3466, %v3468
    %v3470 = vrot.slane %v3454, %v3469
    %v3472 = vunpack.c.l.s4 1966171168
    %v3473 = vunpack.c.0.s8 %v3472
    %v3474 = vlaneseq
    %v3475 = vshrl.u32 %v3474, 7
    %v3476 = vsub.s32 %v3473, %v3475
    %v3477 = vrot.slane %v3455, %v3476
    %v3479 = vunpack.c.l.s4 1966171168
    %v3480 = vunpack.c.0.s8 %v3479
    %v3481 = vlaneseq
    %v3482 = vshrl.u32 %v3481, 7
    %v3483 = vsub.s32 %v3480, %v3482
    %v3484 = vrot.slane %v3456, %v3483
    %v3485 = vcombine.high %v3463, %v3463
    %v3486 = vcombine.high %v3470, %v3470
    %v3487 = vcombine.high %v3477, %v3477
    %v3488 = vcombine.high %v3484, %v3484
    %v3489 = vcombine.high %v2732, %v2732
    %v3491 = vunpack.c.l.s4 1966171168
    %v3492 = vunpack.c.0.s8 %v3491
    %v3493 = vlaneseq
    %v3494 = vshrl.u32 %v3493, 7
    %v3495 = vsub.s32 %v3492, %v3494
    %v3496 = vrot.slane %v2732, %v3495
    %v3498 = vunpack.c.l.s4 1966171168
    %v3499 = vunpack.c.0.s8 %v3498
    %v3500 = vlaneseq
    %v3501 = vshrl.u32 %v3500, 7
    %v3502 = vsub.s32 %v3499, %v3501
    %v3503 = vrot.slane %v3489, %v3502
    %v3504 = vcombine.high %v3496, %v3496
    %v3505 = vcombine.high %v3503, %v3503
    %v3507 = vunpack.c.l.s4 1966171168
    %v3508 = vunpack.c.0.s8 %v3507
    %v3509 = vlaneseq
    %v3510 = vshrl.u32 %v3509, 7
    %v3511 = vsub.s32 %v3508, %v3510
    %v3512 = vrot.slane %v3496, %v3511
    %v3514 = vunpack.c.l.s4 1966171168
    %v3515 = vunpack.c.0.s8 %v3514
    %v3516 = vlaneseq
    %v3517 = vshrl.u32 %v3516, 7
    %v3518 = vsub.s32 %v3515, %v3517
    %v3519 = vrot.slane %v3503, %v3518
    %v3521 = vunpack.c.l.s4 1966171168
    %v3522 = vunpack.c.0.s8 %v3521
    %v3523 = vlaneseq
    %v3524 = vshrl.u32 %v3523, 7
    %v3525 = vsub.s32 %v3522, %v3524
    %v3526 = vrot.slane %v3504, %v3525
    %v3528 = vunpack.c.l.s4 1966171168
    %v3529 = vunpack.c.0.s8 %v3528
    %v3530 = vlaneseq
    %v3531 = vshrl.u32 %v3530, 7
    %v3532 = vsub.s32 %v3529, %v3531
    %v3533 = vrot.slane %v3505, %v3532
    %v3534 = vcombine.high %v3512, %v3512
    %v3535 = vcombine.high %v3526, %v3526
    %v3536 = vcombine.low %v2777, %v2791
    %v3537 = vcombine.low %v2799, %v2801
    %v3538 = vcombine.low %v2784, %v2798
    %v3539 = vcombine.low %v2800, %v2802
    %v3541 = vunpack.c.l.s4 1966171168
    %v3542 = vunpack.c.0.s8 %v3541
    %v3543 = vlaneseq
    %v3544 = vshrl.u32 %v3543, 7
    %v3545 = vsub.s32 %v3542, %v3544
    %v3546 = vrot.slane %v3536, %v3545
    %v3548 = vunpack.c.l.s4 1966171168
    %v3549 = vunpack.c.0.s8 %v3548
    %v3550 = vlaneseq
    %v3551 = vshrl.u32 %v3550, 7
    %v3552 = vsub.s32 %v3549, %v3551
    %v3553 = vrot.slane %v3537, %v3552
    %v3555 = vunpack.c.l.s4 1966171168
    %v3556 = vunpack.c.0.s8 %v3555
    %v3557 = vlaneseq
    %v3558 = vshrl.u32 %v3557, 7
    %v3559 = vsub.s32 %v3556, %v3558
    %v3560 = vrot.slane %v3538, %v3559
    %v3562 = vunpack.c.l.s4 1966171168
    %v3563 = vunpack.c.0.s8 %v3562
    %v3564 = vlaneseq
    %v3565 = vshrl.u32 %v3564, 7
    %v3566 = vsub.s32 %v3563, %v3565
    %v3567 = vrot.slane %v3539, %v3566
    %v3568 = vcombine.low %v3546, %v3553
    %v3569 = vcombine.low %v3560, %v3567
    %v3571 = vunpack.c.l.s4 1966171168
    %v3572 = vunpack.c.0.s8 %v3571
    %v3573 = vlaneseq
    %v3574 = vshrl.u32 %v3573, 7
    %v3575 = vsub.s32 %v3572, %v3574
    %v3576 = vrot.slane %v3568, %v3575
    %v3578 = vunpack.c.l.s4 1966171168
    %v3579 = vunpack.c.0.s8 %v3578
    %v3580 = vlaneseq
    %v3581 = vshrl.u32 %v3580, 7
    %v3582 = vsub.s32 %v3579, %v3581
    %v3583 = vrot.slane %v3569, %v3582
    %v3584 = vcombine.low %v3576, %v3583
    %v3585 = vcombine.low %v2826, %v2840
    %v3586 = vcombine.low %v2848, %v2850
    %v3587 = vcombine.low %v2833, %v2847
    %v3588 = vcombine.low %v2849, %v2851
    %v3590 = vunpack.c.l.s4 1966171168
    %v3591 = vunpack.c.0.s8 %v3590
    %v3592 = vlaneseq
    %v3593 = vshrl.u32 %v3592, 7
    %v3594 = vsub.s32 %v3591, %v3593
    %v3595 = vrot.slane %v3585, %v3594
    %v3597 = vunpack.c.l.s4 1966171168
    %v3598 = vunpack.c.0.s8 %v3597
    %v3599 = vlaneseq
    %v3600 = vshrl.u32 %v3599, 7
    %v3601 = vsub.s32 %v3598, %v3600
    %v3602 = vrot.slane %v3586, %v3601
    %v3604 = vunpack.c.l.s4 1966171168
    %v3605 = vunpack.c.0.s8 %v3604
    %v3606 = vlaneseq
    %v3607 = vshrl.u32 %v3606, 7
    %v3608 = vsub.s32 %v3605, %v3607
    %v3609 = vrot.slane %v3587, %v3608
    %v3611 = vunpack.c.l.s4 1966171168
    %v3612 = vunpack.c.0.s8 %v3611
    %v3613 = vlaneseq
    %v3614 = vshrl.u32 %v3613, 7
    %v3615 = vsub.s32 %v3612, %v3614
    %v3616 = vrot.slane %v3588, %v3615
    %v3617 = vcombine.low %v3595, %v3602
    %v3618 = vcombine.low %v3609, %v3616
    %v3620 = vunpack.c.l.s4 1966171168
    %v3621 = vunpack.c.0.s8 %v3620
    %v3622 = vlaneseq
    %v3623 = vshrl.u32 %v3622, 7
    %v3624 = vsub.s32 %v3621, %v3623
    %v3625 = vrot.slane %v3617, %v3624
    %v3627 = vunpack.c.l.s4 1966171168
    %v3628 = vunpack.c.0.s8 %v3627
    %v3629 = vlaneseq
    %v3630 = vshrl.u32 %v3629, 7
    %v3631 = vsub.s32 %v3628, %v3630
    %v3632 = vrot.slane %v3618, %v3631
    %v3633 = vcombine.low %v3625, %v3632
    %v3634 = vcombine.low %v2875, %v2889
    %v3635 = vcombine.low %v2897, %v2899
    %v3636 = vcombine.low %v2882, %v2896
    %v3637 = vcombine.low %v2898, %v2900
    %v3639 = vunpack.c.l.s4 1966171168
    %v3640 = vunpack.c.0.s8 %v3639
    %v3641 = vlaneseq
    %v3642 = vshrl.u32 %v3641, 7
    %v3643 = vsub.s32 %v3640, %v3642
    %v3644 = vrot.slane %v3634, %v3643
    %v3646 = vunpack.c.l.s4 1966171168
    %v3647 = vunpack.c.0.s8 %v3646
    %v3648 = vlaneseq
    %v3649 = vshrl.u32 %v3648, 7
    %v3650 = vsub.s32 %v3647, %v3649
    %v3651 = vrot.slane %v3635, %v3650
    %v3653 = vunpack.c.l.s4 1966171168
    %v3654 = vunpack.c.0.s8 %v3653
    %v3655 = vlaneseq
    %v3656 = vshrl.u32 %v3655, 7
    %v3657 = vsub.s32 %v3654, %v3656
    %v3658 = vrot.slane %v3636, %v3657
    %v3660 = vunpack.c.l.s4 1966171168
    %v3661 = vunpack.c.0.s8 %v3660
    %v3662 = vlaneseq
    %v3663 = vshrl.u32 %v3662, 7
    %v3664 = vsub.s32 %v3661, %v3663
    %v3665 = vrot.slane %v3637, %v3664
    %v3666 = vcombine.low %v3644, %v3651
    %v3667 = vcombine.low %v3658, %v3665
    %v3669 = vunpack.c.l.s4 1966171168
    %v3670 = vunpack.c.0.s8 %v3669
    %v3671 = vlaneseq
    %v3672 = vshrl.u32 %v3671, 7
    %v3673 = vsub.s32 %v3670, %v3672
    %v3674 = vrot.slane %v3666, %v3673
    %v3676 = vunpack.c.l.s4 1966171168
    %v3677 = vunpack.c.0.s8 %v3676
    %v3678 = vlaneseq
    %v3679 = vshrl.u32 %v3678, 7
    %v3680 = vsub.s32 %v3677, %v3679
    %v3681 = vrot.slane %v3667, %v3680
    %v3682 = vcombine.low %v3674, %v3681
    %v3683 = vcombine.low %v2924, %v2938
    %v3684 = vcombine.low %v2946, %v2948
    %v3685 = vcombine.low %v2931, %v2945
    %v3686 = vcombine.low %v2947, %v2949
    %v3688 = vunpack.c.l.s4 1966171168
    %v3689 = vunpack.c.0.s8 %v3688
    %v3690 = vlaneseq
    %v3691 = vshrl.u32 %v3690, 7
    %v3692 = vsub.s32 %v3689, %v3691
    %v3693 = vrot.slane %v3683, %v3692
    %v3695 = vunpack.c.l.s4 1966171168
    %v3696 = vunpack.c.0.s8 %v3695
    %v3697 = vlaneseq
    %v3698 = vshrl.u32 %v3697, 7
    %v3699 = vsub.s32 %v3696, %v3698
    %v3700 = vrot.slane %v3684, %v3699
    %v3702 = vunpack.c.l.s4 1966171168
    %v3703 = vunpack.c.0.s8 %v3702
    %v3704 = vlaneseq
    %v3705 = vshrl.u32 %v3704, 7
    %v3706 = vsub.s32 %v3703, %v3705
    %v3707 = vrot.slane %v3685, %v3706
    %v3709 = vunpack.c.l.s4 1966171168
    %v3710 = vunpack.c.0.s8 %v3709
    %v3711 = vlaneseq
    %v3712 = vshrl.u32 %v3711, 7
    %v3713 = vsub.s32 %v3710, %v3712
    %v3714 = vrot.slane %v3686, %v3713
    %v3715 = vcombine.low %v3693, %v3700
    %v3716 = vcombine.low %v3707, %v3714
    %v3718 = vunpack.c.l.s4 1966171168
    %v3719 = vunpack.c.0.s8 %v3718
    %v3720 = vlaneseq
    %v3721 = vshrl.u32 %v3720, 7
    %v3722 = vsub.s32 %v3719, %v3721
    %v3723 = vrot.slane %v3715, %v3722
    %v3725 = vunpack.c.l.s4 1966171168
    %v3726 = vunpack.c.0.s8 %v3725
    %v3727 = vlaneseq
    %v3728 = vshrl.u32 %v3727, 7
    %v3729 = vsub.s32 %v3726, %v3728
    %v3730 = vrot.slane %v3716, %v3729
    %v3731 = vcombine.low %v3723, %v3730
    %v3732 = vcombine.low %v2973, %v2987
    %v3733 = vcombine.low %v2995, %v2997
    %v3734 = vcombine.low %v2980, %v2994
    %v3735 = vcombine.low %v2996, %v2998
    %v3737 = vunpack.c.l.s4 1966171168
    %v3738 = vunpack.c.0.s8 %v3737
    %v3739 = vlaneseq
    %v3740 = vshrl.u32 %v3739, 7
    %v3741 = vsub.s32 %v3738, %v3740
    %v3742 = vrot.slane %v3732, %v3741
    %v3744 = vunpack.c.l.s4 1966171168
    %v3745 = vunpack.c.0.s8 %v3744
    %v3746 = vlaneseq
    %v3747 = vshrl.u32 %v3746, 7
    %v3748 = vsub.s32 %v3745, %v3747
    %v3749 = vrot.slane %v3733, %v3748
    %v3751 = vunpack.c.l.s4 1966171168
    %v3752 = vunpack.c.0.s8 %v3751
    %v3753 = vlaneseq
    %v3754 = vshrl.u32 %v3753, 7
    %v3755 = vsub.s32 %v3752, %v3754
    %v3756 = vrot.slane %v3734, %v3755
    %v3758 = vunpack.c.l.s4 1966171168
    %v3759 = vunpack.c.0.s8 %v3758
    %v3760 = vlaneseq
    %v3761 = vshrl.u32 %v3760, 7
    %v3762 = vsub.s32 %v3759, %v3761
    %v3763 = vrot.slane %v3735, %v3762
    %v3764 = vcombine.low %v3742, %v3749
    %v3765 = vcombine.low %v3756, %v3763
    %v3767 = vunpack.c.l.s4 1966171168
    %v3768 = vunpack.c.0.s8 %v3767
    %v3769 = vlaneseq
    %v3770 = vshrl.u32 %v3769, 7
    %v3771 = vsub.s32 %v3768, %v3770
    %v3772 = vrot.slane %v3764, %v3771
    %v3774 = vunpack.c.l.s4 1966171168
    %v3775 = vunpack.c.0.s8 %v3774
    %v3776 = vlaneseq
    %v3777 = vshrl.u32 %v3776, 7
    %v3778 = vsub.s32 %v3775, %v3777
    %v3779 = vrot.slane %v3765, %v3778
    %v3780 = vcombine.low %v3772, %v3779
    %v3781 = vcombine.low %v3022, %v3036
    %v3782 = vcombine.low %v3044, %v3046
    %v3783 = vcombine.low %v3029, %v3043
    %v3784 = vcombine.low %v3045, %v3047
    %v3786 = vunpack.c.l.s4 1966171168
    %v3787 = vunpack.c.0.s8 %v3786
    %v3788 = vlaneseq
    %v3789 = vshrl.u32 %v3788, 7
    %v3790 = vsub.s32 %v3787, %v3789
    %v3791 = vrot.slane %v3781, %v3790
    %v3793 = vunpack.c.l.s4 1966171168
    %v3794 = vunpack.c.0.s8 %v3793
    %v3795 = vlaneseq
    %v3796 = vshrl.u32 %v3795, 7
    %v3797 = vsub.s32 %v3794, %v3796
    %v3798 = vrot.slane %v3782, %v3797
    %v3800 = vunpack.c.l.s4 1966171168
    %v3801 = vunpack.c.0.s8 %v3800
    %v3802 = vlaneseq
    %v3803 = vshrl.u32 %v3802, 7
    %v3804 = vsub.s32 %v3801, %v3803
    %v3805 = vrot.slane %v3783, %v3804
    %v3807 = vunpack.c.l.s4 1966171168
    %v3808 = vunpack.c.0.s8 %v3807
    %v3809 = vlaneseq
    %v3810 = vshrl.u32 %v3809, 7
    %v3811 = vsub.s32 %v3808, %v3810
    %v3812 = vrot.slane %v3784, %v3811
    %v3813 = vcombine.low %v3791, %v3798
    %v3814 = vcombine.low %v3805, %v3812
    %v3816 = vunpack.c.l.s4 1966171168
    %v3817 = vunpack.c.0.s8 %v3816
    %v3818 = vlaneseq
    %v3819 = vshrl.u32 %v3818, 7
    %v3820 = vsub.s32 %v3817, %v3819
    %v3821 = vrot.slane %v3813, %v3820
    %v3823 = vunpack.c.l.s4 1966171168
    %v3824 = vunpack.c.0.s8 %v3823
    %v3825 = vlaneseq
    %v3826 = vshrl.u32 %v3825, 7
    %v3827 = vsub.s32 %v3824, %v3826
    %v3828 = vrot.slane %v3814, %v3827
    %v3829 = vcombine.low %v3821, %v3828
    %v3830 = vcombine.low %v3071, %v3085
    %v3831 = vcombine.low %v3093, %v3095
    %v3832 = vcombine.low %v3078, %v3092
    %v3833 = vcombine.low %v3094, %v3096
    %v3835 = vunpack.c.l.s4 1966171168
    %v3836 = vunpack.c.0.s8 %v3835
    %v3837 = vlaneseq
    %v3838 = vshrl.u32 %v3837, 7
    %v3839 = vsub.s32 %v3836, %v3838
    %v3840 = vrot.slane %v3830, %v3839
    %v3842 = vunpack.c.l.s4 1966171168
    %v3843 = vunpack.c.0.s8 %v3842
    %v3844 = vlaneseq
    %v3845 = vshrl.u32 %v3844, 7
    %v3846 = vsub.s32 %v3843, %v3845
    %v3847 = vrot.slane %v3831, %v3846
    %v3849 = vunpack.c.l.s4 1966171168
    %v3850 = vunpack.c.0.s8 %v3849
    %v3851 = vlaneseq
    %v3852 = vshrl.u32 %v3851, 7
    %v3853 = vsub.s32 %v3850, %v3852
    %v3854 = vrot.slane %v3832, %v3853
    %v3856 = vunpack.c.l.s4 1966171168
    %v3857 = vunpack.c.0.s8 %v3856
    %v3858 = vlaneseq
    %v3859 = vshrl.u32 %v3858, 7
    %v3860 = vsub.s32 %v3857, %v3859
    %v3861 = vrot.slane %v3833, %v3860
    %v3862 = vcombine.low %v3840, %v3847
    %v3863 = vcombine.low %v3854, %v3861
    %v3865 = vunpack.c.l.s4 1966171168
    %v3866 = vunpack.c.0.s8 %v3865
    %v3867 = vlaneseq
    %v3868 = vshrl.u32 %v3867, 7
    %v3869 = vsub.s32 %v3866, %v3868
    %v3870 = vrot.slane %v3862, %v3869
    %v3872 = vunpack.c.l.s4 1966171168
    %v3873 = vunpack.c.0.s8 %v3872
    %v3874 = vlaneseq
    %v3875 = vshrl.u32 %v3874, 7
    %v3876 = vsub.s32 %v3873, %v3875
    %v3877 = vrot.slane %v3863, %v3876
    %v3878 = vcombine.low %v3870, %v3877
    %v3879 = vcombine.low %v3120, %v3134
    %v3880 = vcombine.low %v3142, %v3144
    %v3881 = vcombine.low %v3127, %v3141
    %v3883 = vunpack.c.l.s4 1966171168
    %v3884 = vunpack.c.0.s8 %v3883
    %v3885 = vlaneseq
    %v3886 = vshrl.u32 %v3885, 7
    %v3887 = vsub.s32 %v3884, %v3886
    %v3888 = vrot.slane %v3879, %v3887
    %v3890 = vunpack.c.l.s4 1966171168
    %v3891 = vunpack.c.0.s8 %v3890
    %v3892 = vlaneseq
    %v3893 = vshrl.u32 %v3892, 7
    %v3894 = vsub.s32 %v3891, %v3893
    %v3895 = vrot.slane %v3880, %v3894
    %v3897 = vunpack.c.l.s4 1966171168
    %v3898 = vunpack.c.0.s8 %v3897
    %v3899 = vlaneseq
    %v3900 = vshrl.u32 %v3899, 7
    %v3901 = vsub.s32 %v3898, %v3900
    %v3902 = vrot.slane %v3881, %v3901
    %v3904 = vunpack.c.l.s4 1966171168
    %v3905 = vunpack.c.0.s8 %v3904
    %v3906 = vlaneseq
    %v3907 = vshrl.u32 %v3906, 7
    %v3908 = vsub.s32 %v3905, %v3907
    %v3909 = vrot.slane %v3143, %v3908
    %v3910 = vcombine.low %v3888, %v3895
    %v3911 = vcombine.low %v3902, %v3909
    %v3913 = vunpack.c.l.s4 1966171168
    %v3914 = vunpack.c.0.s8 %v3913
    %v3915 = vlaneseq
    %v3916 = vshrl.u32 %v3915, 7
    %v3917 = vsub.s32 %v3914, %v3916
    %v3918 = vrot.slane %v3910, %v3917
    %v3920 = vunpack.c.l.s4 1966171168
    %v3921 = vunpack.c.0.s8 %v3920
    %v3922 = vlaneseq
    %v3923 = vshrl.u32 %v3922, 7
    %v3924 = vsub.s32 %v3921, %v3923
    %v3925 = vrot.slane %v3911, %v3924
    %v3926 = vcombine.low %v3918, %v3925
    %v3927 = vcombine.low %v3145, %v3169
    %v3928 = vcombine.low %v3183, %v3191
    %v3929 = vcombine.low %v3193, %v3176
    %v3930 = vcombine.low %v3190, %v3192
    %v3932 = vunpack.c.l.s4 1966171168
    %v3933 = vunpack.c.0.s8 %v3932
    %v3934 = vlaneseq
    %v3935 = vshrl.u32 %v3934, 7
    %v3936 = vsub.s32 %v3933, %v3935
    %v3937 = vrot.slane %v3927, %v3936
    %v3939 = vunpack.c.l.s4 1966171168
    %v3940 = vunpack.c.0.s8 %v3939
    %v3941 = vlaneseq
    %v3942 = vshrl.u32 %v3941, 7
    %v3943 = vsub.s32 %v3940, %v3942
    %v3944 = vrot.slane %v3928, %v3943
    %v3946 = vunpack.c.l.s4 1966171168
    %v3947 = vunpack.c.0.s8 %v3946
    %v3948 = vlaneseq
    %v3949 = vshrl.u32 %v3948, 7
    %v3950 = vsub.s32 %v3947, %v3949
    %v3951 = vrot.slane %v3929, %v3950
    %v3953 = vunpack.c.l.s4 1966171168
    %v3954 = vunpack.c.0.s8 %v3953
    %v3955 = vlaneseq
    %v3956 = vshrl.u32 %v3955, 7
    %v3957 = vsub.s32 %v3954, %v3956
    %v3958 = vrot.slane %v3930, %v3957
    %v3959 = vcombine.low %v3937, %v3944
    %v3960 = vcombine.low %v3951, %v3958
    %v3962 = vunpack.c.l.s4 1966171168
    %v3963 = vunpack.c.0.s8 %v3962
    %v3964 = vlaneseq
    %v3965 = vshrl.u32 %v3964, 7
    %v3966 = vsub.s32 %v3963, %v3965
    %v3967 = vrot.slane %v3959, %v3966
    %v3969 = vunpack.c.l.s4 1966171168
    %v3970 = vunpack.c.0.s8 %v3969
    %v3971 = vlaneseq
    %v3972 = vshrl.u32 %v3971, 7
    %v3973 = vsub.s32 %v3970, %v3972
    %v3974 = vrot.slane %v3960, %v3973
    %v3975 = vcombine.low %v3967, %v3974
    %v3976 = vcombine.low %v3194, %v3218
    %v3977 = vcombine.low %v3232, %v3240
    %v3978 = vcombine.low %v3242, %v3225
    %v3979 = vcombine.low %v3239, %v3241
    %v3981 = vunpack.c.l.s4 1966171168
    %v3982 = vunpack.c.0.s8 %v3981
    %v3983 = vlaneseq
    %v3984 = vshrl.u32 %v3983, 7
    %v3985 = vsub.s32 %v3982, %v3984
    %v3986 = vrot.slane %v3976, %v3985
    %v3988 = vunpack.c.l.s4 1966171168
    %v3989 = vunpack.c.0.s8 %v3988
    %v3990 = vlaneseq
    %v3991 = vshrl.u32 %v3990, 7
    %v3992 = vsub.s32 %v3989, %v3991
    %v3993 = vrot.slane %v3977, %v3992
    %v3995 = vunpack.c.l.s4 1966171168
    %v3996 = vunpack.c.0.s8 %v3995
    %v3997 = vlaneseq
    %v3998 = vshrl.u32 %v3997, 7
    %v3999 = vsub.s32 %v3996, %v3998
    %v4000 = vrot.slane %v3978, %v3999
    %v4002 = vunpack.c.l.s4 1966171168
    %v4003 = vunpack.c.0.s8 %v4002
    %v4004 = vlaneseq
    %v4005 = vshrl.u32 %v4004, 7
    %v4006 = vsub.s32 %v4003, %v4005
    %v4007 = vrot.slane %v3979, %v4006
    %v4008 = vcombine.low %v3986, %v3993
    %v4009 = vcombine.low %v4000, %v4007
    %v4011 = vunpack.c.l.s4 1966171168
    %v4012 = vunpack.c.0.s8 %v4011
    %v4013 = vlaneseq
    %v4014 = vshrl.u32 %v4013, 7
    %v4015 = vsub.s32 %v4012, %v4014
    %v4016 = vrot.slane %v4008, %v4015
    %v4018 = vunpack.c.l.s4 1966171168
    %v4019 = vunpack.c.0.s8 %v4018
    %v4020 = vlaneseq
    %v4021 = vshrl.u32 %v4020, 7
    %v4022 = vsub.s32 %v4019, %v4021
    %v4023 = vrot.slane %v4009, %v4022
    %v4024 = vcombine.low %v4016, %v4023
    %v4025 = vcombine.low %v3243, %v3267
    %v4026 = vcombine.low %v3281, %v3289
    %v4027 = vcombine.low %v3291, %v3274
    %v4028 = vcombine.low %v3288, %v3290
    %v4030 = vunpack.c.l.s4 1966171168
    %v4031 = vunpack.c.0.s8 %v4030
    %v4032 = vlaneseq
    %v4033 = vshrl.u32 %v4032, 7
    %v4034 = vsub.s32 %v4031, %v4033
    %v4035 = vrot.slane %v4025, %v4034
    %v4037 = vunpack.c.l.s4 1966171168
    %v4038 = vunpack.c.0.s8 %v4037
    %v4039 = vlaneseq
    %v4040 = vshrl.u32 %v4039, 7
    %v4041 = vsub.s32 %v4038, %v4040
    %v4042 = vrot.slane %v4026, %v4041
    %v4044 = vunpack.c.l.s4 1966171168
    %v4045 = vunpack.c.0.s8 %v4044
    %v4046 = vlaneseq
    %v4047 = vshrl.u32 %v4046, 7
    %v4048 = vsub.s32 %v4045, %v4047
    %v4049 = vrot.slane %v4027, %v4048
    %v4051 = vunpack.c.l.s4 1966171168
    %v4052 = vunpack.c.0.s8 %v4051
    %v4053 = vlaneseq
    %v4054 = vshrl.u32 %v4053, 7
    %v4055 = vsub.s32 %v4052, %v4054
    %v4056 = vrot.slane %v4028, %v4055
    %v4057 = vcombine.low %v4035, %v4042
    %v4058 = vcombine.low %v4049, %v4056
    %v4060 = vunpack.c.l.s4 1966171168
    %v4061 = vunpack.c.0.s8 %v4060
    %v4062 = vlaneseq
    %v4063 = vshrl.u32 %v4062, 7
    %v4064 = vsub.s32 %v4061, %v4063
    %v4065 = vrot.slane %v4057, %v4064
    %v4067 = vunpack.c.l.s4 1966171168
    %v4068 = vunpack.c.0.s8 %v4067
    %v4069 = vlaneseq
    %v4070 = vshrl.u32 %v4069, 7
    %v4071 = vsub.s32 %v4068, %v4070
    %v4072 = vrot.slane %v4058, %v4071
    %v4073 = vcombine.low %v4065, %v4072
    %v4074 = vcombine.low %v3292, %v3316
    %v4075 = vcombine.low %v3330, %v3338
    %v4076 = vcombine.low %v3340, %v3323
    %v4077 = vcombine.low %v3337, %v3339
    %v4079 = vunpack.c.l.s4 1966171168
    %v4080 = vunpack.c.0.s8 %v4079
    %v4081 = vlaneseq
    %v4082 = vshrl.u32 %v4081, 7
    %v4083 = vsub.s32 %v4080, %v4082
    %v4084 = vrot.slane %v4074, %v4083
    %v4086 = vunpack.c.l.s4 1966171168
    %v4087 = vunpack.c.0.s8 %v4086
    %v4088 = vlaneseq
    %v4089 = vshrl.u32 %v4088, 7
    %v4090 = vsub.s32 %v4087, %v4089
    %v4091 = vrot.slane %v4075, %v4090
    %v4093 = vunpack.c.l.s4 1966171168
    %v4094 = vunpack.c.0.s8 %v4093
    %v4095 = vlaneseq
    %v4096 = vshrl.u32 %v4095, 7
    %v4097 = vsub.s32 %v4094, %v4096
    %v4098 = vrot.slane %v4076, %v4097
    %v4100 = vunpack.c.l.s4 1966171168
    %v4101 = vunpack.c.0.s8 %v4100
    %v4102 = vlaneseq
    %v4103 = vshrl.u32 %v4102, 7
    %v4104 = vsub.s32 %v4101, %v4103
    %v4105 = vrot.slane %v4077, %v4104
    %v4106 = vcombine.low %v4084, %v4091
    %v4107 = vcombine.low %v4098, %v4105
    %v4109 = vunpack.c.l.s4 1966171168
    %v4110 = vunpack.c.0.s8 %v4109
    %v4111 = vlaneseq
    %v4112 = vshrl.u32 %v4111, 7
    %v4113 = vsub.s32 %v4110, %v4112
    %v4114 = vrot.slane %v4106, %v4113
    %v4116 = vunpack.c.l.s4 1966171168
    %v4117 = vunpack.c.0.s8 %v4116
    %v4118 = vlaneseq
    %v4119 = vshrl.u32 %v4118, 7
    %v4120 = vsub.s32 %v4117, %v4119
    %v4121 = vrot.slane %v4107, %v4120
    %v4122 = vcombine.low %v4114, %v4121
    %v4123 = vcombine.low %v3341, %v3365
    %v4124 = vcombine.low %v3379, %v3387
    %v4125 = vcombine.low %v3389, %v3372
    %v4126 = vcombine.low %v3386, %v3388
    %v4128 = vunpack.c.l.s4 1966171168
    %v4129 = vunpack.c.0.s8 %v4128
    %v4130 = vlaneseq
    %v4131 = vshrl.u32 %v4130, 7
    %v4132 = vsub.s32 %v4129, %v4131
    %v4133 = vrot.slane %v4123, %v4132
    %v4135 = vunpack.c.l.s4 1966171168
    %v4136 = vunpack.c.0.s8 %v4135
    %v4137 = vlaneseq
    %v4138 = vshrl.u32 %v4137, 7
    %v4139 = vsub.s32 %v4136, %v4138
    %v4140 = vrot.slane %v4124, %v4139
    %v4142 = vunpack.c.l.s4 1966171168
    %v4143 = vunpack.c.0.s8 %v4142
    %v4144 = vlaneseq
    %v4145 = vshrl.u32 %v4144, 7
    %v4146 = vsub.s32 %v4143, %v4145
    %v4147 = vrot.slane %v4125, %v4146
    %v4149 = vunpack.c.l.s4 1966171168
    %v4150 = vunpack.c.0.s8 %v4149
    %v4151 = vlaneseq
    %v4152 = vshrl.u32 %v4151, 7
    %v4153 = vsub.s32 %v4150, %v4152
    %v4154 = vrot.slane %v4126, %v4153
    %v4155 = vcombine.low %v4133, %v4140
    %v4156 = vcombine.low %v4147, %v4154
    %v4158 = vunpack.c.l.s4 1966171168
    %v4159 = vunpack.c.0.s8 %v4158
    %v4160 = vlaneseq
    %v4161 = vshrl.u32 %v4160, 7
    %v4162 = vsub.s32 %v4159, %v4161
    %v4163 = vrot.slane %v4155, %v4162
    %v4165 = vunpack.c.l.s4 1966171168
    %v4166 = vunpack.c.0.s8 %v4165
    %v4167 = vlaneseq
    %v4168 = vshrl.u32 %v4167, 7
    %v4169 = vsub.s32 %v4166, %v4168
    %v4170 = vrot.slane %v4156, %v4169
    %v4171 = vcombine.low %v4163, %v4170
    %v4172 = vcombine.low %v3390, %v3414
    %v4173 = vcombine.low %v3428, %v3436
    %v4174 = vcombine.low %v3438, %v3421
    %v4175 = vcombine.low %v3435, %v3437
    %v4177 = vunpack.c.l.s4 1966171168
    %v4178 = vunpack.c.0.s8 %v4177
    %v4179 = vlaneseq
    %v4180 = vshrl.u32 %v4179, 7
    %v4181 = vsub.s32 %v4178, %v4180
    %v4182 = vrot.slane %v4172, %v4181
    %v4184 = vunpack.c.l.s4 1966171168
    %v4185 = vunpack.c.0.s8 %v4184
    %v4186 = vlaneseq
    %v4187 = vshrl.u32 %v4186, 7
    %v4188 = vsub.s32 %v4185, %v4187
    %v4189 = vrot.slane %v4173, %v4188
    %v4191 = vunpack.c.l.s4 1966171168
    %v4192 = vunpack.c.0.s8 %v4191
    %v4193 = vlaneseq
    %v4194 = vshrl.u32 %v4193, 7
    %v4195 = vsub.s32 %v4192, %v4194
    %v4196 = vrot.slane %v4174, %v4195
    %v4198 = vunpack.c.l.s4 1966171168
    %v4199 = vunpack.c.0.s8 %v4198
    %v4200 = vlaneseq
    %v4201 = vshrl.u32 %v4200, 7
    %v4202 = vsub.s32 %v4199, %v4201
    %v4203 = vrot.slane %v4175, %v4202
    %v4204 = vcombine.low %v4182, %v4189
    %v4205 = vcombine.low %v4196, %v4203
    %v4207 = vunpack.c.l.s4 1966171168
    %v4208 = vunpack.c.0.s8 %v4207
    %v4209 = vlaneseq
    %v4210 = vshrl.u32 %v4209, 7
    %v4211 = vsub.s32 %v4208, %v4210
    %v4212 = vrot.slane %v4204, %v4211
    %v4214 = vunpack.c.l.s4 1966171168
    %v4215 = vunpack.c.0.s8 %v4214
    %v4216 = vlaneseq
    %v4217 = vshrl.u32 %v4216, 7
    %v4218 = vsub.s32 %v4215, %v4217
    %v4219 = vrot.slane %v4205, %v4218
    %v4220 = vcombine.low %v4212, %v4219
    %v4221 = vcombine.low %v3439, %v3463
    %v4222 = vcombine.low %v3477, %v3485
    %v4223 = vcombine.low %v3487, %v3470
    %v4224 = vcombine.low %v3484, %v3486
    %v4226 = vunpack.c.l.s4 1966171168
    %v4227 = vunpack.c.0.s8 %v4226
    %v4228 = vlaneseq
    %v4229 = vshrl.u32 %v4228, 7
    %v4230 = vsub.s32 %v4227, %v4229
    %v4231 = vrot.slane %v4221, %v4230
    %v4233 = vunpack.c.l.s4 1966171168
    %v4234 = vunpack.c.0.s8 %v4233
    %v4235 = vlaneseq
    %v4236 = vshrl.u32 %v4235, 7
    %v4237 = vsub.s32 %v4234, %v4236
    %v4238 = vrot.slane %v4222, %v4237
    %v4240 = vunpack.c.l.s4 1966171168
    %v4241 = vunpack.c.0.s8 %v4240
    %v4242 = vlaneseq
    %v4243 = vshrl.u32 %v4242, 7
    %v4244 = vsub.s32 %v4241, %v4243
    %v4245 = vrot.slane %v4223, %v4244
    %v4247 = vunpack.c.l.s4 1966171168
    %v4248 = vunpack.c.0.s8 %v4247
    %v4249 = vlaneseq
    %v4250 = vshrl.u32 %v4249, 7
    %v4251 = vsub.s32 %v4248, %v4250
    %v4252 = vrot.slane %v4224, %v4251
    %v4253 = vcombine.low %v4231, %v4238
    %v4254 = vcombine.low %v4245, %v4252
    %v4256 = vunpack.c.l.s4 1966171168
    %v4257 = vunpack.c.0.s8 %v4256
    %v4258 = vlaneseq
    %v4259 = vshrl.u32 %v4258, 7
    %v4260 = vsub.s32 %v4257, %v4259
    %v4261 = vrot.slane %v4253, %v4260
    %v4263 = vunpack.c.l.s4 1966171168
    %v4264 = vunpack.c.0.s8 %v4263
    %v4265 = vlaneseq
    %v4266 = vshrl.u32 %v4265, 7
    %v4267 = vsub.s32 %v4264, %v4266
    %v4268 = vrot.slane %v4254, %v4267
    %v4269 = vcombine.low %v4261, %v4268
    %v4270 = vcombine.low %v3488, %v3512
    %v4271 = vcombine.low %v3526, %v3534
    %v4272 = vcombine.low %v3535, %v3519
    %v4274 = vunpack.c.l.s4 1966171168
    %v4275 = vunpack.c.0.s8 %v4274
    %v4276 = vlaneseq
    %v4277 = vshrl.u32 %v4276, 7
    %v4278 = vsub.s32 %v4275, %v4277
    %v4279 = vrot.slane %v4270, %v4278
    %v4281 = vunpack.c.l.s4 1966171168
    %v4282 = vunpack.c.0.s8 %v4281
    %v4283 = vlaneseq
    %v4284 = vshrl.u32 %v4283, 7
    %v4285 = vsub.s32 %v4282, %v4284
    %v4286 = vrot.slane %v4271, %v4285
    %v4288 = vunpack.c.l.s4 1966171168
    %v4289 = vunpack.c.0.s8 %v4288
    %v4290 = vlaneseq
    %v4291 = vshrl.u32 %v4290, 7
    %v4292 = vsub.s32 %v4289, %v4291
    %v4293 = vrot.slane %v4272, %v4292
    %v4295 = vunpack.c.l.s4 1966171168
    %v4296 = vunpack.c.0.s8 %v4295
    %v4297 = vlaneseq
    %v4298 = vshrl.u32 %v4297, 7
    %v4299 = vsub.s32 %v4296, %v4298
    %v4300 = vrot.slane %v3533, %v4299
    %v4301 = vcombine.low %v4279, %v4286
    %v4302 = vcombine.low %v4293, %v4300
    %v4304 = vunpack.c.l.s4 1966171168
    %v4305 = vunpack.c.0.s8 %v4304
    %v4306 = vlaneseq
    %v4307 = vshrl.u32 %v4306, 7
    %v4308 = vsub.s32 %v4305, %v4307
    %v4309 = vrot.slane %v4301, %v4308
    %v4311 = vunpack.c.l.s4 1966171168
    %v4312 = vunpack.c.0.s8 %v4311
    %v4313 = vlaneseq
    %v4314 = vshrl.u32 %v4313, 7
    %v4315 = vsub.s32 %v4312, %v4314
    %v4316 = vrot.slane %v4302, %v4315
    %v4317 = vcombine.low %v4309, %v4316
    %4334 = vst.msk [vmem:[#allocation3 + $0x8] sm:$0xff] %vm95, %v3584
    %4335 = vst.msk [vmem:[#allocation3 + $0x10] sm:$0xff] %vm95, %v3633
    %4336 = vst.msk [vmem:[#allocation3 + $0x18] sm:$0xff] %vm95, %v3682
    %4337 = vst.msk [vmem:[#allocation3 + $0x20] sm:$0xff] %vm95, %v3731
    %4338 = vst.msk [vmem:[#allocation3 + $0x28] sm:$0xff] %vm95, %v3780
    %4339 = vst.msk [vmem:[#allocation3 + $0x30] sm:$0xff] %vm95, %v3829
    %4340 = vst.msk [vmem:[#allocation3 + $0x38] sm:$0xff] %vm95, %v3878
    %vm4341 = vcmask 522240
    %4342 = vst.msk [vmem:[#allocation3 + $0x40] sm:$0x7f] %vm4341, %v3926
    %4343 = vst.msk [vmem:[#allocation3 + $0x58] sm:$0xff] %vm95, %v3975
    %4344 = vst.msk [vmem:[#allocation3 + $0x60] sm:$0xff] %vm95, %v4024
    %4345 = vst.msk [vmem:[#allocation3 + $0x68] sm:$0xff] %vm95, %v4073
    %4346 = vst.msk [vmem:[#allocation3 + $0x70] sm:$0xff] %vm95, %v4122
    %4347 = vst.msk [vmem:[#allocation3 + $0x78] sm:$0xff] %vm95, %v4171
    %4348 = vst.msk [vmem:[#allocation3 + $0x80] sm:$0xff] %vm95, %v4220
    %4349 = vst.msk [vmem:[#allocation3 + $0x88] sm:$0xff] %vm95, %v4269
    %4350 = vst.msk [vmem:[#allocation3 + $0x90] sm:$0x7f] %vm4341, %v4317
    %s4351 = scalar_lea.vmem [#allocation3], 6
    %v4352 = vld [vmem:[%s4351] ss:$4 sm:$0xff]
    %s4353 = scalar_lea.vmem [#allocation3], 38
    %v4354 = vld [vmem:[%s4353] ss:$4 sm:$0xff]
    %s4355 = scalar_lea.vmem [#allocation3], 86
    %v4356 = vld [vmem:[%s4355] ss:$4 sm:$0xff]
    %s4357 = scalar_lea.vmem [#allocation3], 118
    %v4358 = vld [vmem:[%s4357] ss:$4 sm:$0xff]
    %s4359 = scalar_lea.vmem [#allocation3], 7
    %v4360 = vld [vmem:[%s4359] ss:$4 sm:$0xff]
    %s4361 = scalar_lea.vmem [#allocation3], 39
    %v4362 = vld [vmem:[%s4361] ss:$4 sm:$0xff]
    %s4363 = scalar_lea.vmem [#allocation3], 87
    %v4364 = vld [vmem:[%s4363] ss:$4 sm:$0xff]
    %s4365 = scalar_lea.vmem [#allocation3], 119
    %v4366 = vld [vmem:[%s4365] ss:$4 sm:$0xff]
    %s4367 = scalar_lea.vmem [#allocation3], 8
    %v4368 = vld [vmem:[%s4367] ss:$4 sm:$0xff]
    %s4369 = scalar_lea.vmem [#allocation3], 40
    %v4370 = vld [vmem:[%s4369] ss:$4 sm:$0xff]
    %s4371 = scalar_lea.vmem [#allocation3], 88
    %v4372 = vld [vmem:[%s4371] ss:$4 sm:$0xff]
    %s4373 = scalar_lea.vmem [#allocation3], 120
    %v4374 = vld [vmem:[%s4373] ss:$4 sm:$0xff]
    %s4375 = scalar_lea.vmem [#allocation3], 9
    %v4376 = vld [vmem:[%s4375] ss:$4 sm:$0xff]
    %s4377 = scalar_lea.vmem [#allocation3], 41
    %v4378 = vld [vmem:[%s4377] ss:$4 sm:$0xff]
    %s4379 = scalar_lea.vmem [#allocation3], 89
    %v4380 = vld [vmem:[%s4379] ss:$4 sm:$0xff]
    %s4381 = scalar_lea.vmem [#allocation3], 121
    %v4382 = vld [vmem:[%s4381] ss:$4 sm:$0xff]
    %s4383 = scalar_lea.vmem [#allocation3], 10
    %v4384 = vld [vmem:[%s4383] ss:$4 sm:$0xff]
    %s4385 = scalar_lea.vmem [#allocation3], 42
    %v4386 = vld [vmem:[%s4385] ss:$4 sm:$0xff]
    %s4387 = scalar_lea.vmem [#allocation3], 90
    %v4388 = vld [vmem:[%s4387] ss:$4 sm:$0xff]
    %s4389 = scalar_lea.vmem [#allocation3], 122
    %v4390 = vld [vmem:[%s4389] ss:$4 sm:$0xff]
    %s4391 = scalar_lea.vmem [#allocation3], 11
    %v4392 = vld [vmem:[%s4391] ss:$4 sm:$0xff]
    %s4393 = scalar_lea.vmem [#allocation3], 43
    %v4394 = vld [vmem:[%s4393] ss:$4 sm:$0xff]
    %s4395 = scalar_lea.vmem [#allocation3], 91
    %v4396 = vld [vmem:[%s4395] ss:$4 sm:$0xff]
    %s4397 = scalar_lea.vmem [#allocation3], 123
    %v4398 = vld [vmem:[%s4397] ss:$4 sm:$0xff]
    %s4399 = scalar_lea.vmem [#allocation3], 12
    %v4400 = vld [vmem:[%s4399] ss:$4 sm:$0xff]
    %s4401 = scalar_lea.vmem [#allocation3], 44
    %v4402 = vld [vmem:[%s4401] ss:$4 sm:$0xff]
    %s4403 = scalar_lea.vmem [#allocation3], 92
    %v4404 = vld [vmem:[%s4403] ss:$4 sm:$0xff]
    %s4405 = scalar_lea.vmem [#allocation3], 124
    %v4406 = vld [vmem:[%s4405] ss:$4 sm:$0xff]
    %4411 = vrot.lane.b32.xlu0 %v4360, 64
    %v4412 = vpop.permute.xlu0 %4411
    %4413 = vrot.lane.b32.xlu0 %v4362, 64
    %v4414 = vpop.permute.xlu0 %4413
    %4415 = vrot.lane.b32.xlu0 %v4364, 64
    %v4416 = vpop.permute.xlu0 %4415
    %4417 = vrot.lane.b32.xlu0 %v4366, 64
    %v4418 = vpop.permute.xlu0 %4417
    %4427 = vrot.lane.b32.xlu0 %v4376, 64
    %v4428 = vpop.permute.xlu0 %4427
    %4429 = vrot.lane.b32.xlu0 %v4378, 64
    %v4430 = vpop.permute.xlu0 %4429
    %4431 = vrot.lane.b32.xlu0 %v4380, 64
    %v4432 = vpop.permute.xlu0 %4431
    %4433 = vrot.lane.b32.xlu0 %v4382, 64
    %v4434 = vpop.permute.xlu0 %4433
    %4443 = vrot.lane.b32.xlu0 %v4392, 64
    %v4444 = vpop.permute.xlu0 %4443
    %4445 = vrot.lane.b32.xlu0 %v4394, 64
    %v4446 = vpop.permute.xlu0 %4445
    %4447 = vrot.lane.b32.xlu0 %v4396, 64
    %v4448 = vpop.permute.xlu0 %4447
    %4449 = vrot.lane.b32.xlu0 %v4398, 64
    %v4450 = vpop.permute.xlu0 %4449
    %v4455 = vsel %vm95, %v4352, %v4412
    %v4456 = vsel %vm95, %v4354, %v4414
    %v4457 = vsel %vm95, %v4356, %v4416
    %v4458 = vsel %vm95, %v4358, %v4418
    %v4459 = vsel %vm95, %v4368, %v4428
    %v4460 = vsel %vm95, %v4370, %v4430
    %v4461 = vsel %vm95, %v4372, %v4432
    %v4462 = vsel %vm95, %v4374, %v4434
    %v4463 = vsel %vm95, %v4384, %v4444
    %v4464 = vsel %vm95, %v4386, %v4446
    %v4465 = vsel %vm95, %v4388, %v4448
    %v4466 = vsel %vm95, %v4390, %v4450
    %v4467 = vld [vmem:[%s8] sm:$0xff]
    %v4468 = vld [vmem:[%s8 + $0x8] sm:$0xff]
    %v4469 = vld [vmem:[%s8 + $0x10] sm:$0xff]
    %v4470 = vld [vmem:[%s8 + $0x18] sm:$0xff]
    %v4471 = vld [vmem:[%s8 + $0x20] sm:$0xff]
    %v4472 = vld [vmem:[%s8 + $0x28] sm:$0xff]
    %v4473 = vld [vmem:[%s8 + $0x30] sm:$0xff]
    %v4474 = vld [vmem:[%s8 + $0x38] sm:$0xff]
    %v4475 = vld [vmem:[%s8 + $0x40] sm:$0xff]
    %v4476 = vld [vmem:[%s8 + $0x48] sm:$0xff]
    %v4477 = vld [vmem:[%s8 + $0x50] sm:$0xff]
    %v4478 = vld [vmem:[%s8 + $0x58] sm:$0xff]
    %v4479 = vld [vmem:[%s8 + $0x60] sm:$0xff]
    %v4480 = vld [vmem:[%s8 + $0x68] sm:$0xff]
    %v4481 = vld [vmem:[%s8 + $0x70] sm:$0xff]
    %v4482 = vld [vmem:[%s8 + $0x78] sm:$0xff]
    %v4483 = vld [vmem:[%s8 + $0x80] sm:$0xff]
    %v4484 = vld [vmem:[%s8 + $0x88] sm:$0xff]
    %v4485 = vld [vmem:[%s8 + $0x90] sm:$0xff]
    %v4486 = vld [vmem:[%s8 + $0x98] sm:$0xff]
    %v4487 = vld [vmem:[%s8 + $0xa0] sm:$0xff]
    %v4488 = vld [vmem:[%s8 + $0xa8] sm:$0xff]
    %v4489 = vld [vmem:[%s8 + $0xb0] sm:$0xff]
    %v4490 = vld [vmem:[%s8 + $0xb8] sm:$0xff]
    %v4491 = vld [vmem:[%s8 + $0xc0] sm:$0xff]
    %v4492 = vld [vmem:[%s8 + $0xc8] sm:$0xff]
    %v4493 = vld [vmem:[%s8 + $0xd0] sm:$0xff]
    %v4494 = vld [vmem:[%s8 + $0xd8] sm:$0xff]
    %v4495 = vld [vmem:[%s8 + $0xe0] sm:$0xff]
    %v4496 = vld [vmem:[%s8 + $0xe8] sm:$0xff]
    %v4497 = vld [vmem:[%s8 + $0xf0] sm:$0xff]
    %v4498 = vld [vmem:[%s8 + $0xf8] sm:$0xff]
    %v4499 = vld [vmem:[%s8 + $0x100] sm:$0xff]
    %v4500 = vld [vmem:[%s8 + $0x108] sm:$0xff]
    %v4501 = vld [vmem:[%s8 + $0x110] sm:$0xff]
    %v4502 = vld [vmem:[%s8 + $0x118] sm:$0xff]
    %v4503 = vld [vmem:[%s8 + $0x120] sm:$0xff]
    %v4504 = vld [vmem:[%s8 + $0x128] sm:$0xff]
    %v4505 = vld [vmem:[%s8 + $0x130] sm:$0xff]
    %v4506 = vld [vmem:[%s8 + $0x138] sm:$0xff]
    %v4507 = vld [vmem:[%s8 + $0x140] sm:$0xff]
    %v4508 = vld [vmem:[%s8 + $0x148] sm:$0xff]
    %v4509 = vld [vmem:[%s8 + $0x150] sm:$0xff]
    %v4510 = vld [vmem:[%s8 + $0x158] sm:$0xff]
    %v4511 = vld [vmem:[%s8 + $0x160] sm:$0xff]
    %v4512 = vld [vmem:[%s8 + $0x168] sm:$0xff]
    %v4513 = vld [vmem:[%s8 + $0x170] sm:$0xff]
    %v4514 = vld [vmem:[%s8 + $0x178] sm:$0xff]
    %v4515 = vld [vmem:[%s8 + $0x180] sm:$0xff]
    %v4516 = vld [vmem:[%s8 + $0x188] sm:$0xff]
    %v4517 = vld [vmem:[%s8 + $0x190] sm:$0xff]
    %v4518 = vld [vmem:[%s8 + $0x198] sm:$0xff]
    %v4519 = vld [vmem:[%s8 + $0x1a0] sm:$0xff]
    %v4520 = vld [vmem:[%s8 + $0x1a8] sm:$0xff]
    %v4521 = vld [vmem:[%s8 + $0x1b0] sm:$0xff]
    %v4522 = vld [vmem:[%s8 + $0x1b8] sm:$0xff]
    %v4524 = vsel %vm95, %v4400, 0
    %v4527 = vsel %vm95, %v4402, 0
    %v4530 = vsel %vm95, %v4404, 0
    %v4533 = vsel %vm95, %v4406, 0
    %4535 = vmatprep.subr.mxu0 0.0
    %4536 = vmatpush1.msra.mxu0 %v4467
    %4537 = vmatprep.subr.mxu0 0.0
    %4538 = vmatpush1.msra.mxu0 %v4468
    %4539 = vmatprep.subr.mxu0 0.0
    %4540 = vmatpush1.msra.mxu0 %v4469
    %4541 = vmatprep.subr.mxu0 0.0
    %4542 = vmatpush1.msra.mxu0 %v4470
    %4543 = vmatprep.subr.mxu0 0.0
    %4544 = vmatpush1.msra.mxu0 %v4471
    %4545 = vmatprep.subr.mxu0 0.0
    %4546 = vmatpush1.msra.mxu0 %v4472
    %4547 = vmatprep.subr.mxu0 0.0
    %4548 = vmatpush1.msra.mxu0 %v4473
    %4549 = vmatprep.subr.mxu0 0.0
    %4550 = vmatpush1.msra.mxu0 %v4474
    %4551 = vmatprep.subr.mxu0 0.0
    %4552 = vmatpush1.msra.mxu0 %v4475
    %4553 = vmatprep.subr.mxu0 0.0
    %4554 = vmatpush1.msra.mxu0 %v4476
    %4555 = vmatprep.subr.mxu0 0.0
    %4556 = vmatpush1.msra.mxu0 %v4477
    %4557 = vmatprep.subr.mxu0 0.0
    %4558 = vmatpush1.msra.mxu0 %v4478
    %4559 = vmatprep.subr.mxu0 0.0
    %4560 = vmatpush1.msra.mxu0 %v4479
    %4561 = vmatprep.subr.mxu0 0.0
    %4562 = vmatpush1.msra.mxu0 %v4480
    %4563 = vmatprep.subr.mxu0 0.0
    %4564 = vmatpush1.msra.mxu0 %v4481
    %4565 = vmatprep.subr.mxu0 0.0
    %4566 = vmatpush1.msra.mxu0 %v4482
    %4567 = vmatprep.subr.mxu0 0.0
    %4568 = vmatpush1.msra.mxu0 %v4483
    %4569 = vmatprep.subr.mxu0 0.0
    %4570 = vmatpush1.msra.mxu0 %v4484
    %4571 = vmatprep.subr.mxu0 0.0
    %4572 = vmatpush1.msra.mxu0 %v4485
    %4573 = vmatprep.subr.mxu0 0.0
    %4574 = vmatpush1.msra.mxu0 %v4486
    %4575 = vmatprep.subr.mxu0 0.0
    %4576 = vmatpush1.msra.mxu0 %v4487
    %4577 = vmatprep.subr.mxu0 0.0
    %4578 = vmatpush1.msra.mxu0 %v4488
    %4579 = vmatprep.subr.mxu0 0.0
    %4580 = vmatpush1.msra.mxu0 %v4489
    %4581 = vmatprep.subr.mxu0 0.0
    %4582 = vmatpush1.msra.mxu0 %v4490
    %4583 = vmatprep.subr.mxu0 0.0
    %4584 = vmatpush1.msra.mxu0 %v4491
    %4585 = vmatprep.subr.mxu0 0.0
    %4586 = vmatpush1.msra.mxu0 %v4492
    %4587 = vmatprep.subr.mxu0 0.0
    %4588 = vmatpush1.msra.mxu0 %v4493
    %4589 = vmatprep.subr.mxu0 0.0
    %4590 = vmatpush1.msra.mxu0 %v4494
    %4591 = vmatprep.subr.mxu0 0.0
    %4592 = vmatpush1.msra.mxu0 %v4495
    %4593 = vmatprep.subr.mxu0 0.0
    %4594 = vmatpush1.msra.mxu0 %v4496
    %4595 = vmatprep.subr.mxu0 0.0
    %4596 = vmatpush1.msra.mxu0 %v4497
    %4597 = vmatprep.subr.mxu0 0.0
    %4598 = vmatpush1.msra.mxu0 %v4498
    %4599 = vmatprep.mubr.f32.mxu0 %v4459
    %4600 = vmatmul.mubr.f32.gmra.mrb[0].mxu0 %v4455
    %v4601 = vpop.f32.mrb[0].mxu0
    %v4602 = vadd.f32 0.0, %v4601
    %v4603 = vpop.f32.mrb[0].mxu0
    %4604 = vmatprep.mubr.f32.mxu0 %v4460
    %4605 = vmatmul.mubr.f32.gmra.mrb[0].mxu0 %v4456
    %v4606 = vpop.f32.mrb[0].mxu0
    %v4607 = vadd.f32 0.0, %v4606
    %v4608 = vpop.f32.mrb[0].mxu0
    %4609 = vmatprep.mubr.f32.mxu0 %v4461
    %4610 = vmatmul.mubr.f32.gmra.mrb[0].mxu0 %v4457
    %v4611 = vpop.f32.mrb[0].mxu0
    %v4612 = vadd.f32 0.0, %v4611
    %v4613 = vpop.f32.mrb[0].mxu0
    %4614 = vmatprep.mubr.f32.mxu0 %v4462
    %4615 = vmatmul.mubr.f32.gmra.mrb[0].mxu0 %v4458
    %v4616 = vpop.f32.mrb[0].mxu0
    %v4617 = vadd.f32 0.0, %v4616
    %v4618 = vpop.f32.mrb[0].mxu0
    %4619 = vdwg.mxu0
    %4620 = vmatprep.subr.mxu0 0.0
    %4621 = vmatpush1.msra.mxu0 %v4499
    %4622 = vmatprep.subr.mxu0 0.0
    %4623 = vmatpush1.msra.mxu0 %v4500
    %4624 = vmatprep.subr.mxu0 0.0
    %4625 = vmatpush1.msra.mxu0 %v4501
    %4626 = vmatprep.subr.mxu0 0.0
    %4627 = vmatpush1.msra.mxu0 %v4502
    %4628 = vmatprep.subr.mxu0 0.0
    %4629 = vmatpush1.msra.mxu0 %v4503
    %4630 = vmatprep.subr.mxu0 0.0
    %4631 = vmatpush1.msra.mxu0 %v4504
    %4632 = vmatprep.subr.mxu0 0.0
    %4633 = vmatpush1.msra.mxu0 %v4505
    %4634 = vmatprep.subr.mxu0 0.0
    %4635 = vmatpush1.msra.mxu0 %v4506
    %4636 = vmatprep.subr.mxu0 0.0
    %4637 = vmatpush1.msra.mxu0 %v4507
    %4638 = vmatprep.subr.mxu0 0.0
    %4639 = vmatpush1.msra.mxu0 %v4508
    %4640 = vmatprep.subr.mxu0 0.0
    %4641 = vmatpush1.msra.mxu0 %v4509
    %4642 = vmatprep.subr.mxu0 0.0
    %4643 = vmatpush1.msra.mxu0 %v4510
    %4644 = vmatprep.subr.mxu0 0.0
    %4645 = vmatpush1.msra.mxu0 %v4511
    %4646 = vmatprep.subr.mxu0 0.0
    %4647 = vmatpush1.msra.mxu0 %v4512
    %4648 = vmatprep.subr.mxu0 0.0
    %4649 = vmatpush1.msra.mxu0 %v4513
    %4650 = vmatprep.subr.mxu0 0.0
    %4651 = vmatpush1.msra.mxu0 %v4514
    %4652 = vmatprep.subr.mxu0 0.0
    %4653 = vmatpush1.msra.mxu0 %v4515
    %4654 = vmatprep.subr.mxu0 0.0
    %4655 = vmatpush1.msra.mxu0 %v4516
    %4656 = vmatprep.subr.mxu0 0.0
    %4657 = vmatpush1.msra.mxu0 %v4517
    %4658 = vmatprep.subr.mxu0 0.0
    %4659 = vmatpush1.msra.mxu0 %v4518
    %4660 = vmatprep.subr.mxu0 0.0
    %4661 = vmatpush1.msra.mxu0 %v4519
    %4662 = vmatprep.subr.mxu0 0.0
    %4663 = vmatpush1.msra.mxu0 %v4520
    %4664 = vmatprep.subr.mxu0 0.0
    %4665 = vmatpush1.msra.mxu0 %v4521
    %4666 = vmatprep.subr.mxu0 0.0
    %4667 = vmatpush1.msra.mxu0 %v4522
    %4668 = vmatprep.subr.mxu0 0.0
    %4669 = vmatpush1.msra.mxu0 0.0
    %4670 = vmatprep.subr.mxu0 0.0
    %4671 = vmatpush1.msra.mxu0 0.0
    %4672 = vmatprep.subr.mxu0 0.0
    %4673 = vmatpush1.msra.mxu0 0.0
    %4674 = vmatprep.subr.mxu0 0.0
    %4675 = vmatpush1.msra.mxu0 0.0
    %4676 = vmatprep.subr.mxu0 0.0
    %4677 = vmatpush1.msra.mxu0 0.0
    %4678 = vmatprep.subr.mxu0 0.0
    %4679 = vmatpush1.msra.mxu0 0.0
    %4680 = vmatprep.subr.mxu0 0.0
    %4681 = vmatpush1.msra.mxu0 0.0
    %4682 = vmatprep.subr.mxu0 0.0
    %4683 = vmatpush1.msra.mxu0 0.0
    %4684 = vmatprep.mubr.f32.mxu0 %v4524
    %4685 = vmatmul.mubr.f32.gmra.mrb[0].mxu0 %v4463
    %v4686 = vpop.f32.mrb[0].mxu0
    %v4687 = vadd.f32 %v4602, %v4686
    %v4688 = vpop.f32.mrb[0].mxu0
    %4689 = vmatprep.mubr.f32.mxu0 %v4527
    %4690 = vmatmul.mubr.f32.gmra.mrb[0].mxu0 %v4464
    %v4691 = vpop.f32.mrb[0].mxu0
    %v4692 = vadd.f32 %v4607, %v4691
    %v4693 = vpop.f32.mrb[0].mxu0
    %4694 = vmatprep.mubr.f32.mxu0 %v4530
    %4695 = vmatmul.mubr.f32.gmra.mrb[0].mxu0 %v4465
    %v4696 = vpop.f32.mrb[0].mxu0
    %v4697 = vadd.f32 %v4612, %v4696
    %v4698 = vpop.f32.mrb[0].mxu0
    %4699 = vmatprep.mubr.f32.mxu0 %v4533
    %4700 = vmatmul.mubr.f32.gmra.mrb[0].mxu0 %v4466
    %v4701 = vpop.f32.mrb[0].mxu0
    %v4702 = vadd.f32 %v4617, %v4701
    %v4703 = vpop.f32.mrb[0].mxu0
    %4704 = vdwg.mxu0
    %v4705 = vld [vmem:[%s9] sm:$0x1]
    %v4707 = vlaneseq
    %v4708 = vshrl.u32 %v4707, 7
    %v4709 = vsub.s32 0, %v4708
    %v4710 = vrot.slane %v4705, %v4709
    %v4712 = vmul.f32 %v4687, %v4710
    %v4713 = vmul.f32 %v4692, %v4710
    %v4714 = vmul.f32 %v4697, %v4710
    %v4715 = vmul.f32 %v4702, %v4710
    %v4716 = vld [vmem:[%s10] sm:$0x1]
    %v4718 = vlaneseq
    %v4719 = vshrl.u32 %v4718, 7
    %v4720 = vsub.s32 0, %v4719
    %v4721 = vrot.slane %v4716, %v4720
    %v4723 = vadd.f32 %v4712, %v4721
    %v4724 = vadd.f32 %v4713, %v4721
    %v4725 = vadd.f32 %v4714, %v4721
    %v4726 = vadd.f32 %v4715, %v4721
    %v4727 = vmax.f32 %v4723, 0.0
    %v4728 = vmax.f32 %v4724, 0.0
    %v4729 = vmax.f32 %v4725, 0.0
    %v4730 = vmax.f32 %v4726, 0.0
    %4735 = vrot.lane.b32.xlu0 %v4727, 64
    %v4736 = vpop.permute.xlu0 %4735
    %4737 = vrot.lane.b32.xlu0 %v4728, 64
    %v4738 = vpop.permute.xlu0 %4737
    %4739 = vrot.lane.b32.xlu0 %v4729, 64
    %v4740 = vpop.permute.xlu0 %4739
    %4741 = vrot.lane.b32.xlu0 %v4730, 64
    %v4742 = vpop.permute.xlu0 %4741
    %v4747 = vadd.f32 %v4727, %v4736
    %v4748 = vadd.f32 %v4728, %v4738
    %v4749 = vadd.f32 %v4729, %v4740
    %v4750 = vadd.f32 %v4730, %v4742
    %v4751 = vmul.f32 %v4747, 0.5
    %v4752 = vmul.f32 %v4748, 0.5
    %v4753 = vmul.f32 %v4749, 0.5
    %v4754 = vmul.f32 %v4750, 0.5
    %4755 = vst.msk [vmem:[#allocation4] sm:$0xff] %vm95, %v4751
    %4756 = vst.msk [vmem:[#allocation4 + $0x8] sm:$0xff] %vm95, %v4752
    %4757 = vst.msk [vmem:[#allocation4 + $0x10] sm:$0xff] %vm95, %v4753
    %4758 = vst.msk [vmem:[#allocation4 + $0x18] sm:$0xff] %vm95, %v4754
    %v4759 = vld [vmem:[#allocation4] ss:$4 sm:$0xf]
    %s4760 = scalar_lea.vmem [#allocation4], 16
    %v4761 = vld [vmem:[%s4760] ss:$4 sm:$0xf]
    %s4762 = scalar_lea.vmem [#allocation4], 1
    %v4763 = vld [vmem:[%s4762] ss:$4 sm:$0xf]
    %s4764 = scalar_lea.vmem [#allocation4], 17
    %v4765 = vld [vmem:[%s4764] ss:$4 sm:$0xf]
    %s4766 = scalar_lea.vmem [#allocation4], 2
    %v4767 = vld [vmem:[%s4766] ss:$4 sm:$0xf]
    %s4768 = scalar_lea.vmem [#allocation4], 18
    %v4769 = vld [vmem:[%s4768] ss:$4 sm:$0xf]
    %s4770 = scalar_lea.vmem [#allocation4], 3
    %v4771 = vld [vmem:[%s4770] ss:$4 sm:$0xf]
    %s4772 = scalar_lea.vmem [#allocation4], 19
    %v4773 = vld [vmem:[%s4772] ss:$4 sm:$0xf]
    %4776 = vrot.lane.b32.xlu0 %v4763, 64
    %v4777 = vpop.permute.xlu0 %4776
    %4778 = vrot.lane.b32.xlu0 %v4765, 64
    %v4779 = vpop.permute.xlu0 %4778
    %4784 = vrot.lane.b32.xlu0 %v4771, 64
    %v4785 = vpop.permute.xlu0 %4784
    %4786 = vrot.lane.b32.xlu0 %v4773, 64
    %v4787 = vpop.permute.xlu0 %4786
    %v4790 = vsel %vm95, %v4759, %v4777
    %v4791 = vsel %vm95, %v4761, %v4779
    %v4792 = vsel %vm95, %v4767, %v4785
    %v4793 = vsel %vm95, %v4769, %v4787
    %v4798 = vcombine.low %v4790, %v4792
    %v4799 = vcombine.low %v4791, %v4793
    %v4802 = vld [vmem:[%s11] sm:$0xff]
    %v4803 = vld [vmem:[%s11 + $0x8] sm:$0xff]
    %v4804 = vld [vmem:[%s11 + $0x10] sm:$0xff]
    %v4805 = vld [vmem:[%s11 + $0x18] sm:$0xff]
    %v4806 = vld [vmem:[%s11 + $0x20] sm:$0xff]
    %v4807 = vld [vmem:[%s11 + $0x28] sm:$0xff]
    %v4808 = vld [vmem:[%s11 + $0x30] sm:$0xff]
    %v4809 = vld [vmem:[%s11 + $0x38] sm:$0xff]
    %v4810 = vld [vmem:[%s11 + $0x40] sm:$0xff]
    %v4811 = vld [vmem:[%s11 + $0x48] sm:$0xff]
    %v4812 = vld [vmem:[%s11 + $0x50] sm:$0xff]
    %v4813 = vld [vmem:[%s11 + $0x58] sm:$0xff]
    %v4814 = vld [vmem:[%s11 + $0x60] sm:$0xff]
    %v4815 = vld [vmem:[%s11 + $0x68] sm:$0xff]
    %v4816 = vld [vmem:[%s11 + $0x70] sm:$0xff]
    %v4817 = vld [vmem:[%s11 + $0x78] sm:$0xff]
    %v4818 = vld [vmem:[%s11 + $0x80] sm:$0xff]
    %v4819 = vld [vmem:[%s11 + $0x88] sm:$0xff]
    %v4820 = vld [vmem:[%s11 + $0x90] sm:$0xff]
    %v4821 = vld [vmem:[%s11 + $0x98] sm:$0xff]
    %v4822 = vld [vmem:[%s11 + $0xa0] sm:$0xff]
    %v4823 = vld [vmem:[%s11 + $0xa8] sm:$0xff]
    %v4824 = vld [vmem:[%s11 + $0xb0] sm:$0xff]
    %v4825 = vld [vmem:[%s11 + $0xb8] sm:$0xff]
    %v4826 = vld [vmem:[%s11 + $0xc0] sm:$0xff]
    %v4827 = vld [vmem:[%s11 + $0xc8] sm:$0xff]
    %v4828 = vld [vmem:[%s11 + $0xd0] sm:$0xff]
    %v4829 = vld [vmem:[%s11 + $0xd8] sm:$0xff]
    %v4830 = vld [vmem:[%s11 + $0xe0] sm:$0xff]
    %v4831 = vld [vmem:[%s11 + $0xe8] sm:$0xff]
    %v4832 = vld [vmem:[%s11 + $0xf0] sm:$0xff]
    %v4833 = vld [vmem:[%s11 + $0xf8] sm:$0xff]
    %v4834 = vld [vmem:[%s11 + $0x100] sm:$0xff]
    %v4835 = vld [vmem:[%s11 + $0x108] sm:$0xff]
    %v4836 = vld [vmem:[%s11 + $0x110] sm:$0xff]
    %v4837 = vld [vmem:[%s11 + $0x118] sm:$0xff]
    %v4838 = vld [vmem:[%s11 + $0x120] sm:$0xff]
    %v4839 = vld [vmem:[%s11 + $0x128] sm:$0xff]
    %v4840 = vld [vmem:[%s11 + $0x130] sm:$0xff]
    %v4841 = vld [vmem:[%s11 + $0x138] sm:$0xff]
    %v4842 = vld [vmem:[%s11 + $0x140] sm:$0xff]
    %v4843 = vld [vmem:[%s11 + $0x148] sm:$0xff]
    %v4844 = vld [vmem:[%s11 + $0x150] sm:$0xff]
    %v4845 = vld [vmem:[%s11 + $0x158] sm:$0xff]
    %v4846 = vld [vmem:[%s11 + $0x160] sm:$0xff]
    %v4847 = vld [vmem:[%s11 + $0x168] sm:$0xff]
    %v4848 = vld [vmem:[%s11 + $0x170] sm:$0xff]
    %v4849 = vld [vmem:[%s11 + $0x178] sm:$0xff]
    %v4850 = vld [vmem:[%s11 + $0x180] sm:$0xff]
    %v4851 = vld [vmem:[%s11 + $0x188] sm:$0xff]
    %v4852 = vld [vmem:[%s11 + $0x190] sm:$0xff]
    %v4853 = vld [vmem:[%s11 + $0x198] sm:$0xff]
    %v4854 = vld [vmem:[%s11 + $0x1a0] sm:$0xff]
    %v4855 = vld [vmem:[%s11 + $0x1a8] sm:$0xff]
    %v4856 = vld [vmem:[%s11 + $0x1b0] sm:$0xff]
    %v4857 = vld [vmem:[%s11 + $0x1b8] sm:$0xff]
    %v4858 = vld [vmem:[%s11 + $0x1c0] sm:$0xff]
    %v4859 = vld [vmem:[%s11 + $0x1c8] sm:$0xff]
    %v4860 = vld [vmem:[%s11 + $0x1d0] sm:$0xff]
    %v4861 = vld [vmem:[%s11 + $0x1d8] sm:$0xff]
    %v4862 = vld [vmem:[%s11 + $0x1e0] sm:$0xff]
    %v4863 = vld [vmem:[%s11 + $0x1e8] sm:$0xff]
    %v4864 = vld [vmem:[%s11 + $0x1f0] sm:$0xff]
    %v4865 = vld [vmem:[%s11 + $0x1f8] sm:$0xff]
    %v4866 = vld [vmem:[%s11 + $0x200] sm:$0xff]
    %v4867 = vld [vmem:[%s11 + $0x208] sm:$0xff]
    %v4868 = vld [vmem:[%s11 + $0x210] sm:$0xff]
    %v4869 = vld [vmem:[%s11 + $0x218] sm:$0xff]
    %v4870 = vld [vmem:[%s11 + $0x220] sm:$0xff]
    %v4871 = vld [vmem:[%s11 + $0x228] sm:$0xff]
    %v4872 = vld [vmem:[%s11 + $0x230] sm:$0xff]
    %v4873 = vld [vmem:[%s11 + $0x238] sm:$0xff]
    %v4874 = vld [vmem:[%s11 + $0x240] sm:$0xff]
    %v4875 = vld [vmem:[%s11 + $0x248] sm:$0xff]
    %v4876 = vld [vmem:[%s11 + $0x250] sm:$0xff]
    %v4877 = vld [vmem:[%s11 + $0x258] sm:$0xff]
    %v4878 = vld [vmem:[%s11 + $0x260] sm:$0xff]
    %v4879 = vld [vmem:[%s11 + $0x268] sm:$0xff]
    %v4880 = vld [vmem:[%s11 + $0x270] sm:$0xff]
    %v4881 = vld [vmem:[%s11 + $0x278] sm:$0xff]
    %v4882 = vld [vmem:[%s11 + $0x280] sm:$0xff]
    %v4883 = vld [vmem:[%s11 + $0x288] sm:$0xff]
    %v4884 = vld [vmem:[%s11 + $0x290] sm:$0xff]
    %v4885 = vld [vmem:[%s11 + $0x298] sm:$0xff]
    %v4886 = vld [vmem:[%s11 + $0x2a0] sm:$0xff]
    %v4887 = vld [vmem:[%s11 + $0x2a8] sm:$0xff]
    %v4888 = vld [vmem:[%s11 + $0x2b0] sm:$0xff]
    %v4889 = vld [vmem:[%s11 + $0x2b8] sm:$0xff]
    %v4890 = vld [vmem:[%s11 + $0x2c0] sm:$0xff]
    %v4891 = vld [vmem:[%s11 + $0x2c8] sm:$0xff]
    %v4892 = vld [vmem:[%s11 + $0x2d0] sm:$0xff]
    %v4893 = vld [vmem:[%s11 + $0x2d8] sm:$0xff]
    %v4894 = vld [vmem:[%s11 + $0x2e0] sm:$0xff]
    %v4895 = vld [vmem:[%s11 + $0x2e8] sm:$0xff]
    %v4896 = vld [vmem:[%s11 + $0x2f0] sm:$0xff]
    %v4897 = vld [vmem:[%s11 + $0x2f8] sm:$0xff]
    %v4898 = vld [vmem:[%s11 + $0x300] sm:$0xff]
    %v4899 = vld [vmem:[%s11 + $0x308] sm:$0xff]
    %v4900 = vld [vmem:[%s11 + $0x310] sm:$0xff]
    %v4901 = vld [vmem:[%s11 + $0x318] sm:$0xff]
    %v4902 = vld [vmem:[%s11 + $0x320] sm:$0xff]
    %v4903 = vld [vmem:[%s11 + $0x328] sm:$0xff]
    %v4904 = vld [vmem:[%s11 + $0x330] sm:$0xff]
    %v4905 = vld [vmem:[%s11 + $0x338] sm:$0xff]
    %v4906 = vld [vmem:[%s11 + $0x340] sm:$0xff]
    %v4907 = vld [vmem:[%s11 + $0x348] sm:$0xff]
    %v4908 = vld [vmem:[%s11 + $0x350] sm:$0xff]
    %v4909 = vld [vmem:[%s11 + $0x358] sm:$0xff]
    %v4910 = vld [vmem:[%s11 + $0x360] sm:$0xff]
    %v4911 = vld [vmem:[%s11 + $0x368] sm:$0xff]
    %v4912 = vld [vmem:[%s11 + $0x370] sm:$0xff]
    %v4913 = vld [vmem:[%s11 + $0x378] sm:$0xff]
    %v4914 = vld [vmem:[%s11 + $0x380] sm:$0xff]
    %v4915 = vld [vmem:[%s11 + $0x388] sm:$0xff]
    %v4916 = vld [vmem:[%s11 + $0x390] sm:$0xff]
    %v4917 = vld [vmem:[%s11 + $0x398] sm:$0xff]
    %v4918 = vld [vmem:[%s11 + $0x3a0] sm:$0xff]
    %v4919 = vld [vmem:[%s11 + $0x3a8] sm:$0xff]
    %v4920 = vld [vmem:[%s11 + $0x3b0] sm:$0xff]
    %v4921 = vld [vmem:[%s11 + $0x3b8] sm:$0xff]
    %v4922 = vld [vmem:[%s11 + $0x3c0] sm:$0xff]
    %v4923 = vld [vmem:[%s11 + $0x3c8] sm:$0xff]
    %v4924 = vld [vmem:[%s11 + $0x3d0] sm:$0xff]
    %v4925 = vld [vmem:[%s11 + $0x3d8] sm:$0xff]
    %v4926 = vld [vmem:[%s11 + $0x3e0] sm:$0xff]
    %v4927 = vld [vmem:[%s11 + $0x3e8] sm:$0xff]
    %v4928 = vld [vmem:[%s11 + $0x3f0] sm:$0xff]
    %v4929 = vld [vmem:[%s11 + $0x3f8] sm:$0xff]
    %v4930 = vld [vmem:[%s11 + $0x400] sm:$0xff]
    %v4931 = vld [vmem:[%s11 + $0x408] sm:$0xff]
    %v4932 = vld [vmem:[%s11 + $0x410] sm:$0xff]
    %v4933 = vld [vmem:[%s11 + $0x418] sm:$0xff]
    %v4934 = vld [vmem:[%s11 + $0x420] sm:$0xff]
    %v4935 = vld [vmem:[%s11 + $0x428] sm:$0xff]
    %v4936 = vld [vmem:[%s11 + $0x430] sm:$0xff]
    %v4937 = vld [vmem:[%s11 + $0x438] sm:$0xff]
    %v4938 = vld [vmem:[%s11 + $0x440] sm:$0xff]
    %v4939 = vld [vmem:[%s11 + $0x448] sm:$0xff]
    %v4940 = vld [vmem:[%s11 + $0x450] sm:$0xff]
    %v4941 = vld [vmem:[%s11 + $0x458] sm:$0xff]
    %v4942 = vld [vmem:[%s11 + $0x460] sm:$0xff]
    %v4943 = vld [vmem:[%s11 + $0x468] sm:$0xff]
    %v4944 = vld [vmem:[%s11 + $0x470] sm:$0xff]
    %v4945 = vld [vmem:[%s11 + $0x478] sm:$0xff]
    %v4946 = vld [vmem:[%s11 + $0x480] sm:$0xff]
    %v4947 = vld [vmem:[%s11 + $0x488] sm:$0xff]
    %v4948 = vld [vmem:[%s11 + $0x490] sm:$0xff]
    %v4949 = vld [vmem:[%s11 + $0x498] sm:$0xff]
    %v4950 = vld [vmem:[%s11 + $0x4a0] sm:$0xff]
    %v4951 = vld [vmem:[%s11 + $0x4a8] sm:$0xff]
    %v4952 = vld [vmem:[%s11 + $0x4b0] sm:$0xff]
    %v4953 = vld [vmem:[%s11 + $0x4b8] sm:$0xff]
    %v4954 = vld [vmem:[%s11 + $0x4c0] sm:$0xff]
    %v4955 = vld [vmem:[%s11 + $0x4c8] sm:$0xff]
    %v4956 = vld [vmem:[%s11 + $0x4d0] sm:$0xff]
    %v4957 = vld [vmem:[%s11 + $0x4d8] sm:$0xff]
    %v4958 = vld [vmem:[%s11 + $0x4e0] sm:$0xff]
    %v4959 = vld [vmem:[%s11 + $0x4e8] sm:$0xff]
    %v4960 = vld [vmem:[%s11 + $0x4f0] sm:$0xff]
    %v4961 = vld [vmem:[%s11 + $0x4f8] sm:$0xff]
    %v4962 = vld [vmem:[%s11 + $0x500] sm:$0xff]
    %v4963 = vld [vmem:[%s11 + $0x508] sm:$0xff]
    %v4964 = vld [vmem:[%s11 + $0x510] sm:$0xff]
    %v4965 = vld [vmem:[%s11 + $0x518] sm:$0xff]
    %v4966 = vld [vmem:[%s11 + $0x520] sm:$0xff]
    %v4967 = vld [vmem:[%s11 + $0x528] sm:$0xff]
    %v4968 = vld [vmem:[%s11 + $0x530] sm:$0xff]
    %v4969 = vld [vmem:[%s11 + $0x538] sm:$0xff]
    %v4970 = vld [vmem:[%s11 + $0x540] sm:$0xff]
    %v4971 = vld [vmem:[%s11 + $0x548] sm:$0xff]
    %v4972 = vld [vmem:[%s11 + $0x550] sm:$0xff]
    %v4973 = vld [vmem:[%s11 + $0x558] sm:$0xff]
    %v4974 = vld [vmem:[%s11 + $0x560] sm:$0xff]
    %v4975 = vld [vmem:[%s11 + $0x568] sm:$0xff]
    %v4976 = vld [vmem:[%s11 + $0x570] sm:$0xff]
    %v4977 = vld [vmem:[%s11 + $0x578] sm:$0xff]
    %v4978 = vld [vmem:[%s11 + $0x580] sm:$0xff]
    %v4979 = vld [vmem:[%s11 + $0x588] sm:$0xff]
    %v4980 = vld [vmem:[%s11 + $0x590] sm:$0xff]
    %v4981 = vld [vmem:[%s11 + $0x598] sm:$0xff]
    %v4982 = vld [vmem:[%s11 + $0x5a0] sm:$0xff]
    %v4983 = vld [vmem:[%s11 + $0x5a8] sm:$0xff]
    %v4984 = vld [vmem:[%s11 + $0x5b0] sm:$0xff]
    %v4985 = vld [vmem:[%s11 + $0x5b8] sm:$0xff]
    %v4986 = vld [vmem:[%s11 + $0x5c0] sm:$0xff]
    %v4987 = vld [vmem:[%s11 + $0x5c8] sm:$0xff]
    %v4988 = vld [vmem:[%s11 + $0x5d0] sm:$0xff]
    %v4989 = vld [vmem:[%s11 + $0x5d8] sm:$0xff]
    %v4990 = vld [vmem:[%s11 + $0x5e0] sm:$0xff]
    %v4991 = vld [vmem:[%s11 + $0x5e8] sm:$0xff]
    %v4992 = vld [vmem:[%s11 + $0x5f0] sm:$0xff]
    %v4993 = vld [vmem:[%s11 + $0x5f8] sm:$0xff]
    %v4994 = vcombine.low %v4798, %v4799
    %v4995 = vcombine.high %v4798, %v4799
    %4998 = vmatprep.subr.mxu0 %v4803
    %4999 = vmatpush1.msra.mxu0 %v4802
    %5000 = vmatprep.subr.mxu0 %v4809
    %5001 = vmatpush1.msra.mxu0 %v4808
    %5002 = vmatprep.subr.mxu0 %v4815
    %5003 = vmatpush1.msra.mxu0 %v4814
    %5004 = vmatprep.subr.mxu0 %v4821
    %5005 = vmatpush1.msra.mxu0 %v4820
    %5006 = vmatprep.subr.mxu0 %v4827
    %5007 = vmatpush1.msra.mxu0 %v4826
    %5008 = vmatprep.subr.mxu0 %v4833
    %5009 = vmatpush1.msra.mxu0 %v4832
    %5010 = vmatprep.subr.mxu0 %v4839
    %5011 = vmatpush1.msra.mxu0 %v4838
    %5012 = vmatprep.subr.mxu0 %v4845
    %5013 = vmatpush1.msra.mxu0 %v4844
    %5014 = vmatprep.subr.mxu0 %v4851
    %5015 = vmatpush1.msra.mxu0 %v4850
    %5016 = vmatprep.subr.mxu0 %v4857
    %5017 = vmatpush1.msra.mxu0 %v4856
    %5018 = vmatprep.subr.mxu0 %v4863
    %5019 = vmatpush1.msra.mxu0 %v4862
    %5020 = vmatprep.subr.mxu0 %v4869
    %5021 = vmatpush1.msra.mxu0 %v4868
    %5022 = vmatprep.subr.mxu0 %v4875
    %5023 = vmatpush1.msra.mxu0 %v4874
    %5024 = vmatprep.subr.mxu0 %v4881
    %5025 = vmatpush1.msra.mxu0 %v4880
    %5026 = vmatprep.subr.mxu0 %v4887
    %5027 = vmatpush1.msra.mxu0 %v4886
    %5028 = vmatprep.subr.mxu0 %v4893
    %5029 = vmatpush1.msra.mxu0 %v4892
    %5030 = vmatprep.subr.mxu0 %v4899
    %5031 = vmatpush1.msra.mxu0 %v4898
    %5032 = vmatprep.subr.mxu0 %v4905
    %5033 = vmatpush1.msra.mxu0 %v4904
    %5034 = vmatprep.subr.mxu0 %v4911
    %5035 = vmatpush1.msra.mxu0 %v4910
    %5036 = vmatprep.subr.mxu0 %v4917
    %5037 = vmatpush1.msra.mxu0 %v4916
    %5038 = vmatprep.subr.mxu0 %v4923
    %5039 = vmatpush1.msra.mxu0 %v4922
    %5040 = vmatprep.subr.mxu0 %v4929
    %5041 = vmatpush1.msra.mxu0 %v4928
    %5042 = vmatprep.subr.mxu0 %v4935
    %5043 = vmatpush1.msra.mxu0 %v4934
    %5044 = vmatprep.subr.mxu0 %v4941
    %5045 = vmatpush1.msra.mxu0 %v4940
    %5046 = vmatprep.subr.mxu0 %v4947
    %5047 = vmatpush1.msra.mxu0 %v4946
    %5048 = vmatprep.subr.mxu0 %v4953
    %5049 = vmatpush1.msra.mxu0 %v4952
    %5050 = vmatprep.subr.mxu0 %v4959
    %5051 = vmatpush1.msra.mxu0 %v4958
    %5052 = vmatprep.subr.mxu0 %v4965
    %5053 = vmatpush1.msra.mxu0 %v4964
    %5054 = vmatprep.subr.mxu0 %v4971
    %5055 = vmatpush1.msra.mxu0 %v4970
    %5056 = vmatprep.subr.mxu0 %v4977
    %5057 = vmatpush1.msra.mxu0 %v4976
    %5058 = vmatprep.subr.mxu0 %v4983
    %5059 = vmatpush1.msra.mxu0 %v4982
    %5060 = vmatprep.subr.mxu0 %v4989
    %5061 = vmatpush1.msra.mxu0 %v4988
    %5062 = vmatprep.mubr.f32.mxu0 %v4995
    %5063 = vmatmul.mubr.f32.gmra.mrb[0].mxu0 %v4994
    %v5064 = vpop.f32.mrb[0].mxu0
    %v5065 = vadd.f32 0.0, %v5064
    %v5066 = vpop.f32.mrb[0].mxu0
    %v5067 = vadd.f32 0.0, %v5066
    %5068 = vdwg.mxu0
    %5069 = vmatprep.subr.mxu0 %v4805
    %5070 = vmatpush1.msra.mxu0 %v4804
    %5071 = vmatprep.subr.mxu0 %v4811
    %5072 = vmatpush1.msra.mxu0 %v4810
    %5073 = vmatprep.subr.mxu0 %v4817
    %5074 = vmatpush1.msra.mxu0 %v4816
    %5075 = vmatprep.subr.mxu0 %v4823
    %5076 = vmatpush1.msra.mxu0 %v4822
    %5077 = vmatprep.subr.mxu0 %v4829
    %5078 = vmatpush1.msra.mxu0 %v4828
    %5079 = vmatprep.subr.mxu0 %v4835
    %5080 = vmatpush1.msra.mxu0 %v4834
    %5081 = vmatprep.subr.mxu0 %v4841
    %5082 = vmatpush1.msra.mxu0 %v4840
    %5083 = vmatprep.subr.mxu0 %v4847
    %5084 = vmatpush1.msra.mxu0 %v4846
    %5085 = vmatprep.subr.mxu0 %v4853
    %5086 = vmatpush1.msra.mxu0 %v4852
    %5087 = vmatprep.subr.mxu0 %v4859
    %5088 = vmatpush1.msra.mxu0 %v4858
    %5089 = vmatprep.subr.mxu0 %v4865
    %5090 = vmatpush1.msra.mxu0 %v4864
    %5091 = vmatprep.subr.mxu0 %v4871
    %5092 = vmatpush1.msra.mxu0 %v4870
    %5093 = vmatprep.subr.mxu0 %v4877
    %5094 = vmatpush1.msra.mxu0 %v4876
    %5095 = vmatprep.subr.mxu0 %v4883
    %5096 = vmatpush1.msra.mxu0 %v4882
    %5097 = vmatprep.subr.mxu0 %v4889
    %5098 = vmatpush1.msra.mxu0 %v4888
    %5099 = vmatprep.subr.mxu0 %v4895
    %5100 = vmatpush1.msra.mxu0 %v4894
    %5101 = vmatprep.subr.mxu0 %v4901
    %5102 = vmatpush1.msra.mxu0 %v4900
    %5103 = vmatprep.subr.mxu0 %v4907
    %5104 = vmatpush1.msra.mxu0 %v4906
    %5105 = vmatprep.subr.mxu0 %v4913
    %5106 = vmatpush1.msra.mxu0 %v4912
    %5107 = vmatprep.subr.mxu0 %v4919
    %5108 = vmatpush1.msra.mxu0 %v4918
    %5109 = vmatprep.subr.mxu0 %v4925
    %5110 = vmatpush1.msra.mxu0 %v4924
    %5111 = vmatprep.subr.mxu0 %v4931
    %5112 = vmatpush1.msra.mxu0 %v4930
    %5113 = vmatprep.subr.mxu0 %v4937
    %5114 = vmatpush1.msra.mxu0 %v4936
    %5115 = vmatprep.subr.mxu0 %v4943
    %5116 = vmatpush1.msra.mxu0 %v4942
    %5117 = vmatprep.subr.mxu0 %v4949
    %5118 = vmatpush1.msra.mxu0 %v4948
    %5119 = vmatprep.subr.mxu0 %v4955
    %5120 = vmatpush1.msra.mxu0 %v4954
    %5121 = vmatprep.subr.mxu0 %v4961
    %5122 = vmatpush1.msra.mxu0 %v4960
    %5123 = vmatprep.subr.mxu0 %v4967
    %5124 = vmatpush1.msra.mxu0 %v4966
    %5125 = vmatprep.subr.mxu0 %v4973
    %5126 = vmatpush1.msra.mxu0 %v4972
    %5127 = vmatprep.subr.mxu0 %v4979
    %5128 = vmatpush1.msra.mxu0 %v4978
    %5129 = vmatprep.subr.mxu0 %v4985
    %5130 = vmatpush1.msra.mxu0 %v4984
    %5131 = vmatprep.subr.mxu0 %v4991
    %5132 = vmatpush1.msra.mxu0 %v4990
    %5133 = vmatprep.mubr.f32.mxu0 %v4995
    %5134 = vmatmul.mubr.f32.gmra.mrb[0].mxu0 %v4994
    %v5135 = vpop.f32.mrb[0].mxu0
    %v5136 = vadd.f32 0.0, %v5135
    %v5137 = vpop.f32.mrb[0].mxu0
    %v5138 = vadd.f32 0.0, %v5137
    %5139 = vdwg.mxu0
    %5140 = vmatprep.subr.mxu0 %v4807
    %5141 = vmatpush1.msra.mxu0 %v4806
    %5142 = vmatprep.subr.mxu0 %v4813
    %5143 = vmatpush1.msra.mxu0 %v4812
    %5144 = vmatprep.subr.mxu0 %v4819
    %5145 = vmatpush1.msra.mxu0 %v4818
    %5146 = vmatprep.subr.mxu0 %v4825
    %5147 = vmatpush1.msra.mxu0 %v4824
    %5148 = vmatprep.subr.mxu0 %v4831
    %5149 = vmatpush1.msra.mxu0 %v4830
    %5150 = vmatprep.subr.mxu0 %v4837
    %5151 = vmatpush1.msra.mxu0 %v4836
    %5152 = vmatprep.subr.mxu0 %v4843
    %5153 = vmatpush1.msra.mxu0 %v4842
    %5154 = vmatprep.subr.mxu0 %v4849
    %5155 = vmatpush1.msra.mxu0 %v4848
    %5156 = vmatprep.subr.mxu0 %v4855
    %5157 = vmatpush1.msra.mxu0 %v4854
    %5158 = vmatprep.subr.mxu0 %v4861
    %5159 = vmatpush1.msra.mxu0 %v4860
    %5160 = vmatprep.subr.mxu0 %v4867
    %5161 = vmatpush1.msra.mxu0 %v4866
    %5162 = vmatprep.subr.mxu0 %v4873
    %5163 = vmatpush1.msra.mxu0 %v4872
    %5164 = vmatprep.subr.mxu0 %v4879
    %5165 = vmatpush1.msra.mxu0 %v4878
    %5166 = vmatprep.subr.mxu0 %v4885
    %5167 = vmatpush1.msra.mxu0 %v4884
    %5168 = vmatprep.subr.mxu0 %v4891
    %5169 = vmatpush1.msra.mxu0 %v4890
    %5170 = vmatprep.subr.mxu0 %v4897
    %5171 = vmatpush1.msra.mxu0 %v4896
    %5172 = vmatprep.subr.mxu0 %v4903
    %5173 = vmatpush1.msra.mxu0 %v4902
    %5174 = vmatprep.subr.mxu0 %v4909
    %5175 = vmatpush1.msra.mxu0 %v4908
    %5176 = vmatprep.subr.mxu0 %v4915
    %5177 = vmatpush1.msra.mxu0 %v4914
    %5178 = vmatprep.subr.mxu0 %v4921
    %5179 = vmatpush1.msra.mxu0 %v4920
    %5180 = vmatprep.subr.mxu0 %v4927
    %5181 = vmatpush1.msra.mxu0 %v4926
    %5182 = vmatprep.subr.mxu0 %v4933
    %5183 = vmatpush1.msra.mxu0 %v4932
    %5184 = vmatprep.subr.mxu0 %v4939
    %5185 = vmatpush1.msra.mxu0 %v4938
    %5186 = vmatprep.subr.mxu0 %v4945
    %5187 = vmatpush1.msra.mxu0 %v4944
    %5188 = vmatprep.subr.mxu0 %v4951
    %5189 = vmatpush1.msra.mxu0 %v4950
    %5190 = vmatprep.subr.mxu0 %v4957
    %5191 = vmatpush1.msra.mxu0 %v4956
    %5192 = vmatprep.subr.mxu0 %v4963
    %5193 = vmatpush1.msra.mxu0 %v4962
    %5194 = vmatprep.subr.mxu0 %v4969
    %5195 = vmatpush1.msra.mxu0 %v4968
    %5196 = vmatprep.subr.mxu0 %v4975
    %5197 = vmatpush1.msra.mxu0 %v4974
    %5198 = vmatprep.subr.mxu0 %v4981
    %5199 = vmatpush1.msra.mxu0 %v4980
    %5200 = vmatprep.subr.mxu0 %v4987
    %5201 = vmatpush1.msra.mxu0 %v4986
    %5202 = vmatprep.subr.mxu0 %v4993
    %5203 = vmatpush1.msra.mxu0 %v4992
    %5204 = vmatprep.mubr.f32.mxu0 %v4995
    %5205 = vmatmul.mubr.f32.gmra.mrb[0].mxu0 %v4994
    %v5206 = vpop.f32.mrb[0].mxu0
    %v5207 = vadd.f32 0.0, %v5206
    %v5208 = vpop.f32.mrb[0].mxu0
    %v5209 = vadd.f32 0.0, %v5208
    %5210 = vdwg.mxu0
    %5212 = vrot.lane.b32.xlu0 %v5065, 96
    %v5213 = vpop.permute.xlu0 %5212
    %5214 = vrot.lane.b32.xlu0 %v5065, 64
    %v5215 = vpop.permute.xlu0 %5214
    %5216 = vrot.lane.b32.xlu0 %v5065, 32
    %v5217 = vpop.permute.xlu0 %5216
    %5219 = vrot.lane.b32.xlu0 %v5067, 96
    %v5220 = vpop.permute.xlu0 %5219
    %5221 = vrot.lane.b32.xlu0 %v5067, 64
    %v5222 = vpop.permute.xlu0 %5221
    %5223 = vrot.lane.b32.xlu0 %v5067, 32
    %v5224 = vpop.permute.xlu0 %5223
    %5226 = vrot.lane.b32.xlu0 %v5136, 96
    %v5227 = vpop.permute.xlu0 %5226
    %5228 = vrot.lane.b32.xlu0 %v5136, 64
    %v5229 = vpop.permute.xlu0 %5228
    %5230 = vrot.lane.b32.xlu0 %v5136, 32
    %v5231 = vpop.permute.xlu0 %5230
    %5233 = vrot.lane.b32.xlu0 %v5138, 96
    %v5234 = vpop.permute.xlu0 %5233
    %5235 = vrot.lane.b32.xlu0 %v5138, 64
    %v5236 = vpop.permute.xlu0 %5235
    %5237 = vrot.lane.b32.xlu0 %v5138, 32
    %v5238 = vpop.permute.xlu0 %5237
    %5240 = vrot.lane.b32.xlu0 %v5207, 96
    %v5241 = vpop.permute.xlu0 %5240
    %5243 = vrot.lane.b32.xlu0 %v5207, 64
    %v5244 = vpop.permute.xlu0 %5243
    %5246 = vrot.lane.b32.xlu0 %v5207, 32
    %v5247 = vpop.permute.xlu0 %5246
    %5250 = vrot.lane.b32.xlu0 %v5209, 96
    %v5251 = vpop.permute.xlu0 %5250
    %5253 = vrot.lane.b32.xlu0 %v5209, 64
    %v5254 = vpop.permute.xlu0 %5253
    %5256 = vrot.lane.b32.xlu0 %v5209, 32
    %v5257 = vpop.permute.xlu0 %5256
    %vm5259 = vcmask 261120
    %v5260 = vsel %vm5259, %v5065, 0
    %v5262 = vsel %vm5259, %v5136, 0
    %5264 = vmatprep.subr.mxu0 0.0
    %5265 = vmatpush1.xpose.msra.mxu0 %v5262
    %5266 = vmatprep.subr.mxu0 0.0
    %5267 = vmatpush1.xpose.msra.mxu0 0.0
    %5268 = vmatprep.subr.mxu0 0.0
    %5269 = vmatpush1.xpose.msra.mxu0 0.0
    %5270 = vmatprep.subr.mxu0 0.0
    %5271 = vmatpush1.xpose.msra.mxu0 0.0
    %5272 = vmatprep.subr.mxu0 0.0
    %5273 = vmatpush1.xpose.msra.mxu0 0.0
    %5274 = vmatprep.subr.mxu0 0.0
    %5275 = vmatpush1.xpose.msra.mxu0 0.0
    %5276 = vmatprep.subr.mxu0 0.0
    %5277 = vmatpush1.xpose.msra.mxu0 0.0
    %5278 = vmatprep.subr.mxu0 0.0
    %5279 = vmatpush1.xpose.msra.mxu0 0.0
    %5280 = vmatprep.subr.mxu0 0.0
    %5281 = vmatpush1.xpose.msra.mxu0 0.0
    %5282 = vmatprep.subr.mxu0 0.0
    %5283 = vmatpush1.xpose.msra.mxu0 0.0
    %5284 = vmatprep.subr.mxu0 0.0
    %5285 = vmatpush1.xpose.msra.mxu0 0.0
    %5286 = vmatprep.subr.mxu0 0.0
    %5287 = vmatpush1.xpose.msra.mxu0 0.0
    %5288 = vmatprep.subr.mxu0 0.0
    %5289 = vmatpush1.xpose.msra.mxu0 0.0
    %5290 = vmatprep.subr.mxu0 0.0
    %5291 = vmatpush1.xpose.msra.mxu0 0.0
    %5292 = vmatprep.subr.mxu0 0.0
    %5293 = vmatpush1.xpose.msra.mxu0 0.0
    %5294 = vmatprep.subr.mxu0 0.0
    %5295 = vmatpush1.xpose.msra.mxu0 0.0
    %5296 = vmatprep.subr.mxu0 0.0
    %5297 = vmatpush1.xpose.msra.mxu0 0.0
    %5298 = vmatprep.subr.mxu0 0.0
    %5299 = vmatpush1.xpose.msra.mxu0 0.0
    %5300 = vmatprep.subr.mxu0 0.0
    %5301 = vmatpush1.xpose.msra.mxu0 0.0
    %5302 = vmatprep.subr.mxu0 0.0
    %5303 = vmatpush1.xpose.msra.mxu0 0.0
    %5304 = vmatprep.subr.mxu0 0.0
    %5305 = vmatpush1.xpose.msra.mxu0 0.0
    %5306 = vmatprep.subr.mxu0 0.0
    %5307 = vmatpush1.xpose.msra.mxu0 0.0
    %5308 = vmatprep.subr.mxu0 0.0
    %5309 = vmatpush1.xpose.msra.mxu0 0.0
    %5310 = vmatprep.subr.mxu0 0.0
    %5311 = vmatpush1.xpose.msra.mxu0 0.0
    %5312 = vmatprep.subr.mxu0 0.0
    %5313 = vmatpush1.xpose.msra.mxu0 0.0
    %5314 = vmatprep.subr.mxu0 0.0
    %5315 = vmatpush1.xpose.msra.mxu0 0.0
    %5316 = vmatprep.subr.mxu0 0.0
    %5317 = vmatpush1.xpose.msra.mxu0 0.0
    %5318 = vmatprep.subr.mxu0 0.0
    %5319 = vmatpush1.xpose.msra.mxu0 0.0
    %5320 = vmatprep.subr.mxu0 0.0
    %5321 = vmatpush1.xpose.msra.mxu0 0.0
    %5322 = vmatprep.subr.mxu0 0.0
    %5323 = vmatpush1.xpose.msra.mxu0 0.0
    %5324 = vmatprep.subr.mxu0 0.0
    %5325 = vmatpush1.xpose.msra.mxu0 0.0
    %5326 = vmatprep.subr.mxu0 0.0
    %5327 = vmatpush1.xpose.msra.mxu0 0.0
    %5328 = vmatprep.mubr.f32.mxu0 0.0
    %5329 = vmatmul.mubr.f32.gmra.mrb[0].mxu0 %v5260
    %v5330 = vpop.f32.mrb[0].mxu0
    %v5331 = vadd.f32 0.0, %v5330
    %v5332 = vpop.f32.mrb[0].mxu0
    %5333 = vdwg.mxu0
    %v5334 = vsel %vm5259, %v5213, 0
    %v5336 = vsel %vm5259, %v5227, 0
    %5338 = vmatprep.subr.mxu0 0.0
    %5339 = vmatpush1.xpose.msra.mxu0 %v5336
    %5340 = vmatprep.subr.mxu0 0.0
    %5341 = vmatpush1.xpose.msra.mxu0 0.0
    %5342 = vmatprep.subr.mxu0 0.0
    %5343 = vmatpush1.xpose.msra.mxu0 0.0
    %5344 = vmatprep.subr.mxu0 0.0
    %5345 = vmatpush1.xpose.msra.mxu0 0.0
    %5346 = vmatprep.subr.mxu0 0.0
    %5347 = vmatpush1.xpose.msra.mxu0 0.0
    %5348 = vmatprep.subr.mxu0 0.0
    %5349 = vmatpush1.xpose.msra.mxu0 0.0
    %5350 = vmatprep.subr.mxu0 0.0
    %5351 = vmatpush1.xpose.msra.mxu0 0.0
    %5352 = vmatprep.subr.mxu0 0.0
    %5353 = vmatpush1.xpose.msra.mxu0 0.0
    %5354 = vmatprep.subr.mxu0 0.0
    %5355 = vmatpush1.xpose.msra.mxu0 0.0
    %5356 = vmatprep.subr.mxu0 0.0
    %5357 = vmatpush1.xpose.msra.mxu0 0.0
    %5358 = vmatprep.subr.mxu0 0.0
    %5359 = vmatpush1.xpose.msra.mxu0 0.0
    %5360 = vmatprep.subr.mxu0 0.0
    %5361 = vmatpush1.xpose.msra.mxu0 0.0
    %5362 = vmatprep.subr.mxu0 0.0
    %5363 = vmatpush1.xpose.msra.mxu0 0.0
    %5364 = vmatprep.subr.mxu0 0.0
    %5365 = vmatpush1.xpose.msra.mxu0 0.0
    %5366 = vmatprep.subr.mxu0 0.0
    %5367 = vmatpush1.xpose.msra.mxu0 0.0
    %5368 = vmatprep.subr.mxu0 0.0
    %5369 = vmatpush1.xpose.msra.mxu0 0.0
    %5370 = vmatprep.subr.mxu0 0.0
    %5371 = vmatpush1.xpose.msra.mxu0 0.0
    %5372 = vmatprep.subr.mxu0 0.0
    %5373 = vmatpush1.xpose.msra.mxu0 0.0
    %5374 = vmatprep.subr.mxu0 0.0
    %5375 = vmatpush1.xpose.msra.mxu0 0.0
    %5376 = vmatprep.subr.mxu0 0.0
    %5377 = vmatpush1.xpose.msra.mxu0 0.0
    %5378 = vmatprep.subr.mxu0 0.0
    %5379 = vmatpush1.xpose.msra.mxu0 0.0
    %5380 = vmatprep.subr.mxu0 0.0
    %5381 = vmatpush1.xpose.msra.mxu0 0.0
    %5382 = vmatprep.subr.mxu0 0.0
    %5383 = vmatpush1.xpose.msra.mxu0 0.0
    %5384 = vmatprep.subr.mxu0 0.0
    %5385 = vmatpush1.xpose.msra.mxu0 0.0
    %5386 = vmatprep.subr.mxu0 0.0
    %5387 = vmatpush1.xpose.msra.mxu0 0.0
    %5388 = vmatprep.subr.mxu0 0.0
    %5389 = vmatpush1.xpose.msra.mxu0 0.0
    %5390 = vmatprep.subr.mxu0 0.0
    %5391 = vmatpush1.xpose.msra.mxu0 0.0
    %5392 = vmatprep.subr.mxu0 0.0
    %5393 = vmatpush1.xpose.msra.mxu0 0.0
    %5394 = vmatprep.subr.mxu0 0.0
    %5395 = vmatpush1.xpose.msra.mxu0 0.0
    %5396 = vmatprep.subr.mxu0 0.0
    %5397 = vmatpush1.xpose.msra.mxu0 0.0
    %5398 = vmatprep.subr.mxu0 0.0
    %5399 = vmatpush1.xpose.msra.mxu0 0.0
    %5400 = vmatprep.subr.mxu0 0.0
    %5401 = vmatpush1.xpose.msra.mxu0 0.0
    %5402 = vmatprep.mubr.f32.mxu0 0.0
    %5403 = vmatmul.mubr.f32.gmra.mrb[0].mxu0 %v5334
    %v5404 = vpop.f32.mrb[0].mxu0
    %v5405 = vadd.f32 0.0, %v5404
    %v5406 = vpop.f32.mrb[0].mxu0
    %5407 = vdwg.mxu0
    %v5408 = vsel %vm5259, %v5215, 0
    %v5410 = vsel %vm5259, %v5229, 0
    %5412 = vmatprep.subr.mxu0 0.0
    %5413 = vmatpush1.xpose.msra.mxu0 %v5410
    %5414 = vmatprep.subr.mxu0 0.0
    %5415 = vmatpush1.xpose.msra.mxu0 0.0
    %5416 = vmatprep.subr.mxu0 0.0
    %5417 = vmatpush1.xpose.msra.mxu0 0.0
    %5418 = vmatprep.subr.mxu0 0.0
    %5419 = vmatpush1.xpose.msra.mxu0 0.0
    %5420 = vmatprep.subr.mxu0 0.0
    %5421 = vmatpush1.xpose.msra.mxu0 0.0
    %5422 = vmatprep.subr.mxu0 0.0
    %5423 = vmatpush1.xpose.msra.mxu0 0.0
    %5424 = vmatprep.subr.mxu0 0.0
    %5425 = vmatpush1.xpose.msra.mxu0 0.0
    %5426 = vmatprep.subr.mxu0 0.0
    %5427 = vmatpush1.xpose.msra.mxu0 0.0
    %5428 = vmatprep.subr.mxu0 0.0
    %5429 = vmatpush1.xpose.msra.mxu0 0.0
    %5430 = vmatprep.subr.mxu0 0.0
    %5431 = vmatpush1.xpose.msra.mxu0 0.0
    %5432 = vmatprep.subr.mxu0 0.0
    %5433 = vmatpush1.xpose.msra.mxu0 0.0
    %5434 = vmatprep.subr.mxu0 0.0
    %5435 = vmatpush1.xpose.msra.mxu0 0.0
    %5436 = vmatprep.subr.mxu0 0.0
    %5437 = vmatpush1.xpose.msra.mxu0 0.0
    %5438 = vmatprep.subr.mxu0 0.0
    %5439 = vmatpush1.xpose.msra.mxu0 0.0
    %5440 = vmatprep.subr.mxu0 0.0
    %5441 = vmatpush1.xpose.msra.mxu0 0.0
    %5442 = vmatprep.subr.mxu0 0.0
    %5443 = vmatpush1.xpose.msra.mxu0 0.0
    %5444 = vmatprep.subr.mxu0 0.0
    %5445 = vmatpush1.xpose.msra.mxu0 0.0
    %5446 = vmatprep.subr.mxu0 0.0
    %5447 = vmatpush1.xpose.msra.mxu0 0.0
    %5448 = vmatprep.subr.mxu0 0.0
    %5449 = vmatpush1.xpose.msra.mxu0 0.0
    %5450 = vmatprep.subr.mxu0 0.0
    %5451 = vmatpush1.xpose.msra.mxu0 0.0
    %5452 = vmatprep.subr.mxu0 0.0
    %5453 = vmatpush1.xpose.msra.mxu0 0.0
    %5454 = vmatprep.subr.mxu0 0.0
    %5455 = vmatpush1.xpose.msra.mxu0 0.0
    %5456 = vmatprep.subr.mxu0 0.0
    %5457 = vmatpush1.xpose.msra.mxu0 0.0
    %5458 = vmatprep.subr.mxu0 0.0
    %5459 = vmatpush1.xpose.msra.mxu0 0.0
    %5460 = vmatprep.subr.mxu0 0.0
    %5461 = vmatpush1.xpose.msra.mxu0 0.0
    %5462 = vmatprep.subr.mxu0 0.0
    %5463 = vmatpush1.xpose.msra.mxu0 0.0
    %5464 = vmatprep.subr.mxu0 0.0
    %5465 = vmatpush1.xpose.msra.mxu0 0.0
    %5466 = vmatprep.subr.mxu0 0.0
    %5467 = vmatpush1.xpose.msra.mxu0 0.0
    %5468 = vmatprep.subr.mxu0 0.0
    %5469 = vmatpush1.xpose.msra.mxu0 0.0
    %5470 = vmatprep.subr.mxu0 0.0
    %5471 = vmatpush1.xpose.msra.mxu0 0.0
    %5472 = vmatprep.subr.mxu0 0.0
    %5473 = vmatpush1.xpose.msra.mxu0 0.0
    %5474 = vmatprep.subr.mxu0 0.0
    %5475 = vmatpush1.xpose.msra.mxu0 0.0
    %5476 = vmatprep.mubr.f32.mxu0 0.0
    %5477 = vmatmul.mubr.f32.gmra.mrb[0].mxu0 %v5408
    %v5478 = vpop.f32.mrb[0].mxu0
    %v5479 = vadd.f32 0.0, %v5478
    %v5480 = vpop.f32.mrb[0].mxu0
    %5481 = vdwg.mxu0
    %v5482 = vsel %vm5259, %v5217, 0
    %v5484 = vsel %vm5259, %v5231, 0
    %5486 = vmatprep.subr.mxu0 0.0
    %5487 = vmatpush1.xpose.msra.mxu0 %v5484
    %5488 = vmatprep.subr.mxu0 0.0
    %5489 = vmatpush1.xpose.msra.mxu0 0.0
    %5490 = vmatprep.subr.mxu0 0.0
    %5491 = vmatpush1.xpose.msra.mxu0 0.0
    %5492 = vmatprep.subr.mxu0 0.0
    %5493 = vmatpush1.xpose.msra.mxu0 0.0
    %5494 = vmatprep.subr.mxu0 0.0
    %5495 = vmatpush1.xpose.msra.mxu0 0.0
    %5496 = vmatprep.subr.mxu0 0.0
    %5497 = vmatpush1.xpose.msra.mxu0 0.0
    %5498 = vmatprep.subr.mxu0 0.0
    %5499 = vmatpush1.xpose.msra.mxu0 0.0
    %5500 = vmatprep.subr.mxu0 0.0
    %5501 = vmatpush1.xpose.msra.mxu0 0.0
    %5502 = vmatprep.subr.mxu0 0.0
    %5503 = vmatpush1.xpose.msra.mxu0 0.0
    %5504 = vmatprep.subr.mxu0 0.0
    %5505 = vmatpush1.xpose.msra.mxu0 0.0
    %5506 = vmatprep.subr.mxu0 0.0
    %5507 = vmatpush1.xpose.msra.mxu0 0.0
    %5508 = vmatprep.subr.mxu0 0.0
    %5509 = vmatpush1.xpose.msra.mxu0 0.0
    %5510 = vmatprep.subr.mxu0 0.0
    %5511 = vmatpush1.xpose.msra.mxu0 0.0
    %5512 = vmatprep.subr.mxu0 0.0
    %5513 = vmatpush1.xpose.msra.mxu0 0.0
    %5514 = vmatprep.subr.mxu0 0.0
    %5515 = vmatpush1.xpose.msra.mxu0 0.0
    %5516 = vmatprep.subr.mxu0 0.0
    %5517 = vmatpush1.xpose.msra.mxu0 0.0
    %5518 = vmatprep.subr.mxu0 0.0
    %5519 = vmatpush1.xpose.msra.mxu0 0.0
    %5520 = vmatprep.subr.mxu0 0.0
    %5521 = vmatpush1.xpose.msra.mxu0 0.0
    %5522 = vmatprep.subr.mxu0 0.0
    %5523 = vmatpush1.xpose.msra.mxu0 0.0
    %5524 = vmatprep.subr.mxu0 0.0
    %5525 = vmatpush1.xpose.msra.mxu0 0.0
    %5526 = vmatprep.subr.mxu0 0.0
    %5527 = vmatpush1.xpose.msra.mxu0 0.0
    %5528 = vmatprep.subr.mxu0 0.0
    %5529 = vmatpush1.xpose.msra.mxu0 0.0
    %5530 = vmatprep.subr.mxu0 0.0
    %5531 = vmatpush1.xpose.msra.mxu0 0.0
    %5532 = vmatprep.subr.mxu0 0.0
    %5533 = vmatpush1.xpose.msra.mxu0 0.0
    %5534 = vmatprep.subr.mxu0 0.0
    %5535 = vmatpush1.xpose.msra.mxu0 0.0
    %5536 = vmatprep.subr.mxu0 0.0
    %5537 = vmatpush1.xpose.msra.mxu0 0.0
    %5538 = vmatprep.subr.mxu0 0.0
    %5539 = vmatpush1.xpose.msra.mxu0 0.0
    %5540 = vmatprep.subr.mxu0 0.0
    %5541 = vmatpush1.xpose.msra.mxu0 0.0
    %5542 = vmatprep.subr.mxu0 0.0
    %5543 = vmatpush1.xpose.msra.mxu0 0.0
    %5544 = vmatprep.subr.mxu0 0.0
    %5545 = vmatpush1.xpose.msra.mxu0 0.0
    %5546 = vmatprep.subr.mxu0 0.0
    %5547 = vmatpush1.xpose.msra.mxu0 0.0
    %5548 = vmatprep.subr.mxu0 0.0
    %5549 = vmatpush1.xpose.msra.mxu0 0.0
    %5550 = vmatprep.mubr.f32.mxu0 0.0
    %5551 = vmatmul.mubr.f32.gmra.mrb[0].mxu0 %v5482
    %v5552 = vpop.f32.mrb[0].mxu0
    %v5553 = vadd.f32 0.0, %v5552
    %v5554 = vpop.f32.mrb[0].mxu0
    %5555 = vdwg.mxu0
    %v5556 = vsel %vm5259, %v5067, 0
    %v5558 = vsel %vm5259, %v5138, 0
    %5560 = vmatprep.subr.mxu0 0.0
    %5561 = vmatpush1.xpose.msra.mxu0 %v5558
    %5562 = vmatprep.subr.mxu0 0.0
    %5563 = vmatpush1.xpose.msra.mxu0 0.0
    %5564 = vmatprep.subr.mxu0 0.0
    %5565 = vmatpush1.xpose.msra.mxu0 0.0
    %5566 = vmatprep.subr.mxu0 0.0
    %5567 = vmatpush1.xpose.msra.mxu0 0.0
    %5568 = vmatprep.subr.mxu0 0.0
    %5569 = vmatpush1.xpose.msra.mxu0 0.0
    %5570 = vmatprep.subr.mxu0 0.0
    %5571 = vmatpush1.xpose.msra.mxu0 0.0
    %5572 = vmatprep.subr.mxu0 0.0
    %5573 = vmatpush1.xpose.msra.mxu0 0.0
    %5574 = vmatprep.subr.mxu0 0.0
    %5575 = vmatpush1.xpose.msra.mxu0 0.0
    %5576 = vmatprep.subr.mxu0 0.0
    %5577 = vmatpush1.xpose.msra.mxu0 0.0
    %5578 = vmatprep.subr.mxu0 0.0
    %5579 = vmatpush1.xpose.msra.mxu0 0.0
    %5580 = vmatprep.subr.mxu0 0.0
    %5581 = vmatpush1.xpose.msra.mxu0 0.0
    %5582 = vmatprep.subr.mxu0 0.0
    %5583 = vmatpush1.xpose.msra.mxu0 0.0
    %5584 = vmatprep.subr.mxu0 0.0
    %5585 = vmatpush1.xpose.msra.mxu0 0.0
    %5586 = vmatprep.subr.mxu0 0.0
    %5587 = vmatpush1.xpose.msra.mxu0 0.0
    %5588 = vmatprep.subr.mxu0 0.0
    %5589 = vmatpush1.xpose.msra.mxu0 0.0
    %5590 = vmatprep.subr.mxu0 0.0
    %5591 = vmatpush1.xpose.msra.mxu0 0.0
    %5592 = vmatprep.subr.mxu0 0.0
    %5593 = vmatpush1.xpose.msra.mxu0 0.0
    %5594 = vmatprep.subr.mxu0 0.0
    %5595 = vmatpush1.xpose.msra.mxu0 0.0
    %5596 = vmatprep.subr.mxu0 0.0
    %5597 = vmatpush1.xpose.msra.mxu0 0.0
    %5598 = vmatprep.subr.mxu0 0.0
    %5599 = vmatpush1.xpose.msra.mxu0 0.0
    %5600 = vmatprep.subr.mxu0 0.0
    %5601 = vmatpush1.xpose.msra.mxu0 0.0
    %5602 = vmatprep.subr.mxu0 0.0
    %5603 = vmatpush1.xpose.msra.mxu0 0.0
    %5604 = vmatprep.subr.mxu0 0.0
    %5605 = vmatpush1.xpose.msra.mxu0 0.0
    %5606 = vmatprep.subr.mxu0 0.0
    %5607 = vmatpush1.xpose.msra.mxu0 0.0
    %5608 = vmatprep.subr.mxu0 0.0
    %5609 = vmatpush1.xpose.msra.mxu0 0.0
    %5610 = vmatprep.subr.mxu0 0.0
    %5611 = vmatpush1.xpose.msra.mxu0 0.0
    %5612 = vmatprep.subr.mxu0 0.0
    %5613 = vmatpush1.xpose.msra.mxu0 0.0
    %5614 = vmatprep.subr.mxu0 0.0
    %5615 = vmatpush1.xpose.msra.mxu0 0.0
    %5616 = vmatprep.subr.mxu0 0.0
    %5617 = vmatpush1.xpose.msra.mxu0 0.0
    %5618 = vmatprep.subr.mxu0 0.0
    %5619 = vmatpush1.xpose.msra.mxu0 0.0
    %5620 = vmatprep.subr.mxu0 0.0
    %5621 = vmatpush1.xpose.msra.mxu0 0.0
    %5622 = vmatprep.subr.mxu0 0.0
    %5623 = vmatpush1.xpose.msra.mxu0 0.0
    %5624 = vmatprep.mubr.f32.mxu0 0.0
    %5625 = vmatmul.mubr.f32.gmra.mrb[0].mxu0 %v5556
    %v5626 = vpop.f32.mrb[0].mxu0
    %v5627 = vadd.f32 0.0, %v5626
    %v5628 = vpop.f32.mrb[0].mxu0
    %5629 = vdwg.mxu0
    %v5630 = vsel %vm5259, %v5220, 0
    %v5632 = vsel %vm5259, %v5234, 0
    %5634 = vmatprep.subr.mxu0 0.0
    %5635 = vmatpush1.xpose.msra.mxu0 %v5632
    %5636 = vmatprep.subr.mxu0 0.0
    %5637 = vmatpush1.xpose.msra.mxu0 0.0
    %5638 = vmatprep.subr.mxu0 0.0
    %5639 = vmatpush1.xpose.msra.mxu0 0.0
    %5640 = vmatprep.subr.mxu0 0.0
    %5641 = vmatpush1.xpose.msra.mxu0 0.0
    %5642 = vmatprep.subr.mxu0 0.0
    %5643 = vmatpush1.xpose.msra.mxu0 0.0
    %5644 = vmatprep.subr.mxu0 0.0
    %5645 = vmatpush1.xpose.msra.mxu0 0.0
    %5646 = vmatprep.subr.mxu0 0.0
    %5647 = vmatpush1.xpose.msra.mxu0 0.0
    %5648 = vmatprep.subr.mxu0 0.0
    %5649 = vmatpush1.xpose.msra.mxu0 0.0
    %5650 = vmatprep.subr.mxu0 0.0
    %5651 = vmatpush1.xpose.msra.mxu0 0.0
    %5652 = vmatprep.subr.mxu0 0.0
    %5653 = vmatpush1.xpose.msra.mxu0 0.0
    %5654 = vmatprep.subr.mxu0 0.0
    %5655 = vmatpush1.xpose.msra.mxu0 0.0
    %5656 = vmatprep.subr.mxu0 0.0
    %5657 = vmatpush1.xpose.msra.mxu0 0.0
    %5658 = vmatprep.subr.mxu0 0.0
    %5659 = vmatpush1.xpose.msra.mxu0 0.0
    %5660 = vmatprep.subr.mxu0 0.0
    %5661 = vmatpush1.xpose.msra.mxu0 0.0
    %5662 = vmatprep.subr.mxu0 0.0
    %5663 = vmatpush1.xpose.msra.mxu0 0.0
    %5664 = vmatprep.subr.mxu0 0.0
    %5665 = vmatpush1.xpose.msra.mxu0 0.0
    %5666 = vmatprep.subr.mxu0 0.0
    %5667 = vmatpush1.xpose.msra.mxu0 0.0
    %5668 = vmatprep.subr.mxu0 0.0
    %5669 = vmatpush1.xpose.msra.mxu0 0.0
    %5670 = vmatprep.subr.mxu0 0.0
    %5671 = vmatpush1.xpose.msra.mxu0 0.0
    %5672 = vmatprep.subr.mxu0 0.0
    %5673 = vmatpush1.xpose.msra.mxu0 0.0
    %5674 = vmatprep.subr.mxu0 0.0
    %5675 = vmatpush1.xpose.msra.mxu0 0.0
    %5676 = vmatprep.subr.mxu0 0.0
    %5677 = vmatpush1.xpose.msra.mxu0 0.0
    %5678 = vmatprep.subr.mxu0 0.0
    %5679 = vmatpush1.xpose.msra.mxu0 0.0
    %5680 = vmatprep.subr.mxu0 0.0
    %5681 = vmatpush1.xpose.msra.mxu0 0.0
    %5682 = vmatprep.subr.mxu0 0.0
    %5683 = vmatpush1.xpose.msra.mxu0 0.0
    %5684 = vmatprep.subr.mxu0 0.0
    %5685 = vmatpush1.xpose.msra.mxu0 0.0
    %5686 = vmatprep.subr.mxu0 0.0
    %5687 = vmatpush1.xpose.msra.mxu0 0.0
    %5688 = vmatprep.subr.mxu0 0.0
    %5689 = vmatpush1.xpose.msra.mxu0 0.0
    %5690 = vmatprep.subr.mxu0 0.0
    %5691 = vmatpush1.xpose.msra.mxu0 0.0
    %5692 = vmatprep.subr.mxu0 0.0
    %5693 = vmatpush1.xpose.msra.mxu0 0.0
    %5694 = vmatprep.subr.mxu0 0.0
    %5695 = vmatpush1.xpose.msra.mxu0 0.0
    %5696 = vmatprep.subr.mxu0 0.0
    %5697 = vmatpush1.xpose.msra.mxu0 0.0
    %5698 = vmatprep.mubr.f32.mxu0 0.0
    %5699 = vmatmul.mubr.f32.gmra.mrb[0].mxu0 %v5630
    %v5700 = vpop.f32.mrb[0].mxu0
    %v5701 = vadd.f32 0.0, %v5700
    %v5702 = vpop.f32.mrb[0].mxu0
    %5703 = vdwg.mxu0
    %v5704 = vsel %vm5259, %v5222, 0
    %v5706 = vsel %vm5259, %v5236, 0
    %5708 = vmatprep.subr.mxu0 0.0
    %5709 = vmatpush1.xpose.msra.mxu0 %v5706
    %5710 = vmatprep.subr.mxu0 0.0
    %5711 = vmatpush1.xpose.msra.mxu0 0.0
    %5712 = vmatprep.subr.mxu0 0.0
    %5713 = vmatpush1.xpose.msra.mxu0 0.0
    %5714 = vmatprep.subr.mxu0 0.0
    %5715 = vmatpush1.xpose.msra.mxu0 0.0
    %5716 = vmatprep.subr.mxu0 0.0
    %5717 = vmatpush1.xpose.msra.mxu0 0.0
    %5718 = vmatprep.subr.mxu0 0.0
    %5719 = vmatpush1.xpose.msra.mxu0 0.0
    %5720 = vmatprep.subr.mxu0 0.0
    %5721 = vmatpush1.xpose.msra.mxu0 0.0
    %5722 = vmatprep.subr.mxu0 0.0
    %5723 = vmatpush1.xpose.msra.mxu0 0.0
    %5724 = vmatprep.subr.mxu0 0.0
    %5725 = vmatpush1.xpose.msra.mxu0 0.0
    %5726 = vmatprep.subr.mxu0 0.0
    %5727 = vmatpush1.xpose.msra.mxu0 0.0
    %5728 = vmatprep.subr.mxu0 0.0
    %5729 = vmatpush1.xpose.msra.mxu0 0.0
    %5730 = vmatprep.subr.mxu0 0.0
    %5731 = vmatpush1.xpose.msra.mxu0 0.0
    %5732 = vmatprep.subr.mxu0 0.0
    %5733 = vmatpush1.xpose.msra.mxu0 0.0
    %5734 = vmatprep.subr.mxu0 0.0
    %5735 = vmatpush1.xpose.msra.mxu0 0.0
    %5736 = vmatprep.subr.mxu0 0.0
    %5737 = vmatpush1.xpose.msra.mxu0 0.0
    %5738 = vmatprep.subr.mxu0 0.0
    %5739 = vmatpush1.xpose.msra.mxu0 0.0
    %5740 = vmatprep.subr.mxu0 0.0
    %5741 = vmatpush1.xpose.msra.mxu0 0.0
    %5742 = vmatprep.subr.mxu0 0.0
    %5743 = vmatpush1.xpose.msra.mxu0 0.0
    %5744 = vmatprep.subr.mxu0 0.0
    %5745 = vmatpush1.xpose.msra.mxu0 0.0
    %5746 = vmatprep.subr.mxu0 0.0
    %5747 = vmatpush1.xpose.msra.mxu0 0.0
    %5748 = vmatprep.subr.mxu0 0.0
    %5749 = vmatpush1.xpose.msra.mxu0 0.0
    %5750 = vmatprep.subr.mxu0 0.0
    %5751 = vmatpush1.xpose.msra.mxu0 0.0
    %5752 = vmatprep.subr.mxu0 0.0
    %5753 = vmatpush1.xpose.msra.mxu0 0.0
    %5754 = vmatprep.subr.mxu0 0.0
    %5755 = vmatpush1.xpose.msra.mxu0 0.0
    %5756 = vmatprep.subr.mxu0 0.0
    %5757 = vmatpush1.xpose.msra.mxu0 0.0
    %5758 = vmatprep.subr.mxu0 0.0
    %5759 = vmatpush1.xpose.msra.mxu0 0.0
    %5760 = vmatprep.subr.mxu0 0.0
    %5761 = vmatpush1.xpose.msra.mxu0 0.0
    %5762 = vmatprep.subr.mxu0 0.0
    %5763 = vmatpush1.xpose.msra.mxu0 0.0
    %5764 = vmatprep.subr.mxu0 0.0
    %5765 = vmatpush1.xpose.msra.mxu0 0.0
    %5766 = vmatprep.subr.mxu0 0.0
    %5767 = vmatpush1.xpose.msra.mxu0 0.0
    %5768 = vmatprep.subr.mxu0 0.0
    %5769 = vmatpush1.xpose.msra.mxu0 0.0
    %5770 = vmatprep.subr.mxu0 0.0
    %5771 = vmatpush1.xpose.msra.mxu0 0.0
    %5772 = vmatprep.mubr.f32.mxu0 0.0
    %5773 = vmatmul.mubr.f32.gmra.mrb[0].mxu0 %v5704
    %v5774 = vpop.f32.mrb[0].mxu0
    %v5775 = vadd.f32 0.0, %v5774
    %v5776 = vpop.f32.mrb[0].mxu0
    %5777 = vdwg.mxu0
    %v5778 = vsel %vm5259, %v5224, 0
    %v5780 = vsel %vm5259, %v5238, 0
    %5782 = vmatprep.subr.mxu0 0.0
    %5783 = vmatpush1.xpose.msra.mxu0 %v5780
    %5784 = vmatprep.subr.mxu0 0.0
    %5785 = vmatpush1.xpose.msra.mxu0 0.0
    %5786 = vmatprep.subr.mxu0 0.0
    %5787 = vmatpush1.xpose.msra.mxu0 0.0
    %5788 = vmatprep.subr.mxu0 0.0
    %5789 = vmatpush1.xpose.msra.mxu0 0.0
    %5790 = vmatprep.subr.mxu0 0.0
    %5791 = vmatpush1.xpose.msra.mxu0 0.0
    %5792 = vmatprep.subr.mxu0 0.0
    %5793 = vmatpush1.xpose.msra.mxu0 0.0
    %5794 = vmatprep.subr.mxu0 0.0
    %5795 = vmatpush1.xpose.msra.mxu0 0.0
    %5796 = vmatprep.subr.mxu0 0.0
    %5797 = vmatpush1.xpose.msra.mxu0 0.0
    %5798 = vmatprep.subr.mxu0 0.0
    %5799 = vmatpush1.xpose.msra.mxu0 0.0
    %5800 = vmatprep.subr.mxu0 0.0
    %5801 = vmatpush1.xpose.msra.mxu0 0.0
    %5802 = vmatprep.subr.mxu0 0.0
    %5803 = vmatpush1.xpose.msra.mxu0 0.0
    %5804 = vmatprep.subr.mxu0 0.0
    %5805 = vmatpush1.xpose.msra.mxu0 0.0
    %5806 = vmatprep.subr.mxu0 0.0
    %5807 = vmatpush1.xpose.msra.mxu0 0.0
    %5808 = vmatprep.subr.mxu0 0.0
    %5809 = vmatpush1.xpose.msra.mxu0 0.0
    %5810 = vmatprep.subr.mxu0 0.0
    %5811 = vmatpush1.xpose.msra.mxu0 0.0
    %5812 = vmatprep.subr.mxu0 0.0
    %5813 = vmatpush1.xpose.msra.mxu0 0.0
    %5814 = vmatprep.subr.mxu0 0.0
    %5815 = vmatpush1.xpose.msra.mxu0 0.0
    %5816 = vmatprep.subr.mxu0 0.0
    %5817 = vmatpush1.xpose.msra.mxu0 0.0
    %5818 = vmatprep.subr.mxu0 0.0
    %5819 = vmatpush1.xpose.msra.mxu0 0.0
    %5820 = vmatprep.subr.mxu0 0.0
    %5821 = vmatpush1.xpose.msra.mxu0 0.0
    %5822 = vmatprep.subr.mxu0 0.0
    %5823 = vmatpush1.xpose.msra.mxu0 0.0
    %5824 = vmatprep.subr.mxu0 0.0
    %5825 = vmatpush1.xpose.msra.mxu0 0.0
    %5826 = vmatprep.subr.mxu0 0.0
    %5827 = vmatpush1.xpose.msra.mxu0 0.0
    %5828 = vmatprep.subr.mxu0 0.0
    %5829 = vmatpush1.xpose.msra.mxu0 0.0
    %5830 = vmatprep.subr.mxu0 0.0
    %5831 = vmatpush1.xpose.msra.mxu0 0.0
    %5832 = vmatprep.subr.mxu0 0.0
    %5833 = vmatpush1.xpose.msra.mxu0 0.0
    %5834 = vmatprep.subr.mxu0 0.0
    %5835 = vmatpush1.xpose.msra.mxu0 0.0
    %5836 = vmatprep.subr.mxu0 0.0
    %5837 = vmatpush1.xpose.msra.mxu0 0.0
    %5838 = vmatprep.subr.mxu0 0.0
    %5839 = vmatpush1.xpose.msra.mxu0 0.0
    %5840 = vmatprep.subr.mxu0 0.0
    %5841 = vmatpush1.xpose.msra.mxu0 0.0
    %5842 = vmatprep.subr.mxu0 0.0
    %5843 = vmatpush1.xpose.msra.mxu0 0.0
    %5844 = vmatprep.subr.mxu0 0.0
    %5845 = vmatpush1.xpose.msra.mxu0 0.0
    %5846 = vmatprep.mubr.f32.mxu0 0.0
    %5847 = vmatmul.mubr.f32.gmra.mrb[0].mxu0 %v5778
    %v5848 = vpop.f32.mrb[0].mxu0
    %v5849 = vadd.f32 0.0, %v5848
    %v5850 = vpop.f32.mrb[0].mxu0
    %5851 = vdwg.mxu0
    %v5852 = vmul.f32 %v5331, 0.17677669
    %v5853 = vmul.f32 %v5405, 0.17677669
    %v5854 = vmul.f32 %v5479, 0.17677669
    %v5855 = vmul.f32 %v5553, 0.17677669
    %v5856 = vmul.f32 %v5627, 0.17677669
    %v5857 = vmul.f32 %v5701, 0.17677669
    %v5858 = vmul.f32 %v5775, 0.17677669
    %v5859 = vmul.f32 %v5849, 0.17677669
    %v5860 = vld [vmem:[%s18] sm:$0xff]
    %v5861 = vadd.f32 %v5852, %v5860
    %v5862 = vadd.f32 %v5853, %v5860
    %v5863 = vadd.f32 %v5854, %v5860
    %v5864 = vadd.f32 %v5855, %v5860
    %v5865 = vadd.f32 %v5856, %v5860
    %v5866 = vadd.f32 %v5857, %v5860
    %v5867 = vadd.f32 %v5858, %v5860
    %v5868 = vadd.f32 %v5859, %v5860
    %vm5869 = vcmask 64512
    %v5870 = vsel %vm5869, %v5861, -inf
    %5871 = vmax.xlane.f32.xlu0 %v5870
    %v5872 = vpop.xlane.xlu0 %5871
    %v5873 = vsel %vm5869, %v5862, -inf
    %5874 = vmax.xlane.f32.xlu0 %v5873
    %v5875 = vpop.xlane.xlu0 %5874
    %v5876 = vsel %vm5869, %v5863, -inf
    %5877 = vmax.xlane.f32.xlu0 %v5876
    %v5878 = vpop.xlane.xlu0 %5877
    %v5879 = vsel %vm5869, %v5864, -inf
    %5880 = vmax.xlane.f32.xlu0 %v5879
    %v5881 = vpop.xlane.xlu0 %5880
    %v5882 = vsel %vm5869, %v5865, -inf
    %5883 = vmax.xlane.f32.xlu0 %v5882
    %v5884 = vpop.xlane.xlu0 %5883
    %v5885 = vsel %vm5869, %v5866, -inf
    %5886 = vmax.xlane.f32.xlu0 %v5885
    %v5887 = vpop.xlane.xlu0 %5886
    %v5888 = vsel %vm5869, %v5867, -inf
    %5889 = vmax.xlane.f32.xlu0 %v5888
    %v5890 = vpop.xlane.xlu0 %5889
    %v5891 = vsel %vm5869, %v5868, -inf
    %5892 = vmax.xlane.f32.xlu0 %v5891
    %v5893 = vpop.xlane.xlu0 %5892
    %v5894 = vsub.f32 %v5861, %v5872
    %v5895 = vsub.f32 %v5862, %v5875
    %v5896 = vsub.f32 %v5863, %v5878
    %v5897 = vsub.f32 %v5864, %v5881
    %v5898 = vsub.f32 %v5865, %v5884
    %v5899 = vsub.f32 %v5866, %v5887
    %v5900 = vsub.f32 %v5867, %v5890
    %v5901 = vsub.f32 %v5868, %v5893
    %v5902 = vmul.f32 %v5894, 1.442695
    %v5903 = vpow.pop %v5902
    %v5904 = vmul.f32 %v5895, 1.442695
    %v5905 = vpow.pop %v5904
    %v5906 = vmul.f32 %v5896, 1.442695
    %v5907 = vpow.pop %v5906
    %v5908 = vmul.f32 %v5897, 1.442695
    %v5909 = vpow.pop %v5908
    %v5910 = vmul.f32 %v5898, 1.442695
    %v5911 = vpow.pop %v5910
    %v5912 = vmul.f32 %v5899, 1.442695
    %v5913 = vpow.pop %v5912
    %v5914 = vmul.f32 %v5900, 1.442695
    %v5915 = vpow.pop %v5914
    %v5916 = vmul.f32 %v5901, 1.442695
    %v5917 = vpow.pop %v5916
    %v5918 = vsel %vm5869, %v5903, 0.0
    %5919 = vadd.xlane.f32.xlu0 %v5918
    %v5920 = vpop.xlane.xlu0 %5919
    %v5921 = vsel %vm5869, %v5905, 0.0
    %5922 = vadd.xlane.f32.xlu0 %v5921
    %v5923 = vpop.xlane.xlu0 %5922
    %v5924 = vsel %vm5869, %v5907, 0.0
    %5925 = vadd.xlane.f32.xlu0 %v5924
    %v5926 = vpop.xlane.xlu0 %5925
    %v5927 = vsel %vm5869, %v5909, 0.0
    %5928 = vadd.xlane.f32.xlu0 %v5927
    %v5929 = vpop.xlane.xlu0 %5928
    %v5930 = vsel %vm5869, %v5911, 0.0
    %5931 = vadd.xlane.f32.xlu0 %v5930
    %v5932 = vpop.xlane.xlu0 %5931
    %v5933 = vsel %vm5869, %v5913, 0.0
    %5934 = vadd.xlane.f32.xlu0 %v5933
    %v5935 = vpop.xlane.xlu0 %5934
    %v5936 = vsel %vm5869, %v5915, 0.0
    %5937 = vadd.xlane.f32.xlu0 %v5936
    %v5938 = vpop.xlane.xlu0 %5937
    %v5939 = vsel %vm5869, %v5917, 0.0
    %5940 = vadd.xlane.f32.xlu0 %v5939
    %v5941 = vpop.xlane.xlu0 %5940
    %v5942 = vrcp.pop %v5920
    %v5943 = vrcp.pop %v5923
    %v5944 = vrcp.pop %v5926
    %v5945 = vrcp.pop %v5929
    %v5946 = vrcp.pop %v5932
    %v5947 = vrcp.pop %v5935
    %v5948 = vrcp.pop %v5938
    %v5949 = vrcp.pop %v5941
    %v5950 = vmul.f32 %v5903, %v5942
    %v5951 = vmul.f32 %v5905, %v5943
    %v5952 = vmul.f32 %v5907, %v5944
    %v5953 = vmul.f32 %v5909, %v5945
    %v5954 = vmul.f32 %v5911, %v5946
    %v5955 = vmul.f32 %v5913, %v5947
    %v5956 = vmul.f32 %v5915, %v5948
    %v5957 = vmul.f32 %v5917, %v5949
    %v5959 = vsel %vm5869, %v5950, 0
    %5961 = vmatprep.subr.mxu0 0.0
    %5962 = vmatpush1.msra.mxu0 %v5207
    %5963 = vmatprep.subr.mxu0 0.0
    %5964 = vmatpush1.msra.mxu0 0.0
    %5965 = vmatprep.subr.mxu0 0.0
    %5966 = vmatpush1.msra.mxu0 0.0
    %5967 = vmatprep.subr.mxu0 0.0
    %5968 = vmatpush1.msra.mxu0 0.0
    %5969 = vmatprep.subr.mxu0 0.0
    %5970 = vmatpush1.msra.mxu0 0.0
    %5971 = vmatprep.subr.mxu0 0.0
    %5972 = vmatpush1.msra.mxu0 0.0
    %5973 = vmatprep.subr.mxu0 0.0
    %5974 = vmatpush1.msra.mxu0 0.0
    %5975 = vmatprep.subr.mxu0 0.0
    %5976 = vmatpush1.msra.mxu0 0.0
    %5977 = vmatprep.subr.mxu0 0.0
    %5978 = vmatpush1.msra.mxu0 0.0
    %5979 = vmatprep.subr.mxu0 0.0
    %5980 = vmatpush1.msra.mxu0 0.0
    %5981 = vmatprep.subr.mxu0 0.0
    %5982 = vmatpush1.msra.mxu0 0.0
    %5983 = vmatprep.subr.mxu0 0.0
    %5984 = vmatpush1.msra.mxu0 0.0
    %5985 = vmatprep.subr.mxu0 0.0
    %5986 = vmatpush1.msra.mxu0 0.0
    %5987 = vmatprep.subr.mxu0 0.0
    %5988 = vmatpush1.msra.mxu0 0.0
    %5989 = vmatprep.subr.mxu0 0.0
    %5990 = vmatpush1.msra.mxu0 0.0
    %5991 = vmatprep.subr.mxu0 0.0
    %5992 = vmatpush1.msra.mxu0 0.0
    %5993 = vmatprep.subr.mxu0 0.0
    %5994 = vmatpush1.msra.mxu0 0.0
    %5995 = vmatprep.subr.mxu0 0.0
    %5996 = vmatpush1.msra.mxu0 0.0
    %5997 = vmatprep.subr.mxu0 0.0
    %5998 = vmatpush1.msra.mxu0 0.0
    %5999 = vmatprep.subr.mxu0 0.0
    %6000 = vmatpush1.msra.mxu0 0.0
    %6001 = vmatprep.subr.mxu0 0.0
    %6002 = vmatpush1.msra.mxu0 0.0
    %6003 = vmatprep.subr.mxu0 0.0
    %6004 = vmatpush1.msra.mxu0 0.0
    %6005 = vmatprep.subr.mxu0 0.0
    %6006 = vmatpush1.msra.mxu0 0.0
    %6007 = vmatprep.subr.mxu0 0.0
    %6008 = vmatpush1.msra.mxu0 0.0
    %6009 = vmatprep.subr.mxu0 0.0
    %6010 = vmatpush1.msra.mxu0 0.0
    %6011 = vmatprep.subr.mxu0 0.0
    %6012 = vmatpush1.msra.mxu0 0.0
    %6013 = vmatprep.subr.mxu0 0.0
    %6014 = vmatpush1.msra.mxu0 0.0
    %6015 = vmatprep.subr.mxu0 0.0
    %6016 = vmatpush1.msra.mxu0 0.0
    %6017 = vmatprep.subr.mxu0 0.0
    %6018 = vmatpush1.msra.mxu0 0.0
    %6019 = vmatprep.subr.mxu0 0.0
    %6020 = vmatpush1.msra.mxu0 0.0
    %6021 = vmatprep.subr.mxu0 0.0
    %6022 = vmatpush1.msra.mxu0 0.0
    %6023 = vmatprep.subr.mxu0 0.0
    %6024 = vmatpush1.msra.mxu0 0.0
    %6025 = vmatprep.mubr.f32.mxu0 0.0
    %6026 = vmatmul.mubr.f32.gmra.mrb[0].mxu0 %v5959
    %v6027 = vpop.f32.mrb[0].mxu0
    %v6028 = vadd.f32 0.0, %v6027
    %v6029 = vpop.f32.mrb[0].mxu0
    %6030 = vdwg.mxu0
    %v6032 = vsel %vm5869, %v5951, 0
    %6034 = vmatprep.subr.mxu0 0.0
    %6035 = vmatpush1.msra.mxu0 %v5241
    %6036 = vmatprep.subr.mxu0 0.0
    %6037 = vmatpush1.msra.mxu0 0.0
    %6038 = vmatprep.subr.mxu0 0.0
    %6039 = vmatpush1.msra.mxu0 0.0
    %6040 = vmatprep.subr.mxu0 0.0
    %6041 = vmatpush1.msra.mxu0 0.0
    %6042 = vmatprep.subr.mxu0 0.0
    %6043 = vmatpush1.msra.mxu0 0.0
    %6044 = vmatprep.subr.mxu0 0.0
    %6045 = vmatpush1.msra.mxu0 0.0
    %6046 = vmatprep.subr.mxu0 0.0
    %6047 = vmatpush1.msra.mxu0 0.0
    %6048 = vmatprep.subr.mxu0 0.0
    %6049 = vmatpush1.msra.mxu0 0.0
    %6050 = vmatprep.subr.mxu0 0.0
    %6051 = vmatpush1.msra.mxu0 0.0
    %6052 = vmatprep.subr.mxu0 0.0
    %6053 = vmatpush1.msra.mxu0 0.0
    %6054 = vmatprep.subr.mxu0 0.0
    %6055 = vmatpush1.msra.mxu0 0.0
    %6056 = vmatprep.subr.mxu0 0.0
    %6057 = vmatpush1.msra.mxu0 0.0
    %6058 = vmatprep.subr.mxu0 0.0
    %6059 = vmatpush1.msra.mxu0 0.0
    %6060 = vmatprep.subr.mxu0 0.0
    %6061 = vmatpush1.msra.mxu0 0.0
    %6062 = vmatprep.subr.mxu0 0.0
    %6063 = vmatpush1.msra.mxu0 0.0
    %6064 = vmatprep.subr.mxu0 0.0
    %6065 = vmatpush1.msra.mxu0 0.0
    %6066 = vmatprep.subr.mxu0 0.0
    %6067 = vmatpush1.msra.mxu0 0.0
    %6068 = vmatprep.subr.mxu0 0.0
    %6069 = vmatpush1.msra.mxu0 0.0
    %6070 = vmatprep.subr.mxu0 0.0
    %6071 = vmatpush1.msra.mxu0 0.0
    %6072 = vmatprep.subr.mxu0 0.0
    %6073 = vmatpush1.msra.mxu0 0.0
    %6074 = vmatprep.subr.mxu0 0.0
    %6075 = vmatpush1.msra.mxu0 0.0
    %6076 = vmatprep.subr.mxu0 0.0
    %6077 = vmatpush1.msra.mxu0 0.0
    %6078 = vmatprep.subr.mxu0 0.0
    %6079 = vmatpush1.msra.mxu0 0.0
    %6080 = vmatprep.subr.mxu0 0.0
    %6081 = vmatpush1.msra.mxu0 0.0
    %6082 = vmatprep.subr.mxu0 0.0
    %6083 = vmatpush1.msra.mxu0 0.0
    %6084 = vmatprep.subr.mxu0 0.0
    %6085 = vmatpush1.msra.mxu0 0.0
    %6086 = vmatprep.subr.mxu0 0.0
    %6087 = vmatpush1.msra.mxu0 0.0
    %6088 = vmatprep.subr.mxu0 0.0
    %6089 = vmatpush1.msra.mxu0 0.0
    %6090 = vmatprep.subr.mxu0 0.0
    %6091 = vmatpush1.msra.mxu0 0.0
    %6092 = vmatprep.subr.mxu0 0.0
    %6093 = vmatpush1.msra.mxu0 0.0
    %6094 = vmatprep.subr.mxu0 0.0
    %6095 = vmatpush1.msra.mxu0 0.0
    %6096 = vmatprep.subr.mxu0 0.0
    %6097 = vmatpush1.msra.mxu0 0.0
    %6098 = vmatprep.mubr.f32.mxu0 0.0
    %6099 = vmatmul.mubr.f32.gmra.mrb[0].mxu0 %v6032
    %v6100 = vpop.f32.mrb[0].mxu0
    %v6101 = vadd.f32 0.0, %v6100
    %v6102 = vpop.f32.mrb[0].mxu0
    %6103 = vdwg.mxu0
    %v6105 = vsel %vm5869, %v5952, 0
    %6107 = vmatprep.subr.mxu0 0.0
    %6108 = vmatpush1.msra.mxu0 %v5244
    %6109 = vmatprep.subr.mxu0 0.0
    %6110 = vmatpush1.msra.mxu0 0.0
    %6111 = vmatprep.subr.mxu0 0.0
    %6112 = vmatpush1.msra.mxu0 0.0
    %6113 = vmatprep.subr.mxu0 0.0
    %6114 = vmatpush1.msra.mxu0 0.0
    %6115 = vmatprep.subr.mxu0 0.0
    %6116 = vmatpush1.msra.mxu0 0.0
    %6117 = vmatprep.subr.mxu0 0.0
    %6118 = vmatpush1.msra.mxu0 0.0
    %6119 = vmatprep.subr.mxu0 0.0
    %6120 = vmatpush1.msra.mxu0 0.0
    %6121 = vmatprep.subr.mxu0 0.0
    %6122 = vmatpush1.msra.mxu0 0.0
    %6123 = vmatprep.subr.mxu0 0.0
    %6124 = vmatpush1.msra.mxu0 0.0
    %6125 = vmatprep.subr.mxu0 0.0
    %6126 = vmatpush1.msra.mxu0 0.0
    %6127 = vmatprep.subr.mxu0 0.0
    %6128 = vmatpush1.msra.mxu0 0.0
    %6129 = vmatprep.subr.mxu0 0.0
    %6130 = vmatpush1.msra.mxu0 0.0
    %6131 = vmatprep.subr.mxu0 0.0
    %6132 = vmatpush1.msra.mxu0 0.0
    %6133 = vmatprep.subr.mxu0 0.0
    %6134 = vmatpush1.msra.mxu0 0.0
    %6135 = vmatprep.subr.mxu0 0.0
    %6136 = vmatpush1.msra.mxu0 0.0
    %6137 = vmatprep.subr.mxu0 0.0
    %6138 = vmatpush1.msra.mxu0 0.0
    %6139 = vmatprep.subr.mxu0 0.0
    %6140 = vmatpush1.msra.mxu0 0.0
    %6141 = vmatprep.subr.mxu0 0.0
    %6142 = vmatpush1.msra.mxu0 0.0
    %6143 = vmatprep.subr.mxu0 0.0
    %6144 = vmatpush1.msra.mxu0 0.0
    %6145 = vmatprep.subr.mxu0 0.0
    %6146 = vmatpush1.msra.mxu0 0.0
    %6147 = vmatprep.subr.mxu0 0.0
    %6148 = vmatpush1.msra.mxu0 0.0
    %6149 = vmatprep.subr.mxu0 0.0
    %6150 = vmatpush1.msra.mxu0 0.0
    %6151 = vmatprep.subr.mxu0 0.0
    %6152 = vmatpush1.msra.mxu0 0.0
    %6153 = vmatprep.subr.mxu0 0.0
    %6154 = vmatpush1.msra.mxu0 0.0
    %6155 = vmatprep.subr.mxu0 0.0
    %6156 = vmatpush1.msra.mxu0 0.0
    %6157 = vmatprep.subr.mxu0 0.0
    %6158 = vmatpush1.msra.mxu0 0.0
    %6159 = vmatprep.subr.mxu0 0.0
    %6160 = vmatpush1.msra.mxu0 0.0
    %6161 = vmatprep.subr.mxu0 0.0
    %6162 = vmatpush1.msra.mxu0 0.0
    %6163 = vmatprep.subr.mxu0 0.0
    %6164 = vmatpush1.msra.mxu0 0.0
    %6165 = vmatprep.subr.mxu0 0.0
    %6166 = vmatpush1.msra.mxu0 0.0
    %6167 = vmatprep.subr.mxu0 0.0
    %6168 = vmatpush1.msra.mxu0 0.0
    %6169 = vmatprep.subr.mxu0 0.0
    %6170 = vmatpush1.msra.mxu0 0.0
    %6171 = vmatprep.mubr.f32.mxu0 0.0
    %6172 = vmatmul.mubr.f32.gmra.mrb[0].mxu0 %v6105
    %v6173 = vpop.f32.mrb[0].mxu0
    %v6174 = vadd.f32 0.0, %v6173
    %v6175 = vpop.f32.mrb[0].mxu0
    %6176 = vdwg.mxu0
    %v6178 = vsel %vm5869, %v5953, 0
    %6180 = vmatprep.subr.mxu0 0.0
    %6181 = vmatpush1.msra.mxu0 %v5247
    %6182 = vmatprep.subr.mxu0 0.0
    %6183 = vmatpush1.msra.mxu0 0.0
    %6184 = vmatprep.subr.mxu0 0.0
    %6185 = vmatpush1.msra.mxu0 0.0
    %6186 = vmatprep.subr.mxu0 0.0
    %6187 = vmatpush1.msra.mxu0 0.0
    %6188 = vmatprep.subr.mxu0 0.0
    %6189 = vmatpush1.msra.mxu0 0.0
    %6190 = vmatprep.subr.mxu0 0.0
    %6191 = vmatpush1.msra.mxu0 0.0
    %6192 = vmatprep.subr.mxu0 0.0
    %6193 = vmatpush1.msra.mxu0 0.0
    %6194 = vmatprep.subr.mxu0 0.0
    %6195 = vmatpush1.msra.mxu0 0.0
    %6196 = vmatprep.subr.mxu0 0.0
    %6197 = vmatpush1.msra.mxu0 0.0
    %6198 = vmatprep.subr.mxu0 0.0
    %6199 = vmatpush1.msra.mxu0 0.0
    %6200 = vmatprep.subr.mxu0 0.0
    %6201 = vmatpush1.msra.mxu0 0.0
    %6202 = vmatprep.subr.mxu0 0.0
    %6203 = vmatpush1.msra.mxu0 0.0
    %6204 = vmatprep.subr.mxu0 0.0
    %6205 = vmatpush1.msra.mxu0 0.0
    %6206 = vmatprep.subr.mxu0 0.0
    %6207 = vmatpush1.msra.mxu0 0.0
    %6208 = vmatprep.subr.mxu0 0.0
    %6209 = vmatpush1.msra.mxu0 0.0
    %6210 = vmatprep.subr.mxu0 0.0
    %6211 = vmatpush1.msra.mxu0 0.0
    %6212 = vmatprep.subr.mxu0 0.0
    %6213 = vmatpush1.msra.mxu0 0.0
    %6214 = vmatprep.subr.mxu0 0.0
    %6215 = vmatpush1.msra.mxu0 0.0
    %6216 = vmatprep.subr.mxu0 0.0
    %6217 = vmatpush1.msra.mxu0 0.0
    %6218 = vmatprep.subr.mxu0 0.0
    %6219 = vmatpush1.msra.mxu0 0.0
    %6220 = vmatprep.subr.mxu0 0.0
    %6221 = vmatpush1.msra.mxu0 0.0
    %6222 = vmatprep.subr.mxu0 0.0
    %6223 = vmatpush1.msra.mxu0 0.0
    %6224 = vmatprep.subr.mxu0 0.0
    %6225 = vmatpush1.msra.mxu0 0.0
    %6226 = vmatprep.subr.mxu0 0.0
    %6227 = vmatpush1.msra.mxu0 0.0
    %6228 = vmatprep.subr.mxu0 0.0
    %6229 = vmatpush1.msra.mxu0 0.0
    %6230 = vmatprep.subr.mxu0 0.0
    %6231 = vmatpush1.msra.mxu0 0.0
    %6232 = vmatprep.subr.mxu0 0.0
    %6233 = vmatpush1.msra.mxu0 0.0
    %6234 = vmatprep.subr.mxu0 0.0
    %6235 = vmatpush1.msra.mxu0 0.0
    %6236 = vmatprep.subr.mxu0 0.0
    %6237 = vmatpush1.msra.mxu0 0.0
    %6238 = vmatprep.subr.mxu0 0.0
    %6239 = vmatpush1.msra.mxu0 0.0
    %6240 = vmatprep.subr.mxu0 0.0
    %6241 = vmatpush1.msra.mxu0 0.0
    %6242 = vmatprep.subr.mxu0 0.0
    %6243 = vmatpush1.msra.mxu0 0.0
    %6244 = vmatprep.mubr.f32.mxu0 0.0
    %6245 = vmatmul.mubr.f32.gmra.mrb[0].mxu0 %v6178
    %v6246 = vpop.f32.mrb[0].mxu0
    %v6247 = vadd.f32 0.0, %v6246
    %v6248 = vpop.f32.mrb[0].mxu0
    %6249 = vdwg.mxu0
    %v6251 = vsel %vm5869, %v5954, 0
    %6253 = vmatprep.subr.mxu0 0.0
    %6254 = vmatpush1.msra.mxu0 %v5209
    %6255 = vmatprep.subr.mxu0 0.0
    %6256 = vmatpush1.msra.mxu0 0.0
    %6257 = vmatprep.subr.mxu0 0.0
    %6258 = vmatpush1.msra.mxu0 0.0
    %6259 = vmatprep.subr.mxu0 0.0
    %6260 = vmatpush1.msra.mxu0 0.0
    %6261 = vmatprep.subr.mxu0 0.0
    %6262 = vmatpush1.msra.mxu0 0.0
    %6263 = vmatprep.subr.mxu0 0.0
    %6264 = vmatpush1.msra.mxu0 0.0
    %6265 = vmatprep.subr.mxu0 0.0
    %6266 = vmatpush1.msra.mxu0 0.0
    %6267 = vmatprep.subr.mxu0 0.0
    %6268 = vmatpush1.msra.mxu0 0.0
    %6269 = vmatprep.subr.mxu0 0.0
    %6270 = vmatpush1.msra.mxu0 0.0
    %6271 = vmatprep.subr.mxu0 0.0
    %6272 = vmatpush1.msra.mxu0 0.0
    %6273 = vmatprep.subr.mxu0 0.0
    %6274 = vmatpush1.msra.mxu0 0.0
    %6275 = vmatprep.subr.mxu0 0.0
    %6276 = vmatpush1.msra.mxu0 0.0
    %6277 = vmatprep.subr.mxu0 0.0
    %6278 = vmatpush1.msra.mxu0 0.0
    %6279 = vmatprep.subr.mxu0 0.0
    %6280 = vmatpush1.msra.mxu0 0.0
    %6281 = vmatprep.subr.mxu0 0.0
    %6282 = vmatpush1.msra.mxu0 0.0
    %6283 = vmatprep.subr.mxu0 0.0
    %6284 = vmatpush1.msra.mxu0 0.0
    %6285 = vmatprep.subr.mxu0 0.0
    %6286 = vmatpush1.msra.mxu0 0.0
    %6287 = vmatprep.subr.mxu0 0.0
    %6288 = vmatpush1.msra.mxu0 0.0
    %6289 = vmatprep.subr.mxu0 0.0
    %6290 = vmatpush1.msra.mxu0 0.0
    %6291 = vmatprep.subr.mxu0 0.0
    %6292 = vmatpush1.msra.mxu0 0.0
    %6293 = vmatprep.subr.mxu0 0.0
    %6294 = vmatpush1.msra.mxu0 0.0
    %6295 = vmatprep.subr.mxu0 0.0
    %6296 = vmatpush1.msra.mxu0 0.0
    %6297 = vmatprep.subr.mxu0 0.0
    %6298 = vmatpush1.msra.mxu0 0.0
    %6299 = vmatprep.subr.mxu0 0.0
    %6300 = vmatpush1.msra.mxu0 0.0
    %6301 = vmatprep.subr.mxu0 0.0
    %6302 = vmatpush1.msra.mxu0 0.0
    %6303 = vmatprep.subr.mxu0 0.0
    %6304 = vmatpush1.msra.mxu0 0.0
    %6305 = vmatprep.subr.mxu0 0.0
    %6306 = vmatpush1.msra.mxu0 0.0
    %6307 = vmatprep.subr.mxu0 0.0
    %6308 = vmatpush1.msra.mxu0 0.0
    %6309 = vmatprep.subr.mxu0 0.0
    %6310 = vmatpush1.msra.mxu0 0.0
    %6311 = vmatprep.subr.mxu0 0.0
    %6312 = vmatpush1.msra.mxu0 0.0
    %6313 = vmatprep.subr.mxu0 0.0
    %6314 = vmatpush1.msra.mxu0 0.0
    %6315 = vmatprep.subr.mxu0 0.0
    %6316 = vmatpush1.msra.mxu0 0.0
    %6317 = vmatprep.mubr.f32.mxu0 0.0
    %6318 = vmatmul.mubr.f32.gmra.mrb[0].mxu0 %v6251
    %v6319 = vpop.f32.mrb[0].mxu0
    %v6320 = vadd.f32 0.0, %v6319
    %v6321 = vpop.f32.mrb[0].mxu0
    %6322 = vdwg.mxu0
    %v6324 = vsel %vm5869, %v5955, 0
    %6326 = vmatprep.subr.mxu0 0.0
    %6327 = vmatpush1.msra.mxu0 %v5251
    %6328 = vmatprep.subr.mxu0 0.0
    %6329 = vmatpush1.msra.mxu0 0.0
    %6330 = vmatprep.subr.mxu0 0.0
    %6331 = vmatpush1.msra.mxu0 0.0
    %6332 = vmatprep.subr.mxu0 0.0
    %6333 = vmatpush1.msra.mxu0 0.0
    %6334 = vmatprep.subr.mxu0 0.0
    %6335 = vmatpush1.msra.mxu0 0.0
    %6336 = vmatprep.subr.mxu0 0.0
    %6337 = vmatpush1.msra.mxu0 0.0
    %6338 = vmatprep.subr.mxu0 0.0
    %6339 = vmatpush1.msra.mxu0 0.0
    %6340 = vmatprep.subr.mxu0 0.0
    %6341 = vmatpush1.msra.mxu0 0.0
    %6342 = vmatprep.subr.mxu0 0.0
    %6343 = vmatpush1.msra.mxu0 0.0
    %6344 = vmatprep.subr.mxu0 0.0
    %6345 = vmatpush1.msra.mxu0 0.0
    %6346 = vmatprep.subr.mxu0 0.0
    %6347 = vmatpush1.msra.mxu0 0.0
    %6348 = vmatprep.subr.mxu0 0.0
    %6349 = vmatpush1.msra.mxu0 0.0
    %6350 = vmatprep.subr.mxu0 0.0
    %6351 = vmatpush1.msra.mxu0 0.0
    %6352 = vmatprep.subr.mxu0 0.0
    %6353 = vmatpush1.msra.mxu0 0.0
    %6354 = vmatprep.subr.mxu0 0.0
    %6355 = vmatpush1.msra.mxu0 0.0
    %6356 = vmatprep.subr.mxu0 0.0
    %6357 = vmatpush1.msra.mxu0 0.0
    %6358 = vmatprep.subr.mxu0 0.0
    %6359 = vmatpush1.msra.mxu0 0.0
    %6360 = vmatprep.subr.mxu0 0.0
    %6361 = vmatpush1.msra.mxu0 0.0
    %6362 = vmatprep.subr.mxu0 0.0
    %6363 = vmatpush1.msra.mxu0 0.0
    %6364 = vmatprep.subr.mxu0 0.0
    %6365 = vmatpush1.msra.mxu0 0.0
    %6366 = vmatprep.subr.mxu0 0.0
    %6367 = vmatpush1.msra.mxu0 0.0
    %6368 = vmatprep.subr.mxu0 0.0
    %6369 = vmatpush1.msra.mxu0 0.0
    %6370 = vmatprep.subr.mxu0 0.0
    %6371 = vmatpush1.msra.mxu0 0.0
    %6372 = vmatprep.subr.mxu0 0.0
    %6373 = vmatpush1.msra.mxu0 0.0
    %6374 = vmatprep.subr.mxu0 0.0
    %6375 = vmatpush1.msra.mxu0 0.0
    %6376 = vmatprep.subr.mxu0 0.0
    %6377 = vmatpush1.msra.mxu0 0.0
    %6378 = vmatprep.subr.mxu0 0.0
    %6379 = vmatpush1.msra.mxu0 0.0
    %6380 = vmatprep.subr.mxu0 0.0
    %6381 = vmatpush1.msra.mxu0 0.0
    %6382 = vmatprep.subr.mxu0 0.0
    %6383 = vmatpush1.msra.mxu0 0.0
    %6384 = vmatprep.subr.mxu0 0.0
    %6385 = vmatpush1.msra.mxu0 0.0
    %6386 = vmatprep.subr.mxu0 0.0
    %6387 = vmatpush1.msra.mxu0 0.0
    %6388 = vmatprep.subr.mxu0 0.0
    %6389 = vmatpush1.msra.mxu0 0.0
    %6390 = vmatprep.mubr.f32.mxu0 0.0
    %6391 = vmatmul.mubr.f32.gmra.mrb[0].mxu0 %v6324
    %v6392 = vpop.f32.mrb[0].mxu0
    %v6393 = vadd.f32 0.0, %v6392
    %v6394 = vpop.f32.mrb[0].mxu0
    %6395 = vdwg.mxu0
    %v6397 = vsel %vm5869, %v5956, 0
    %6399 = vmatprep.subr.mxu0 0.0
    %6400 = vmatpush1.msra.mxu0 %v5254
    %6401 = vmatprep.subr.mxu0 0.0
    %6402 = vmatpush1.msra.mxu0 0.0
    %6403 = vmatprep.subr.mxu0 0.0
    %6404 = vmatpush1.msra.mxu0 0.0
    %6405 = vmatprep.subr.mxu0 0.0
    %6406 = vmatpush1.msra.mxu0 0.0
    %6407 = vmatprep.subr.mxu0 0.0
    %6408 = vmatpush1.msra.mxu0 0.0
    %6409 = vmatprep.subr.mxu0 0.0
    %6410 = vmatpush1.msra.mxu0 0.0
    %6411 = vmatprep.subr.mxu0 0.0
    %6412 = vmatpush1.msra.mxu0 0.0
    %6413 = vmatprep.subr.mxu0 0.0
    %6414 = vmatpush1.msra.mxu0 0.0
    %6415 = vmatprep.subr.mxu0 0.0
    %6416 = vmatpush1.msra.mxu0 0.0
    %6417 = vmatprep.subr.mxu0 0.0
    %6418 = vmatpush1.msra.mxu0 0.0
    %6419 = vmatprep.subr.mxu0 0.0
    %6420 = vmatpush1.msra.mxu0 0.0
    %6421 = vmatprep.subr.mxu0 0.0
    %6422 = vmatpush1.msra.mxu0 0.0
    %6423 = vmatprep.subr.mxu0 0.0
    %6424 = vmatpush1.msra.mxu0 0.0
    %6425 = vmatprep.subr.mxu0 0.0
    %6426 = vmatpush1.msra.mxu0 0.0
    %6427 = vmatprep.subr.mxu0 0.0
    %6428 = vmatpush1.msra.mxu0 0.0
    %6429 = vmatprep.subr.mxu0 0.0
    %6430 = vmatpush1.msra.mxu0 0.0
    %6431 = vmatprep.subr.mxu0 0.0
    %6432 = vmatpush1.msra.mxu0 0.0
    %6433 = vmatprep.subr.mxu0 0.0
    %6434 = vmatpush1.msra.mxu0 0.0
    %6435 = vmatprep.subr.mxu0 0.0
    %6436 = vmatpush1.msra.mxu0 0.0
    %6437 = vmatprep.subr.mxu0 0.0
    %6438 = vmatpush1.msra.mxu0 0.0
    %6439 = vmatprep.subr.mxu0 0.0
    %6440 = vmatpush1.msra.mxu0 0.0
    %6441 = vmatprep.subr.mxu0 0.0
    %6442 = vmatpush1.msra.mxu0 0.0
    %6443 = vmatprep.subr.mxu0 0.0
    %6444 = vmatpush1.msra.mxu0 0.0
    %6445 = vmatprep.subr.mxu0 0.0
    %6446 = vmatpush1.msra.mxu0 0.0
    %6447 = vmatprep.subr.mxu0 0.0
    %6448 = vmatpush1.msra.mxu0 0.0
    %6449 = vmatprep.subr.mxu0 0.0
    %6450 = vmatpush1.msra.mxu0 0.0
    %6451 = vmatprep.subr.mxu0 0.0
    %6452 = vmatpush1.msra.mxu0 0.0
    %6453 = vmatprep.subr.mxu0 0.0
    %6454 = vmatpush1.msra.mxu0 0.0
    %6455 = vmatprep.subr.mxu0 0.0
    %6456 = vmatpush1.msra.mxu0 0.0
    %6457 = vmatprep.subr.mxu0 0.0
    %6458 = vmatpush1.msra.mxu0 0.0
    %6459 = vmatprep.subr.mxu0 0.0
    %6460 = vmatpush1.msra.mxu0 0.0
    %6461 = vmatprep.subr.mxu0 0.0
    %6462 = vmatpush1.msra.mxu0 0.0
    %6463 = vmatprep.mubr.f32.mxu0 0.0
    %6464 = vmatmul.mubr.f32.gmra.mrb[0].mxu0 %v6397
    %v6465 = vpop.f32.mrb[0].mxu0
    %v6466 = vadd.f32 0.0, %v6465
    %v6467 = vpop.f32.mrb[0].mxu0
    %6468 = vdwg.mxu0
    %v6470 = vsel %vm5869, %v5957, 0
    %6472 = vmatprep.subr.mxu0 0.0
    %6473 = vmatpush1.msra.mxu0 %v5257
    %6474 = vmatprep.subr.mxu0 0.0
    %6475 = vmatpush1.msra.mxu0 0.0
    %6476 = vmatprep.subr.mxu0 0.0
    %6477 = vmatpush1.msra.mxu0 0.0
    %6478 = vmatprep.subr.mxu0 0.0
    %6479 = vmatpush1.msra.mxu0 0.0
    %6480 = vmatprep.subr.mxu0 0.0
    %6481 = vmatpush1.msra.mxu0 0.0
    %6482 = vmatprep.subr.mxu0 0.0
    %6483 = vmatpush1.msra.mxu0 0.0
    %6484 = vmatprep.subr.mxu0 0.0
    %6485 = vmatpush1.msra.mxu0 0.0
    %6486 = vmatprep.subr.mxu0 0.0
    %6487 = vmatpush1.msra.mxu0 0.0
    %6488 = vmatprep.subr.mxu0 0.0
    %6489 = vmatpush1.msra.mxu0 0.0
    %6490 = vmatprep.subr.mxu0 0.0
    %6491 = vmatpush1.msra.mxu0 0.0
    %6492 = vmatprep.subr.mxu0 0.0
    %6493 = vmatpush1.msra.mxu0 0.0
    %6494 = vmatprep.subr.mxu0 0.0
    %6495 = vmatpush1.msra.mxu0 0.0
    %6496 = vmatprep.subr.mxu0 0.0
    %6497 = vmatpush1.msra.mxu0 0.0
    %6498 = vmatprep.subr.mxu0 0.0
    %6499 = vmatpush1.msra.mxu0 0.0
    %6500 = vmatprep.subr.mxu0 0.0
    %6501 = vmatpush1.msra.mxu0 0.0
    %6502 = vmatprep.subr.mxu0 0.0
    %6503 = vmatpush1.msra.mxu0 0.0
    %6504 = vmatprep.subr.mxu0 0.0
    %6505 = vmatpush1.msra.mxu0 0.0
    %6506 = vmatprep.subr.mxu0 0.0
    %6507 = vmatpush1.msra.mxu0 0.0
    %6508 = vmatprep.subr.mxu0 0.0
    %6509 = vmatpush1.msra.mxu0 0.0
    %6510 = vmatprep.subr.mxu0 0.0
    %6511 = vmatpush1.msra.mxu0 0.0
    %6512 = vmatprep.subr.mxu0 0.0
    %6513 = vmatpush1.msra.mxu0 0.0
    %6514 = vmatprep.subr.mxu0 0.0
    %6515 = vmatpush1.msra.mxu0 0.0
    %6516 = vmatprep.subr.mxu0 0.0
    %6517 = vmatpush1.msra.mxu0 0.0
    %6518 = vmatprep.subr.mxu0 0.0
    %6519 = vmatpush1.msra.mxu0 0.0
    %6520 = vmatprep.subr.mxu0 0.0
    %6521 = vmatpush1.msra.mxu0 0.0
    %6522 = vmatprep.subr.mxu0 0.0
    %6523 = vmatpush1.msra.mxu0 0.0
    %6524 = vmatprep.subr.mxu0 0.0
    %6525 = vmatpush1.msra.mxu0 0.0
    %6526 = vmatprep.subr.mxu0 0.0
    %6527 = vmatpush1.msra.mxu0 0.0
    %6528 = vmatprep.subr.mxu0 0.0
    %6529 = vmatpush1.msra.mxu0 0.0
    %6530 = vmatprep.subr.mxu0 0.0
    %6531 = vmatpush1.msra.mxu0 0.0
    %6532 = vmatprep.subr.mxu0 0.0
    %6533 = vmatpush1.msra.mxu0 0.0
    %6534 = vmatprep.subr.mxu0 0.0
    %6535 = vmatpush1.msra.mxu0 0.0
    %6536 = vmatprep.mubr.f32.mxu0 0.0
    %6537 = vmatmul.mubr.f32.gmra.mrb[0].mxu0 %v6470
    %v6538 = vpop.f32.mrb[0].mxu0
    %v6539 = vadd.f32 0.0, %v6538
    %v6540 = vpop.f32.mrb[0].mxu0
    %6541 = vdwg.mxu0
    %6543 = vrot.lane.b32.xlu0 %v6101, 32
    %v6544 = vpop.permute.xlu0 %6543
    %6547 = vrot.lane.b32.xlu0 %v6174, 64
    %v6548 = vpop.permute.xlu0 %6547
    %6551 = vrot.lane.b32.xlu0 %v6247, 96
    %v6552 = vpop.permute.xlu0 %6551
    %6555 = vrot.lane.b32.xlu0 %v6393, 32
    %v6556 = vpop.permute.xlu0 %6555
    %6559 = vrot.lane.b32.xlu0 %v6466, 64
    %v6560 = vpop.permute.xlu0 %6559
    %6563 = vrot.lane.b32.xlu0 %v6539, 96
    %v6564 = vpop.permute.xlu0 %6563
    %v6566 = vsel %vm5259, %v6028, %v6544
    %v6567 = vsel %vm95, %v6566, %v6548
    %vm6568 = vcmask 785408
    %v6569 = vsel %vm6568, %v6567, %v6552
    %v6570 = vsel %vm5259, %v6320, %v6556
    %v6571 = vsel %vm95, %v6570, %v6560
    %v6572 = vsel %vm6568, %v6571, %v6564
    %v6575 = vcombine.low %v6569, %v6572
    %v6576 = vcombine.high %v6569, %v6572
    %v6579 = vadd.f32 %v4798, %v6575
    %v6580 = vadd.f32 %v4799, %v6576
    %v6581 = vld [vmem:[%s12] sm:$0xff]
    %v6582 = vld [vmem:[%s12 + $0x8] sm:$0xff]
    %v6583 = vld [vmem:[%s12 + $0x10] sm:$0xff]
    %v6584 = vld [vmem:[%s12 + $0x18] sm:$0xff]
    %v6585 = vld [vmem:[%s12 + $0x20] sm:$0xff]
    %v6586 = vld [vmem:[%s12 + $0x28] sm:$0xff]
    %v6587 = vld [vmem:[%s12 + $0x30] sm:$0xff]
    %v6588 = vld [vmem:[%s12 + $0x38] sm:$0xff]
    %v6589 = vld [vmem:[%s12 + $0x40] sm:$0xff]
    %v6590 = vld [vmem:[%s12 + $0x48] sm:$0xff]
    %v6591 = vld [vmem:[%s12 + $0x50] sm:$0xff]
    %v6592 = vld [vmem:[%s12 + $0x58] sm:$0xff]
    %v6593 = vld [vmem:[%s12 + $0x60] sm:$0xff]
    %v6594 = vld [vmem:[%s12 + $0x68] sm:$0xff]
    %v6595 = vld [vmem:[%s12 + $0x70] sm:$0xff]
    %v6596 = vld [vmem:[%s12 + $0x78] sm:$0xff]
    %v6597 = vld [vmem:[%s12 + $0x80] sm:$0xff]
    %v6598 = vld [vmem:[%s12 + $0x88] sm:$0xff]
    %v6599 = vld [vmem:[%s12 + $0x90] sm:$0xff]
    %v6600 = vld [vmem:[%s12 + $0x98] sm:$0xff]
    %v6601 = vld [vmem:[%s12 + $0xa0] sm:$0xff]
    %v6602 = vld [vmem:[%s12 + $0xa8] sm:$0xff]
    %v6603 = vld [vmem:[%s12 + $0xb0] sm:$0xff]
    %v6604 = vld [vmem:[%s12 + $0xb8] sm:$0xff]
    %v6605 = vld [vmem:[%s12 + $0xc0] sm:$0xff]
    %v6606 = vld [vmem:[%s12 + $0xc8] sm:$0xff]
    %v6607 = vld [vmem:[%s12 + $0xd0] sm:$0xff]
    %v6608 = vld [vmem:[%s12 + $0xd8] sm:$0xff]
    %v6609 = vld [vmem:[%s12 + $0xe0] sm:$0xff]
    %v6610 = vld [vmem:[%s12 + $0xe8] sm:$0xff]
    %v6611 = vld [vmem:[%s12 + $0xf0] sm:$0xff]
    %v6612 = vld [vmem:[%s12 + $0xf8] sm:$0xff]
    %v6613 = vld [vmem:[%s12 + $0x100] sm:$0xff]
    %v6614 = vld [vmem:[%s12 + $0x108] sm:$0xff]
    %v6615 = vld [vmem:[%s12 + $0x110] sm:$0xff]
    %v6616 = vld [vmem:[%s12 + $0x118] sm:$0xff]
    %v6617 = vld [vmem:[%s12 + $0x120] sm:$0xff]
    %v6618 = vld [vmem:[%s12 + $0x128] sm:$0xff]
    %v6619 = vld [vmem:[%s12 + $0x130] sm:$0xff]
    %v6620 = vld [vmem:[%s12 + $0x138] sm:$0xff]
    %v6621 = vld [vmem:[%s12 + $0x140] sm:$0xff]
    %v6622 = vld [vmem:[%s12 + $0x148] sm:$0xff]
    %v6623 = vld [vmem:[%s12 + $0x150] sm:$0xff]
    %v6624 = vld [vmem:[%s12 + $0x158] sm:$0xff]
    %v6625 = vld [vmem:[%s12 + $0x160] sm:$0xff]
    %v6626 = vld [vmem:[%s12 + $0x168] sm:$0xff]
    %v6627 = vld [vmem:[%s12 + $0x170] sm:$0xff]
    %v6628 = vld [vmem:[%s12 + $0x178] sm:$0xff]
    %v6629 = vld [vmem:[%s12 + $0x180] sm:$0xff]
    %v6630 = vld [vmem:[%s12 + $0x188] sm:$0xff]
    %v6631 = vld [vmem:[%s12 + $0x190] sm:$0xff]
    %v6632 = vld [vmem:[%s12 + $0x198] sm:$0xff]
    %v6633 = vld [vmem:[%s12 + $0x1a0] sm:$0xff]
    %v6634 = vld [vmem:[%s12 + $0x1a8] sm:$0xff]
    %v6635 = vld [vmem:[%s12 + $0x1b0] sm:$0xff]
    %v6636 = vld [vmem:[%s12 + $0x1b8] sm:$0xff]
    %v6637 = vld [vmem:[%s12 + $0x1c0] sm:$0xff]
    %v6638 = vld [vmem:[%s12 + $0x1c8] sm:$0xff]
    %v6639 = vld [vmem:[%s12 + $0x1d0] sm:$0xff]
    %v6640 = vld [vmem:[%s12 + $0x1d8] sm:$0xff]
    %v6641 = vld [vmem:[%s12 + $0x1e0] sm:$0xff]
    %v6642 = vld [vmem:[%s12 + $0x1e8] sm:$0xff]
    %v6643 = vld [vmem:[%s12 + $0x1f0] sm:$0xff]
    %v6644 = vld [vmem:[%s12 + $0x1f8] sm:$0xff]
    %v6645 = vld [vmem:[%s13] sm:$0x3]
    %v6647 = vlaneseq
    %v6648 = vshrl.u32 %v6647, 7
    %v6649 = vsub.s32 0, %v6648
    %v6650 = vrot.slane %v6645, %v6649
    %v6651 = vlaneseq
    %v6652 = vshrl.u32 %v6651, 7
    %v6653 = vsub.s32 1, %v6652
    %v6654 = vrot.slane %v6645, %v6653
    %v6659 = vcombine.low %v6579, %v6580
    %v6660 = vcombine.high %v6579, %v6580
    %6663 = vmatprep.subr.mxu0 %v6582
    %6664 = vmatpush1.msra.mxu0 %v6581
    %6665 = vmatprep.subr.mxu0 %v6584
    %6666 = vmatpush1.msra.mxu0 %v6583
    %6667 = vmatprep.subr.mxu0 %v6586
    %6668 = vmatpush1.msra.mxu0 %v6585
    %6669 = vmatprep.subr.mxu0 %v6588
    %6670 = vmatpush1.msra.mxu0 %v6587
    %6671 = vmatprep.subr.mxu0 %v6590
    %6672 = vmatpush1.msra.mxu0 %v6589
    %6673 = vmatprep.subr.mxu0 %v6592
    %6674 = vmatpush1.msra.mxu0 %v6591
    %6675 = vmatprep.subr.mxu0 %v6594
    %6676 = vmatpush1.msra.mxu0 %v6593
    %6677 = vmatprep.subr.mxu0 %v6596
    %6678 = vmatpush1.msra.mxu0 %v6595
    %6679 = vmatprep.subr.mxu0 %v6598
    %6680 = vmatpush1.msra.mxu0 %v6597
    %6681 = vmatprep.subr.mxu0 %v6600
    %6682 = vmatpush1.msra.mxu0 %v6599
    %6683 = vmatprep.subr.mxu0 %v6602
    %6684 = vmatpush1.msra.mxu0 %v6601
    %6685 = vmatprep.subr.mxu0 %v6604
    %6686 = vmatpush1.msra.mxu0 %v6603
    %6687 = vmatprep.subr.mxu0 %v6606
    %6688 = vmatpush1.msra.mxu0 %v6605
    %6689 = vmatprep.subr.mxu0 %v6608
    %6690 = vmatpush1.msra.mxu0 %v6607
    %6691 = vmatprep.subr.mxu0 %v6610
    %6692 = vmatpush1.msra.mxu0 %v6609
    %6693 = vmatprep.subr.mxu0 %v6612
    %6694 = vmatpush1.msra.mxu0 %v6611
    %6695 = vmatprep.subr.mxu0 %v6614
    %6696 = vmatpush1.msra.mxu0 %v6613
    %6697 = vmatprep.subr.mxu0 %v6616
    %6698 = vmatpush1.msra.mxu0 %v6615
    %6699 = vmatprep.subr.mxu0 %v6618
    %6700 = vmatpush1.msra.mxu0 %v6617
    %6701 = vmatprep.subr.mxu0 %v6620
    %6702 = vmatpush1.msra.mxu0 %v6619
    %6703 = vmatprep.subr.mxu0 %v6622
    %6704 = vmatpush1.msra.mxu0 %v6621
    %6705 = vmatprep.subr.mxu0 %v6624
    %6706 = vmatpush1.msra.mxu0 %v6623
    %6707 = vmatprep.subr.mxu0 %v6626
    %6708 = vmatpush1.msra.mxu0 %v6625
    %6709 = vmatprep.subr.mxu0 %v6628
    %6710 = vmatpush1.msra.mxu0 %v6627
    %6711 = vmatprep.subr.mxu0 %v6630
    %6712 = vmatpush1.msra.mxu0 %v6629
    %6713 = vmatprep.subr.mxu0 %v6632
    %6714 = vmatpush1.msra.mxu0 %v6631
    %6715 = vmatprep.subr.mxu0 %v6634
    %6716 = vmatpush1.msra.mxu0 %v6633
    %6717 = vmatprep.subr.mxu0 %v6636
    %6718 = vmatpush1.msra.mxu0 %v6635
    %6719 = vmatprep.subr.mxu0 %v6638
    %6720 = vmatpush1.msra.mxu0 %v6637
    %6721 = vmatprep.subr.mxu0 %v6640
    %6722 = vmatpush1.msra.mxu0 %v6639
    %6723 = vmatprep.subr.mxu0 %v6642
    %6724 = vmatpush1.msra.mxu0 %v6641
    %6725 = vmatprep.subr.mxu0 %v6644
    %6726 = vmatpush1.msra.mxu0 %v6643
    %6727 = vmatprep.mubr.f32.mxu0 %v6660
    %6728 = vmatmul.mubr.f32.gmra.mrb[0].mxu0 %v6659
    %v6729 = vpop.f32.mrb[0].mxu0
    %v6730 = vadd.f32 %v6650, %v6729
    %v6731 = vpop.f32.mrb[0].mxu0
    %v6732 = vadd.f32 %v6654, %v6731
    %6733 = vdwg.mxu0
    %v6736 = vcombine.low %v6730, %v6732
    %v6737 = vcombine.high %v6730, %v6732
    %v6740 = vcombine.high %v6736, %v6736
    %v6741 = vcombine.high %v6737, %v6737
    %vm6744 = vcmask 1043456
    %v6745 = vsel %vm6744, %v6736, 0.0
    %v6746 = vrot.slane %v6745, 4
    %v6747 = vadd.f32 %v6745, %v6746
    %v6748 = vrot.slane %v6747, 2
    %v6749 = vadd.f32 %v6747, %v6748
    %v6750 = vrot.slane %v6749, 1
    %v6751 = vadd.f32 %v6749, %v6750
    %v6752 = vsel %vm6744, %v6740, 0.0
    %v6753 = vrot.slane %v6752, 4
    %v6754 = vadd.f32 %v6752, %v6753
    %v6755 = vrot.slane %v6754, 2
    %v6756 = vadd.f32 %v6754, %v6755
    %v6757 = vrot.slane %v6756, 1
    %v6758 = vadd.f32 %v6756, %v6757
    %v6759 = vsel %vm6744, %v6737, 0.0
    %v6760 = vrot.slane %v6759, 4
    %v6761 = vadd.f32 %v6759, %v6760
    %v6762 = vrot.slane %v6761, 2
    %v6763 = vadd.f32 %v6761, %v6762
    %v6764 = vrot.slane %v6763, 1
    %v6765 = vadd.f32 %v6763, %v6764
    %v6766 = vsel %vm6744, %v6741, 0.0
    %v6767 = vrot.slane %v6766, 4
    %v6768 = vadd.f32 %v6766, %v6767
    %v6769 = vrot.slane %v6768, 2
    %v6770 = vadd.f32 %v6768, %v6769
    %v6771 = vrot.slane %v6770, 1
    %v6772 = vadd.f32 %v6770, %v6771
    %v6773 = vrcp.pop 4.0
    %v6774 = vmul.f32 %v6751, %v6773
    %v6775 = vmul.f32 %v6758, %v6773
    %v6776 = vmul.f32 %v6765, %v6773
    %v6777 = vmul.f32 %v6772, %v6773
    %v6778 = vld [vmem:[%s14] sm:$0xff]
    %v6779 = vld [vmem:[%s14 + $0x8] sm:$0xff]
    %v6780 = vld [vmem:[%s14 + $0x10] sm:$0xff]
    %v6781 = vld [vmem:[%s14 + $0x18] sm:$0xff]
    %v6782 = vld [vmem:[%s14 + $0x20] sm:$0xff]
    %v6783 = vld [vmem:[%s14 + $0x28] sm:$0xff]
    %v6784 = vld [vmem:[%s14 + $0x30] sm:$0xff]
    %v6785 = vld [vmem:[%s14 + $0x38] sm:$0xff]
    %v6786 = vld [vmem:[%s14 + $0x40] sm:$0xff]
    %v6787 = vld [vmem:[%s14 + $0x48] sm:$0xff]
    %v6788 = vld [vmem:[%s14 + $0x50] sm:$0xff]
    %v6789 = vld [vmem:[%s14 + $0x58] sm:$0xff]
    %v6790 = vld [vmem:[%s14 + $0x60] sm:$0xff]
    %v6791 = vld [vmem:[%s14 + $0x68] sm:$0xff]
    %v6792 = vld [vmem:[%s14 + $0x70] sm:$0xff]
    %v6793 = vld [vmem:[%s14 + $0x78] sm:$0xff]
    %v6794 = vld [vmem:[%s14 + $0x80] sm:$0xff]
    %v6795 = vld [vmem:[%s14 + $0x88] sm:$0xff]
    %v6796 = vld [vmem:[%s14 + $0x90] sm:$0xff]
    %v6797 = vld [vmem:[%s14 + $0x98] sm:$0xff]
    %v6798 = vld [vmem:[%s14 + $0xa0] sm:$0xff]
    %v6799 = vld [vmem:[%s14 + $0xa8] sm:$0xff]
    %v6800 = vld [vmem:[%s14 + $0xb0] sm:$0xff]
    %v6801 = vld [vmem:[%s14 + $0xb8] sm:$0xff]
    %v6802 = vld [vmem:[%s14 + $0xc0] sm:$0xff]
    %v6803 = vld [vmem:[%s14 + $0xc8] sm:$0xff]
    %v6804 = vld [vmem:[%s14 + $0xd0] sm:$0xff]
    %v6805 = vld [vmem:[%s14 + $0xd8] sm:$0xff]
    %v6806 = vld [vmem:[%s14 + $0xe0] sm:$0xff]
    %v6807 = vld [vmem:[%s14 + $0xe8] sm:$0xff]
    %v6808 = vld [vmem:[%s14 + $0xf0] sm:$0xff]
    %v6809 = vld [vmem:[%s14 + $0xf8] sm:$0xff]
    %v6810 = vld [vmem:[%s15] sm:$0x1]
    %v6812 = vlaneseq
    %v6813 = vshrl.u32 %v6812, 7
    %v6814 = vsub.s32 0, %v6813
    %v6815 = vrot.slane %v6810, %v6814
    %vm6821 = vcmask 1041409
    %v6822 = vsel %vm6821, %v6776, %v6774
    %v6823 = vsel %vm6821, %v6777, %v6775
    %6826 = vmatprep.subr.mxu0 0.0
    %6827 = vmatpush1.msra.mxu0 %v6778
    %6828 = vmatprep.subr.mxu0 0.0
    %6829 = vmatpush1.msra.mxu0 %v6779
    %6830 = vmatprep.subr.mxu0 0.0
    %6831 = vmatpush1.msra.mxu0 %v6780
    %6832 = vmatprep.subr.mxu0 0.0
    %6833 = vmatpush1.msra.mxu0 %v6781
    %6834 = vmatprep.subr.mxu0 0.0
    %6835 = vmatpush1.msra.mxu0 %v6782
    %6836 = vmatprep.subr.mxu0 0.0
    %6837 = vmatpush1.msra.mxu0 %v6783
    %6838 = vmatprep.subr.mxu0 0.0
    %6839 = vmatpush1.msra.mxu0 %v6784
    %6840 = vmatprep.subr.mxu0 0.0
    %6841 = vmatpush1.msra.mxu0 %v6785
    %6842 = vmatprep.subr.mxu0 0.0
    %6843 = vmatpush1.msra.mxu0 %v6786
    %6844 = vmatprep.subr.mxu0 0.0
    %6845 = vmatpush1.msra.mxu0 %v6787
    %6846 = vmatprep.subr.mxu0 0.0
    %6847 = vmatpush1.msra.mxu0 %v6788
    %6848 = vmatprep.subr.mxu0 0.0
    %6849 = vmatpush1.msra.mxu0 %v6789
    %6850 = vmatprep.subr.mxu0 0.0
    %6851 = vmatpush1.msra.mxu0 %v6790
    %6852 = vmatprep.subr.mxu0 0.0
    %6853 = vmatpush1.msra.mxu0 %v6791
    %6854 = vmatprep.subr.mxu0 0.0
    %6855 = vmatpush1.msra.mxu0 %v6792
    %6856 = vmatprep.subr.mxu0 0.0
    %6857 = vmatpush1.msra.mxu0 %v6793
    %6858 = vmatprep.subr.mxu0 0.0
    %6859 = vmatpush1.msra.mxu0 %v6794
    %6860 = vmatprep.subr.mxu0 0.0
    %6861 = vmatpush1.msra.mxu0 %v6795
    %6862 = vmatprep.subr.mxu0 0.0
    %6863 = vmatpush1.msra.mxu0 %v6796
    %6864 = vmatprep.subr.mxu0 0.0
    %6865 = vmatpush1.msra.mxu0 %v6797
    %6866 = vmatprep.subr.mxu0 0.0
    %6867 = vmatpush1.msra.mxu0 %v6798
    %6868 = vmatprep.subr.mxu0 0.0
    %6869 = vmatpush1.msra.mxu0 %v6799
    %6870 = vmatprep.subr.mxu0 0.0
    %6871 = vmatpush1.msra.mxu0 %v6800
    %6872 = vmatprep.subr.mxu0 0.0
    %6873 = vmatpush1.msra.mxu0 %v6801
    %6874 = vmatprep.subr.mxu0 0.0
    %6875 = vmatpush1.msra.mxu0 %v6802
    %6876 = vmatprep.subr.mxu0 0.0
    %6877 = vmatpush1.msra.mxu0 %v6803
    %6878 = vmatprep.subr.mxu0 0.0
    %6879 = vmatpush1.msra.mxu0 %v6804
    %6880 = vmatprep.subr.mxu0 0.0
    %6881 = vmatpush1.msra.mxu0 %v6805
    %6882 = vmatprep.subr.mxu0 0.0
    %6883 = vmatpush1.msra.mxu0 %v6806
    %6884 = vmatprep.subr.mxu0 0.0
    %6885 = vmatpush1.msra.mxu0 %v6807
    %6886 = vmatprep.subr.mxu0 0.0
    %6887 = vmatpush1.msra.mxu0 %v6808
    %6888 = vmatprep.subr.mxu0 0.0
    %6889 = vmatpush1.msra.mxu0 %v6809
    %6890 = vmatprep.mubr.f32.mxu0 %v6823
    %6891 = vmatmul.mubr.f32.gmra.mrb[0].mxu0 %v6822
    %v6892 = vpop.f32.mrb[0].mxu0
    %v6893 = vadd.f32 %v6815, %v6892
    %v6894 = vpop.f32.mrb[0].mxu0
    %6895 = vdwg.mxu0
    %v6896 = vld [vmem:[%s1] sm:$0x3]
    %vm6897 = vcmask 123904
    %v6898 = vsel %vm6897, %v6896, 0.0
    %6899 = vadd.xlane.f32.xlu0 %v6898
    %v6900 = vpop.xlane.xlu0 %6899
    %v6901 = vrcp.pop 16.0
    %v6902 = vmul.f32 %v6900, %v6901
    %v6903 = vsub.f32 %v6896, %v6902
    %v6904 = vmul.f32 %v6903, %v6903
    %v6905 = vsel %vm6897, %v6904, 0.0
    %6906 = vadd.xlane.f32.xlu0 %v6905
    %v6907 = vpop.xlane.xlu0 %6906
    %v6908 = vrcp.pop 15.0
    %v6909 = vmul.f32 %v6907, %v6908
    %v6910 = vrsqrt.pop %v6909
    %v6911 = vmul.f32 %v6909, %v6910
    %vm6912 = vcmp.eq.f32.partialorder %v6909, inf
    %v6913 = vsel %vm6912, %v6909, %v6911
    %vm6914 = vcmp.eq.f32.partialorder %v6909, 0.0
    %v6915 = vand.u32 %v6909, 2147483648
    %v6916 = vsel %vm6914, %v6915, %v6913
    %v6917 = vadd.f32 %v6916, 1e-05
    %v6918 = vrcp.pop %v6917
    %v6919 = vmul.f32 %v6903, %v6918
    %v6920 = vld [vmem:[%s16] sm:$0xff]
    %v6921 = vld [vmem:[%s16 + $0x8] sm:$0xff]
    %vm6922 = vcmask 130048
    %v6924 = vsel %vm6922, %v6919, 0
    %6926 = vmatprep.subr.mxu0 0.0
    %6927 = vmatpush1.msra.mxu0 %v6920
    %6928 = vmatprep.subr.mxu0 0.0
    %6929 = vmatpush1.msra.mxu0 %v6921
    %6930 = vmatprep.subr.mxu0 0.0
    %6931 = vmatpush1.msra.mxu0 0.0
    %6932 = vmatprep.subr.mxu0 0.0
    %6933 = vmatpush1.msra.mxu0 0.0
    %6934 = vmatprep.subr.mxu0 0.0
    %6935 = vmatpush1.msra.mxu0 0.0
    %6936 = vmatprep.subr.mxu0 0.0
    %6937 = vmatpush1.msra.mxu0 0.0
    %6938 = vmatprep.subr.mxu0 0.0
    %6939 = vmatpush1.msra.mxu0 0.0
    %6940 = vmatprep.subr.mxu0 0.0
    %6941 = vmatpush1.msra.mxu0 0.0
    %6942 = vmatprep.subr.mxu0 0.0
    %6943 = vmatpush1.msra.mxu0 0.0
    %6944 = vmatprep.subr.mxu0 0.0
    %6945 = vmatpush1.msra.mxu0 0.0
    %6946 = vmatprep.subr.mxu0 0.0
    %6947 = vmatpush1.msra.mxu0 0.0
    %6948 = vmatprep.subr.mxu0 0.0
    %6949 = vmatpush1.msra.mxu0 0.0
    %6950 = vmatprep.subr.mxu0 0.0
    %6951 = vmatpush1.msra.mxu0 0.0
    %6952 = vmatprep.subr.mxu0 0.0
    %6953 = vmatpush1.msra.mxu0 0.0
    %6954 = vmatprep.subr.mxu0 0.0
    %6955 = vmatpush1.msra.mxu0 0.0
    %6956 = vmatprep.subr.mxu0 0.0
    %6957 = vmatpush1.msra.mxu0 0.0
    %6958 = vmatprep.subr.mxu0 0.0
    %6959 = vmatpush1.msra.mxu0 0.0
    %6960 = vmatprep.subr.mxu0 0.0
    %6961 = vmatpush1.msra.mxu0 0.0
    %6962 = vmatprep.subr.mxu0 0.0
    %6963 = vmatpush1.msra.mxu0 0.0
    %6964 = vmatprep.subr.mxu0 0.0
    %6965 = vmatpush1.msra.mxu0 0.0
    %6966 = vmatprep.subr.mxu0 0.0
    %6967 = vmatpush1.msra.mxu0 0.0
    %6968 = vmatprep.subr.mxu0 0.0
    %6969 = vmatpush1.msra.mxu0 0.0
    %6970 = vmatprep.subr.mxu0 0.0
    %6971 = vmatpush1.msra.mxu0 0.0
    %6972 = vmatprep.subr.mxu0 0.0
    %6973 = vmatpush1.msra.mxu0 0.0
    %6974 = vmatprep.subr.mxu0 0.0
    %6975 = vmatpush1.msra.mxu0 0.0
    %6976 = vmatprep.subr.mxu0 0.0
    %6977 = vmatpush1.msra.mxu0 0.0
    %6978 = vmatprep.subr.mxu0 0.0
    %6979 = vmatpush1.msra.mxu0 0.0
    %6980 = vmatprep.subr.mxu0 0.0
    %6981 = vmatpush1.msra.mxu0 0.0
    %6982 = vmatprep.subr.mxu0 0.0
    %6983 = vmatpush1.msra.mxu0 0.0
    %6984 = vmatprep.subr.mxu0 0.0
    %6985 = vmatpush1.msra.mxu0 0.0
    %6986 = vmatprep.subr.mxu0 0.0
    %6987 = vmatpush1.msra.mxu0 0.0
    %6988 = vmatprep.subr.mxu0 0.0
    %6989 = vmatpush1.msra.mxu0 0.0
    %6990 = vmatprep.mubr.f32.mxu0 0.0
    %6991 = vmatmul.mubr.f32.gmra.mrb[0].mxu0 %v6924
    %v6992 = vpop.f32.mrb[0].mxu0
    %v6993 = vadd.f32 0.0, %v6992
    %v6994 = vpop.f32.mrb[0].mxu0
    %6995 = vdwg.mxu0
    %v6996 = vadd.f32 %v6893, %v6993
    %v6997 = vld [vmem:[%s17] sm:$0x1]
    %v6999 = vlaneseq
    %v7000 = vshrl.u32 %v6999, 7
    %v7001 = vsub.s32 0, %v7000
    %v7002 = vrot.slane %v6997, %v7001
    %v7004 = vadd.f32 %v6996, %v7002
    %vm7005 = vcmask 25600
    %7006 = vst.msk [vmem:[#allocation5] sm:$0x3] %vm7005, %v7004
    // Predicated region
    $region78: #{forward.1} parent=1 // pred_check
      _
    $region79: #{forward.1} parent=1 // pred_check_branch
      %7008 = sbr.rel (0) target = $region81
    $region80: #{forward.1} parent=1 // pred_region
      %s7010 = ssub.s32 32, 32
      %7011 = vsyncadd [#allocation6], %s7010
      %s7013 = sshll.u32 [#allocation5], 4
      %s7014 = int_to_ptr.vmem [resolvable:$true] %s7013
      %7016 = dma.vmem_to_hbm [thread:$0]  %s7014, 32, %s19, [#allocation6]
    $region81: #{forward.1} parent=1 // pred_fallthru
      _
    // Predicated region
    $region82: #{forward.1} parent=1 // pred_check
      _
    $region83: #{forward.1} parent=1 // pred_check_branch
      %7018 = sbr.rel (0) target = $region85
    $region84: #{forward.1} parent=1 // pred_region
      %7019 = dma.done [#allocation6], 32
    $region85: #{forward.1} parent=1 // pred_fallthru
      _
    %7020 = vsyncpa [#allocation6], 1

</llo_original>
